<compile_context>
chip_gen: v7x
topology: tpu7x:2x2x1
jax: 0.10.0
libtpu: 0.0.40
codegen_flags: <defaults>
</compile_context>

<pallas_src>
import jax
import jax.numpy as jnp
from jax.experimental import pallas as pl
from jax.experimental.pallas import tpu as pltpu

LANES = 128


def _round_up(x, m):
    return (x + m - 1) // m * m


def _pick_imgs_per_block(n, rows_per_img, target_rows):
    """Largest divisor of n whose block stays under target_rows rows
    (and keeps >= 2 grid steps when possible, for pipelining/megacore)."""
    best = 1
    for d in range(1, n + 1):
        if n % d:
            continue
        if d * rows_per_img > target_rows:
            continue
        if n // d < min(2, n):
            continue
        best = d
    return best


def _tpu_tuning():
    """(vmem_limit_bytes, conv1_target_rows, conv2_target_rows) per generation.
    v5e/v6e: 128 MiB VMEM -> large tiles + 64 MiB scoped limit.
    v7x: only 64 MiB VMEM per TensorCore -> smaller tiles / limit so
    double-buffering (DMA/compute overlap) survives."""
    kind = ""
    try:
        kind = jax.devices()[0].device_kind.lower()
    except Exception:
        pass
    if "v7" in kind:
        return 40 * 1024 * 1024, 2048, 4096
    if ("v2" in kind) or ("v3" in kind):
        return 12 * 1024 * 1024, 1024, 1024
    return 64 * 1024 * 1024, 4096, 8192


VMEM_LIMIT, CONV1_TARGET_ROWS, CONV2_TARGET_ROWS = _tpu_tuning()


# --------------------- conv1: stacked matmul + 2x2 maxpool + relu ---------------------

def _conv1_kernel(p_ref, w_ref, b_ref, o_ref):
    # p_ref: (4, TP, 32) bf16 corner-major im2col patches (axis 0 = the four
    #        2x2 pool-window corners of each pooled output position).
    # One long (4*TP, 32) @ (32, 128) MXU stream, then VPU max over corners,
    # + bias (commutes with the window max), relu.  Epilogue stays f32.
    tp = o_ref.shape[0]
    kk = p_ref.shape[2]
    lhs = p_ref[...].reshape(4 * tp, kk)
    acc = jnp.dot(lhs, w_ref[...], preferred_element_type=jnp.float32)
    acc = acc.reshape(4, tp, LANES)
    acc = jnp.maximum(jnp.maximum(acc[0], acc[1]), jnp.maximum(acc[2], acc[3]))
    acc = acc + b_ref[...]
    o_ref[...] = jnp.maximum(acc, 0.0).astype(o_ref.dtype)


def conv1_pool_relu(x, w_pad, b_pad):
    """relu(max_pool2d(conv2d(x, conv1_w) + b, 2)) for the 1-channel 5x5 conv.

    x: (N, 28, 28) bf16  ->  (N, 12, 12, 128) bf16 (channels 10..127 are zero).
    # TODO(synk): the (4, N*144, 32) corner-major patch tensor is still built by
    # XLA; with C=1 an in-kernel tap loop degenerates to (rows,1)@(1,128) outer
    # products, so the small (~37 KB/img) wrapper relayout is kept for conv1 only.
    """
    N, H, W = x.shape
    k = 5
    OH, OW = H - k + 1, W - k + 1
    PH, PW = OH // 2, OW // 2
    KP = w_pad.shape[0]                                       # 25 taps padded to 32

    cols = [x[:, i:i + OH, j:j + OW] for i in range(k) for j in range(k)]
    p = jnp.stack(cols, axis=-1)                              # (N, OH, OW, 25)
    p = jnp.pad(p, ((0, 0), (0, 0), (0, 0), (0, KP - k * k)))
    p = p.reshape(N, PH, 2, PW, 2, KP).transpose(2, 4, 0, 1, 3, 5)
    p = p.reshape(4, N * PH * PW, KP).astype(jnp.bfloat16)

    rows = N * PH * PW
    ipb = _pick_imgs_per_block(N, PH * PW, CONV1_TARGET_ROWS)
    tp = ipb * PH * PW                                        # multiple of 8 (144*ipb)
    grid = (rows // tp,)

    cost = pl.CostEstimate(
        flops=2 * 4 * rows * KP * LANES,
        transcendentals=0,
        bytes_accessed=4 * rows * KP * 2 + KP * LANES * 2 + LANES * 4
                       + rows * LANES * 2,
    )
    # TODO(synk): on v7x, CORE_PARALLEL (or pl.core_map) would shard this row
    # axis across both TensorCores explicitly; kept "parallel" for portability.
    out = pl.pallas_call(
        _conv1_kernel,
        out_shape=jax.ShapeDtypeStruct((rows, LANES), jnp.bfloat16),
        grid=grid,
        in_specs=[
            pl.BlockSpec((4, tp, KP), lambda i: (0, i, 0)),
            pl.BlockSpec((KP, LANES), lambda i: (0, 0)),
            pl.BlockSpec((1, LANES), lambda i: (0, 0)),
        ],
        out_specs=pl.BlockSpec((tp, LANES), lambda i: (i, 0)),
        compiler_params=pltpu.CompilerParams(
            dimension_semantics=("parallel",),
            vmem_limit_bytes=VMEM_LIMIT,
        ),
        cost_estimate=cost,
    )(p, w_pad, b_pad)
    return out.reshape(N, PH, PW, LANES)


# --------------- conv2: in-kernel im2col (25 tap matmuls) + pool + relu ---------------

def _conv2_kernel(x_ref, w_ref, b_ref, o_ref):
    # x_ref: (nb, 12, 12, 128) bf16 lane-dense conv1 activations.
    # w_ref: (25, 128, 128) bf16 (tap, cin, cout) with zero-padded cin/cout.
    # b_ref: (1, 128) f32.
    # o_ref: (nb, 16, 128) bf16, dim1 = pw*4 + ph (fc1 rows are pre-permuted to match).
    nb = x_ref.shape[0]
    xv = x_ref[...]
    acc = None
    for t in range(25):                       # in-kernel im2col: shifted-slice matmuls
        i, j = divmod(t, 5)
        lhs = xv[:, i:i + 8, j:j + 8, :].reshape(nb * 64, LANES)
        part = jnp.dot(lhs, w_ref[t], preferred_element_type=jnp.float32)
        acc = part if acc is None else acc + part
    acc = acc.reshape(nb, 4, 2, 8, LANES)                 # (n, ph, a, ow, c)
    acc = jnp.maximum(acc[:, :, 0], acc[:, :, 1])         # pool over H -> (nb, 4, 8, 128)
    bias = b_ref[...]
    for pw in range(4):                                   # pool over W + bias + relu
        v = jnp.maximum(acc[:, :, 2 * pw, :], acc[:, :, 2 * pw + 1, :])
        v = jnp.maximum(v + bias, 0.0)
        o_ref[:, pw * 4:(pw + 1) * 4, :] = v.astype(o_ref.dtype)


def conv2_pool_relu(y, w_pad, b_pad):
    """relu(max_pool2d(conv2d(y, conv2_w) + b, 2)) on the lane-dense conv1 output.

    y: (N, 12, 12, 128) bf16  ->  (N, 16, 128) bf16, dim1 = pw*4 + ph."""
    N = y.shape[0]
    nb = _pick_imgs_per_block(N, 144, CONV2_TARGET_ROWS)
    grid = (N // nb,)

    cost = pl.CostEstimate(
        flops=2 * 25 * N * 64 * LANES * LANES,
        transcendentals=0,
        bytes_accessed=N * 144 * LANES * 2 + 25 * LANES * LANES * 2 + LANES * 4
                       + N * 16 * LANES * 2,
    )
    out = pl.pallas_call(
        _conv2_kernel,
        out_shape=jax.ShapeDtypeStruct((N, 16, LANES), jnp.bfloat16),
        grid=grid,
        in_specs=[
            pl.BlockSpec((nb, 12, 12, LANES), lambda i: (i, 0, 0, 0)),
            pl.BlockSpec((25, LANES, LANES), lambda i: (0, 0, 0)),
            pl.BlockSpec((1, LANES), lambda i: (0, 0)),
        ],
        out_specs=pl.BlockSpec((nb, 16, LANES), lambda i: (i, 0, 0)),
        compiler_params=pltpu.CompilerParams(
            dimension_semantics=("parallel",),
            vmem_limit_bytes=VMEM_LIMIT,
        ),
        cost_estimate=cost,
    )(y, w_pad, b_pad)
    return out


# --------------------- fused FC tail: fc1 + relu + fc2 + log_softmax ---------------------

def _fc_tail_kernel(x_ref, w1_ref, b1_ref, w2_ref, b2_ref, o_ref):
    h = jnp.dot(x_ref[...], w1_ref[...], preferred_element_type=jnp.float32)
    h = jnp.maximum(h + b1_ref[...], 0.0)                  # fc1 + relu (padded cols = 0)
    logits = jnp.dot(h.astype(jnp.bfloat16), w2_ref[...],
                     preferred_element_type=jnp.float32)
    # INVARIANT: b2 stays f32 and the padded w2 columns stay exactly zero, so
    # the -1e30 sentinel on padded classes underflows in exp() without inf/NaN.
    logits = logits + b2_ref[...]
    m = jnp.max(logits, axis=-1, keepdims=True)
    s = logits - m
    lse = jnp.log(jnp.sum(jnp.exp(s), axis=-1, keepdims=True))
    o_ref[...] = (s - lse).astype(o_ref.dtype)


def fc_tail(x, w1_pad, b1_pad, w2_pad, b2_pad):
    """log_softmax(relu(x @ w1 + b1) @ w2 + b2) over lane-padded classes."""
    M, K = x.shape
    tb = 512
    if M <= tb:
        mp = _round_up(max(M, 8), 8)
        tb = mp
    else:
        mp = _round_up(M, tb)
    xp = jnp.pad(x, ((0, mp - M), (0, 0))).astype(jnp.bfloat16)

    cost = pl.CostEstimate(
        flops=2 * mp * K * LANES + 2 * mp * LANES * LANES,
        transcendentals=mp * LANES,
        bytes_accessed=mp * K * 2 + K * LANES * 2 + LANES * LANES * 2
                       + 2 * LANES * 4 + mp * LANES * 4,
    )
    out = pl.pallas_call(
        _fc_tail_kernel,
        out_shape=jax.ShapeDtypeStruct((mp, LANES), jnp.float32),
        grid=(mp // tb,),
        in_specs=[
            pl.BlockSpec((tb, K), lambda i: (i, 0)),
            pl.BlockSpec((K, LANES), lambda i: (0, 0)),
            pl.BlockSpec((1, LANES), lambda i: (0, 0)),
            pl.BlockSpec((LANES, LANES), lambda i: (0, 0)),
            pl.BlockSpec((1, LANES), lambda i: (0, 0)),
        ],
        out_specs=pl.BlockSpec((tb, LANES), lambda i: (i, 0)),
        compiler_params=pltpu.CompilerParams(
            dimension_semantics=("parallel",),
            vmem_limit_bytes=VMEM_LIMIT,
        ),
        cost_estimate=cost,
    )(xp, w1_pad, b1_pad, w2_pad, b2_pad)
    return out[:M]


# ------------------------------- params -------------------------------

def init_params(key):
    ks = jax.random.split(key, 8)

    def u(k, shape, fan_in):
        bound = 1.0 / jnp.sqrt(jnp.float32(fan_in))
        return jax.random.uniform(k, shape, jnp.float32, -bound, bound)

    return {
        "conv1_w": u(ks[0], (10, 1, 5, 5), 25),
        "conv1_b": u(ks[1], (10,), 25),
        "conv2_w": u(ks[2], (20, 10, 5, 5), 250),
        "conv2_b": u(ks[3], (20,), 250),
        "fc1_w":   u(ks[4], (50, 320), 320),
        "fc1_b":   u(ks[5], (50,), 320),
        "fc2_w":   u(ks[6], (10, 50), 50),
        "fc2_b":   u(ks[7], (10,), 50),
    }


def prepare_params(p):
    """One-time transpose / lane-pad / bf16 cast of all weights."""
    # conv1: (10,1,5,5) -> (32 taps, 128 cout); extra taps / channels are zero.
    c1w = p["conv1_w"].reshape(10, 25).T                               # (25, 10)
    c1w = jnp.pad(c1w, ((0, 7), (0, LANES - 10))).astype(jnp.bfloat16)  # (32, 128)
    c1b = jnp.pad(p["conv1_b"], (0, LANES - 10)).reshape(1, LANES).astype(jnp.float32)

    # conv2: OIHW (20,10,5,5) -> (25 taps, 128 cin, 128 cout); padded cin rows are
    # zero so the lane-padded conv1 output needs no channel slice.
    c2w = jnp.transpose(p["conv2_w"], (2, 3, 1, 0)).reshape(25, 10, 20)
    c2w = jnp.pad(c2w, ((0, 0), (0, LANES - 10), (0, LANES - 20))).astype(jnp.bfloat16)
    c2b = jnp.pad(p["conv2_b"], (0, LANES - 20)).reshape(1, LANES).astype(jnp.float32)

    # fc1: permute rows to consume the lane-padded conv2 output flattened as
    # feature g = (pw*4 + ph)*128 + c  (so the flatten is a free reshape).
    f1w = p["fc1_w"].reshape(50, 20, 4, 4)                  # (out, c, h, w); f = c*16+h*4+w
    f1w = jnp.transpose(f1w, (3, 2, 1, 0))                  # (w, h, c, out)
    f1w = jnp.pad(f1w, ((0, 0), (0, 0), (0, LANES - 20), (0, LANES - 50)))
    f1w = f1w.reshape(4 * 4 * LANES, LANES).astype(jnp.bfloat16)        # (2048, 128)
    f1b = jnp.pad(p["fc1_b"], (0, LANES - 50)).reshape(1, LANES).astype(jnp.float32)

    # fc2: padded classes get bias = -1e30 (kept f32!) so log_softmax ignores them.
    f2w = jnp.pad(p["fc2_w"].T, ((0, LANES - 50), (0, LANES - 10))).astype(jnp.bfloat16)
    f2b = jnp.full((1, LANES), -1e30, jnp.float32).at[0, :10].set(p["fc2_b"])

    return {"c1w": c1w, "c1b": c1b, "c2w": c2w, "c2b": c2b,
            "f1w": f1w, "f1b": f1b, "f2w": f2w, "f2b": f2b}


# ------------------------------- Net forward -------------------------------

def net_forward(pp, x):
    # x: (N, 1, 28, 28) NCHW float32
    # TODO(synk): Dropout2d / F.dropout are identity here (eval-mode semantics).
    N = x.shape[0]
    x = x.reshape(N, 28, 28).astype(jnp.bfloat16)           # single channel -> (N, H, W)
    y = conv1_pool_relu(x, pp["c1w"], pp["c1b"])             # (N, 12, 12, 128) lane-dense
    y = conv2_pool_relu(y, pp["c2w"], pp["c2b"])             # (N, 16, 128) lane-dense
    feats = y.reshape(N, 4 * 4 * LANES)                      # free flatten; fc1 pre-permuted
    out = fc_tail(feats, pp["f1w"], pp["f1b"], pp["f2w"], pp["f2b"])   # (N, 128)
    return out[:, :10]


# ------------------------------- f32 reference -------------------------------

def net_reference(p, x):
    def conv(x, w, b):
        y = jax.lax.conv_general_dilated(
            x, w, window_strides=(1, 1), padding="VALID",
            dimension_numbers=("NCHW", "OIHW", "NCHW"))
        return y + b.reshape(1, -1, 1, 1)

    def pool_relu(x):
        y = jax.lax.reduce_window(x, -jnp.inf, jax.lax.max,
                                  (1, 1, 2, 2), (1, 1, 2, 2), "VALID")
        return jnp.maximum(y, 0.0)

    y = pool_relu(conv(x, p["conv1_w"], p["conv1_b"]))
    y = pool_relu(conv(y, p["conv2_w"], p["conv2_b"]))
    y = y.reshape(-1, 320)
    y = jnp.maximum(y @ p["fc1_w"].T + p["fc1_b"], 0.0)
    y = y @ p["fc2_w"].T + p["fc2_b"]
    return jax.nn.log_softmax(y, axis=-1)


if __name__ == "__main__":
    key = jax.random.PRNGKey(0)
    pkey, xkey = jax.random.split(key)
    raw = init_params(pkey)
    prepared = prepare_params(raw)
    # forward implies 28x28 single-channel input (-> 20*4*4 = 320 flatten)
    x = jax.random.normal(xkey, (2, 1, 28, 28), jnp.float32)
    out = jax.jit(net_forward)(prepared, x)
    jax.block_until_ready(out)
    assert out.shape == (2, 10)
    ref = net_reference(raw, x)
    assert jnp.max(jnp.abs(out - ref)) < 0.25, "mismatch vs f32 reference"
    print("KERNEL_OK")
</pallas_src>

<mosaic_0001>
module attributes {stable_mosaic.version = 11 : i64} {
  func.func @_conv1_kernel(%arg0: i32, %arg1: memref<4x144x32xbf16, #tpu.memory_space<vmem>>, %arg2: memref<32x128xbf16, #tpu.memory_space<vmem>>, %arg3: memref<1x128xf32, #tpu.memory_space<vmem>>, %arg4: memref<144x128xbf16, #tpu.memory_space<vmem>>) attributes {dimension_semantics = [#tpu.dimension_semantics<parallel>], iteration_bounds = array<i64: 2>, scalar_prefetch = 0 : i64, scratch_operands = 0 : i64, tpu.core_type = #tpu.core_type<tc>, window_params = [{transform_indices = @transform_0, window_bounds = array<i64: 4, 144, 32>}, {pipeline_mode = #tpu.pipeline_mode<synchronous>, transform_indices = @transform_1, window_bounds = array<i64: 32, 128>}, {pipeline_mode = #tpu.pipeline_mode<synchronous>, transform_indices = @transform_2, window_bounds = array<i64: 1, 128>}, {transform_indices = @transform_3, window_bounds = array<i64: 144, 128>}]} {
    %c0 = arith.constant 0 : index
    %c0_0 = arith.constant 0 : index
    %c0_1 = arith.constant 0 : index
    %0 = vector.load %arg1[%c0, %c0_0, %c0_1] : memref<4x144x32xbf16, #tpu.memory_space<vmem>>, vector<4x144x32xbf16>
    %1 = vector.shape_cast %0 : vector<4x144x32xbf16> to vector<576x32xbf16>
    %c0_2 = arith.constant 0 : index
    %c0_3 = arith.constant 0 : index
    %2 = vector.load %arg2[%c0_2, %c0_3] : memref<32x128xbf16, #tpu.memory_space<vmem>>, vector<32x128xbf16>
    %cst = arith.constant dense<0.000000e+00> : vector<576x128xf32>
    %3 = tpu.matmul %1, %2, %cst {dimension_numbers = #tpu.dot_dimension_numbers<[1], [0], [0], [1], [0, 0, 1, 1], [], []>} : vector<576x32xbf16>, vector<32x128xbf16>, vector<576x128xf32> -> vector<576x128xf32>
    %4 = vector.shape_cast %3 : vector<576x128xf32> to vector<4x144x128xf32>
    %5 = vector.extract_strided_slice %4 {offsets = [0, 0, 0], sizes = [1, 144, 128], strides = [1, 1, 1]} : vector<4x144x128xf32> to vector<1x144x128xf32>
    %6 = vector.shape_cast %5 : vector<1x144x128xf32> to vector<144x128xf32>
    %7 = vector.extract_strided_slice %4 {offsets = [1, 0, 0], sizes = [1, 144, 128], strides = [1, 1, 1]} : vector<4x144x128xf32> to vector<1x144x128xf32>
    %8 = vector.shape_cast %7 : vector<1x144x128xf32> to vector<144x128xf32>
    %9 = arith.maximumf %6, %8 : vector<144x128xf32>
    %10 = vector.extract_strided_slice %4 {offsets = [2, 0, 0], sizes = [1, 144, 128], strides = [1, 1, 1]} : vector<4x144x128xf32> to vector<1x144x128xf32>
    %11 = vector.shape_cast %10 : vector<1x144x128xf32> to vector<144x128xf32>
    %12 = vector.extract_strided_slice %4 {offsets = [3, 0, 0], sizes = [1, 144, 128], strides = [1, 1, 1]} : vector<4x144x128xf32> to vector<1x144x128xf32>
    %13 = vector.shape_cast %12 : vector<1x144x128xf32> to vector<144x128xf32>
    %14 = arith.maximumf %11, %13 : vector<144x128xf32>
    %15 = arith.maximumf %9, %14 : vector<144x128xf32>
    %c0_4 = arith.constant 0 : index
    %c0_5 = arith.constant 0 : index
    %16 = vector.load %arg3[%c0_4, %c0_5] : memref<1x128xf32, #tpu.memory_space<vmem>>, vector<1x128xf32>
    %17 = vector.broadcast %16 : vector<1x128xf32> to vector<144x128xf32>
    %18 = arith.addf %15, %17 : vector<144x128xf32>
    %cst_6 = arith.constant 0.000000e+00 : f32
    %19 = vector.broadcast %cst_6 : f32 to vector<144x128xf32>
    %20 = arith.maximumf %18, %19 : vector<144x128xf32>
    %21 = arith.truncf %20 : vector<144x128xf32> to vector<144x128xbf16>
    %c0_7 = arith.constant 0 : index
    %c0_8 = arith.constant 0 : index
    %22 = vector.load %arg4[%c0_7, %c0_8] : memref<144x128xbf16, #tpu.memory_space<vmem>>, vector<144x128xbf16>
    tpu.vector_store %arg4[%c0_7, %c0_8], %21 {strides = array<i32>} : memref<144x128xbf16, #tpu.memory_space<vmem>>, vector<144x128xbf16>,
    return
  }
  func.func @transform_0(%arg0: i32) -> (i32, i32, i32) {
    %c0_i32 = arith.constant 0 : i32
    %c0_i32_0 = arith.constant 0 : i32
    %c0_i32_1 = arith.constant 0 : i32
    return %c0_i32, %arg0, %c0_i32_0 : i32, i32, i32
  }
  func.func @transform_1(%arg0: i32) -> (i32, i32) {
    %c0_i32 = arith.constant 0 : i32
    %c0_i32_0 = arith.constant 0 : i32
    %c0_i32_1 = arith.constant 0 : i32
    return %c0_i32, %c0_i32_0 : i32, i32
  }
  func.func @transform_2(%arg0: i32) -> (i32, i32) {
    %c0_i32 = arith.constant 0 : i32
    %c0_i32_0 = arith.constant 0 : i32
    %c0_i32_1 = arith.constant 0 : i32
    return %c0_i32, %c0_i32_0 : i32, i32
  }
  func.func @transform_3(%arg0: i32) -> (i32, i32) {
    %c0_i32 = arith.constant 0 : i32
    %c0_i32_0 = arith.constant 0 : i32
    return %arg0, %c0_i32 : i32, i32
  }
}

module attributes {stable_mosaic.version = 11 : i64} {
  func.func @_conv2_kernel(%arg0: i32, %arg1: memref<1x12x12x128xbf16, #tpu.memory_space<vmem>>, %arg2: memref<25x128x128xbf16, #tpu.memory_space<vmem>>, %arg3: memref<1x128xf32, #tpu.memory_space<vmem>>, %arg4: memref<1x16x128xbf16, #tpu.memory_space<vmem>>) attributes {dimension_semantics = [#tpu.dimension_semantics<parallel>], iteration_bounds = array<i64: 2>, scalar_prefetch = 0 : i64, scratch_operands = 0 : i64, tpu.core_type = #tpu.core_type<tc>, window_params = [{transform_indices = @transform_0, window_bounds = array<i64: 1, 12, 12, 128>}, {pipeline_mode = #tpu.pipeline_mode<synchronous>, transform_indices = @transform_1, window_bounds = array<i64: 25, 128, 128>}, {pipeline_mode = #tpu.pipeline_mode<synchronous>, transform_indices = @transform_2, window_bounds = array<i64: 1, 128>}, {transform_indices = @transform_3, window_bounds = array<i64: 1, 16, 128>}]} {
    %c0 = arith.constant 0 : index
    %c0_0 = arith.constant 0 : index
    %c0_1 = arith.constant 0 : index
    %c0_2 = arith.constant 0 : index
    %0 = vector.load %arg1[%c0, %c0_0, %c0_1, %c0_2] : memref<1x12x12x128xbf16, #tpu.memory_space<vmem>>, vector<1x12x12x128xbf16>
    %1 = vector.extract_strided_slice %0 {offsets = [0, 0, 0, 0], sizes = [1, 8, 8, 128], strides = [1, 1, 1, 1]} : vector<1x12x12x128xbf16> to vector<1x8x8x128xbf16>
    %2 = vector.shape_cast %1 : vector<1x8x8x128xbf16> to vector<64x128xbf16>
    %c0_3 = arith.constant 0 : index
    %c0_4 = arith.constant 0 : index
    %c0_5 = arith.constant 0 : index
    %3 = vector.load %arg2[%c0_3, %c0_4, %c0_5] : memref<25x128x128xbf16, #tpu.memory_space<vmem>>, vector<1x128x128xbf16>
    %4 = vector.shape_cast %3 : vector<1x128x128xbf16> to vector<128x128xbf16>
    %cst = arith.constant dense<0.000000e+00> : vector<64x128xf32>
    %5 = tpu.matmul %2, %4, %cst {dimension_numbers = #tpu.dot_dimension_numbers<[1], [0], [0], [1], [0, 0, 1, 1], [], []>} : vector<64x128xbf16>, vector<128x128xbf16>, vector<64x128xf32> -> vector<64x128xf32>
    %6 = vector.extract_strided_slice %0 {offsets = [0, 0, 1, 0], sizes = [1, 8, 8, 128], strides = [1, 1, 1, 1]} : vector<1x12x12x128xbf16> to vector<1x8x8x128xbf16>
    %7 = vector.shape_cast %6 : vector<1x8x8x128xbf16> to vector<64x128xbf16>
    %c1 = arith.constant 1 : index
    %c0_6 = arith.constant 0 : index
    %c0_7 = arith.constant 0 : index
    %8 = vector.load %arg2[%c1, %c0_6, %c0_7] : memref<25x128x128xbf16, #tpu.memory_space<vmem>>, vector<1x128x128xbf16>
    %9 = vector.shape_cast %8 : vector<1x128x128xbf16> to vector<128x128xbf16>
    %cst_8 = arith.constant dense<0.000000e+00> : vector<64x128xf32>
    %10 = tpu.matmul %7, %9, %cst_8 {dimension_numbers = #tpu.dot_dimension_numbers<[1], [0], [0], [1], [0, 0, 1, 1], [], []>} : vector<64x128xbf16>, vector<128x128xbf16>, vector<64x128xf32> -> vector<64x128xf32>
    %11 = arith.addf %5, %10 : vector<64x128xf32>
    %12 = vector.extract_strided_slice %0 {offsets = [0, 0, 2, 0], sizes = [1, 8, 8, 128], strides = [1, 1, 1, 1]} : vector<1x12x12x128xbf16> to vector<1x8x8x128xbf16>
    %13 = vector.shape_cast %12 : vector<1x8x8x128xbf16> to vector<64x128xbf16>
    %c2 = arith.constant 2 : index
    %c0_9 = arith.constant 0 : index
    %c0_10 = arith.constant 0 : index
    %14 = vector.load %arg2[%c2, %c0_9, %c0_10] : memref<25x128x128xbf16, #tpu.memory_space<vmem>>, vector<1x128x128xbf16>
    %15 = vector.shape_cast %14 : vector<1x128x128xbf16> to vector<128x128xbf16>
    %cst_11 = arith.constant dense<0.000000e+00> : vector<64x128xf32>
    %16 = tpu.matmul %13, %15, %cst_11 {dimension_numbers = #tpu.dot_dimension_numbers<[1], [0], [0], [1], [0, 0, 1, 1], [], []>} : vector<64x128xbf16>, vector<128x128xbf16>, vector<64x128xf32> -> vector<64x128xf32>
    %17 = arith.addf %11, %16 : vector<64x128xf32>
    %18 = vector.extract_strided_slice %0 {offsets = [0, 0, 3, 0], sizes = [1, 8, 8, 128], strides = [1, 1, 1, 1]} : vector<1x12x12x128xbf16> to vector<1x8x8x128xbf16>
    %19 = vector.shape_cast %18 : vector<1x8x8x128xbf16> to vector<64x128xbf16>
    %c3 = arith.constant 3 : index
    %c0_12 = arith.constant 0 : index
    %c0_13 = arith.constant 0 : index
    %20 = vector.load %arg2[%c3, %c0_12, %c0_13] : memref<25x128x128xbf16, #tpu.memory_space<vmem>>, vector<1x128x128xbf16>
    %21 = vector.shape_cast %20 : vector<1x128x128xbf16> to vector<128x128xbf16>
    %cst_14 = arith.constant dense<0.000000e+00> : vector<64x128xf32>
    %22 = tpu.matmul %19, %21, %cst_14 {dimension_numbers = #tpu.dot_dimension_numbers<[1], [0], [0], [1], [0, 0, 1, 1], [], []>} : vector<64x128xbf16>, vector<128x128xbf16>, vector<64x128xf32> -> vector<64x128xf32>
    %23 = arith.addf %17, %22 : vector<64x128xf32>
    %24 = vector.extract_strided_slice %0 {offsets = [0, 0, 4, 0], sizes = [1, 8, 8, 128], strides = [1, 1, 1, 1]} : vector<1x12x12x128xbf16> to vector<1x8x8x128xbf16>
    %25 = vector.shape_cast %24 : vector<1x8x8x128xbf16> to vector<64x128xbf16>
    %c4 = arith.constant 4 : index
    %c0_15 = arith.constant 0 : index
    %c0_16 = arith.constant 0 : index
    %26 = vector.load %arg2[%c4, %c0_15, %c0_16] : memref<25x128x128xbf16, #tpu.memory_space<vmem>>, vector<1x128x128xbf16>
    %27 = vector.shape_cast %26 : vector<1x128x128xbf16> to vector<128x128xbf16>
    %cst_17 = arith.constant dense<0.000000e+00> : vector<64x128xf32>
    %28 = tpu.matmul %25, %27, %cst_17 {dimension_numbers = #tpu.dot_dimension_numbers<[1], [0], [0], [1], [0, 0, 1, 1], [], []>} : vector<64x128xbf16>, vector<128x128xbf16>, vector<64x128xf32> -> vector<64x128xf32>
    %29 = arith.addf %23, %28 : vector<64x128xf32>
    %30 = vector.extract_strided_slice %0 {offsets = [0, 1, 0, 0], sizes = [1, 8, 8, 128], strides = [1, 1, 1, 1]} : vector<1x12x12x128xbf16> to vector<1x8x8x128xbf16>
    %31 = vector.shape_cast %30 : vector<1x8x8x128xbf16> to vector<64x128xbf16>
    %c5 = arith.constant 5 : index
    %c0_18 = arith.constant 0 : index
    %c0_19 = arith.constant 0 : index
    %32 = vector.load %arg2[%c5, %c0_18, %c0_19] : memref<25x128x128xbf16, #tpu.memory_space<vmem>>, vector<1x128x128xbf16>
    %33 = vector.shape_cast %32 : vector<1x128x128xbf16> to vector<128x128xbf16>
    %cst_20 = arith.constant dense<0.000000e+00> : vector<64x128xf32>
    %34 = tpu.matmul %31, %33, %cst_20 {dimension_numbers = #tpu.dot_dimension_numbers<[1], [0], [0], [1], [0, 0, 1, 1], [], []>} : vector<64x128xbf16>, vector<128x128xbf16>, vector<64x128xf32> -> vector<64x128xf32>
    %35 = arith.addf %29, %34 : vector<64x128xf32>
    %36 = vector.extract_strided_slice %0 {offsets = [0, 1, 1, 0], sizes = [1, 8, 8, 128], strides = [1, 1, 1, 1]} : vector<1x12x12x128xbf16> to vector<1x8x8x128xbf16>
    %37 = vector.shape_cast %36 : vector<1x8x8x128xbf16> to vector<64x128xbf16>
    %c6 = arith.constant 6 : index
    %c0_21 = arith.constant 0 : index
    %c0_22 = arith.constant 0 : index
    %38 = vector.load %arg2[%c6, %c0_21, %c0_22] : memref<25x128x128xbf16, #tpu.memory_space<vmem>>, vector<1x128x128xbf16>
    %39 = vector.shape_cast %38 : vector<1x128x128xbf16> to vector<128x128xbf16>
    %cst_23 = arith.constant dense<0.000000e+00> : vector<64x128xf32>
    %40 = tpu.matmul %37, %39, %cst_23 {dimension_numbers = #tpu.dot_dimension_numbers<[1], [0], [0], [1], [0, 0, 1, 1], [], []>} : vector<64x128xbf16>, vector<128x128xbf16>, vector<64x128xf32> -> vector<64x128xf32>
    %41 = arith.addf %35, %40 : vector<64x128xf32>
    %42 = vector.extract_strided_slice %0 {offsets = [0, 1, 2, 0], sizes = [1, 8, 8, 128], strides = [1, 1, 1, 1]} : vector<1x12x12x128xbf16> to vector<1x8x8x128xbf16>
    %43 = vector.shape_cast %42 : vector<1x8x8x128xbf16> to vector<64x128xbf16>
    %c7 = arith.constant 7 : index
    %c0_24 = arith.constant 0 : index
    %c0_25 = arith.constant 0 : index
    %44 = vector.load %arg2[%c7, %c0_24, %c0_25] : memref<25x128x128xbf16, #tpu.memory_space<vmem>>, vector<1x128x128xbf16>
    %45 = vector.shape_cast %44 : vector<1x128x128xbf16> to vector<128x128xbf16>
    %cst_26 = arith.constant dense<0.000000e+00> : vector<64x128xf32>
    %46 = tpu.matmul %43, %45, %cst_26 {dimension_numbers = #tpu.dot_dimension_numbers<[1], [0], [0], [1], [0, 0, 1, 1], [], []>} : vector<64x128xbf16>, vector<128x128xbf16>, vector<64x128xf32> -> vector<64x128xf32>
    %47 = arith.addf %41, %46 : vector<64x128xf32>
    %48 = vector.extract_strided_slice %0 {offsets = [0, 1, 3, 0], sizes = [1, 8, 8, 128], strides = [1, 1, 1, 1]} : vector<1x12x12x128xbf16> to vector<1x8x8x128xbf16>
    %49 = vector.shape_cast %48 : vector<1x8x8x128xbf16> to vector<64x128xbf16>
    %c8 = arith.constant 8 : index
    %c0_27 = arith.constant 0 : index
    %c0_28 = arith.constant 0 : index
    %50 = vector.load %arg2[%c8, %c0_27, %c0_28] : memref<25x128x128xbf16, #tpu.memory_space<vmem>>, vector<1x128x128xbf16>
    %51 = vector.shape_cast %50 : vector<1x128x128xbf16> to vector<128x128xbf16>
    %cst_29 = arith.constant dense<0.000000e+00> : vector<64x128xf32>
    %52 = tpu.matmul %49, %51, %cst_29 {dimension_numbers = #tpu.dot_dimension_numbers<[1], [0], [0], [1], [0, 0, 1, 1], [], []>} : vector<64x128xbf16>, vector<128x128xbf16>, vector<64x128xf32> -> vector<64x128xf32>
    %53 = arith.addf %47, %52 : vector<64x128xf32>
    %54 = vector.extract_strided_slice %0 {offsets = [0, 1, 4, 0], sizes = [1, 8, 8, 128], strides = [1, 1, 1, 1]} : vector<1x12x12x128xbf16> to vector<1x8x8x128xbf16>
    %55 = vector.shape_cast %54 : vector<1x8x8x128xbf16> to vector<64x128xbf16>
    %c9 = arith.constant 9 : index
    %c0_30 = arith.constant 0 : index
    %c0_31 = arith.constant 0 : index
    %56 = vector.load %arg2[%c9, %c0_30, %c0_31] : memref<25x128x128xbf16, #tpu.memory_space<vmem>>, vector<1x128x128xbf16>
    %57 = vector.shape_cast %56 : vector<1x128x128xbf16> to vector<128x128xbf16>
    %cst_32 = arith.constant dense<0.000000e+00> : vector<64x128xf32>
    %58 = tpu.matmul %55, %57, %cst_32 {dimension_numbers = #tpu.dot_dimension_numbers<[1], [0], [0], [1], [0, 0, 1, 1], [], []>} : vector<64x128xbf16>, vector<128x128xbf16>, vector<64x128xf32> -> vector<64x128xf32>
    %59 = arith.addf %53, %58 : vector<64x128xf32>
    %60 = vector.extract_strided_slice %0 {offsets = [0, 2, 0, 0], sizes = [1, 8, 8, 128], strides = [1, 1, 1, 1]} : vector<1x12x12x128xbf16> to vector<1x8x8x128xbf16>
    %61 = vector.shape_cast %60 : vector<1x8x8x128xbf16> to vector<64x128xbf16>
    %c10 = arith.constant 10 : index
    %c0_33 = arith.constant 0 : index
    %c0_34 = arith.constant 0 : index
    %62 = vector.load %arg2[%c10, %c0_33, %c0_34] : memref<25x128x128xbf16, #tpu.memory_space<vmem>>, vector<1x128x128xbf16>
    %63 = vector.shape_cast %62 : vector<1x128x128xbf16> to vector<128x128xbf16>
    %cst_35 = arith.constant dense<0.000000e+00> : vector<64x128xf32>
    %64 = tpu.matmul %61, %63, %cst_35 {dimension_numbers = #tpu.dot_dimension_numbers<[1], [0], [0], [1], [0, 0, 1, 1], [], []>} : vector<64x128xbf16>, vector<128x128xbf16>, vector<64x128xf32> -> vector<64x128xf32>
    %65 = arith.addf %59, %64 : vector<64x128xf32>
    %66 = vector.extract_strided_slice %0 {offsets = [0, 2, 1, 0], sizes = [1, 8, 8, 128], strides = [1, 1, 1, 1]} : vector<1x12x12x128xbf16> to vector<1x8x8x128xbf16>
    %67 = vector.shape_cast %66 : vector<1x8x8x128xbf16> to vector<64x128xbf16>
    %c11 = arith.constant 11 : index
    %c0_36 = arith.constant 0 : index
    %c0_37 = arith.constant 0 : index
    %68 = vector.load %arg2[%c11, %c0_36, %c0_37] : memref<25x128x128xbf16, #tpu.memory_space<vmem>>, vector<1x128x128xbf16>
    %69 = vector.shape_cast %68 : vector<1x128x128xbf16> to vector<128x128xbf16>
    %cst_38 = arith.constant dense<0.000000e+00> : vector<64x128xf32>
    %70 = tpu.matmul %67, %69, %cst_38 {dimension_numbers = #tpu.dot_dimension_numbers<[1], [0], [0], [1], [0, 0, 1, 1], [], []>} : vector<64x128xbf16>, vector<128x128xbf16>, vector<64x128xf32> -> vector<64x128xf32>
    %71 = arith.addf %65, %70 : vector<64x128xf32>
    %72 = vector.extract_strided_slice %0 {offsets = [0, 2, 2, 0], sizes = [1, 8, 8, 128], strides = [1, 1, 1, 1]} : vector<1x12x12x128xbf16> to vector<1x8x8x128xbf16>
    %73 = vector.shape_cast %72 : vector<1x8x8x128xbf16> to vector<64x128xbf16>
    %c12 = arith.constant 12 : index
    %c0_39 = arith.constant 0 : index
    %c0_40 = arith.constant 0 : index
    %74 = vector.load %arg2[%c12, %c0_39, %c0_40] : memref<25x128x128xbf16, #tpu.memory_space<vmem>>, vector<1x128x128xbf16>
    %75 = vector.shape_cast %74 : vector<1x128x128xbf16> to vector<128x128xbf16>
    %cst_41 = arith.constant dense<0.000000e+00> : vector<64x128xf32>
    %76 = tpu.matmul %73, %75, %cst_41 {dimension_numbers = #tpu.dot_dimension_numbers<[1], [0], [0], [1], [0, 0, 1, 1], [], []>} : vector<64x128xbf16>, vector<128x128xbf16>, vector<64x128xf32> -> vector<64x128xf32>
    %77 = arith.addf %71, %76 : vector<64x128xf32>
    %78 = vector.extract_strided_slice %0 {offsets = [0, 2, 3, 0], sizes = [1, 8, 8, 128], strides = [1, 1, 1, 1]} : vector<1x12x12x128xbf16> to vector<1x8x8x128xbf16>
    %79 = vector.shape_cast %78 : vector<1x8x8x128xbf16> to vector<64x128xbf16>
    %c13 = arith.constant 13 : index
    %c0_42 = arith.constant 0 : index
    %c0_43 = arith.constant 0 : index
    %80 = vector.load %arg2[%c13, %c0_42, %c0_43] : memref<25x128x128xbf16, #tpu.memory_space<vmem>>, vector<1x128x128xbf16>
    %81 = vector.shape_cast %80 : vector<1x128x128xbf16> to vector<128x128xbf16>
    %cst_44 = arith.constant dense<0.000000e+00> : vector<64x128xf32>
    %82 = tpu.matmul %79, %81, %cst_44 {dimension_numbers = #tpu.dot_dimension_numbers<[1], [0], [0], [1], [0, 0, 1, 1], [], []>} : vector<64x128xbf16>, vector<128x128xbf16>, vector<64x128xf32> -> vector<64x128xf32>
    %83 = arith.addf %77, %82 : vector<64x128xf32>
    %84 = vector.extract_strided_slice %0 {offsets = [0, 2, 4, 0], sizes = [1, 8, 8, 128], strides = [1, 1, 1, 1]} : vector<1x12x12x128xbf16> to vector<1x8x8x128xbf16>
    %85 = vector.shape_cast %84 : vector<1x8x8x128xbf16> to vector<64x128xbf16>
    %c14 = arith.constant 14 : index
    %c0_45 = arith.constant 0 : index
    %c0_46 = arith.constant 0 : index
    %86 = vector.load %arg2[%c14, %c0_45, %c0_46] : memref<25x128x128xbf16, #tpu.memory_space<vmem>>, vector<1x128x128xbf16>
    %87 = vector.shape_cast %86 : vector<1x128x128xbf16> to vector<128x128xbf16>
    %cst_47 = arith.constant dense<0.000000e+00> : vector<64x128xf32>
    %88 = tpu.matmul %85, %87, %cst_47 {dimension_numbers = #tpu.dot_dimension_numbers<[1], [0], [0], [1], [0, 0, 1, 1], [], []>} : vector<64x128xbf16>, vector<128x128xbf16>, vector<64x128xf32> -> vector<64x128xf32>
    %89 = arith.addf %83, %88 : vector<64x128xf32>
    %90 = vector.extract_strided_slice %0 {offsets = [0, 3, 0, 0], sizes = [1, 8, 8, 128], strides = [1, 1, 1, 1]} : vector<1x12x12x128xbf16> to vector<1x8x8x128xbf16>
    %91 = vector.shape_cast %90 : vector<1x8x8x128xbf16> to vector<64x128xbf16>
    %c15 = arith.constant 15 : index
    %c0_48 = arith.constant 0 : index
    %c0_49 = arith.constant 0 : index
    %92 = vector.load %arg2[%c15, %c0_48, %c0_49] : memref<25x128x128xbf16, #tpu.memory_space<vmem>>, vector<1x128x128xbf16>
    %93 = vector.shape_cast %92 : vector<1x128x128xbf16> to vector<128x128xbf16>
    %cst_50 = arith.constant dense<0.000000e+00> : vector<64x128xf32>
    %94 = tpu.matmul %91, %93, %cst_50 {dimension_numbers = #tpu.dot_dimension_numbers<[1], [0], [0], [1], [0, 0, 1, 1], [], []>} : vector<64x128xbf16>, vector<128x128xbf16>, vector<64x128xf32> -> vector<64x128xf32>
    %95 = arith.addf %89, %94 : vector<64x128xf32>
    %96 = vector.extract_strided_slice %0 {offsets = [0, 3, 1, 0], sizes = [1, 8, 8, 128], strides = [1, 1, 1, 1]} : vector<1x12x12x128xbf16> to vector<1x8x8x128xbf16>
    %97 = vector.shape_cast %96 : vector<1x8x8x128xbf16> to vector<64x128xbf16>
    %c16 = arith.constant 16 : index
    %c0_51 = arith.constant 0 : index
    %c0_52 = arith.constant 0 : index
    %98 = vector.load %arg2[%c16, %c0_51, %c0_52] : memref<25x128x128xbf16, #tpu.memory_space<vmem>>, vector<1x128x128xbf16>
    %99 = vector.shape_cast %98 : vector<1x128x128xbf16> to vector<128x128xbf16>
    %cst_53 = arith.constant dense<0.000000e+00> : vector<64x128xf32>
    %100 = tpu.matmul %97, %99, %cst_53 {dimension_numbers = #tpu.dot_dimension_numbers<[1], [0], [0], [1], [0, 0, 1, 1], [], []>} : vector<64x128xbf16>, vector<128x128xbf16>, vector<64x128xf32> -> vector<64x128xf32>
    %101 = arith.addf %95, %100 : vector<64x128xf32>
    %102 = vector.extract_strided_slice %0 {offsets = [0, 3, 2, 0], sizes = [1, 8, 8, 128], strides = [1, 1, 1, 1]} : vector<1x12x12x128xbf16> to vector<1x8x8x128xbf16>
    %103 = vector.shape_cast %102 : vector<1x8x8x128xbf16> to vector<64x128xbf16>
    %c17 = arith.constant 17 : index
    %c0_54 = arith.constant 0 : index
    %c0_55 = arith.constant 0 : index
    %104 = vector.load %arg2[%c17, %c0_54, %c0_55] : memref<25x128x128xbf16, #tpu.memory_space<vmem>>, vector<1x128x128xbf16>
    %105 = vector.shape_cast %104 : vector<1x128x128xbf16> to vector<128x128xbf16>
    %cst_56 = arith.constant dense<0.000000e+00> : vector<64x128xf32>
    %106 = tpu.matmul %103, %105, %cst_56 {dimension_numbers = #tpu.dot_dimension_numbers<[1], [0], [0], [1], [0, 0, 1, 1], [], []>} : vector<64x128xbf16>, vector<128x128xbf16>, vector<64x128xf32> -> vector<64x128xf32>
    %107 = arith.addf %101, %106 : vector<64x128xf32>
    %108 = vector.extract_strided_slice %0 {offsets = [0, 3, 3, 0], sizes = [1, 8, 8, 128], strides = [1, 1, 1, 1]} : vector<1x12x12x128xbf16> to vector<1x8x8x128xbf16>
    %109 = vector.shape_cast %108 : vector<1x8x8x128xbf16> to vector<64x128xbf16>
    %c18 = arith.constant 18 : index
    %c0_57 = arith.constant 0 : index
    %c0_58 = arith.constant 0 : index
    %110 = vector.load %arg2[%c18, %c0_57, %c0_58] : memref<25x128x128xbf16, #tpu.memory_space<vmem>>, vector<1x128x128xbf16>
    %111 = vector.shape_cast %110 : vector<1x128x128xbf16> to vector<128x128xbf16>
    %cst_59 = arith.constant dense<0.000000e+00> : vector<64x128xf32>
    %112 = tpu.matmul %109, %111, %cst_59 {dimension_numbers = #tpu.dot_dimension_numbers<[1], [0], [0], [1], [0, 0, 1, 1], [], []>} : vector<64x128xbf16>, vector<128x128xbf16>, vector<64x128xf32> -> vector<64x128xf32>
    %113 = arith.addf %107, %112 : vector<64x128xf32>
    %114 = vector.extract_strided_slice %0 {offsets = [0, 3, 4, 0], sizes = [1, 8, 8, 128], strides = [1, 1, 1, 1]} : vector<1x12x12x128xbf16> to vector<1x8x8x128xbf16>
    %115 = vector.shape_cast %114 : vector<1x8x8x128xbf16> to vector<64x128xbf16>
    %c19 = arith.constant 19 : index
    %c0_60 = arith.constant 0 : index
    %c0_61 = arith.constant 0 : index
    %116 = vector.load %arg2[%c19, %c0_60, %c0_61] : memref<25x128x128xbf16, #tpu.memory_space<vmem>>, vector<1x128x128xbf16>
    %117 = vector.shape_cast %116 : vector<1x128x128xbf16> to vector<128x128xbf16>
    %cst_62 = arith.constant dense<0.000000e+00> : vector<64x128xf32>
    %118 = tpu.matmul %115, %117, %cst_62 {dimension_numbers = #tpu.dot_dimension_numbers<[1], [0], [0], [1], [0, 0, 1, 1], [], []>} : vector<64x128xbf16>, vector<128x128xbf16>, vector<64x128xf32> -> vector<64x128xf32>
    %119 = arith.addf %113, %118 : vector<64x128xf32>
    %120 = vector.extract_strided_slice %0 {offsets = [0, 4, 0, 0], sizes = [1, 8, 8, 128], strides = [1, 1, 1, 1]} : vector<1x12x12x128xbf16> to vector<1x8x8x128xbf16>
    %121 = vector.shape_cast %120 : vector<1x8x8x128xbf16> to vector<64x128xbf16>
    %c20 = arith.constant 20 : index
    %c0_63 = arith.constant 0 : index
    %c0_64 = arith.constant 0 : index
    %122 = vector.load %arg2[%c20, %c0_63, %c0_64] : memref<25x128x128xbf16, #tpu.memory_space<vmem>>, vector<1x128x128xbf16>
    %123 = vector.shape_cast %122 : vector<1x128x128xbf16> to vector<128x128xbf16>
    %cst_65 = arith.constant dense<0.000000e+00> : vector<64x128xf32>
    %124 = tpu.matmul %121, %123, %cst_65 {dimension_numbers = #tpu.dot_dimension_numbers<[1], [0], [0], [1], [0, 0, 1, 1], [], []>} : vector<64x128xbf16>, vector<128x128xbf16>, vector<64x128xf32> -> vector<64x128xf32>
    %125 = arith.addf %119, %124 : vector<64x128xf32>
    %126 = vector.extract_strided_slice %0 {offsets = [0, 4, 1, 0], sizes = [1, 8, 8, 128], strides = [1, 1, 1, 1]} : vector<1x12x12x128xbf16> to vector<1x8x8x128xbf16>
    %127 = vector.shape_cast %126 : vector<1x8x8x128xbf16> to vector<64x128xbf16>
    %c21 = arith.constant 21 : index
    %c0_66 = arith.constant 0 : index
    %c0_67 = arith.constant 0 : index
    %128 = vector.load %arg2[%c21, %c0_66, %c0_67] : memref<25x128x128xbf16, #tpu.memory_space<vmem>>, vector<1x128x128xbf16>
    %129 = vector.shape_cast %128 : vector<1x128x128xbf16> to vector<128x128xbf16>
    %cst_68 = arith.constant dense<0.000000e+00> : vector<64x128xf32>
    %130 = tpu.matmul %127, %129, %cst_68 {dimension_numbers = #tpu.dot_dimension_numbers<[1], [0], [0], [1], [0, 0, 1, 1], [], []>} : vector<64x128xbf16>, vector<128x128xbf16>, vector<64x128xf32> -> vector<64x128xf32>
    %131 = arith.addf %125, %130 : vector<64x128xf32>
    %132 = vector.extract_strided_slice %0 {offsets = [0, 4, 2, 0], sizes = [1, 8, 8, 128], strides = [1, 1, 1, 1]} : vector<1x12x12x128xbf16> to vector<1x8x8x128xbf16>
    %133 = vector.shape_cast %132 : vector<1x8x8x128xbf16> to vector<64x128xbf16>
    %c22 = arith.constant 22 : index
    %c0_69 = arith.constant 0 : index
    %c0_70 = arith.constant 0 : index
    %134 = vector.load %arg2[%c22, %c0_69, %c0_70] : memref<25x128x128xbf16, #tpu.memory_space<vmem>>, vector<1x128x128xbf16>
    %135 = vector.shape_cast %134 : vector<1x128x128xbf16> to vector<128x128xbf16>
    %cst_71 = arith.constant dense<0.000000e+00> : vector<64x128xf32>
    %136 = tpu.matmul %133, %135, %cst_71 {dimension_numbers = #tpu.dot_dimension_numbers<[1], [0], [0], [1], [0, 0, 1, 1], [], []>} : vector<64x128xbf16>, vector<128x128xbf16>, vector<64x128xf32> -> vector<64x128xf32>
    %137 = arith.addf %131, %136 : vector<64x128xf32>
    %138 = vector.extract_strided_slice %0 {offsets = [0, 4, 3, 0], sizes = [1, 8, 8, 128], strides = [1, 1, 1, 1]} : vector<1x12x12x128xbf16> to vector<1x8x8x128xbf16>
    %139 = vector.shape_cast %138 : vector<1x8x8x128xbf16> to vector<64x128xbf16>
    %c23 = arith.constant 23 : index
    %c0_72 = arith.constant 0 : index
    %c0_73 = arith.constant 0 : index
    %140 = vector.load %arg2[%c23, %c0_72, %c0_73] : memref<25x128x128xbf16, #tpu.memory_space<vmem>>, vector<1x128x128xbf16>
    %141 = vector.shape_cast %140 : vector<1x128x128xbf16> to vector<128x128xbf16>
    %cst_74 = arith.constant dense<0.000000e+00> : vector<64x128xf32>
    %142 = tpu.matmul %139, %141, %cst_74 {dimension_numbers = #tpu.dot_dimension_numbers<[1], [0], [0], [1], [0, 0, 1, 1], [], []>} : vector<64x128xbf16>, vector<128x128xbf16>, vector<64x128xf32> -> vector<64x128xf32>
    %143 = arith.addf %137, %142 : vector<64x128xf32>
    %144 = vector.extract_strided_slice %0 {offsets = [0, 4, 4, 0], sizes = [1, 8, 8, 128], strides = [1, 1, 1, 1]} : vector<1x12x12x128xbf16> to vector<1x8x8x128xbf16>
    %145 = vector.shape_cast %144 : vector<1x8x8x128xbf16> to vector<64x128xbf16>
    %c24 = arith.constant 24 : index
    %c0_75 = arith.constant 0 : index
    %c0_76 = arith.constant 0 : index
    %146 = vector.load %arg2[%c24, %c0_75, %c0_76] : memref<25x128x128xbf16, #tpu.memory_space<vmem>>, vector<1x128x128xbf16>
    %147 = vector.shape_cast %146 : vector<1x128x128xbf16> to vector<128x128xbf16>
    %cst_77 = arith.constant dense<0.000000e+00> : vector<64x128xf32>
    %148 = tpu.matmul %145, %147, %cst_77 {dimension_numbers = #tpu.dot_dimension_numbers<[1], [0], [0], [1], [0, 0, 1, 1], [], []>} : vector<64x128xbf16>, vector<128x128xbf16>, vector<64x128xf32> -> vector<64x128xf32>
    %149 = arith.addf %143, %148 : vector<64x128xf32>
    %150 = vector.shape_cast %149 : vector<64x128xf32> to vector<1x4x2x8x128xf32>
    %151 = vector.extract_strided_slice %150 {offsets = [0, 0, 0, 0, 0], sizes = [1, 4, 1, 8, 128], strides = [1, 1, 1, 1, 1]} : vector<1x4x2x8x128xf32> to vector<1x4x1x8x128xf32>
    %152 = vector.shape_cast %151 : vector<1x4x1x8x128xf32> to vector<1x4x8x128xf32>
    %153 = vector.extract_strided_slice %150 {offsets = [0, 0, 1, 0, 0], sizes = [1, 4, 1, 8, 128], strides = [1, 1, 1, 1, 1]} : vector<1x4x2x8x128xf32> to vector<1x4x1x8x128xf32>
    %154 = vector.shape_cast %153 : vector<1x4x1x8x128xf32> to vector<1x4x8x128xf32>
    %155 = arith.maximumf %152, %154 : vector<1x4x8x128xf32>
    %c0_78 = arith.constant 0 : index
    %c0_79 = arith.constant 0 : index
    %156 = vector.load %arg3[%c0_78, %c0_79] : memref<1x128xf32, #tpu.memory_space<vmem>>, vector<1x128xf32>
    %157 = vector.extract_strided_slice %155 {offsets = [0, 0, 0, 0], sizes = [1, 4, 1, 128], strides = [1, 1, 1, 1]} : vector<1x4x8x128xf32> to vector<1x4x1x128xf32>
    %158 = vector.shape_cast %157 : vector<1x4x1x128xf32> to vector<1x4x128xf32>
    %159 = vector.extract_strided_slice %155 {offsets = [0, 0, 1, 0], sizes = [1, 4, 1, 128], strides = [1, 1, 1, 1]} : vector<1x4x8x128xf32> to vector<1x4x1x128xf32>
    %160 = vector.shape_cast %159 : vector<1x4x1x128xf32> to vector<1x4x128xf32>
    %161 = arith.maximumf %158, %160 : vector<1x4x128xf32>
    %162 = vector.shape_cast %156 : vector<1x128xf32> to vector<1x1x128xf32>
    %163 = vector.broadcast %162 : vector<1x1x128xf32> to vector<1x4x128xf32>
    %164 = arith.addf %161, %163 : vector<1x4x128xf32>
    %cst_80 = arith.constant 0.000000e+00 : f32
    %165 = vector.broadcast %cst_80 : f32 to vector<1x4x128xf32>
    %166 = arith.maximumf %164, %165 : vector<1x4x128xf32>
    %167 = arith.truncf %166 : vector<1x4x128xf32> to vector<1x4x128xbf16>
    %c0_81 = arith.constant 0 : index
    %c0_82 = arith.constant 0 : index
    %c0_83 = arith.constant 0 : index
    %168 = vector.load %arg4[%c0_81, %c0_82, %c0_83] : memref<1x16x128xbf16, #tpu.memory_space<vmem>>, vector<1x4x128xbf16>
    tpu.vector_store %arg4[%c0_81, %c0_82, %c0_83], %167 {strides = array<i32>} : memref<1x16x128xbf16, #tpu.memory_space<vmem>>, vector<1x4x128xbf16>,
    %169 = vector.extract_strided_slice %155 {offsets = [0, 0, 2, 0], sizes = [1, 4, 1, 128], strides = [1, 1, 1, 1]} : vector<1x4x8x128xf32> to vector<1x4x1x128xf32>
    %170 = vector.shape_cast %169 : vector<1x4x1x128xf32> to vector<1x4x128xf32>
    %171 = vector.extract_strided_slice %155 {offsets = [0, 0, 3, 0], sizes = [1, 4, 1, 128], strides = [1, 1, 1, 1]} : vector<1x4x8x128xf32> to vector<1x4x1x128xf32>
    %172 = vector.shape_cast %171 : vector<1x4x1x128xf32> to vector<1x4x128xf32>
    %173 = arith.maximumf %170, %172 : vector<1x4x128xf32>
    %174 = vector.shape_cast %156 : vector<1x128xf32> to vector<1x1x128xf32>
    %175 = vector.broadcast %174 : vector<1x1x128xf32> to vector<1x4x128xf32>
    %176 = arith.addf %173, %175 : vector<1x4x128xf32>
    %cst_84 = arith.constant 0.000000e+00 : f32
    %177 = vector.broadcast %cst_84 : f32 to vector<1x4x128xf32>
    %178 = arith.maximumf %176, %177 : vector<1x4x128xf32>
    %179 = arith.truncf %178 : vector<1x4x128xf32> to vector<1x4x128xbf16>
    %c0_85 = arith.constant 0 : index
    %c4_86 = arith.constant 4 : index
    %c0_87 = arith.constant 0 : index
    %180 = vector.load %arg4[%c0_85, %c4_86, %c0_87] : memref<1x16x128xbf16, #tpu.memory_space<vmem>>, vector<1x4x128xbf16>
    tpu.vector_store %arg4[%c0_85, %c4_86, %c0_87], %179 {strides = array<i32>} : memref<1x16x128xbf16, #tpu.memory_space<vmem>>, vector<1x4x128xbf16>,
    %181 = vector.extract_strided_slice %155 {offsets = [0, 0, 4, 0], sizes = [1, 4, 1, 128], strides = [1, 1, 1, 1]} : vector<1x4x8x128xf32> to vector<1x4x1x128xf32>
    %182 = vector.shape_cast %181 : vector<1x4x1x128xf32> to vector<1x4x128xf32>
    %183 = vector.extract_strided_slice %155 {offsets = [0, 0, 5, 0], sizes = [1, 4, 1, 128], strides = [1, 1, 1, 1]} : vector<1x4x8x128xf32> to vector<1x4x1x128xf32>
    %184 = vector.shape_cast %183 : vector<1x4x1x128xf32> to vector<1x4x128xf32>
    %185 = arith.maximumf %182, %184 : vector<1x4x128xf32>
    %186 = vector.shape_cast %156 : vector<1x128xf32> to vector<1x1x128xf32>
    %187 = vector.broadcast %186 : vector<1x1x128xf32> to vector<1x4x128xf32>
    %188 = arith.addf %185, %187 : vector<1x4x128xf32>
    %cst_88 = arith.constant 0.000000e+00 : f32
    %189 = vector.broadcast %cst_88 : f32 to vector<1x4x128xf32>
    %190 = arith.maximumf %188, %189 : vector<1x4x128xf32>
    %191 = arith.truncf %190 : vector<1x4x128xf32> to vector<1x4x128xbf16>
    %c0_89 = arith.constant 0 : index
    %c8_90 = arith.constant 8 : index
    %c0_91 = arith.constant 0 : index
    %192 = vector.load %arg4[%c0_89, %c8_90, %c0_91] : memref<1x16x128xbf16, #tpu.memory_space<vmem>>, vector<1x4x128xbf16>
    tpu.vector_store %arg4[%c0_89, %c8_90, %c0_91], %191 {strides = array<i32>} : memref<1x16x128xbf16, #tpu.memory_space<vmem>>, vector<1x4x128xbf16>,
    %193 = vector.extract_strided_slice %155 {offsets = [0, 0, 6, 0], sizes = [1, 4, 1, 128], strides = [1, 1, 1, 1]} : vector<1x4x8x128xf32> to vector<1x4x1x128xf32>
    %194 = vector.shape_cast %193 : vector<1x4x1x128xf32> to vector<1x4x128xf32>
    %195 = vector.extract_strided_slice %155 {offsets = [0, 0, 7, 0], sizes = [1, 4, 1, 128], strides = [1, 1, 1, 1]} : vector<1x4x8x128xf32> to vector<1x4x1x128xf32>
    %196 = vector.shape_cast %195 : vector<1x4x1x128xf32> to vector<1x4x128xf32>
    %197 = arith.maximumf %194, %196 : vector<1x4x128xf32>
    %198 = vector.shape_cast %156 : vector<1x128xf32> to vector<1x1x128xf32>
    %199 = vector.broadcast %198 : vector<1x1x128xf32> to vector<1x4x128xf32>
    %200 = arith.addf %197, %199 : vector<1x4x128xf32>
    %cst_92 = arith.constant 0.000000e+00 : f32
    %201 = vector.broadcast %cst_92 : f32 to vector<1x4x128xf32>
    %202 = arith.maximumf %200, %201 : vector<1x4x128xf32>
    %203 = arith.truncf %202 : vector<1x4x128xf32> to vector<1x4x128xbf16>
    %c0_93 = arith.constant 0 : index
    %c12_94 = arith.constant 12 : index
    %c0_95 = arith.constant 0 : index
    %204 = vector.load %arg4[%c0_93, %c12_94, %c0_95] : memref<1x16x128xbf16, #tpu.memory_space<vmem>>, vector<1x4x128xbf16>
    tpu.vector_store %arg4[%c0_93, %c12_94, %c0_95], %203 {strides = array<i32>} : memref<1x16x128xbf16, #tpu.memory_space<vmem>>, vector<1x4x128xbf16>,
    return
  }
  func.func @transform_0(%arg0: i32) -> (i32, i32, i32, i32) {
    %c0_i32 = arith.constant 0 : i32
    %c0_i32_0 = arith.constant 0 : i32
    %c0_i32_1 = arith.constant 0 : i32
    %c0_i32_2 = arith.constant 0 : i32
    return %arg0, %c0_i32, %c0_i32_0, %c0_i32_1 : i32, i32, i32, i32
  }
  func.func @transform_1(%arg0: i32) -> (i32, i32, i32) {
    %c0_i32 = arith.constant 0 : i32
    %c0_i32_0 = arith.constant 0 : i32
    %c0_i32_1 = arith.constant 0 : i32
    %c0_i32_2 = arith.constant 0 : i32
    return %c0_i32, %c0_i32_0, %c0_i32_1 : i32, i32, i32
  }
  func.func @transform_2(%arg0: i32) -> (i32, i32) {
    %c0_i32 = arith.constant 0 : i32
    %c0_i32_0 = arith.constant 0 : i32
    %c0_i32_1 = arith.constant 0 : i32
    return %c0_i32, %c0_i32_0 : i32, i32
  }
  func.func @transform_3(%arg0: i32) -> (i32, i32, i32) {
    %c0_i32 = arith.constant 0 : i32
    %c0_i32_0 = arith.constant 0 : i32
    %c0_i32_1 = arith.constant 0 : i32
    return %arg0, %c0_i32, %c0_i32_0 : i32, i32, i32
  }
}

module attributes {stable_mosaic.version = 11 : i64} {
  func.func @_fc_tail_kernel(%arg0: i32, %arg1: memref<8x2048xbf16, #tpu.memory_space<vmem>>, %arg2: memref<2048x128xbf16, #tpu.memory_space<vmem>>, %arg3: memref<1x128xf32, #tpu.memory_space<vmem>>, %arg4: memref<128x128xbf16, #tpu.memory_space<vmem>>, %arg5: memref<1x128xf32, #tpu.memory_space<vmem>>, %arg6: memref<8x128xf32, #tpu.memory_space<vmem>>) attributes {dimension_semantics = [#tpu.dimension_semantics<parallel>], iteration_bounds = array<i64: 1>, scalar_prefetch = 0 : i64, scratch_operands = 0 : i64, tpu.core_type = #tpu.core_type<tc>, window_params = [{transform_indices = @transform_0, window_bounds = array<i64: 8, 2048>}, {pipeline_mode = #tpu.pipeline_mode<synchronous>, transform_indices = @transform_1, window_bounds = array<i64: 2048, 128>}, {pipeline_mode = #tpu.pipeline_mode<synchronous>, transform_indices = @transform_2, window_bounds = array<i64: 1, 128>}, {pipeline_mode = #tpu.pipeline_mode<synchronous>, transform_indices = @transform_3, window_bounds = array<i64: 128, 128>}, {pipeline_mode = #tpu.pipeline_mode<synchronous>, transform_indices = @transform_4, window_bounds = array<i64: 1, 128>}, {transform_indices = @transform_5, window_bounds = array<i64: 8, 128>}]} {
    %c0 = arith.constant 0 : index
    %c0_0 = arith.constant 0 : index
    %0 = vector.load %arg1[%c0, %c0_0] : memref<8x2048xbf16, #tpu.memory_space<vmem>>, vector<8x2048xbf16>
    %c0_1 = arith.constant 0 : index
    %c0_2 = arith.constant 0 : index
    %1 = vector.load %arg2[%c0_1, %c0_2] : memref<2048x128xbf16, #tpu.memory_space<vmem>>, vector<2048x128xbf16>
    %cst = arith.constant dense<0.000000e+00> : vector<8x128xf32>
    %2 = tpu.matmul %0, %1, %cst {dimension_numbers = #tpu.dot_dimension_numbers<[1], [0], [0], [1], [0, 0, 1, 1], [], []>} : vector<8x2048xbf16>, vector<2048x128xbf16>, vector<8x128xf32> -> vector<8x128xf32>
    %c0_3 = arith.constant 0 : index
    %c0_4 = arith.constant 0 : index
    %3 = vector.load %arg3[%c0_3, %c0_4] : memref<1x128xf32, #tpu.memory_space<vmem>>, vector<1x128xf32>
    %4 = vector.broadcast %3 : vector<1x128xf32> to vector<8x128xf32>
    %5 = arith.addf %2, %4 : vector<8x128xf32>
    %cst_5 = arith.constant 0.000000e+00 : f32
    %6 = vector.broadcast %cst_5 : f32 to vector<8x128xf32>
    %7 = arith.maximumf %5, %6 : vector<8x128xf32>
    %8 = arith.truncf %7 : vector<8x128xf32> to vector<8x128xbf16>
    %c0_6 = arith.constant 0 : index
    %c0_7 = arith.constant 0 : index
    %9 = vector.load %arg4[%c0_6, %c0_7] : memref<128x128xbf16, #tpu.memory_space<vmem>>, vector<128x128xbf16>
    %cst_8 = arith.constant dense<0.000000e+00> : vector<8x128xf32>
    %10 = tpu.matmul %8, %9, %cst_8 {dimension_numbers = #tpu.dot_dimension_numbers<[1], [0], [0], [1], [0, 0, 1, 1], [], []>} : vector<8x128xbf16>, vector<128x128xbf16>, vector<8x128xf32> -> vector<8x128xf32>
    %c0_9 = arith.constant 0 : index
    %c0_10 = arith.constant 0 : index
    %11 = vector.load %arg5[%c0_9, %c0_10] : memref<1x128xf32, #tpu.memory_space<vmem>>, vector<1x128xf32>
    %12 = vector.broadcast %11 : vector<1x128xf32> to vector<8x128xf32>
    %13 = arith.addf %10, %12 : vector<8x128xf32>
    %cst_11 = arith.constant dense<0xFF800000> : vector<8xf32>
    %14 = vector.multi_reduction <maximumf>, %13, %cst_11 [1] : vector<8x128xf32> to vector<8xf32>
    %15 = vector.shape_cast %14 : vector<8xf32> to vector<8x1xf32>
    %16 = vector.broadcast %15 : vector<8x1xf32> to vector<8x128xf32>
    %17 = arith.subf %13, %16 : vector<8x128xf32>
    %18 = math.exp %17 : vector<8x128xf32>
    %cst_12 = arith.constant dense<0.000000e+00> : vector<8xf32>
    %19 = vector.multi_reduction <add>, %18, %cst_12 [1] : vector<8x128xf32> to vector<8xf32>
    %20 = vector.shape_cast %19 : vector<8xf32> to vector<8x1xf32>
    %21 = math.log %20 : vector<8x1xf32>
    %22 = vector.broadcast %21 : vector<8x1xf32> to vector<8x128xf32>
    %23 = arith.subf %17, %22 : vector<8x128xf32>
    %c0_13 = arith.constant 0 : index
    %c0_14 = arith.constant 0 : index
    %24 = vector.load %arg6[%c0_13, %c0_14] : memref<8x128xf32, #tpu.memory_space<vmem>>, vector<8x128xf32>
    tpu.vector_store %arg6[%c0_13, %c0_14], %23 {strides = array<i32>} : memref<8x128xf32, #tpu.memory_space<vmem>>, vector<8x128xf32>,
    return
  }
  func.func @transform_0(%arg0: i32) -> (i32, i32) {
    %c0_i32 = arith.constant 0 : i32
    %c0_i32_0 = arith.constant 0 : i32
    return %arg0, %c0_i32 : i32, i32
  }
  func.func @transform_1(%arg0: i32) -> (i32, i32) {
    %c0_i32 = arith.constant 0 : i32
    %c0_i32_0 = arith.constant 0 : i32
    %c0_i32_1 = arith.constant 0 : i32
    return %c0_i32, %c0_i32_0 : i32, i32
  }
  func.func @transform_2(%arg0: i32) -> (i32, i32) {
    %c0_i32 = arith.constant 0 : i32
    %c0_i32_0 = arith.constant 0 : i32
    %c0_i32_1 = arith.constant 0 : i32
    return %c0_i32, %c0_i32_0 : i32, i32
  }
  func.func @transform_3(%arg0: i32) -> (i32, i32) {
    %c0_i32 = arith.constant 0 : i32
    %c0_i32_0 = arith.constant 0 : i32
    %c0_i32_1 = arith.constant 0 : i32
    return %c0_i32, %c0_i32_0 : i32, i32
  }
  func.func @transform_4(%arg0: i32) -> (i32, i32) {
    %c0_i32 = arith.constant 0 : i32
    %c0_i32_0 = arith.constant 0 : i32
    %c0_i32_1 = arith.constant 0 : i32
    return %c0_i32, %c0_i32_0 : i32, i32
  }
  func.func @transform_5(%arg0: i32) -> (i32, i32) {
    %c0_i32 = arith.constant 0 : i32
    %c0_i32_0 = arith.constant 0 : i32
    return %arg0, %c0_i32 : i32, i32
  }
}

</mosaic_0001>

<llo_original>
// kernel: net_forward.3
$region0: #{net_forward.3}
  #allocation0 [shape = 'u32[]', space=smem, size = 0x4, offset = 0x4, fixed_abs, tag = 'smem constant byte address 0x4 - core index']
  #allocation1 [shape = 'u32[144,128]{1,0:T(1,128)}', space=vmem, size = 0x12000, scoped, tag = 'internal scratch']
  #allocation9 [shape = 's32[]', space=sflag, size = 0x4, offset = 0, fixed_abs, tag = 'sflag constant byte address 0x0 - dummy sync flag']
  %s0 = inlined_call_operand.hbm [shape: bf16[4,288,32], index: 0, kind: input, shape index: {}]
  %s1 = inlined_call_operand.hbm [shape: bf16[32,128], index: 1, kind: input, shape index: {}]
  %s2 = inlined_call_operand.hbm [shape: f32[1,128], index: 2, kind: input, shape index: {}]
  %s3 = inlined_call_operand.hbm [shape: bf16[288,128], index: 3, kind: output, shape index: {}]
  %s4 = sld [smem:[#allocation0]]
  $region57: #{net_forward.3} parent=0
    _
  %s6 = ssub.s32 1, %s4
  %s7 = scalar_select 0, %s6, %s4
  $region1: #{net_forward.3} parent=0
    #allocation2 [shape = 'u8[294912]{0}', space=vmem, size = 0x48000, scoped, tag = 'input window, operand 0']
    #allocation3 [shape = 's32[2]{0}', space=sflag, size = 0x8, scoped, tag = 'scoped memory for net_forward.3']
    #allocation4 [shape = 's32[2]{0}', space=sflag, size = 0x8, scoped, tag = 'scoped memory for net_forward.3']
    #allocation5 [shape = 'u8[8192]{0}', space=vmem, size = 0x2000, scoped, tag = 'input window, operand 1, single buffered']
    #allocation6 [shape = 's32[1]{0}', space=sflag, size = 0x4, scoped, tag = 'scoped memory for net_forward.3']
    #allocation7 [shape = 'u8[512]{0}', space=vmem, size = 0x400, scoped, tag = 'input window, operand 2, single buffered']
    #allocation8 [shape = 'u8[73728]{0}', space=vmem, size = 0x12000, scoped, tag = 'output window, operand 0']
    %8 = vsyncpa [#allocation3], 0
    %s9 = scalar_lea.sflag [#allocation3], 1
    %10 = vsyncpa %s9, 0
    %11 = vsyncpa [#allocation6], 0
    %12 = vsyncpa [#allocation4], 0
    %s13 = scalar_lea.sflag [#allocation4], 1
    %14 = vsyncpa %s13, 0
    loop: start=0, step=1, limit=4
    $region2: #{net_forward.3} parent=1 // loop_pre_header
      _
    $region3: #{net_forward.3} parent=1 // loop_header
      %s16 = sphi 0, %s20
      %p17 = scmp.ge.s32.totalorder %s16, 4
      %s26 = sphi 0, %s28
      %s29 = sphi 0, %s26
      %s30 = sphi 0, %s29
      %s46 = sphi 0, %s30
      %s50 = sphi 0, %s50
      %s52 = sphi 0, %s50
      %s53 = sphi 0, %s52
      %s67 = sphi 0, %s53
      %s71 = sphi 0, %s71
      %s73 = sphi 0, %s71
      %s74 = sphi 0, %s73
      %s88 = sphi 0, %s74
      %s94 = sphi 0, %s96
      %s97 = sphi 0, %s94
      %s98 = sphi 0, %s97
      %s114 = sphi 0, %s98
    $region4: #{net_forward.3} parent=1 // loop_header_branch
      %19 = sbr.rel (%p17) target = $region8
    $region5: #{net_forward.3} parent=1 // loop_body
      %s21 = ssub.s32 %s16, 1
      %s22 = ssub.s32 %s16, 2
      %s23 = sadd.s32 %s16, 1
      %s24 = ssub.s32 %s16, %s23
      %p25 = scmp.eq.s32.totalorder %s24, 0
      %s27 = sadd.s32 %s26, 1
      %s28 = scalar_select %p25, %s26, %s27
      %p31 = pneg %p25
      %p32 = scmp.eq.s32.totalorder %s16, 1
      %p33 = por %p31, %p32
      %p34 = scmp.ne.s32.totalorder %s26, %s29
      %p35 = scmp.eq.s32.totalorder %s16, 0
      %p36 = por %p34, %p35
      %p37 = scmp.ne.s32.totalorder %s26, %s29
      %p38 = scmp.eq.s32.totalorder %s21, 1
      %p39 = por %p37, %p38
      %p40 = scmp.ne.s32.totalorder %s29, %s30
      %p41 = scmp.eq.s32.totalorder %s21, 0
      %p42 = por %p40, %p41
      %p43 = scmp.ne.s32.totalorder %s29, %s30
      %p44 = scmp.eq.s32.totalorder %s22, 1
      %p45 = por %p43, %p44
      %p47 = scmp.ne.s32.totalorder %s30, %s46
      %p48 = scmp.eq.s32.totalorder %s22, 0
      %p49 = por %p47, %p48
      %s51 = sadd.s32 %s50, 1
      %p54 = scmp.eq.s32.totalorder %s16, 1
      %p55 = scmp.ne.s32.totalorder %s50, %s52
      %p56 = scmp.eq.s32.totalorder %s16, 0
      %p57 = por %p55, %p56
      %p58 = scmp.ne.s32.totalorder %s50, %s52
      %p59 = scmp.eq.s32.totalorder %s21, 1
      %p60 = por %p58, %p59
      %p61 = scmp.ne.s32.totalorder %s52, %s53
      %p62 = scmp.eq.s32.totalorder %s21, 0
      %p63 = por %p61, %p62
      %p64 = scmp.ne.s32.totalorder %s52, %s53
      %p65 = scmp.eq.s32.totalorder %s22, 1
      %p66 = por %p64, %p65
      %p68 = scmp.ne.s32.totalorder %s53, %s67
      %p69 = scmp.eq.s32.totalorder %s22, 0
      %p70 = por %p68, %p69
      %s72 = sadd.s32 %s71, 1
      %p75 = scmp.eq.s32.totalorder %s16, 1
      %p76 = scmp.ne.s32.totalorder %s71, %s73
      %p77 = scmp.eq.s32.totalorder %s16, 0
      %p78 = por %p76, %p77
      %p79 = scmp.ne.s32.totalorder %s71, %s73
      %p80 = scmp.eq.s32.totalorder %s21, 1
      %p81 = por %p79, %p80
      %p82 = scmp.ne.s32.totalorder %s73, %s74
      %p83 = scmp.eq.s32.totalorder %s21, 0
      %p84 = por %p82, %p83
      %p85 = scmp.ne.s32.totalorder %s73, %s74
      %p86 = scmp.eq.s32.totalorder %s22, 1
      %p87 = por %p85, %p86
      %p89 = scmp.ne.s32.totalorder %s74, %s88
      %p90 = scmp.eq.s32.totalorder %s22, 0
      %p91 = por %p89, %p90
      %s92 = ssub.s32 %s16, %s23
      %p93 = scmp.eq.s32.totalorder %s92, 0
      %s95 = sadd.s32 %s94, 1
      %s96 = scalar_select %p93, %s94, %s95
      %p99 = pneg %p93
      %p100 = scmp.eq.s32.totalorder %s16, 1
      %p101 = por %p99, %p100
      %p102 = scmp.ne.s32.totalorder %s94, %s97
      %p103 = scmp.eq.s32.totalorder %s16, 0
      %p104 = por %p102, %p103
      %p105 = scmp.ne.s32.totalorder %s94, %s97
      %p106 = scmp.eq.s32.totalorder %s21, 1
      %p107 = por %p105, %p106
      %p108 = scmp.ne.s32.totalorder %s97, %s98
      %p109 = scmp.eq.s32.totalorder %s21, 0
      %p110 = por %p108, %p109
      %p111 = scmp.ne.s32.totalorder %s97, %s98
      %p112 = scmp.eq.s32.totalorder %s22, 1
      %p113 = por %p111, %p112
      %p115 = scmp.ne.s32.totalorder %s98, %s114
      %p116 = scmp.eq.s32.totalorder %s22, 0
      %p117 = por %p115, %p116
      %p118 = scmp.le.s32.totalorder 1, %s16
      %p119 = scmp.lt.s32.totalorder %s16, 3
      %p120 = pnand %p118, %p119
      %p121 = pneg %p120
      // Predicated region
      $region9: #{net_forward.3} parent=5 // pred_check
        _
      $region10: #{net_forward.3} parent=5 // pred_check_branch
        %123 = sbr.rel (%p120) target = $region12
      $region11: #{net_forward.3} parent=5 // pred_region
        %s124 = ssub.s32 %s16, 1
        // Predicated region
        $region13: #{net_forward.3} parent=11 // pred_check
          %p125 = pneg %p63
        $region14: #{net_forward.3} parent=11 // pred_check_branch
          %127 = sbr.rel (%p125) target = $region16
        $region15: #{net_forward.3} parent=11 // pred_region
          %s129 = ssub.s32 256, 256
          %130 = vsyncadd [#allocation6], %s129
          %s131 = sshll.u32 [#allocation5], 4
          %s132 = int_to_ptr.vmem [resolvable:$true] %s131
          %137 = dma.hbm_to_vmem [thread:$0]  %s1, 256, %s132, [#allocation6], 64, 64, 4
        $region16: #{net_forward.3} parent=11 // pred_fallthru
          _
        // Predicated region
        $region17: #{net_forward.3} parent=11 // pred_check
          %p138 = pneg %p84
        $region18: #{net_forward.3} parent=11 // pred_check_branch
          %140 = sbr.rel (%p138) target = $region20
        $region19: #{net_forward.3} parent=11 // pred_region
          %s142 = ssub.s32 16, 16
          %143 = vsyncadd [#allocation6], %s142
          %s145 = sshll.u32 [#allocation7], 4
          %s146 = int_to_ptr.vmem [resolvable:$true] %s145
          %148 = dma.hbm_to_vmem [thread:$0]  %s2, 16, %s146, [#allocation6]
        $region20: #{net_forward.3} parent=11 // pred_fallthru
          _
      $region12: #{net_forward.3} parent=5 // pred_fallthru
        _
      %p149 = scmp.lt.s32.totalorder %s16, 2
      // Predicated region
      $region21: #{net_forward.3} parent=5 // pred_check
        %p150 = pneg %p149
      $region22: #{net_forward.3} parent=5 // pred_check_branch
        %152 = sbr.rel (%p150) target = $region24
      $region23: #{net_forward.3} parent=5 // pred_region
        // Predicated region
        $region25: #{net_forward.3} parent=23 // pred_check
          %p153 = pneg %p36
        $region26: #{net_forward.3} parent=23 // pred_check_branch
          %155 = sbr.rel (%p153) target = $region28
        $region27: #{net_forward.3} parent=23 // pred_region
          #allocation10 [shape = 'u32[6]{0}', space=smem, size = 0x18, scoped, tag = 'DMA stride descriptor']
          %s156 = sand.u32 %s26, 1
          %s157 = scalar_lea.sflag [#allocation3], %s156
          %s158 = sand.u32 %s26, 1
          %s159 = smul.addr %s158, 288
          %s160 = scalar_lea.vmem [#allocation2], %s159
          %s161 = smul.u32 18, %s16
          %s163 = ssub.s32 4608, 4608
          %164 = vsyncadd %s157, %s163
          %s165 = smul.addr %s161, 64
          %s166 = scalar_lea.hbm %s0, %s165
          %s168 = sshll.u32 1, 14
          %s169 = sxor.u32 4294967295, %s168
          %s171 = sld [smem:[#allocation0]]
          %s172 = sadd.s32 2, %s171
          %s174 = sshll.u32 7, 26
          %s175 = sxor.u32 4294967295, %s174
          %s176 = sand.u32 0, %s175
          %s177 = sshll.u32 %s172, 26
          %s178 = sor.u32 %s176, %s177
          %s179 = sshll.u32 %s160, 4
          %s180 = int_to_ptr.vmem [resolvable:$true] %s179
          %186 = sst [smem:[#allocation10]] 2304
          %s187 = scalar_lea.smem [#allocation10], 1
          %188 = sst [smem:[%s187]] 1152
          %s189 = scalar_lea.smem [#allocation10], 2
          %190 = sst [smem:[%s189]] 18
          %s191 = scalar_lea.smem [#allocation10], 3
          %192 = sst [smem:[%s191]] 64
          %s193 = scalar_lea.smem [#allocation10], 4
          %194 = sst [smem:[%s193]] 64
          %s195 = scalar_lea.smem [#allocation10], 5
          %196 = sst [smem:[%s195]] 4
          %198 = dma.general %s166, 4608, %s180, %s157, [#allocation9], [#allocation10], %s178, 0
        $region28: #{net_forward.3} parent=23 // pred_fallthru
          _
      $region24: #{net_forward.3} parent=5 // pred_fallthru
        _
      %p199 = scmp.le.s32.totalorder 1, %s16
      %p200 = scmp.lt.s32.totalorder %s16, 3
      %p201 = pnand %p199, %p200
      %p202 = pneg %p201
      // Predicated region
      $region29: #{net_forward.3} parent=5 // pred_check
        _
      $region30: #{net_forward.3} parent=5 // pred_check_branch
        %204 = sbr.rel (%p201) target = $region32
      $region31: #{net_forward.3} parent=5 // pred_region
        %s205 = ssub.s32 %s16, 1
        %s206 = sand.u32 %s29, 1
        %s207 = scalar_lea.sflag [#allocation3], %s206
        %s208 = sand.u32 %s29, 1
        %s209 = smul.addr %s208, 288
        %s210 = scalar_lea.vmem [#allocation2], %s209
        // Predicated region
        $region33: #{net_forward.3} parent=31 // pred_check
          %p211 = pneg %p42
        $region34: #{net_forward.3} parent=31 // pred_check_branch
          %213 = sbr.rel (%p211) target = $region36
        $region35: #{net_forward.3} parent=31 // pred_region
          %214 = dma.done %s207, 4608
        $region36: #{net_forward.3} parent=31 // pred_fallthru
          _
        // Predicated region
        $region37: #{net_forward.3} parent=31 // pred_check
          %p215 = pneg %p63
        $region38: #{net_forward.3} parent=31 // pred_check_branch
          %217 = sbr.rel (%p215) target = $region40
        $region39: #{net_forward.3} parent=31 // pred_region
          %218 = dma.done [#allocation6], 256
        $region40: #{net_forward.3} parent=31 // pred_fallthru
          _
        // Predicated region
        $region41: #{net_forward.3} parent=31 // pred_check
          %p219 = pneg %p84
        $region42: #{net_forward.3} parent=31 // pred_check_branch
          %221 = sbr.rel (%p219) target = $region44
        $region43: #{net_forward.3} parent=31 // pred_region
          %222 = dma.done [#allocation6], 16
        $region44: #{net_forward.3} parent=31 // pred_fallthru
          _
        %s223 = sand.u32 %s29, 1
        %s224 = scalar_lea.sflag [#allocation3], %s223
        %s225 = sand.u32 %s29, 1
        %s226 = smul.addr %s225, 288
        %s227 = scalar_lea.vmem [#allocation2], %s226
        %p228 = pneg %p42
        %p229 = pneg %p39
        %p230 = pneg %p63
        %p231 = pneg %p60
        %p232 = pneg %p84
        %p233 = pneg %p81
        %p234 = pneg %p110
        %p235 = pneg %p107
        %s236 = sand.u32 %s97, 1
        %s237 = scalar_lea.sflag [#allocation4], %s236
        %s238 = sand.u32 %s97, 1
        %s239 = smul.addr %s238, 72
        %s240 = scalar_lea.vmem [#allocation8], %s239
        %s241 = smul.u32 18, %s21
        %s242 = smul.u32 18, %s21
        %v244 = vld [vmem:[%s210] sm:$0xf]
        %v245 = vld [vmem:[%s210 + $0x4] sm:$0xf]
        %v246 = vld [vmem:[%s210 + $0x8] sm:$0xf]
        %v247 = vld [vmem:[%s210 + $0xc] sm:$0xf]
        %v248 = vld [vmem:[%s210 + $0x10] sm:$0xf]
        %v249 = vld [vmem:[%s210 + $0x14] sm:$0xf]
        %v250 = vld [vmem:[%s210 + $0x18] sm:$0xf]
        %v251 = vld [vmem:[%s210 + $0x1c] sm:$0xf]
        %v252 = vld [vmem:[%s210 + $0x20] sm:$0xf]
        %v253 = vld [vmem:[%s210 + $0x24] sm:$0xf]
        %v254 = vld [vmem:[%s210 + $0x28] sm:$0xf]
        %v255 = vld [vmem:[%s210 + $0x2c] sm:$0xf]
        %v256 = vld [vmem:[%s210 + $0x30] sm:$0xf]
        %v257 = vld [vmem:[%s210 + $0x34] sm:$0xf]
        %v258 = vld [vmem:[%s210 + $0x38] sm:$0xf]
        %v259 = vld [vmem:[%s210 + $0x3c] sm:$0xf]
        %v260 = vld [vmem:[%s210 + $0x40] sm:$0xf]
        %v261 = vld [vmem:[%s210 + $0x44] sm:$0xf]
        %v262 = vld [vmem:[%s210 + $0x48] sm:$0xf]
        %v263 = vld [vmem:[%s210 + $0x4c] sm:$0xf]
        %v264 = vld [vmem:[%s210 + $0x50] sm:$0xf]
        %v265 = vld [vmem:[%s210 + $0x54] sm:$0xf]
        %v266 = vld [vmem:[%s210 + $0x58] sm:$0xf]
        %v267 = vld [vmem:[%s210 + $0x5c] sm:$0xf]
        %v268 = vld [vmem:[%s210 + $0x60] sm:$0xf]
        %v269 = vld [vmem:[%s210 + $0x64] sm:$0xf]
        %v270 = vld [vmem:[%s210 + $0x68] sm:$0xf]
        %v271 = vld [vmem:[%s210 + $0x6c] sm:$0xf]
        %v272 = vld [vmem:[%s210 + $0x70] sm:$0xf]
        %v273 = vld [vmem:[%s210 + $0x74] sm:$0xf]
        %v274 = vld [vmem:[%s210 + $0x78] sm:$0xf]
        %v275 = vld [vmem:[%s210 + $0x7c] sm:$0xf]
        %v276 = vld [vmem:[%s210 + $0x80] sm:$0xf]
        %v277 = vld [vmem:[%s210 + $0x84] sm:$0xf]
        %v278 = vld [vmem:[%s210 + $0x88] sm:$0xf]
        %v279 = vld [vmem:[%s210 + $0x8c] sm:$0xf]
        %v280 = vld [vmem:[%s210 + $0x90] sm:$0xf]
        %v281 = vld [vmem:[%s210 + $0x94] sm:$0xf]
        %v282 = vld [vmem:[%s210 + $0x98] sm:$0xf]
        %v283 = vld [vmem:[%s210 + $0x9c] sm:$0xf]
        %v284 = vld [vmem:[%s210 + $0xa0] sm:$0xf]
        %v285 = vld [vmem:[%s210 + $0xa4] sm:$0xf]
        %v286 = vld [vmem:[%s210 + $0xa8] sm:$0xf]
        %v287 = vld [vmem:[%s210 + $0xac] sm:$0xf]
        %v288 = vld [vmem:[%s210 + $0xb0] sm:$0xf]
        %v289 = vld [vmem:[%s210 + $0xb4] sm:$0xf]
        %v290 = vld [vmem:[%s210 + $0xb8] sm:$0xf]
        %v291 = vld [vmem:[%s210 + $0xbc] sm:$0xf]
        %v292 = vld [vmem:[%s210 + $0xc0] sm:$0xf]
        %v293 = vld [vmem:[%s210 + $0xc4] sm:$0xf]
        %v294 = vld [vmem:[%s210 + $0xc8] sm:$0xf]
        %v295 = vld [vmem:[%s210 + $0xcc] sm:$0xf]
        %v296 = vld [vmem:[%s210 + $0xd0] sm:$0xf]
        %v297 = vld [vmem:[%s210 + $0xd4] sm:$0xf]
        %v298 = vld [vmem:[%s210 + $0xd8] sm:$0xf]
        %v299 = vld [vmem:[%s210 + $0xdc] sm:$0xf]
        %v300 = vld [vmem:[%s210 + $0xe0] sm:$0xf]
        %v301 = vld [vmem:[%s210 + $0xe4] sm:$0xf]
        %v302 = vld [vmem:[%s210 + $0xe8] sm:$0xf]
        %v303 = vld [vmem:[%s210 + $0xec] sm:$0xf]
        %v304 = vld [vmem:[%s210 + $0xf0] sm:$0xf]
        %v305 = vld [vmem:[%s210 + $0xf4] sm:$0xf]
        %v306 = vld [vmem:[%s210 + $0xf8] sm:$0xf]
        %v307 = vld [vmem:[%s210 + $0xfc] sm:$0xf]
        %v308 = vld [vmem:[%s210 + $0x100] sm:$0xf]
        %v309 = vld [vmem:[%s210 + $0x104] sm:$0xf]
        %v310 = vld [vmem:[%s210 + $0x108] sm:$0xf]
        %v311 = vld [vmem:[%s210 + $0x10c] sm:$0xf]
        %v312 = vld [vmem:[%s210 + $0x110] sm:$0xf]
        %v313 = vld [vmem:[%s210 + $0x114] sm:$0xf]
        %v314 = vld [vmem:[%s210 + $0x118] sm:$0xf]
        %v315 = vld [vmem:[%s210 + $0x11c] sm:$0xf]
        %v316 = vld [vmem:[#allocation5] sm:$0xf]
        %v317 = vld [vmem:[#allocation5 + $0x4] sm:$0xf]
        %v318 = vld [vmem:[#allocation5 + $0x8] sm:$0xf]
        %v319 = vld [vmem:[#allocation5 + $0xc] sm:$0xf]
        %v392 = vunpack.c.l.b16 %v244
        %v393 = vunpack.c.l.b16 %v245
        %v394 = vunpack.c.l.b16 %v246
        %v395 = vunpack.c.l.b16 %v247
        %v396 = vunpack.c.l.b16 %v248
        %v397 = vunpack.c.l.b16 %v249
        %v398 = vunpack.c.l.b16 %v250
        %v399 = vunpack.c.l.b16 %v251
        %v400 = vunpack.c.l.b16 %v252
        %v401 = vunpack.c.l.b16 %v253
        %v402 = vunpack.c.l.b16 %v254
        %v403 = vunpack.c.l.b16 %v255
        %v404 = vunpack.c.l.b16 %v256
        %v405 = vunpack.c.l.b16 %v257
        %v406 = vunpack.c.l.b16 %v258
        %v407 = vunpack.c.l.b16 %v259
        %v408 = vunpack.c.l.b16 %v260
        %v409 = vunpack.c.l.b16 %v261
        %v410 = vunpack.c.l.b16 %v262
        %v411 = vunpack.c.l.b16 %v263
        %v412 = vunpack.c.l.b16 %v264
        %v413 = vunpack.c.l.b16 %v265
        %v414 = vunpack.c.l.b16 %v266
        %v415 = vunpack.c.l.b16 %v267
        %v416 = vunpack.c.l.b16 %v268
        %v417 = vunpack.c.l.b16 %v269
        %v418 = vunpack.c.l.b16 %v270
        %v419 = vunpack.c.l.b16 %v271
        %v420 = vunpack.c.l.b16 %v272
        %v421 = vunpack.c.l.b16 %v273
        %v422 = vunpack.c.l.b16 %v274
        %v423 = vunpack.c.l.b16 %v275
        %v424 = vunpack.c.l.b16 %v276
        %v425 = vunpack.c.l.b16 %v277
        %v426 = vunpack.c.l.b16 %v278
        %v427 = vunpack.c.l.b16 %v279
        %v428 = vunpack.c.l.b16 %v280
        %v429 = vunpack.c.l.b16 %v281
        %v430 = vunpack.c.l.b16 %v282
        %v431 = vunpack.c.l.b16 %v283
        %v432 = vunpack.c.l.b16 %v284
        %v433 = vunpack.c.l.b16 %v285
        %v434 = vunpack.c.l.b16 %v286
        %v435 = vunpack.c.l.b16 %v287
        %v436 = vunpack.c.l.b16 %v288
        %v437 = vunpack.c.l.b16 %v289
        %v438 = vunpack.c.l.b16 %v290
        %v439 = vunpack.c.l.b16 %v291
        %v440 = vunpack.c.l.b16 %v292
        %v441 = vunpack.c.l.b16 %v293
        %v442 = vunpack.c.l.b16 %v294
        %v443 = vunpack.c.l.b16 %v295
        %v444 = vunpack.c.l.b16 %v296
        %v445 = vunpack.c.l.b16 %v297
        %v446 = vunpack.c.l.b16 %v298
        %v447 = vunpack.c.l.b16 %v299
        %v448 = vunpack.c.l.b16 %v300
        %v449 = vunpack.c.l.b16 %v301
        %v450 = vunpack.c.l.b16 %v302
        %v451 = vunpack.c.l.b16 %v303
        %v452 = vunpack.c.l.b16 %v304
        %v453 = vunpack.c.l.b16 %v305
        %v454 = vunpack.c.l.b16 %v306
        %v455 = vunpack.c.l.b16 %v307
        %v456 = vunpack.c.l.b16 %v308
        %v457 = vunpack.c.l.b16 %v309
        %v458 = vunpack.c.l.b16 %v310
        %v459 = vunpack.c.l.b16 %v311
        %v460 = vunpack.c.l.b16 %v312
        %v461 = vunpack.c.l.b16 %v313
        %v462 = vunpack.c.l.b16 %v314
        %v463 = vunpack.c.l.b16 %v315
        %v464 = vpack.c.b16 %v393, %v392
        %v465 = vpack.c.b16 %v395, %v394
        %v466 = vpack.c.b16 %v397, %v396
        %v467 = vpack.c.b16 %v399, %v398
        %v468 = vpack.c.b16 %v401, %v400
        %v469 = vpack.c.b16 %v403, %v402
        %v470 = vpack.c.b16 %v405, %v404
        %v471 = vpack.c.b16 %v407, %v406
        %v472 = vpack.c.b16 %v409, %v408
        %v473 = vpack.c.b16 %v411, %v410
        %v474 = vpack.c.b16 %v413, %v412
        %v475 = vpack.c.b16 %v415, %v414
        %v476 = vpack.c.b16 %v417, %v416
        %v477 = vpack.c.b16 %v419, %v418
        %v478 = vpack.c.b16 %v421, %v420
        %v479 = vpack.c.b16 %v423, %v422
        %v480 = vpack.c.b16 %v425, %v424
        %v481 = vpack.c.b16 %v427, %v426
        %v482 = vpack.c.b16 %v429, %v428
        %v483 = vpack.c.b16 %v431, %v430
        %v484 = vpack.c.b16 %v433, %v432
        %v485 = vpack.c.b16 %v435, %v434
        %v486 = vpack.c.b16 %v437, %v436
        %v487 = vpack.c.b16 %v439, %v438
        %v488 = vpack.c.b16 %v441, %v440
        %v489 = vpack.c.b16 %v443, %v442
        %v490 = vpack.c.b16 %v445, %v444
        %v491 = vpack.c.b16 %v447, %v446
        %v492 = vpack.c.b16 %v449, %v448
        %v493 = vpack.c.b16 %v451, %v450
        %v494 = vpack.c.b16 %v453, %v452
        %v495 = vpack.c.b16 %v455, %v454
        %v496 = vpack.c.b16 %v457, %v456
        %v497 = vpack.c.b16 %v459, %v458
        %v498 = vpack.c.b16 %v461, %v460
        %v499 = vpack.c.b16 %v463, %v462
        %v504 = vunpack.c.l.b16 %v316
        %v505 = vunpack.c.l.b16 %v317
        %v506 = vunpack.c.l.b16 %v318
        %v507 = vunpack.c.l.b16 %v319
        %v508 = vpack.c.b16 %v505, %v504
        %v509 = vpack.c.b16 %v507, %v506
        %vm512 = vcmask 261120
        %v514 = vsel %vm512, %v464, 0
        %v517 = vsel %vm512, %v465, 0
        %v520 = vsel %vm512, %v466, 0
        %v523 = vsel %vm512, %v467, 0
        %v526 = vsel %vm512, %v468, 0
        %v529 = vsel %vm512, %v469, 0
        %v532 = vsel %vm512, %v470, 0
        %v535 = vsel %vm512, %v471, 0
        %v538 = vsel %vm512, %v472, 0
        %v541 = vsel %vm512, %v473, 0
        %v544 = vsel %vm512, %v474, 0
        %v547 = vsel %vm512, %v475, 0
        %v550 = vsel %vm512, %v476, 0
        %v553 = vsel %vm512, %v477, 0
        %v556 = vsel %vm512, %v478, 0
        %v559 = vsel %vm512, %v479, 0
        %v562 = vsel %vm512, %v480, 0
        %v565 = vsel %vm512, %v481, 0
        %v568 = vsel %vm512, %v482, 0
        %v571 = vsel %vm512, %v483, 0
        %v574 = vsel %vm512, %v484, 0
        %v577 = vsel %vm512, %v485, 0
        %v580 = vsel %vm512, %v486, 0
        %v583 = vsel %vm512, %v487, 0
        %v586 = vsel %vm512, %v488, 0
        %v589 = vsel %vm512, %v489, 0
        %v592 = vsel %vm512, %v490, 0
        %v595 = vsel %vm512, %v491, 0
        %v598 = vsel %vm512, %v492, 0
        %v601 = vsel %vm512, %v493, 0
        %v604 = vsel %vm512, %v494, 0
        %v607 = vsel %vm512, %v495, 0
        %v610 = vsel %vm512, %v496, 0
        %v613 = vsel %vm512, %v497, 0
        %v616 = vsel %vm512, %v498, 0
        %v619 = vsel %vm512, %v499, 0
        %621 = vmatprep.subr.bf16.mxu0 0
        %622 = vmatpush1.bf16.msra.mxu0 %v508
        %623 = vmatprep.subr.bf16.mxu0 0
        %624 = vmatpush1.bf16.msra.mxu0 %v509
        %625 = vmatprep.subr.bf16.mxu0 0
        %626 = vmatpush1.bf16.msra.mxu0 0
        %627 = vmatprep.subr.bf16.mxu0 0
        %628 = vmatpush1.bf16.msra.mxu0 0
        %629 = vmatprep.subr.bf16.mxu0 0
        %630 = vmatpush1.bf16.msra.mxu0 0
        %631 = vmatprep.subr.bf16.mxu0 0
        %632 = vmatpush1.bf16.msra.mxu0 0
        %633 = vmatprep.subr.bf16.mxu0 0
        %634 = vmatpush1.bf16.msra.mxu0 0
        %635 = vmatprep.subr.bf16.mxu0 0
        %636 = vmatpush1.bf16.msra.mxu0 0
        %637 = vmatprep.subr.bf16.mxu0 0
        %638 = vmatpush1.bf16.msra.mxu0 0
        %639 = vmatprep.subr.bf16.mxu0 0
        %640 = vmatpush1.bf16.msra.mxu0 0
        %641 = vmatprep.subr.bf16.mxu0 0
        %642 = vmatpush1.bf16.msra.mxu0 0
        %643 = vmatprep.subr.bf16.mxu0 0
        %644 = vmatpush1.bf16.msra.mxu0 0
        %645 = vmatprep.subr.bf16.mxu0 0
        %646 = vmatpush1.bf16.msra.mxu0 0
        %647 = vmatprep.subr.bf16.mxu0 0
        %648 = vmatpush1.bf16.msra.mxu0 0
        %649 = vmatprep.subr.bf16.mxu0 0
        %650 = vmatpush1.bf16.msra.mxu0 0
        %651 = vmatprep.subr.bf16.mxu0 0
        %652 = vmatpush1.bf16.msra.mxu0 0
        %653 = vmatprep.mubr.bf16.mxu0 0
        %654 = vmatmul.mubr.bf16.gmra.mrb[0].mxu0 %v514
        %v655 = vpop.f32.mrb[0].mxu0
        %v656 = vadd.f32 0.0, %v655
        %v657 = vpop.f32.mrb[0].mxu0
        %v658 = vpop.f32.mrb[0].mxu0
        %v659 = vadd.f32 0.0, %v658
        %v660 = vpop.f32.mrb[0].mxu0
        %661 = vmatprep.mubr.bf16.mxu0 0
        %662 = vmatmul.mubr.bf16.gmra.mrb[0].mxu0 %v517
        %v663 = vpop.f32.mrb[0].mxu0
        %v664 = vadd.f32 0.0, %v663
        %v665 = vpop.f32.mrb[0].mxu0
        %v666 = vpop.f32.mrb[0].mxu0
        %v667 = vadd.f32 0.0, %v666
        %v668 = vpop.f32.mrb[0].mxu0
        %669 = vmatprep.mubr.bf16.mxu0 0
        %670 = vmatmul.mubr.bf16.gmra.mrb[0].mxu0 %v520
        %v671 = vpop.f32.mrb[0].mxu0
        %v672 = vadd.f32 0.0, %v671
        %v673 = vpop.f32.mrb[0].mxu0
        %v674 = vpop.f32.mrb[0].mxu0
        %v675 = vadd.f32 0.0, %v674
        %v676 = vpop.f32.mrb[0].mxu0
        %677 = vmatprep.mubr.bf16.mxu0 0
        %678 = vmatmul.mubr.bf16.gmra.mrb[0].mxu0 %v523
        %v679 = vpop.f32.mrb[0].mxu0
        %v680 = vadd.f32 0.0, %v679
        %v681 = vpop.f32.mrb[0].mxu0
        %v682 = vpop.f32.mrb[0].mxu0
        %v683 = vadd.f32 0.0, %v682
        %v684 = vpop.f32.mrb[0].mxu0
        %685 = vmatprep.mubr.bf16.mxu0 0
        %686 = vmatmul.mubr.bf16.gmra.mrb[0].mxu0 %v526
        %v687 = vpop.f32.mrb[0].mxu0
        %v688 = vadd.f32 0.0, %v687
        %v689 = vpop.f32.mrb[0].mxu0
        %v690 = vpop.f32.mrb[0].mxu0
        %v691 = vadd.f32 0.0, %v690
        %v692 = vpop.f32.mrb[0].mxu0
        %693 = vmatprep.mubr.bf16.mxu0 0
        %694 = vmatmul.mubr.bf16.gmra.mrb[0].mxu0 %v529
        %v695 = vpop.f32.mrb[0].mxu0
        %v696 = vadd.f32 0.0, %v695
        %v697 = vpop.f32.mrb[0].mxu0
        %v698 = vpop.f32.mrb[0].mxu0
        %v699 = vadd.f32 0.0, %v698
        %v700 = vpop.f32.mrb[0].mxu0
        %701 = vmatprep.mubr.bf16.mxu0 0
        %702 = vmatmul.mubr.bf16.gmra.mrb[0].mxu0 %v532
        %v703 = vpop.f32.mrb[0].mxu0
        %v704 = vadd.f32 0.0, %v703
        %v705 = vpop.f32.mrb[0].mxu0
        %v706 = vpop.f32.mrb[0].mxu0
        %v707 = vadd.f32 0.0, %v706
        %v708 = vpop.f32.mrb[0].mxu0
        %709 = vmatprep.mubr.bf16.mxu0 0
        %710 = vmatmul.mubr.bf16.gmra.mrb[0].mxu0 %v535
        %v711 = vpop.f32.mrb[0].mxu0
        %v712 = vadd.f32 0.0, %v711
        %v713 = vpop.f32.mrb[0].mxu0
        %v714 = vpop.f32.mrb[0].mxu0
        %v715 = vadd.f32 0.0, %v714
        %v716 = vpop.f32.mrb[0].mxu0
        %717 = vmatprep.mubr.bf16.mxu0 0
        %718 = vmatmul.mubr.bf16.gmra.mrb[0].mxu0 %v538
        %v719 = vpop.f32.mrb[0].mxu0
        %v720 = vadd.f32 0.0, %v719
        %v721 = vpop.f32.mrb[0].mxu0
        %v722 = vpop.f32.mrb[0].mxu0
        %v723 = vadd.f32 0.0, %v722
        %v724 = vpop.f32.mrb[0].mxu0
        %725 = vmatprep.mubr.bf16.mxu0 0
        %726 = vmatmul.mubr.bf16.gmra.mrb[0].mxu0 %v541
        %v727 = vpop.f32.mrb[0].mxu0
        %v728 = vadd.f32 0.0, %v727
        %v729 = vpop.f32.mrb[0].mxu0
        %v730 = vpop.f32.mrb[0].mxu0
        %v731 = vadd.f32 0.0, %v730
        %v732 = vpop.f32.mrb[0].mxu0
        %733 = vmatprep.mubr.bf16.mxu0 0
        %734 = vmatmul.mubr.bf16.gmra.mrb[0].mxu0 %v544
        %v735 = vpop.f32.mrb[0].mxu0
        %v736 = vadd.f32 0.0, %v735
        %v737 = vpop.f32.mrb[0].mxu0
        %v738 = vpop.f32.mrb[0].mxu0
        %v739 = vadd.f32 0.0, %v738
        %v740 = vpop.f32.mrb[0].mxu0
        %741 = vmatprep.mubr.bf16.mxu0 0
        %742 = vmatmul.mubr.bf16.gmra.mrb[0].mxu0 %v547
        %v743 = vpop.f32.mrb[0].mxu0
        %v744 = vadd.f32 0.0, %v743
        %v745 = vpop.f32.mrb[0].mxu0
        %v746 = vpop.f32.mrb[0].mxu0
        %v747 = vadd.f32 0.0, %v746
        %v748 = vpop.f32.mrb[0].mxu0
        %749 = vmatprep.mubr.bf16.mxu0 0
        %750 = vmatmul.mubr.bf16.gmra.mrb[0].mxu0 %v550
        %v751 = vpop.f32.mrb[0].mxu0
        %v752 = vadd.f32 0.0, %v751
        %v753 = vpop.f32.mrb[0].mxu0
        %v754 = vpop.f32.mrb[0].mxu0
        %v755 = vadd.f32 0.0, %v754
        %v756 = vpop.f32.mrb[0].mxu0
        %757 = vmatprep.mubr.bf16.mxu0 0
        %758 = vmatmul.mubr.bf16.gmra.mrb[0].mxu0 %v553
        %v759 = vpop.f32.mrb[0].mxu0
        %v760 = vadd.f32 0.0, %v759
        %v761 = vpop.f32.mrb[0].mxu0
        %v762 = vpop.f32.mrb[0].mxu0
        %v763 = vadd.f32 0.0, %v762
        %v764 = vpop.f32.mrb[0].mxu0
        %765 = vmatprep.mubr.bf16.mxu0 0
        %766 = vmatmul.mubr.bf16.gmra.mrb[0].mxu0 %v556
        %v767 = vpop.f32.mrb[0].mxu0
        %v768 = vadd.f32 0.0, %v767
        %v769 = vpop.f32.mrb[0].mxu0
        %v770 = vpop.f32.mrb[0].mxu0
        %v771 = vadd.f32 0.0, %v770
        %v772 = vpop.f32.mrb[0].mxu0
        %773 = vmatprep.mubr.bf16.mxu0 0
        %774 = vmatmul.mubr.bf16.gmra.mrb[0].mxu0 %v559
        %v775 = vpop.f32.mrb[0].mxu0
        %v776 = vadd.f32 0.0, %v775
        %v777 = vpop.f32.mrb[0].mxu0
        %v778 = vpop.f32.mrb[0].mxu0
        %v779 = vadd.f32 0.0, %v778
        %v780 = vpop.f32.mrb[0].mxu0
        %781 = vmatprep.mubr.bf16.mxu0 0
        %782 = vmatmul.mubr.bf16.gmra.mrb[0].mxu0 %v562
        %v783 = vpop.f32.mrb[0].mxu0
        %v784 = vadd.f32 0.0, %v783
        %v785 = vpop.f32.mrb[0].mxu0
        %v786 = vpop.f32.mrb[0].mxu0
        %v787 = vadd.f32 0.0, %v786
        %v788 = vpop.f32.mrb[0].mxu0
        %789 = vmatprep.mubr.bf16.mxu0 0
        %790 = vmatmul.mubr.bf16.gmra.mrb[0].mxu0 %v565
        %v791 = vpop.f32.mrb[0].mxu0
        %v792 = vadd.f32 0.0, %v791
        %v793 = vpop.f32.mrb[0].mxu0
        %v794 = vpop.f32.mrb[0].mxu0
        %v795 = vadd.f32 0.0, %v794
        %v796 = vpop.f32.mrb[0].mxu0
        %797 = vmatprep.mubr.bf16.mxu0 0
        %798 = vmatmul.mubr.bf16.gmra.mrb[0].mxu0 %v568
        %v799 = vpop.f32.mrb[0].mxu0
        %v800 = vadd.f32 0.0, %v799
        %v801 = vpop.f32.mrb[0].mxu0
        %v802 = vpop.f32.mrb[0].mxu0
        %v803 = vadd.f32 0.0, %v802
        %v804 = vpop.f32.mrb[0].mxu0
        %805 = vmatprep.mubr.bf16.mxu0 0
        %806 = vmatmul.mubr.bf16.gmra.mrb[0].mxu0 %v571
        %v807 = vpop.f32.mrb[0].mxu0
        %v808 = vadd.f32 0.0, %v807
        %v809 = vpop.f32.mrb[0].mxu0
        %v810 = vpop.f32.mrb[0].mxu0
        %v811 = vadd.f32 0.0, %v810
        %v812 = vpop.f32.mrb[0].mxu0
        %813 = vmatprep.mubr.bf16.mxu0 0
        %814 = vmatmul.mubr.bf16.gmra.mrb[0].mxu0 %v574
        %v815 = vpop.f32.mrb[0].mxu0
        %v816 = vadd.f32 0.0, %v815
        %v817 = vpop.f32.mrb[0].mxu0
        %v818 = vpop.f32.mrb[0].mxu0
        %v819 = vadd.f32 0.0, %v818
        %v820 = vpop.f32.mrb[0].mxu0
        %821 = vmatprep.mubr.bf16.mxu0 0
        %822 = vmatmul.mubr.bf16.gmra.mrb[0].mxu0 %v577
        %v823 = vpop.f32.mrb[0].mxu0
        %v824 = vadd.f32 0.0, %v823
        %v825 = vpop.f32.mrb[0].mxu0
        %v826 = vpop.f32.mrb[0].mxu0
        %v827 = vadd.f32 0.0, %v826
        %v828 = vpop.f32.mrb[0].mxu0
        %829 = vmatprep.mubr.bf16.mxu0 0
        %830 = vmatmul.mubr.bf16.gmra.mrb[0].mxu0 %v580
        %v831 = vpop.f32.mrb[0].mxu0
        %v832 = vadd.f32 0.0, %v831
        %v833 = vpop.f32.mrb[0].mxu0
        %v834 = vpop.f32.mrb[0].mxu0
        %v835 = vadd.f32 0.0, %v834
        %v836 = vpop.f32.mrb[0].mxu0
        %837 = vmatprep.mubr.bf16.mxu0 0
        %838 = vmatmul.mubr.bf16.gmra.mrb[0].mxu0 %v583
        %v839 = vpop.f32.mrb[0].mxu0
        %v840 = vadd.f32 0.0, %v839
        %v841 = vpop.f32.mrb[0].mxu0
        %v842 = vpop.f32.mrb[0].mxu0
        %v843 = vadd.f32 0.0, %v842
        %v844 = vpop.f32.mrb[0].mxu0
        %845 = vmatprep.mubr.bf16.mxu0 0
        %846 = vmatmul.mubr.bf16.gmra.mrb[0].mxu0 %v586
        %v847 = vpop.f32.mrb[0].mxu0
        %v848 = vadd.f32 0.0, %v847
        %v849 = vpop.f32.mrb[0].mxu0
        %v850 = vpop.f32.mrb[0].mxu0
        %v851 = vadd.f32 0.0, %v850
        %v852 = vpop.f32.mrb[0].mxu0
        %853 = vmatprep.mubr.bf16.mxu0 0
        %854 = vmatmul.mubr.bf16.gmra.mrb[0].mxu0 %v589
        %v855 = vpop.f32.mrb[0].mxu0
        %v856 = vadd.f32 0.0, %v855
        %v857 = vpop.f32.mrb[0].mxu0
        %v858 = vpop.f32.mrb[0].mxu0
        %v859 = vadd.f32 0.0, %v858
        %v860 = vpop.f32.mrb[0].mxu0
        %861 = vmatprep.mubr.bf16.mxu0 0
        %862 = vmatmul.mubr.bf16.gmra.mrb[0].mxu0 %v592
        %v863 = vpop.f32.mrb[0].mxu0
        %v864 = vadd.f32 0.0, %v863
        %v865 = vpop.f32.mrb[0].mxu0
        %v866 = vpop.f32.mrb[0].mxu0
        %v867 = vadd.f32 0.0, %v866
        %v868 = vpop.f32.mrb[0].mxu0
        %869 = vmatprep.mubr.bf16.mxu0 0
        %870 = vmatmul.mubr.bf16.gmra.mrb[0].mxu0 %v595
        %v871 = vpop.f32.mrb[0].mxu0
        %v872 = vadd.f32 0.0, %v871
        %v873 = vpop.f32.mrb[0].mxu0
        %v874 = vpop.f32.mrb[0].mxu0
        %v875 = vadd.f32 0.0, %v874
        %v876 = vpop.f32.mrb[0].mxu0
        %877 = vmatprep.mubr.bf16.mxu0 0
        %878 = vmatmul.mubr.bf16.gmra.mrb[0].mxu0 %v598
        %v879 = vpop.f32.mrb[0].mxu0
        %v880 = vadd.f32 0.0, %v879
        %v881 = vpop.f32.mrb[0].mxu0
        %v882 = vpop.f32.mrb[0].mxu0
        %v883 = vadd.f32 0.0, %v882
        %v884 = vpop.f32.mrb[0].mxu0
        %885 = vmatprep.mubr.bf16.mxu0 0
        %886 = vmatmul.mubr.bf16.gmra.mrb[0].mxu0 %v601
        %v887 = vpop.f32.mrb[0].mxu0
        %v888 = vadd.f32 0.0, %v887
        %v889 = vpop.f32.mrb[0].mxu0
        %v890 = vpop.f32.mrb[0].mxu0
        %v891 = vadd.f32 0.0, %v890
        %v892 = vpop.f32.mrb[0].mxu0
        %893 = vmatprep.mubr.bf16.mxu0 0
        %894 = vmatmul.mubr.bf16.gmra.mrb[0].mxu0 %v604
        %v895 = vpop.f32.mrb[0].mxu0
        %v896 = vadd.f32 0.0, %v895
        %v897 = vpop.f32.mrb[0].mxu0
        %v898 = vpop.f32.mrb[0].mxu0
        %v899 = vadd.f32 0.0, %v898
        %v900 = vpop.f32.mrb[0].mxu0
        %901 = vmatprep.mubr.bf16.mxu0 0
        %902 = vmatmul.mubr.bf16.gmra.mrb[0].mxu0 %v607
        %v903 = vpop.f32.mrb[0].mxu0
        %v904 = vadd.f32 0.0, %v903
        %v905 = vpop.f32.mrb[0].mxu0
        %v906 = vpop.f32.mrb[0].mxu0
        %v907 = vadd.f32 0.0, %v906
        %v908 = vpop.f32.mrb[0].mxu0
        %909 = vmatprep.mubr.bf16.mxu0 0
        %910 = vmatmul.mubr.bf16.gmra.mrb[0].mxu0 %v610
        %v911 = vpop.f32.mrb[0].mxu0
        %v912 = vadd.f32 0.0, %v911
        %v913 = vpop.f32.mrb[0].mxu0
        %v914 = vpop.f32.mrb[0].mxu0
        %v915 = vadd.f32 0.0, %v914
        %v916 = vpop.f32.mrb[0].mxu0
        %917 = vmatprep.mubr.bf16.mxu0 0
        %918 = vmatmul.mubr.bf16.gmra.mrb[0].mxu0 %v613
        %v919 = vpop.f32.mrb[0].mxu0
        %v920 = vadd.f32 0.0, %v919
        %v921 = vpop.f32.mrb[0].mxu0
        %v922 = vpop.f32.mrb[0].mxu0
        %v923 = vadd.f32 0.0, %v922
        %v924 = vpop.f32.mrb[0].mxu0
        %925 = vmatprep.mubr.bf16.mxu0 0
        %926 = vmatmul.mubr.bf16.gmra.mrb[0].mxu0 %v616
        %v927 = vpop.f32.mrb[0].mxu0
        %v928 = vadd.f32 0.0, %v927
        %v929 = vpop.f32.mrb[0].mxu0
        %v930 = vpop.f32.mrb[0].mxu0
        %v931 = vadd.f32 0.0, %v930
        %v932 = vpop.f32.mrb[0].mxu0
        %933 = vmatprep.mubr.bf16.mxu0 0
        %934 = vmatmul.mubr.bf16.gmra.mrb[0].mxu0 %v619
        %v935 = vpop.f32.mrb[0].mxu0
        %v936 = vadd.f32 0.0, %v935
        %v937 = vpop.f32.mrb[0].mxu0
        %v938 = vpop.f32.mrb[0].mxu0
        %v939 = vadd.f32 0.0, %v938
        %v940 = vpop.f32.mrb[0].mxu0
        %941 = vdwg.mxu0
        %v942 = vmax.f32 %v656, %v728
        %v943 = vmax.f32 %v659, %v731
        %v944 = vmax.f32 %v664, %v736
        %v945 = vmax.f32 %v667, %v739
        %v946 = vmax.f32 %v672, %v744
        %v947 = vmax.f32 %v675, %v747
        %v948 = vmax.f32 %v680, %v752
        %v949 = vmax.f32 %v683, %v755
        %v950 = vmax.f32 %v688, %v760
        %v951 = vmax.f32 %v691, %v763
        %v952 = vmax.f32 %v696, %v768
        %v953 = vmax.f32 %v699, %v771
        %v954 = vmax.f32 %v704, %v776
        %v955 = vmax.f32 %v707, %v779
        %v956 = vmax.f32 %v712, %v784
        %v957 = vmax.f32 %v715, %v787
        %v958 = vmax.f32 %v720, %v792
        %v959 = vmax.f32 %v723, %v795
        %v960 = vmax.f32 %v800, %v872
        %v961 = vmax.f32 %v803, %v875
        %v962 = vmax.f32 %v808, %v880
        %v963 = vmax.f32 %v811, %v883
        %v964 = vmax.f32 %v816, %v888
        %v965 = vmax.f32 %v819, %v891
        %v966 = vmax.f32 %v824, %v896
        %v967 = vmax.f32 %v827, %v899
        %v968 = vmax.f32 %v832, %v904
        %v969 = vmax.f32 %v835, %v907
        %v970 = vmax.f32 %v840, %v912
        %v971 = vmax.f32 %v843, %v915
        %v972 = vmax.f32 %v848, %v920
        %v973 = vmax.f32 %v851, %v923
        %v974 = vmax.f32 %v856, %v928
        %v975 = vmax.f32 %v859, %v931
        %v976 = vmax.f32 %v864, %v936
        %v977 = vmax.f32 %v867, %v939
        %v978 = vmax.f32 %v942, %v960
        %v979 = vmax.f32 %v943, %v961
        %v980 = vmax.f32 %v944, %v962
        %v981 = vmax.f32 %v945, %v963
        %v982 = vmax.f32 %v946, %v964
        %v983 = vmax.f32 %v947, %v965
        %v984 = vmax.f32 %v948, %v966
        %v985 = vmax.f32 %v949, %v967
        %v986 = vmax.f32 %v950, %v968
        %v987 = vmax.f32 %v951, %v969
        %v988 = vmax.f32 %v952, %v970
        %v989 = vmax.f32 %v953, %v971
        %v990 = vmax.f32 %v954, %v972
        %v991 = vmax.f32 %v955, %v973
        %v992 = vmax.f32 %v956, %v974
        %v993 = vmax.f32 %v957, %v975
        %v994 = vmax.f32 %v958, %v976
        %v995 = vmax.f32 %v959, %v977
        %v996 = vld [vmem:[#allocation7] sm:$0x1]
        %v998 = vlaneseq
        %v999 = vshrl.u32 %v998, 7
        %v1000 = vsub.s32 0, %v999
        %v1001 = vrot.slane %v996, %v1000
        %v1003 = vadd.f32 %v978, %v1001
        %v1004 = vadd.f32 %v979, %v1001
        %v1005 = vadd.f32 %v980, %v1001
        %v1006 = vadd.f32 %v981, %v1001
        %v1007 = vadd.f32 %v982, %v1001
        %v1008 = vadd.f32 %v983, %v1001
        %v1009 = vadd.f32 %v984, %v1001
        %v1010 = vadd.f32 %v985, %v1001
        %v1011 = vadd.f32 %v986, %v1001
        %v1012 = vadd.f32 %v987, %v1001
        %v1013 = vadd.f32 %v988, %v1001
        %v1014 = vadd.f32 %v989, %v1001
        %v1015 = vadd.f32 %v990, %v1001
        %v1016 = vadd.f32 %v991, %v1001
        %v1017 = vadd.f32 %v992, %v1001
        %v1018 = vadd.f32 %v993, %v1001
        %v1019 = vadd.f32 %v994, %v1001
        %v1020 = vadd.f32 %v995, %v1001
        %v1021 = vmax.f32 %v1003, 0.0
        %v1022 = vmax.f32 %v1004, 0.0
        %v1023 = vmax.f32 %v1005, 0.0
        %v1024 = vmax.f32 %v1006, 0.0
        %v1025 = vmax.f32 %v1007, 0.0
        %v1026 = vmax.f32 %v1008, 0.0
        %v1027 = vmax.f32 %v1009, 0.0
        %v1028 = vmax.f32 %v1010, 0.0
        %v1029 = vmax.f32 %v1011, 0.0
        %v1030 = vmax.f32 %v1012, 0.0
        %v1031 = vmax.f32 %v1013, 0.0
        %v1032 = vmax.f32 %v1014, 0.0
        %v1033 = vmax.f32 %v1015, 0.0
        %v1034 = vmax.f32 %v1016, 0.0
        %v1035 = vmax.f32 %v1017, 0.0
        %v1036 = vmax.f32 %v1018, 0.0
        %v1037 = vmax.f32 %v1019, 0.0
        %v1038 = vmax.f32 %v1020, 0.0
        %v1039 = vpack.c.bf16 %v1022, %v1021
        %v1040 = vpack.c.bf16 %v1024, %v1023
        %v1041 = vpack.c.bf16 %v1026, %v1025
        %v1042 = vpack.c.bf16 %v1028, %v1027
        %v1043 = vpack.c.bf16 %v1030, %v1029
        %v1044 = vpack.c.bf16 %v1032, %v1031
        %v1045 = vpack.c.bf16 %v1034, %v1033
        %v1046 = vpack.c.bf16 %v1036, %v1035
        %v1047 = vpack.c.bf16 %v1038, %v1037
        %v1057 = vunpack.c.l.b16 %v1039
        %v1058 = vunpack.c.h.b16 %v1039
        %v1059 = vunpack.c.l.b16 %v1040
        %v1060 = vunpack.c.h.b16 %v1040
        %v1061 = vunpack.c.l.b16 %v1041
        %v1062 = vunpack.c.h.b16 %v1041
        %v1063 = vunpack.c.l.b16 %v1042
        %v1064 = vunpack.c.h.b16 %v1042
        %v1065 = vunpack.c.l.b16 %v1043
        %v1066 = vunpack.c.h.b16 %v1043
        %v1067 = vunpack.c.l.b16 %v1044
        %v1068 = vunpack.c.h.b16 %v1044
        %v1069 = vunpack.c.l.b16 %v1045
        %v1070 = vunpack.c.h.b16 %v1045
        %v1071 = vunpack.c.l.b16 %v1046
        %v1072 = vunpack.c.h.b16 %v1046
        %v1073 = vunpack.c.l.b16 %v1047
        %v1074 = vunpack.c.h.b16 %v1047
        %v1075 = vpack.c.b16 %v1057, %v1057
        %v1076 = vpack.c.b16 %v1058, %v1058
        %v1077 = vpack.c.b16 %v1059, %v1059
        %v1078 = vpack.c.b16 %v1060, %v1060
        %v1079 = vpack.c.b16 %v1061, %v1061
        %v1080 = vpack.c.b16 %v1062, %v1062
        %v1081 = vpack.c.b16 %v1063, %v1063
        %v1082 = vpack.c.b16 %v1064, %v1064
        %v1083 = vpack.c.b16 %v1065, %v1065
        %v1084 = vpack.c.b16 %v1066, %v1066
        %v1085 = vpack.c.b16 %v1067, %v1067
        %v1086 = vpack.c.b16 %v1068, %v1068
        %v1087 = vpack.c.b16 %v1069, %v1069
        %v1088 = vpack.c.b16 %v1070, %v1070
        %v1089 = vpack.c.b16 %v1071, %v1071
        %v1090 = vpack.c.b16 %v1072, %v1072
        %v1091 = vpack.c.b16 %v1073, %v1073
        %v1092 = vpack.c.b16 %v1074, %v1074
        %1111 = vst [vmem:[%s240] sm:$0xf] %v1075
        %1112 = vst [vmem:[%s240 + $0x4] sm:$0xf] %v1076
        %1113 = vst [vmem:[%s240 + $0x8] sm:$0xf] %v1077
        %1114 = vst [vmem:[%s240 + $0xc] sm:$0xf] %v1078
        %1115 = vst [vmem:[%s240 + $0x10] sm:$0xf] %v1079
        %1116 = vst [vmem:[%s240 + $0x14] sm:$0xf] %v1080
        %1117 = vst [vmem:[%s240 + $0x18] sm:$0xf] %v1081
        %1118 = vst [vmem:[%s240 + $0x1c] sm:$0xf] %v1082
        %1119 = vst [vmem:[%s240 + $0x20] sm:$0xf] %v1083
        %1120 = vst [vmem:[%s240 + $0x24] sm:$0xf] %v1084
        %1121 = vst [vmem:[%s240 + $0x28] sm:$0xf] %v1085
        %1122 = vst [vmem:[%s240 + $0x2c] sm:$0xf] %v1086
        %1123 = vst [vmem:[%s240 + $0x30] sm:$0xf] %v1087
        %1124 = vst [vmem:[%s240 + $0x34] sm:$0xf] %v1088
        %1125 = vst [vmem:[%s240 + $0x38] sm:$0xf] %v1089
        %1126 = vst [vmem:[%s240 + $0x3c] sm:$0xf] %v1090
        %1127 = vst [vmem:[%s240 + $0x40] sm:$0xf] %v1091
        %1128 = vst [vmem:[%s240 + $0x44] sm:$0xf] %v1092
        %s1129 = sand.u32 %s97, 1
        %s1130 = scalar_lea.sflag [#allocation4], %s1129
        %s1131 = sand.u32 %s97, 1
        %s1132 = smul.addr %s1131, 72
        %s1133 = scalar_lea.vmem [#allocation8], %s1132
        // Predicated region
        $region45: #{net_forward.3} parent=31 // pred_check
          %p1134 = pneg %p107
        $region46: #{net_forward.3} parent=31 // pred_check_branch
          %1136 = sbr.rel (%p1134) target = $region48
        $region47: #{net_forward.3} parent=31 // pred_region
          %s1137 = smul.u32 18, %s21
          %s1139 = ssub.s32 1152, 1152
          %1140 = vsyncadd %s1130, %s1139
          %s1141 = smul.addr %s1137, 64
          %s1142 = scalar_lea.hbm %s3, %s1141
          %s1143 = sshll.u32 %s1133, 4
          %s1144 = int_to_ptr.vmem [resolvable:$true] %s1143
          %1149 = dma.vmem_to_hbm [thread:$0]  %s1144, 1152, %s1142, %s1130, 64, 64, 4
        $region48: #{net_forward.3} parent=31 // pred_fallthru
          _
      $region32: #{net_forward.3} parent=5 // pred_fallthru
        _
      %p1150 = scmp.le.s32.totalorder 2, %s16
      // Predicated region
      $region49: #{net_forward.3} parent=5 // pred_check
        %p1151 = pneg %p1150
      $region50: #{net_forward.3} parent=5 // pred_check_branch
        %1153 = sbr.rel (%p1151) target = $region52
      $region51: #{net_forward.3} parent=5 // pred_region
        %s1154 = ssub.s32 %s16, 2
        // Predicated region
        $region53: #{net_forward.3} parent=51 // pred_check
          %p1155 = pneg %p113
        $region54: #{net_forward.3} parent=51 // pred_check_branch
          %1157 = sbr.rel (%p1155) target = $region56
        $region55: #{net_forward.3} parent=51 // pred_region
          %s1158 = sand.u32 %s98, 1
          %s1159 = scalar_lea.sflag [#allocation4], %s1158
          %s1160 = sand.u32 %s98, 1
          %s1161 = smul.addr %s1160, 72
          %s1162 = scalar_lea.vmem [#allocation8], %s1161
          %1163 = dma.done %s1159, 1152
        $region56: #{net_forward.3} parent=51 // pred_fallthru
          _
      $region52: #{net_forward.3} parent=5 // pred_fallthru
        _
    $region6: #{net_forward.3} parent=1 // loop_footer
      %s20 = sadd.s32 1, %s16
    $region7: #{net_forward.3} parent=1 // loop_footer_branch
      %15 = sbr.rel target = $region3
    $region8: #{net_forward.3} parent=1 // loop_exit
      _
    %1164 = vsyncpa [#allocation3], 1
    %s1165 = scalar_lea.sflag [#allocation3], 1
    %1166 = vsyncpa %s1165, 1
    %1167 = vsyncpa [#allocation6], 1
    %1168 = vsyncpa [#allocation4], 1
    %s1169 = scalar_lea.sflag [#allocation4], 1
    %1170 = vsyncpa %s1169, 1

// kernel: net_forward.5
$region0: #{net_forward.5}
  #allocation0 [shape = 'u32[]', space=smem, size = 0x4, offset = 0x4, fixed_abs, tag = 'smem constant byte address 0x4 - core index']
  #allocation1 [shape = 'u32[144,128]{1,0:T(1,128)}', space=vmem, size = 0x12000, scoped, tag = 'internal scratch']
  %s0 = inlined_call_operand.hbm [shape: bf16[8,2048], index: 0, kind: input, shape index: {}]
  %s1 = inlined_call_operand.hbm [shape: bf16[2048,128], index: 1, kind: input, shape index: {}]
  %s2 = inlined_call_operand.hbm [shape: f32[1,128], index: 2, kind: input, shape index: {}]
  %s3 = inlined_call_operand.hbm [shape: bf16[128,128], index: 3, kind: input, shape index: {}]
  %s4 = inlined_call_operand.hbm [shape: f32[1,128], index: 4, kind: input, shape index: {}]
  %s5 = inlined_call_operand.hbm [shape: f32[8,128], index: 5, kind: output, shape index: {}]
  %s6 = sld [smem:[#allocation0]]
  $region50: #{net_forward.5} parent=0
    _
  %s8 = ssub.s32 1, %s6
  %s9 = scalar_select 0, %s8, %s6
  $region1: #{net_forward.5} parent=0
    #allocation2 [shape = 'u8[32768]{0}', space=vmem, size = 0x8000, scoped, tag = 'input window, operand 0, single buffered']
    #allocation3 [shape = 's32[1]{0}', space=sflag, size = 0x4, scoped, tag = 'scoped memory for net_forward.5']
    #allocation4 [shape = 's32[1]{0}', space=sflag, size = 0x4, scoped, tag = 'scoped memory for net_forward.5']
    #allocation5 [shape = 'u8[524288]{0}', space=vmem, size = 0x80000, scoped, tag = 'input window, operand 1, single buffered']
    #allocation6 [shape = 's32[1]{0}', space=sflag, size = 0x4, scoped, tag = 'scoped memory for net_forward.5']
    #allocation7 [shape = 'u8[512]{0}', space=vmem, size = 0x400, scoped, tag = 'input window, operand 2, single buffered']
    #allocation8 [shape = 'u8[32768]{0}', space=vmem, size = 0x8000, scoped, tag = 'input window, operand 3, single buffered']
    #allocation9 [shape = 's32[1]{0}', space=sflag, size = 0x4, scoped, tag = 'scoped memory for net_forward.5']
    #allocation10 [shape = 'u8[512]{0}', space=vmem, size = 0x400, scoped, tag = 'input window, operand 4, single buffered']
    #allocation11 [shape = 'u8[4096]{0}', space=vmem, size = 0x1000, scoped, tag = 'output window, operand 0, single buffered']
    %10 = vsyncpa [#allocation3], 0
    %11 = vsyncpa [#allocation6], 0
    %12 = vsyncpa [#allocation9], 0
    %13 = vsyncpa [#allocation4], 0
    // Predicated region
    $region2: #{net_forward.5} parent=1 // pred_check
      _
    $region3: #{net_forward.5} parent=1 // pred_check_branch
      %15 = sbr.rel (0) target = $region5
    $region4: #{net_forward.5} parent=1 // pred_region
      %s17 = ssub.s32 1024, 1024
      %18 = vsyncadd [#allocation3], %s17
      %s20 = sshll.u32 [#allocation2], 4
      %s21 = int_to_ptr.vmem [resolvable:$true] %s20
      %23 = dma.hbm_to_vmem [thread:$0]  %s0, 1024, %s21, [#allocation3]
    $region5: #{net_forward.5} parent=1 // pred_fallthru
      _
    // Predicated region
    $region6: #{net_forward.5} parent=1 // pred_check
      _
    $region7: #{net_forward.5} parent=1 // pred_check_branch
      %25 = sbr.rel (0) target = $region9
    $region8: #{net_forward.5} parent=1 // pred_region
      %s27 = ssub.s32 16384, 16384
      %28 = vsyncadd [#allocation6], %s27
      %s29 = sshll.u32 [#allocation5], 4
      %s30 = int_to_ptr.vmem [resolvable:$true] %s29
      %35 = dma.hbm_to_vmem [thread:$0]  %s1, 16384, %s30, [#allocation6], 64, 64, 4
    $region9: #{net_forward.5} parent=1 // pred_fallthru
      _
    // Predicated region
    $region10: #{net_forward.5} parent=1 // pred_check
      _
    $region11: #{net_forward.5} parent=1 // pred_check_branch
      %37 = sbr.rel (0) target = $region13
    $region12: #{net_forward.5} parent=1 // pred_region
      %s39 = ssub.s32 16, 16
      %40 = vsyncadd [#allocation6], %s39
      %s42 = sshll.u32 [#allocation7], 4
      %s43 = int_to_ptr.vmem [resolvable:$true] %s42
      %45 = dma.hbm_to_vmem [thread:$0]  %s2, 16, %s43, [#allocation6]
    $region13: #{net_forward.5} parent=1 // pred_fallthru
      _
    // Predicated region
    $region14: #{net_forward.5} parent=1 // pred_check
      _
    $region15: #{net_forward.5} parent=1 // pred_check_branch
      %47 = sbr.rel (0) target = $region17
    $region16: #{net_forward.5} parent=1 // pred_region
      %s49 = ssub.s32 1024, 1024
      %50 = vsyncadd [#allocation9], %s49
      %s51 = sshll.u32 [#allocation8], 4
      %s52 = int_to_ptr.vmem [resolvable:$true] %s51
      %57 = dma.hbm_to_vmem [thread:$0]  %s3, 1024, %s52, [#allocation9], 64, 64, 4
    $region17: #{net_forward.5} parent=1 // pred_fallthru
      _
    // Predicated region
    $region18: #{net_forward.5} parent=1 // pred_check
      _
    $region19: #{net_forward.5} parent=1 // pred_check_branch
      %59 = sbr.rel (0) target = $region21
    $region20: #{net_forward.5} parent=1 // pred_region
      %s61 = ssub.s32 16, 16
      %62 = vsyncadd [#allocation9], %s61
      %s64 = sshll.u32 [#allocation10], 4
      %s65 = int_to_ptr.vmem [resolvable:$true] %s64
      %67 = dma.hbm_to_vmem [thread:$0]  %s4, 16, %s65, [#allocation9]
    $region21: #{net_forward.5} parent=1 // pred_fallthru
      _
    // Predicated region
    $region22: #{net_forward.5} parent=1 // pred_check
      _
    $region23: #{net_forward.5} parent=1 // pred_check_branch
      %69 = sbr.rel (0) target = $region25
    $region24: #{net_forward.5} parent=1 // pred_region
      %70 = dma.done [#allocation3], 1024
    $region25: #{net_forward.5} parent=1 // pred_fallthru
      _
    // Predicated region
    $region26: #{net_forward.5} parent=1 // pred_check
      _
    $region27: #{net_forward.5} parent=1 // pred_check_branch
      %72 = sbr.rel (0) target = $region29
    $region28: #{net_forward.5} parent=1 // pred_region
      %73 = dma.done [#allocation6], 16384
    $region29: #{net_forward.5} parent=1 // pred_fallthru
      _
    // Predicated region
    $region30: #{net_forward.5} parent=1 // pred_check
      _
    $region31: #{net_forward.5} parent=1 // pred_check_branch
      %75 = sbr.rel (0) target = $region33
    $region32: #{net_forward.5} parent=1 // pred_region
      %76 = dma.done [#allocation6], 16
    $region33: #{net_forward.5} parent=1 // pred_fallthru
      _
    // Predicated region
    $region34: #{net_forward.5} parent=1 // pred_check
      _
    $region35: #{net_forward.5} parent=1 // pred_check_branch
      %78 = sbr.rel (0) target = $region37
    $region36: #{net_forward.5} parent=1 // pred_region
      %79 = dma.done [#allocation9], 1024
    $region37: #{net_forward.5} parent=1 // pred_fallthru
      _
    // Predicated region
    $region38: #{net_forward.5} parent=1 // pred_check
      _
    $region39: #{net_forward.5} parent=1 // pred_check_branch
      %81 = sbr.rel (0) target = $region41
    $region40: #{net_forward.5} parent=1 // pred_region
      %82 = dma.done [#allocation9], 16
    $region41: #{net_forward.5} parent=1 // pred_fallthru
      _
    %v84 = vld [vmem:[#allocation2] sm:$0xff]
    %v85 = vld [vmem:[#allocation2 + $0x8] sm:$0xff]
    %v86 = vld [vmem:[#allocation2 + $0x10] sm:$0xff]
    %v87 = vld [vmem:[#allocation2 + $0x18] sm:$0xff]
    %v88 = vld [vmem:[#allocation2 + $0x20] sm:$0xff]
    %v89 = vld [vmem:[#allocation2 + $0x28] sm:$0xff]
    %v90 = vld [vmem:[#allocation2 + $0x30] sm:$0xff]
    %v91 = vld [vmem:[#allocation2 + $0x38] sm:$0xff]
    %v92 = vld [vmem:[#allocation5] sm:$0xf]
    %v93 = vld [vmem:[#allocation5 + $0x4] sm:$0xf]
    %v94 = vld [vmem:[#allocation5 + $0x8] sm:$0xf]
    %v95 = vld [vmem:[#allocation5 + $0xc] sm:$0xf]
    %v96 = vld [vmem:[#allocation5 + $0x10] sm:$0xf]
    %v97 = vld [vmem:[#allocation5 + $0x14] sm:$0xf]
    %v98 = vld [vmem:[#allocation5 + $0x18] sm:$0xf]
    %v99 = vld [vmem:[#allocation5 + $0x1c] sm:$0xf]
    %v100 = vld [vmem:[#allocation5 + $0x20] sm:$0xf]
    %v101 = vld [vmem:[#allocation5 + $0x24] sm:$0xf]
    %v102 = vld [vmem:[#allocation5 + $0x28] sm:$0xf]
    %v103 = vld [vmem:[#allocation5 + $0x2c] sm:$0xf]
    %v104 = vld [vmem:[#allocation5 + $0x30] sm:$0xf]
    %v105 = vld [vmem:[#allocation5 + $0x34] sm:$0xf]
    %v106 = vld [vmem:[#allocation5 + $0x38] sm:$0xf]
    %v107 = vld [vmem:[#allocation5 + $0x3c] sm:$0xf]
    %v108 = vld [vmem:[#allocation5 + $0x40] sm:$0xf]
    %v109 = vld [vmem:[#allocation5 + $0x44] sm:$0xf]
    %v110 = vld [vmem:[#allocation5 + $0x48] sm:$0xf]
    %v111 = vld [vmem:[#allocation5 + $0x4c] sm:$0xf]
    %v112 = vld [vmem:[#allocation5 + $0x50] sm:$0xf]
    %v113 = vld [vmem:[#allocation5 + $0x54] sm:$0xf]
    %v114 = vld [vmem:[#allocation5 + $0x58] sm:$0xf]
    %v115 = vld [vmem:[#allocation5 + $0x5c] sm:$0xf]
    %v116 = vld [vmem:[#allocation5 + $0x60] sm:$0xf]
    %v117 = vld [vmem:[#allocation5 + $0x64] sm:$0xf]
    %v118 = vld [vmem:[#allocation5 + $0x68] sm:$0xf]
    %v119 = vld [vmem:[#allocation5 + $0x6c] sm:$0xf]
    %v120 = vld [vmem:[#allocation5 + $0x70] sm:$0xf]
    %v121 = vld [vmem:[#allocation5 + $0x74] sm:$0xf]
    %v122 = vld [vmem:[#allocation5 + $0x78] sm:$0xf]
    %v123 = vld [vmem:[#allocation5 + $0x7c] sm:$0xf]
    %v124 = vld [vmem:[#allocation5 + $0x80] sm:$0xf]
    %v125 = vld [vmem:[#allocation5 + $0x84] sm:$0xf]
    %v126 = vld [vmem:[#allocation5 + $0x88] sm:$0xf]
    %v127 = vld [vmem:[#allocation5 + $0x8c] sm:$0xf]
    %v128 = vld [vmem:[#allocation5 + $0x90] sm:$0xf]
    %v129 = vld [vmem:[#allocation5 + $0x94] sm:$0xf]
    %v130 = vld [vmem:[#allocation5 + $0x98] sm:$0xf]
    %v131 = vld [vmem:[#allocation5 + $0x9c] sm:$0xf]
    %v132 = vld [vmem:[#allocation5 + $0xa0] sm:$0xf]
    %v133 = vld [vmem:[#allocation5 + $0xa4] sm:$0xf]
    %v134 = vld [vmem:[#allocation5 + $0xa8] sm:$0xf]
    %v135 = vld [vmem:[#allocation5 + $0xac] sm:$0xf]
    %v136 = vld [vmem:[#allocation5 + $0xb0] sm:$0xf]
    %v137 = vld [vmem:[#allocation5 + $0xb4] sm:$0xf]
    %v138 = vld [vmem:[#allocation5 + $0xb8] sm:$0xf]
    %v139 = vld [vmem:[#allocation5 + $0xbc] sm:$0xf]
    %v140 = vld [vmem:[#allocation5 + $0xc0] sm:$0xf]
    %v141 = vld [vmem:[#allocation5 + $0xc4] sm:$0xf]
    %v142 = vld [vmem:[#allocation5 + $0xc8] sm:$0xf]
    %v143 = vld [vmem:[#allocation5 + $0xcc] sm:$0xf]
    %v144 = vld [vmem:[#allocation5 + $0xd0] sm:$0xf]
    %v145 = vld [vmem:[#allocation5 + $0xd4] sm:$0xf]
    %v146 = vld [vmem:[#allocation5 + $0xd8] sm:$0xf]
    %v147 = vld [vmem:[#allocation5 + $0xdc] sm:$0xf]
    %v148 = vld [vmem:[#allocation5 + $0xe0] sm:$0xf]
    %v149 = vld [vmem:[#allocation5 + $0xe4] sm:$0xf]
    %v150 = vld [vmem:[#allocation5 + $0xe8] sm:$0xf]
    %v151 = vld [vmem:[#allocation5 + $0xec] sm:$0xf]
    %v152 = vld [vmem:[#allocation5 + $0xf0] sm:$0xf]
    %v153 = vld [vmem:[#allocation5 + $0xf4] sm:$0xf]
    %v154 = vld [vmem:[#allocation5 + $0xf8] sm:$0xf]
    %v155 = vld [vmem:[#allocation5 + $0xfc] sm:$0xf]
    %v156 = vld [vmem:[#allocation5 + $0x100] sm:$0xf]
    %v157 = vld [vmem:[#allocation5 + $0x104] sm:$0xf]
    %v158 = vld [vmem:[#allocation5 + $0x108] sm:$0xf]
    %v159 = vld [vmem:[#allocation5 + $0x10c] sm:$0xf]
    %v160 = vld [vmem:[#allocation5 + $0x110] sm:$0xf]
    %v161 = vld [vmem:[#allocation5 + $0x114] sm:$0xf]
    %v162 = vld [vmem:[#allocation5 + $0x118] sm:$0xf]
    %v163 = vld [vmem:[#allocation5 + $0x11c] sm:$0xf]
    %v164 = vld [vmem:[#allocation5 + $0x120] sm:$0xf]
    %v165 = vld [vmem:[#allocation5 + $0x124] sm:$0xf]
    %v166 = vld [vmem:[#allocation5 + $0x128] sm:$0xf]
    %v167 = vld [vmem:[#allocation5 + $0x12c] sm:$0xf]
    %v168 = vld [vmem:[#allocation5 + $0x130] sm:$0xf]
    %v169 = vld [vmem:[#allocation5 + $0x134] sm:$0xf]
    %v170 = vld [vmem:[#allocation5 + $0x138] sm:$0xf]
    %v171 = vld [vmem:[#allocation5 + $0x13c] sm:$0xf]
    %v172 = vld [vmem:[#allocation5 + $0x140] sm:$0xf]
    %v173 = vld [vmem:[#allocation5 + $0x144] sm:$0xf]
    %v174 = vld [vmem:[#allocation5 + $0x148] sm:$0xf]
    %v175 = vld [vmem:[#allocation5 + $0x14c] sm:$0xf]
    %v176 = vld [vmem:[#allocation5 + $0x150] sm:$0xf]
    %v177 = vld [vmem:[#allocation5 + $0x154] sm:$0xf]
    %v178 = vld [vmem:[#allocation5 + $0x158] sm:$0xf]
    %v179 = vld [vmem:[#allocation5 + $0x15c] sm:$0xf]
    %v180 = vld [vmem:[#allocation5 + $0x160] sm:$0xf]
    %v181 = vld [vmem:[#allocation5 + $0x164] sm:$0xf]
    %v182 = vld [vmem:[#allocation5 + $0x168] sm:$0xf]
    %v183 = vld [vmem:[#allocation5 + $0x16c] sm:$0xf]
    %v184 = vld [vmem:[#allocation5 + $0x170] sm:$0xf]
    %v185 = vld [vmem:[#allocation5 + $0x174] sm:$0xf]
    %v186 = vld [vmem:[#allocation5 + $0x178] sm:$0xf]
    %v187 = vld [vmem:[#allocation5 + $0x17c] sm:$0xf]
    %v188 = vld [vmem:[#allocation5 + $0x180] sm:$0xf]
    %v189 = vld [vmem:[#allocation5 + $0x184] sm:$0xf]
    %v190 = vld [vmem:[#allocation5 + $0x188] sm:$0xf]
    %v191 = vld [vmem:[#allocation5 + $0x18c] sm:$0xf]
    %v192 = vld [vmem:[#allocation5 + $0x190] sm:$0xf]
    %v193 = vld [vmem:[#allocation5 + $0x194] sm:$0xf]
    %v194 = vld [vmem:[#allocation5 + $0x198] sm:$0xf]
    %v195 = vld [vmem:[#allocation5 + $0x19c] sm:$0xf]
    %v196 = vld [vmem:[#allocation5 + $0x1a0] sm:$0xf]
    %v197 = vld [vmem:[#allocation5 + $0x1a4] sm:$0xf]
    %v198 = vld [vmem:[#allocation5 + $0x1a8] sm:$0xf]
    %v199 = vld [vmem:[#allocation5 + $0x1ac] sm:$0xf]
    %v200 = vld [vmem:[#allocation5 + $0x1b0] sm:$0xf]
    %v201 = vld [vmem:[#allocation5 + $0x1b4] sm:$0xf]
    %v202 = vld [vmem:[#allocation5 + $0x1b8] sm:$0xf]
    %v203 = vld [vmem:[#allocation5 + $0x1bc] sm:$0xf]
    %v204 = vld [vmem:[#allocation5 + $0x1c0] sm:$0xf]
    %v205 = vld [vmem:[#allocation5 + $0x1c4] sm:$0xf]
    %v206 = vld [vmem:[#allocation5 + $0x1c8] sm:$0xf]
    %v207 = vld [vmem:[#allocation5 + $0x1cc] sm:$0xf]
    %v208 = vld [vmem:[#allocation5 + $0x1d0] sm:$0xf]
    %v209 = vld [vmem:[#allocation5 + $0x1d4] sm:$0xf]
    %v210 = vld [vmem:[#allocation5 + $0x1d8] sm:$0xf]
    %v211 = vld [vmem:[#allocation5 + $0x1dc] sm:$0xf]
    %v212 = vld [vmem:[#allocation5 + $0x1e0] sm:$0xf]
    %v213 = vld [vmem:[#allocation5 + $0x1e4] sm:$0xf]
    %v214 = vld [vmem:[#allocation5 + $0x1e8] sm:$0xf]
    %v215 = vld [vmem:[#allocation5 + $0x1ec] sm:$0xf]
    %v216 = vld [vmem:[#allocation5 + $0x1f0] sm:$0xf]
    %v217 = vld [vmem:[#allocation5 + $0x1f4] sm:$0xf]
    %v218 = vld [vmem:[#allocation5 + $0x1f8] sm:$0xf]
    %v219 = vld [vmem:[#allocation5 + $0x1fc] sm:$0xf]
    %v220 = vld [vmem:[#allocation5 + $0x200] sm:$0xf]
    %v221 = vld [vmem:[#allocation5 + $0x204] sm:$0xf]
    %v222 = vld [vmem:[#allocation5 + $0x208] sm:$0xf]
    %v223 = vld [vmem:[#allocation5 + $0x20c] sm:$0xf]
    %v224 = vld [vmem:[#allocation5 + $0x210] sm:$0xf]
    %v225 = vld [vmem:[#allocation5 + $0x214] sm:$0xf]
    %v226 = vld [vmem:[#allocation5 + $0x218] sm:$0xf]
    %v227 = vld [vmem:[#allocation5 + $0x21c] sm:$0xf]
    %v228 = vld [vmem:[#allocation5 + $0x220] sm:$0xf]
    %v229 = vld [vmem:[#allocation5 + $0x224] sm:$0xf]
    %v230 = vld [vmem:[#allocation5 + $0x228] sm:$0xf]
    %v231 = vld [vmem:[#allocation5 + $0x22c] sm:$0xf]
    %v232 = vld [vmem:[#allocation5 + $0x230] sm:$0xf]
    %v233 = vld [vmem:[#allocation5 + $0x234] sm:$0xf]
    %v234 = vld [vmem:[#allocation5 + $0x238] sm:$0xf]
    %v235 = vld [vmem:[#allocation5 + $0x23c] sm:$0xf]
    %v236 = vld [vmem:[#allocation5 + $0x240] sm:$0xf]
    %v237 = vld [vmem:[#allocation5 + $0x244] sm:$0xf]
    %v238 = vld [vmem:[#allocation5 + $0x248] sm:$0xf]
    %v239 = vld [vmem:[#allocation5 + $0x24c] sm:$0xf]
    %v240 = vld [vmem:[#allocation5 + $0x250] sm:$0xf]
    %v241 = vld [vmem:[#allocation5 + $0x254] sm:$0xf]
    %v242 = vld [vmem:[#allocation5 + $0x258] sm:$0xf]
    %v243 = vld [vmem:[#allocation5 + $0x25c] sm:$0xf]
    %v244 = vld [vmem:[#allocation5 + $0x260] sm:$0xf]
    %v245 = vld [vmem:[#allocation5 + $0x264] sm:$0xf]
    %v246 = vld [vmem:[#allocation5 + $0x268] sm:$0xf]
    %v247 = vld [vmem:[#allocation5 + $0x26c] sm:$0xf]
    %v248 = vld [vmem:[#allocation5 + $0x270] sm:$0xf]
    %v249 = vld [vmem:[#allocation5 + $0x274] sm:$0xf]
    %v250 = vld [vmem:[#allocation5 + $0x278] sm:$0xf]
    %v251 = vld [vmem:[#allocation5 + $0x27c] sm:$0xf]
    %v252 = vld [vmem:[#allocation5 + $0x280] sm:$0xf]
    %v253 = vld [vmem:[#allocation5 + $0x284] sm:$0xf]
    %v254 = vld [vmem:[#allocation5 + $0x288] sm:$0xf]
    %v255 = vld [vmem:[#allocation5 + $0x28c] sm:$0xf]
    %v256 = vld [vmem:[#allocation5 + $0x290] sm:$0xf]
    %v257 = vld [vmem:[#allocation5 + $0x294] sm:$0xf]
    %v258 = vld [vmem:[#allocation5 + $0x298] sm:$0xf]
    %v259 = vld [vmem:[#allocation5 + $0x29c] sm:$0xf]
    %v260 = vld [vmem:[#allocation5 + $0x2a0] sm:$0xf]
    %v261 = vld [vmem:[#allocation5 + $0x2a4] sm:$0xf]
    %v262 = vld [vmem:[#allocation5 + $0x2a8] sm:$0xf]
    %v263 = vld [vmem:[#allocation5 + $0x2ac] sm:$0xf]
    %v264 = vld [vmem:[#allocation5 + $0x2b0] sm:$0xf]
    %v265 = vld [vmem:[#allocation5 + $0x2b4] sm:$0xf]
    %v266 = vld [vmem:[#allocation5 + $0x2b8] sm:$0xf]
    %v267 = vld [vmem:[#allocation5 + $0x2bc] sm:$0xf]
    %v268 = vld [vmem:[#allocation5 + $0x2c0] sm:$0xf]
    %v269 = vld [vmem:[#allocation5 + $0x2c4] sm:$0xf]
    %v270 = vld [vmem:[#allocation5 + $0x2c8] sm:$0xf]
    %v271 = vld [vmem:[#allocation5 + $0x2cc] sm:$0xf]
    %v272 = vld [vmem:[#allocation5 + $0x2d0] sm:$0xf]
    %v273 = vld [vmem:[#allocation5 + $0x2d4] sm:$0xf]
    %v274 = vld [vmem:[#allocation5 + $0x2d8] sm:$0xf]
    %v275 = vld [vmem:[#allocation5 + $0x2dc] sm:$0xf]
    %v276 = vld [vmem:[#allocation5 + $0x2e0] sm:$0xf]
    %v277 = vld [vmem:[#allocation5 + $0x2e4] sm:$0xf]
    %v278 = vld [vmem:[#allocation5 + $0x2e8] sm:$0xf]
    %v279 = vld [vmem:[#allocation5 + $0x2ec] sm:$0xf]
    %v280 = vld [vmem:[#allocation5 + $0x2f0] sm:$0xf]
    %v281 = vld [vmem:[#allocation5 + $0x2f4] sm:$0xf]
    %v282 = vld [vmem:[#allocation5 + $0x2f8] sm:$0xf]
    %v283 = vld [vmem:[#allocation5 + $0x2fc] sm:$0xf]
    %v284 = vld [vmem:[#allocation5 + $0x300] sm:$0xf]
    %v285 = vld [vmem:[#allocation5 + $0x304] sm:$0xf]
    %v286 = vld [vmem:[#allocation5 + $0x308] sm:$0xf]
    %v287 = vld [vmem:[#allocation5 + $0x30c] sm:$0xf]
    %v288 = vld [vmem:[#allocation5 + $0x310] sm:$0xf]
    %v289 = vld [vmem:[#allocation5 + $0x314] sm:$0xf]
    %v290 = vld [vmem:[#allocation5 + $0x318] sm:$0xf]
    %v291 = vld [vmem:[#allocation5 + $0x31c] sm:$0xf]
    %v292 = vld [vmem:[#allocation5 + $0x320] sm:$0xf]
    %v293 = vld [vmem:[#allocation5 + $0x324] sm:$0xf]
    %v294 = vld [vmem:[#allocation5 + $0x328] sm:$0xf]
    %v295 = vld [vmem:[#allocation5 + $0x32c] sm:$0xf]
    %v296 = vld [vmem:[#allocation5 + $0x330] sm:$0xf]
    %v297 = vld [vmem:[#allocation5 + $0x334] sm:$0xf]
    %v298 = vld [vmem:[#allocation5 + $0x338] sm:$0xf]
    %v299 = vld [vmem:[#allocation5 + $0x33c] sm:$0xf]
    %v300 = vld [vmem:[#allocation5 + $0x340] sm:$0xf]
    %v301 = vld [vmem:[#allocation5 + $0x344] sm:$0xf]
    %v302 = vld [vmem:[#allocation5 + $0x348] sm:$0xf]
    %v303 = vld [vmem:[#allocation5 + $0x34c] sm:$0xf]
    %v304 = vld [vmem:[#allocation5 + $0x350] sm:$0xf]
    %v305 = vld [vmem:[#allocation5 + $0x354] sm:$0xf]
    %v306 = vld [vmem:[#allocation5 + $0x358] sm:$0xf]
    %v307 = vld [vmem:[#allocation5 + $0x35c] sm:$0xf]
    %v308 = vld [vmem:[#allocation5 + $0x360] sm:$0xf]
    %v309 = vld [vmem:[#allocation5 + $0x364] sm:$0xf]
    %v310 = vld [vmem:[#allocation5 + $0x368] sm:$0xf]
    %v311 = vld [vmem:[#allocation5 + $0x36c] sm:$0xf]
    %v312 = vld [vmem:[#allocation5 + $0x370] sm:$0xf]
    %v313 = vld [vmem:[#allocation5 + $0x374] sm:$0xf]
    %v314 = vld [vmem:[#allocation5 + $0x378] sm:$0xf]
    %v315 = vld [vmem:[#allocation5 + $0x37c] sm:$0xf]
    %v316 = vld [vmem:[#allocation5 + $0x380] sm:$0xf]
    %v317 = vld [vmem:[#allocation5 + $0x384] sm:$0xf]
    %v318 = vld [vmem:[#allocation5 + $0x388] sm:$0xf]
    %v319 = vld [vmem:[#allocation5 + $0x38c] sm:$0xf]
    %v320 = vld [vmem:[#allocation5 + $0x390] sm:$0xf]
    %v321 = vld [vmem:[#allocation5 + $0x394] sm:$0xf]
    %v322 = vld [vmem:[#allocation5 + $0x398] sm:$0xf]
    %v323 = vld [vmem:[#allocation5 + $0x39c] sm:$0xf]
    %v324 = vld [vmem:[#allocation5 + $0x3a0] sm:$0xf]
    %v325 = vld [vmem:[#allocation5 + $0x3a4] sm:$0xf]
    %v326 = vld [vmem:[#allocation5 + $0x3a8] sm:$0xf]
    %v327 = vld [vmem:[#allocation5 + $0x3ac] sm:$0xf]
    %v328 = vld [vmem:[#allocation5 + $0x3b0] sm:$0xf]
    %v329 = vld [vmem:[#allocation5 + $0x3b4] sm:$0xf]
    %v330 = vld [vmem:[#allocation5 + $0x3b8] sm:$0xf]
    %v331 = vld [vmem:[#allocation5 + $0x3bc] sm:$0xf]
    %v332 = vld [vmem:[#allocation5 + $0x3c0] sm:$0xf]
    %v333 = vld [vmem:[#allocation5 + $0x3c4] sm:$0xf]
    %v334 = vld [vmem:[#allocation5 + $0x3c8] sm:$0xf]
    %v335 = vld [vmem:[#allocation5 + $0x3cc] sm:$0xf]
    %v336 = vld [vmem:[#allocation5 + $0x3d0] sm:$0xf]
    %v337 = vld [vmem:[#allocation5 + $0x3d4] sm:$0xf]
    %v338 = vld [vmem:[#allocation5 + $0x3d8] sm:$0xf]
    %v339 = vld [vmem:[#allocation5 + $0x3dc] sm:$0xf]
    %v340 = vld [vmem:[#allocation5 + $0x3e0] sm:$0xf]
    %v341 = vld [vmem:[#allocation5 + $0x3e4] sm:$0xf]
    %v342 = vld [vmem:[#allocation5 + $0x3e8] sm:$0xf]
    %v343 = vld [vmem:[#allocation5 + $0x3ec] sm:$0xf]
    %v344 = vld [vmem:[#allocation5 + $0x3f0] sm:$0xf]
    %v345 = vld [vmem:[#allocation5 + $0x3f4] sm:$0xf]
    %v346 = vld [vmem:[#allocation5 + $0x3f8] sm:$0xf]
    %v347 = vld [vmem:[#allocation5 + $0x3fc] sm:$0xf]
    %v348 = vld [vmem:[#allocation7] sm:$0x1]
    %v350 = vlaneseq
    %v351 = vshrl.u32 %v350, 7
    %v352 = vsub.s32 0, %v351
    %v353 = vrot.slane %v348, %v352
    %v363 = vunpack.c.l.b16 %v84
    %v364 = vunpack.c.h.b16 %v84
    %v365 = vunpack.c.l.b16 %v85
    %v366 = vunpack.c.h.b16 %v85
    %v367 = vunpack.c.l.b16 %v86
    %v368 = vunpack.c.h.b16 %v86
    %v369 = vunpack.c.l.b16 %v87
    %v370 = vunpack.c.h.b16 %v87
    %v371 = vunpack.c.l.b16 %v88
    %v372 = vunpack.c.h.b16 %v88
    %v373 = vunpack.c.l.b16 %v89
    %v374 = vunpack.c.h.b16 %v89
    %v375 = vunpack.c.l.b16 %v90
    %v376 = vunpack.c.h.b16 %v90
    %v377 = vunpack.c.l.b16 %v91
    %v378 = vunpack.c.h.b16 %v91
    %v379 = vpack.c.b16 %v363, %v363
    %v380 = vpack.c.b16 %v364, %v364
    %v381 = vpack.c.b16 %v365, %v365
    %v382 = vpack.c.b16 %v366, %v366
    %v383 = vpack.c.b16 %v367, %v367
    %v384 = vpack.c.b16 %v368, %v368
    %v385 = vpack.c.b16 %v369, %v369
    %v386 = vpack.c.b16 %v370, %v370
    %v387 = vpack.c.b16 %v371, %v371
    %v388 = vpack.c.b16 %v372, %v372
    %v389 = vpack.c.b16 %v373, %v373
    %v390 = vpack.c.b16 %v374, %v374
    %v391 = vpack.c.b16 %v375, %v375
    %v392 = vpack.c.b16 %v376, %v376
    %v393 = vpack.c.b16 %v377, %v377
    %v394 = vpack.c.b16 %v378, %v378
    %v667 = vunpack.c.l.b16 %v92
    %v668 = vunpack.c.l.b16 %v93
    %v669 = vunpack.c.l.b16 %v94
    %v670 = vunpack.c.l.b16 %v95
    %v671 = vunpack.c.l.b16 %v96
    %v672 = vunpack.c.l.b16 %v97
    %v673 = vunpack.c.l.b16 %v98
    %v674 = vunpack.c.l.b16 %v99
    %v675 = vunpack.c.l.b16 %v100
    %v676 = vunpack.c.l.b16 %v101
    %v677 = vunpack.c.l.b16 %v102
    %v678 = vunpack.c.l.b16 %v103
    %v679 = vunpack.c.l.b16 %v104
    %v680 = vunpack.c.l.b16 %v105
    %v681 = vunpack.c.l.b16 %v106
    %v682 = vunpack.c.l.b16 %v107
    %v683 = vunpack.c.l.b16 %v108
    %v684 = vunpack.c.l.b16 %v109
    %v685 = vunpack.c.l.b16 %v110
    %v686 = vunpack.c.l.b16 %v111
    %v687 = vunpack.c.l.b16 %v112
    %v688 = vunpack.c.l.b16 %v113
    %v689 = vunpack.c.l.b16 %v114
    %v690 = vunpack.c.l.b16 %v115
    %v691 = vunpack.c.l.b16 %v116
    %v692 = vunpack.c.l.b16 %v117
    %v693 = vunpack.c.l.b16 %v118
    %v694 = vunpack.c.l.b16 %v119
    %v695 = vunpack.c.l.b16 %v120
    %v696 = vunpack.c.l.b16 %v121
    %v697 = vunpack.c.l.b16 %v122
    %v698 = vunpack.c.l.b16 %v123
    %v699 = vunpack.c.l.b16 %v124
    %v700 = vunpack.c.l.b16 %v125
    %v701 = vunpack.c.l.b16 %v126
    %v702 = vunpack.c.l.b16 %v127
    %v703 = vunpack.c.l.b16 %v128
    %v704 = vunpack.c.l.b16 %v129
    %v705 = vunpack.c.l.b16 %v130
    %v706 = vunpack.c.l.b16 %v131
    %v707 = vunpack.c.l.b16 %v132
    %v708 = vunpack.c.l.b16 %v133
    %v709 = vunpack.c.l.b16 %v134
    %v710 = vunpack.c.l.b16 %v135
    %v711 = vunpack.c.l.b16 %v136
    %v712 = vunpack.c.l.b16 %v137
    %v713 = vunpack.c.l.b16 %v138
    %v714 = vunpack.c.l.b16 %v139
    %v715 = vunpack.c.l.b16 %v140
    %v716 = vunpack.c.l.b16 %v141
    %v717 = vunpack.c.l.b16 %v142
    %v718 = vunpack.c.l.b16 %v143
    %v719 = vunpack.c.l.b16 %v144
    %v720 = vunpack.c.l.b16 %v145
    %v721 = vunpack.c.l.b16 %v146
    %v722 = vunpack.c.l.b16 %v147
    %v723 = vunpack.c.l.b16 %v148
    %v724 = vunpack.c.l.b16 %v149
    %v725 = vunpack.c.l.b16 %v150
    %v726 = vunpack.c.l.b16 %v151
    %v727 = vunpack.c.l.b16 %v152
    %v728 = vunpack.c.l.b16 %v153
    %v729 = vunpack.c.l.b16 %v154
    %v730 = vunpack.c.l.b16 %v155
    %v731 = vunpack.c.l.b16 %v156
    %v732 = vunpack.c.l.b16 %v157
    %v733 = vunpack.c.l.b16 %v158
    %v734 = vunpack.c.l.b16 %v159
    %v735 = vunpack.c.l.b16 %v160
    %v736 = vunpack.c.l.b16 %v161
    %v737 = vunpack.c.l.b16 %v162
    %v738 = vunpack.c.l.b16 %v163
    %v739 = vunpack.c.l.b16 %v164
    %v740 = vunpack.c.l.b16 %v165
    %v741 = vunpack.c.l.b16 %v166
    %v742 = vunpack.c.l.b16 %v167
    %v743 = vunpack.c.l.b16 %v168
    %v744 = vunpack.c.l.b16 %v169
    %v745 = vunpack.c.l.b16 %v170
    %v746 = vunpack.c.l.b16 %v171
    %v747 = vunpack.c.l.b16 %v172
    %v748 = vunpack.c.l.b16 %v173
    %v749 = vunpack.c.l.b16 %v174
    %v750 = vunpack.c.l.b16 %v175
    %v751 = vunpack.c.l.b16 %v176
    %v752 = vunpack.c.l.b16 %v177
    %v753 = vunpack.c.l.b16 %v178
    %v754 = vunpack.c.l.b16 %v179
    %v755 = vunpack.c.l.b16 %v180
    %v756 = vunpack.c.l.b16 %v181
    %v757 = vunpack.c.l.b16 %v182
    %v758 = vunpack.c.l.b16 %v183
    %v759 = vunpack.c.l.b16 %v184
    %v760 = vunpack.c.l.b16 %v185
    %v761 = vunpack.c.l.b16 %v186
    %v762 = vunpack.c.l.b16 %v187
    %v763 = vunpack.c.l.b16 %v188
    %v764 = vunpack.c.l.b16 %v189
    %v765 = vunpack.c.l.b16 %v190
    %v766 = vunpack.c.l.b16 %v191
    %v767 = vunpack.c.l.b16 %v192
    %v768 = vunpack.c.l.b16 %v193
    %v769 = vunpack.c.l.b16 %v194
    %v770 = vunpack.c.l.b16 %v195
    %v771 = vunpack.c.l.b16 %v196
    %v772 = vunpack.c.l.b16 %v197
    %v773 = vunpack.c.l.b16 %v198
    %v774 = vunpack.c.l.b16 %v199
    %v775 = vunpack.c.l.b16 %v200
    %v776 = vunpack.c.l.b16 %v201
    %v777 = vunpack.c.l.b16 %v202
    %v778 = vunpack.c.l.b16 %v203
    %v779 = vunpack.c.l.b16 %v204
    %v780 = vunpack.c.l.b16 %v205
    %v781 = vunpack.c.l.b16 %v206
    %v782 = vunpack.c.l.b16 %v207
    %v783 = vunpack.c.l.b16 %v208
    %v784 = vunpack.c.l.b16 %v209
    %v785 = vunpack.c.l.b16 %v210
    %v786 = vunpack.c.l.b16 %v211
    %v787 = vunpack.c.l.b16 %v212
    %v788 = vunpack.c.l.b16 %v213
    %v789 = vunpack.c.l.b16 %v214
    %v790 = vunpack.c.l.b16 %v215
    %v791 = vunpack.c.l.b16 %v216
    %v792 = vunpack.c.l.b16 %v217
    %v793 = vunpack.c.l.b16 %v218
    %v794 = vunpack.c.l.b16 %v219
    %v795 = vunpack.c.l.b16 %v220
    %v796 = vunpack.c.l.b16 %v221
    %v797 = vunpack.c.l.b16 %v222
    %v798 = vunpack.c.l.b16 %v223
    %v799 = vunpack.c.l.b16 %v224
    %v800 = vunpack.c.l.b16 %v225
    %v801 = vunpack.c.l.b16 %v226
    %v802 = vunpack.c.l.b16 %v227
    %v803 = vunpack.c.l.b16 %v228
    %v804 = vunpack.c.l.b16 %v229
    %v805 = vunpack.c.l.b16 %v230
    %v806 = vunpack.c.l.b16 %v231
    %v807 = vunpack.c.l.b16 %v232
    %v808 = vunpack.c.l.b16 %v233
    %v809 = vunpack.c.l.b16 %v234
    %v810 = vunpack.c.l.b16 %v235
    %v811 = vunpack.c.l.b16 %v236
    %v812 = vunpack.c.l.b16 %v237
    %v813 = vunpack.c.l.b16 %v238
    %v814 = vunpack.c.l.b16 %v239
    %v815 = vunpack.c.l.b16 %v240
    %v816 = vunpack.c.l.b16 %v241
    %v817 = vunpack.c.l.b16 %v242
    %v818 = vunpack.c.l.b16 %v243
    %v819 = vunpack.c.l.b16 %v244
    %v820 = vunpack.c.l.b16 %v245
    %v821 = vunpack.c.l.b16 %v246
    %v822 = vunpack.c.l.b16 %v247
    %v823 = vunpack.c.l.b16 %v248
    %v824 = vunpack.c.l.b16 %v249
    %v825 = vunpack.c.l.b16 %v250
    %v826 = vunpack.c.l.b16 %v251
    %v827 = vunpack.c.l.b16 %v252
    %v828 = vunpack.c.l.b16 %v253
    %v829 = vunpack.c.l.b16 %v254
    %v830 = vunpack.c.l.b16 %v255
    %v831 = vunpack.c.l.b16 %v256
    %v832 = vunpack.c.l.b16 %v257
    %v833 = vunpack.c.l.b16 %v258
    %v834 = vunpack.c.l.b16 %v259
    %v835 = vunpack.c.l.b16 %v260
    %v836 = vunpack.c.l.b16 %v261
    %v837 = vunpack.c.l.b16 %v262
    %v838 = vunpack.c.l.b16 %v263
    %v839 = vunpack.c.l.b16 %v264
    %v840 = vunpack.c.l.b16 %v265
    %v841 = vunpack.c.l.b16 %v266
    %v842 = vunpack.c.l.b16 %v267
    %v843 = vunpack.c.l.b16 %v268
    %v844 = vunpack.c.l.b16 %v269
    %v845 = vunpack.c.l.b16 %v270
    %v846 = vunpack.c.l.b16 %v271
    %v847 = vunpack.c.l.b16 %v272
    %v848 = vunpack.c.l.b16 %v273
    %v849 = vunpack.c.l.b16 %v274
    %v850 = vunpack.c.l.b16 %v275
    %v851 = vunpack.c.l.b16 %v276
    %v852 = vunpack.c.l.b16 %v277
    %v853 = vunpack.c.l.b16 %v278
    %v854 = vunpack.c.l.b16 %v279
    %v855 = vunpack.c.l.b16 %v280
    %v856 = vunpack.c.l.b16 %v281
    %v857 = vunpack.c.l.b16 %v282
    %v858 = vunpack.c.l.b16 %v283
    %v859 = vunpack.c.l.b16 %v284
    %v860 = vunpack.c.l.b16 %v285
    %v861 = vunpack.c.l.b16 %v286
    %v862 = vunpack.c.l.b16 %v287
    %v863 = vunpack.c.l.b16 %v288
    %v864 = vunpack.c.l.b16 %v289
    %v865 = vunpack.c.l.b16 %v290
    %v866 = vunpack.c.l.b16 %v291
    %v867 = vunpack.c.l.b16 %v292
    %v868 = vunpack.c.l.b16 %v293
    %v869 = vunpack.c.l.b16 %v294
    %v870 = vunpack.c.l.b16 %v295
    %v871 = vunpack.c.l.b16 %v296
    %v872 = vunpack.c.l.b16 %v297
    %v873 = vunpack.c.l.b16 %v298
    %v874 = vunpack.c.l.b16 %v299
    %v875 = vunpack.c.l.b16 %v300
    %v876 = vunpack.c.l.b16 %v301
    %v877 = vunpack.c.l.b16 %v302
    %v878 = vunpack.c.l.b16 %v303
    %v879 = vunpack.c.l.b16 %v304
    %v880 = vunpack.c.l.b16 %v305
    %v881 = vunpack.c.l.b16 %v306
    %v882 = vunpack.c.l.b16 %v307
    %v883 = vunpack.c.l.b16 %v308
    %v884 = vunpack.c.l.b16 %v309
    %v885 = vunpack.c.l.b16 %v310
    %v886 = vunpack.c.l.b16 %v311
    %v887 = vunpack.c.l.b16 %v312
    %v888 = vunpack.c.l.b16 %v313
    %v889 = vunpack.c.l.b16 %v314
    %v890 = vunpack.c.l.b16 %v315
    %v891 = vunpack.c.l.b16 %v316
    %v892 = vunpack.c.l.b16 %v317
    %v893 = vunpack.c.l.b16 %v318
    %v894 = vunpack.c.l.b16 %v319
    %v895 = vunpack.c.l.b16 %v320
    %v896 = vunpack.c.l.b16 %v321
    %v897 = vunpack.c.l.b16 %v322
    %v898 = vunpack.c.l.b16 %v323
    %v899 = vunpack.c.l.b16 %v324
    %v900 = vunpack.c.l.b16 %v325
    %v901 = vunpack.c.l.b16 %v326
    %v902 = vunpack.c.l.b16 %v327
    %v903 = vunpack.c.l.b16 %v328
    %v904 = vunpack.c.l.b16 %v329
    %v905 = vunpack.c.l.b16 %v330
    %v906 = vunpack.c.l.b16 %v331
    %v907 = vunpack.c.l.b16 %v332
    %v908 = vunpack.c.l.b16 %v333
    %v909 = vunpack.c.l.b16 %v334
    %v910 = vunpack.c.l.b16 %v335
    %v911 = vunpack.c.l.b16 %v336
    %v912 = vunpack.c.l.b16 %v337
    %v913 = vunpack.c.l.b16 %v338
    %v914 = vunpack.c.l.b16 %v339
    %v915 = vunpack.c.l.b16 %v340
    %v916 = vunpack.c.l.b16 %v341
    %v917 = vunpack.c.l.b16 %v342
    %v918 = vunpack.c.l.b16 %v343
    %v919 = vunpack.c.l.b16 %v344
    %v920 = vunpack.c.l.b16 %v345
    %v921 = vunpack.c.l.b16 %v346
    %v922 = vunpack.c.l.b16 %v347
    %v923 = vpack.c.b16 %v668, %v667
    %v924 = vpack.c.b16 %v670, %v669
    %v925 = vpack.c.b16 %v672, %v671
    %v926 = vpack.c.b16 %v674, %v673
    %v927 = vpack.c.b16 %v676, %v675
    %v928 = vpack.c.b16 %v678, %v677
    %v929 = vpack.c.b16 %v680, %v679
    %v930 = vpack.c.b16 %v682, %v681
    %v931 = vpack.c.b16 %v684, %v683
    %v932 = vpack.c.b16 %v686, %v685
    %v933 = vpack.c.b16 %v688, %v687
    %v934 = vpack.c.b16 %v690, %v689
    %v935 = vpack.c.b16 %v692, %v691
    %v936 = vpack.c.b16 %v694, %v693
    %v937 = vpack.c.b16 %v696, %v695
    %v938 = vpack.c.b16 %v698, %v697
    %v939 = vpack.c.b16 %v700, %v699
    %v940 = vpack.c.b16 %v702, %v701
    %v941 = vpack.c.b16 %v704, %v703
    %v942 = vpack.c.b16 %v706, %v705
    %v943 = vpack.c.b16 %v708, %v707
    %v944 = vpack.c.b16 %v710, %v709
    %v945 = vpack.c.b16 %v712, %v711
    %v946 = vpack.c.b16 %v714, %v713
    %v947 = vpack.c.b16 %v716, %v715
    %v948 = vpack.c.b16 %v718, %v717
    %v949 = vpack.c.b16 %v720, %v719
    %v950 = vpack.c.b16 %v722, %v721
    %v951 = vpack.c.b16 %v724, %v723
    %v952 = vpack.c.b16 %v726, %v725
    %v953 = vpack.c.b16 %v728, %v727
    %v954 = vpack.c.b16 %v730, %v729
    %v955 = vpack.c.b16 %v732, %v731
    %v956 = vpack.c.b16 %v734, %v733
    %v957 = vpack.c.b16 %v736, %v735
    %v958 = vpack.c.b16 %v738, %v737
    %v959 = vpack.c.b16 %v740, %v739
    %v960 = vpack.c.b16 %v742, %v741
    %v961 = vpack.c.b16 %v744, %v743
    %v962 = vpack.c.b16 %v746, %v745
    %v963 = vpack.c.b16 %v748, %v747
    %v964 = vpack.c.b16 %v750, %v749
    %v965 = vpack.c.b16 %v752, %v751
    %v966 = vpack.c.b16 %v754, %v753
    %v967 = vpack.c.b16 %v756, %v755
    %v968 = vpack.c.b16 %v758, %v757
    %v969 = vpack.c.b16 %v760, %v759
    %v970 = vpack.c.b16 %v762, %v761
    %v971 = vpack.c.b16 %v764, %v763
    %v972 = vpack.c.b16 %v766, %v765
    %v973 = vpack.c.b16 %v768, %v767
    %v974 = vpack.c.b16 %v770, %v769
    %v975 = vpack.c.b16 %v772, %v771
    %v976 = vpack.c.b16 %v774, %v773
    %v977 = vpack.c.b16 %v776, %v775
    %v978 = vpack.c.b16 %v778, %v777
    %v979 = vpack.c.b16 %v780, %v779
    %v980 = vpack.c.b16 %v782, %v781
    %v981 = vpack.c.b16 %v784, %v783
    %v982 = vpack.c.b16 %v786, %v785
    %v983 = vpack.c.b16 %v788, %v787
    %v984 = vpack.c.b16 %v790, %v789
    %v985 = vpack.c.b16 %v792, %v791
    %v986 = vpack.c.b16 %v794, %v793
    %v987 = vpack.c.b16 %v796, %v795
    %v988 = vpack.c.b16 %v798, %v797
    %v989 = vpack.c.b16 %v800, %v799
    %v990 = vpack.c.b16 %v802, %v801
    %v991 = vpack.c.b16 %v804, %v803
    %v992 = vpack.c.b16 %v806, %v805
    %v993 = vpack.c.b16 %v808, %v807
    %v994 = vpack.c.b16 %v810, %v809
    %v995 = vpack.c.b16 %v812, %v811
    %v996 = vpack.c.b16 %v814, %v813
    %v997 = vpack.c.b16 %v816, %v815
    %v998 = vpack.c.b16 %v818, %v817
    %v999 = vpack.c.b16 %v820, %v819
    %v1000 = vpack.c.b16 %v822, %v821
    %v1001 = vpack.c.b16 %v824, %v823
    %v1002 = vpack.c.b16 %v826, %v825
    %v1003 = vpack.c.b16 %v828, %v827
    %v1004 = vpack.c.b16 %v830, %v829
    %v1005 = vpack.c.b16 %v832, %v831
    %v1006 = vpack.c.b16 %v834, %v833
    %v1007 = vpack.c.b16 %v836, %v835
    %v1008 = vpack.c.b16 %v838, %v837
    %v1009 = vpack.c.b16 %v840, %v839
    %v1010 = vpack.c.b16 %v842, %v841
    %v1011 = vpack.c.b16 %v844, %v843
    %v1012 = vpack.c.b16 %v846, %v845
    %v1013 = vpack.c.b16 %v848, %v847
    %v1014 = vpack.c.b16 %v850, %v849
    %v1015 = vpack.c.b16 %v852, %v851
    %v1016 = vpack.c.b16 %v854, %v853
    %v1017 = vpack.c.b16 %v856, %v855
    %v1018 = vpack.c.b16 %v858, %v857
    %v1019 = vpack.c.b16 %v860, %v859
    %v1020 = vpack.c.b16 %v862, %v861
    %v1021 = vpack.c.b16 %v864, %v863
    %v1022 = vpack.c.b16 %v866, %v865
    %v1023 = vpack.c.b16 %v868, %v867
    %v1024 = vpack.c.b16 %v870, %v869
    %v1025 = vpack.c.b16 %v872, %v871
    %v1026 = vpack.c.b16 %v874, %v873
    %v1027 = vpack.c.b16 %v876, %v875
    %v1028 = vpack.c.b16 %v878, %v877
    %v1029 = vpack.c.b16 %v880, %v879
    %v1030 = vpack.c.b16 %v882, %v881
    %v1031 = vpack.c.b16 %v884, %v883
    %v1032 = vpack.c.b16 %v886, %v885
    %v1033 = vpack.c.b16 %v888, %v887
    %v1034 = vpack.c.b16 %v890, %v889
    %v1035 = vpack.c.b16 %v892, %v891
    %v1036 = vpack.c.b16 %v894, %v893
    %v1037 = vpack.c.b16 %v896, %v895
    %v1038 = vpack.c.b16 %v898, %v897
    %v1039 = vpack.c.b16 %v900, %v899
    %v1040 = vpack.c.b16 %v902, %v901
    %v1041 = vpack.c.b16 %v904, %v903
    %v1042 = vpack.c.b16 %v906, %v905
    %v1043 = vpack.c.b16 %v908, %v907
    %v1044 = vpack.c.b16 %v910, %v909
    %v1045 = vpack.c.b16 %v912, %v911
    %v1046 = vpack.c.b16 %v914, %v913
    %v1047 = vpack.c.b16 %v916, %v915
    %v1048 = vpack.c.b16 %v918, %v917
    %v1049 = vpack.c.b16 %v920, %v919
    %v1050 = vpack.c.b16 %v922, %v921
    %1179 = vmatprep.subr.bf16.mxu0 0
    %1180 = vmatpush1.bf16.msra.mxu0 %v923
    %1181 = vmatprep.subr.bf16.mxu0 0
    %1182 = vmatpush1.bf16.msra.mxu0 %v924
    %1183 = vmatprep.subr.bf16.mxu0 0
    %1184 = vmatpush1.bf16.msra.mxu0 %v925
    %1185 = vmatprep.subr.bf16.mxu0 0
    %1186 = vmatpush1.bf16.msra.mxu0 %v926
    %1187 = vmatprep.subr.bf16.mxu0 0
    %1188 = vmatpush1.bf16.msra.mxu0 %v927
    %1189 = vmatprep.subr.bf16.mxu0 0
    %1190 = vmatpush1.bf16.msra.mxu0 %v928
    %1191 = vmatprep.subr.bf16.mxu0 0
    %1192 = vmatpush1.bf16.msra.mxu0 %v929
    %1193 = vmatprep.subr.bf16.mxu0 0
    %1194 = vmatpush1.bf16.msra.mxu0 %v930
    %1195 = vmatprep.subr.bf16.mxu0 0
    %1196 = vmatpush1.bf16.msra.mxu0 %v931
    %1197 = vmatprep.subr.bf16.mxu0 0
    %1198 = vmatpush1.bf16.msra.mxu0 %v932
    %1199 = vmatprep.subr.bf16.mxu0 0
    %1200 = vmatpush1.bf16.msra.mxu0 %v933
    %1201 = vmatprep.subr.bf16.mxu0 0
    %1202 = vmatpush1.bf16.msra.mxu0 %v934
    %1203 = vmatprep.subr.bf16.mxu0 0
    %1204 = vmatpush1.bf16.msra.mxu0 %v935
    %1205 = vmatprep.subr.bf16.mxu0 0
    %1206 = vmatpush1.bf16.msra.mxu0 %v936
    %1207 = vmatprep.subr.bf16.mxu0 0
    %1208 = vmatpush1.bf16.msra.mxu0 %v937
    %1209 = vmatprep.subr.bf16.mxu0 0
    %1210 = vmatpush1.bf16.msra.mxu0 %v938
    %1211 = vmatprep.mubr.bf16.mxu0 %v380
    %1212 = vmatmul.mubr.bf16.gmra.mrb[0].mxu0 %v379
    %v1213 = vpop.f32.mrb[0].mxu0
    %v1214 = vadd.f32 %v353, %v1213
    %v1215 = vpop.f32.mrb[0].mxu0
    %v1216 = vpop.f32.mrb[0].mxu0
    %v1217 = vpop.f32.mrb[0].mxu0
    %1218 = vdwg.mxu0
    %1219 = vmatprep.subr.bf16.mxu0 0
    %1220 = vmatpush1.bf16.msra.mxu0 %v939
    %1221 = vmatprep.subr.bf16.mxu0 0
    %1222 = vmatpush1.bf16.msra.mxu0 %v940
    %1223 = vmatprep.subr.bf16.mxu0 0
    %1224 = vmatpush1.bf16.msra.mxu0 %v941
    %1225 = vmatprep.subr.bf16.mxu0 0
    %1226 = vmatpush1.bf16.msra.mxu0 %v942
    %1227 = vmatprep.subr.bf16.mxu0 0
    %1228 = vmatpush1.bf16.msra.mxu0 %v943
    %1229 = vmatprep.subr.bf16.mxu0 0
    %1230 = vmatpush1.bf16.msra.mxu0 %v944
    %1231 = vmatprep.subr.bf16.mxu0 0
    %1232 = vmatpush1.bf16.msra.mxu0 %v945
    %1233 = vmatprep.subr.bf16.mxu0 0
    %1234 = vmatpush1.bf16.msra.mxu0 %v946
    %1235 = vmatprep.subr.bf16.mxu0 0
    %1236 = vmatpush1.bf16.msra.mxu0 %v947
    %1237 = vmatprep.subr.bf16.mxu0 0
    %1238 = vmatpush1.bf16.msra.mxu0 %v948
    %1239 = vmatprep.subr.bf16.mxu0 0
    %1240 = vmatpush1.bf16.msra.mxu0 %v949
    %1241 = vmatprep.subr.bf16.mxu0 0
    %1242 = vmatpush1.bf16.msra.mxu0 %v950
    %1243 = vmatprep.subr.bf16.mxu0 0
    %1244 = vmatpush1.bf16.msra.mxu0 %v951
    %1245 = vmatprep.subr.bf16.mxu0 0
    %1246 = vmatpush1.bf16.msra.mxu0 %v952
    %1247 = vmatprep.subr.bf16.mxu0 0
    %1248 = vmatpush1.bf16.msra.mxu0 %v953
    %1249 = vmatprep.subr.bf16.mxu0 0
    %1250 = vmatpush1.bf16.msra.mxu0 %v954
    %1251 = vmatprep.mubr.bf16.mxu0 %v382
    %1252 = vmatmul.mubr.bf16.gmra.mrb[0].mxu0 %v381
    %v1253 = vpop.f32.mrb[0].mxu0
    %v1254 = vadd.f32 %v1214, %v1253
    %v1255 = vpop.f32.mrb[0].mxu0
    %v1256 = vpop.f32.mrb[0].mxu0
    %v1257 = vpop.f32.mrb[0].mxu0
    %1258 = vdwg.mxu0
    %1259 = vmatprep.subr.bf16.mxu0 0
    %1260 = vmatpush1.bf16.msra.mxu0 %v955
    %1261 = vmatprep.subr.bf16.mxu0 0
    %1262 = vmatpush1.bf16.msra.mxu0 %v956
    %1263 = vmatprep.subr.bf16.mxu0 0
    %1264 = vmatpush1.bf16.msra.mxu0 %v957
    %1265 = vmatprep.subr.bf16.mxu0 0
    %1266 = vmatpush1.bf16.msra.mxu0 %v958
    %1267 = vmatprep.subr.bf16.mxu0 0
    %1268 = vmatpush1.bf16.msra.mxu0 %v959
    %1269 = vmatprep.subr.bf16.mxu0 0
    %1270 = vmatpush1.bf16.msra.mxu0 %v960
    %1271 = vmatprep.subr.bf16.mxu0 0
    %1272 = vmatpush1.bf16.msra.mxu0 %v961
    %1273 = vmatprep.subr.bf16.mxu0 0
    %1274 = vmatpush1.bf16.msra.mxu0 %v962
    %1275 = vmatprep.subr.bf16.mxu0 0
    %1276 = vmatpush1.bf16.msra.mxu0 %v963
    %1277 = vmatprep.subr.bf16.mxu0 0
    %1278 = vmatpush1.bf16.msra.mxu0 %v964
    %1279 = vmatprep.subr.bf16.mxu0 0
    %1280 = vmatpush1.bf16.msra.mxu0 %v965
    %1281 = vmatprep.subr.bf16.mxu0 0
    %1282 = vmatpush1.bf16.msra.mxu0 %v966
    %1283 = vmatprep.subr.bf16.mxu0 0
    %1284 = vmatpush1.bf16.msra.mxu0 %v967
    %1285 = vmatprep.subr.bf16.mxu0 0
    %1286 = vmatpush1.bf16.msra.mxu0 %v968
    %1287 = vmatprep.subr.bf16.mxu0 0
    %1288 = vmatpush1.bf16.msra.mxu0 %v969
    %1289 = vmatprep.subr.bf16.mxu0 0
    %1290 = vmatpush1.bf16.msra.mxu0 %v970
    %1291 = vmatprep.mubr.bf16.mxu0 %v384
    %1292 = vmatmul.mubr.bf16.gmra.mrb[0].mxu0 %v383
    %v1293 = vpop.f32.mrb[0].mxu0
    %v1294 = vadd.f32 %v1254, %v1293
    %v1295 = vpop.f32.mrb[0].mxu0
    %v1296 = vpop.f32.mrb[0].mxu0
    %v1297 = vpop.f32.mrb[0].mxu0
    %1298 = vdwg.mxu0
    %1299 = vmatprep.subr.bf16.mxu0 0
    %1300 = vmatpush1.bf16.msra.mxu0 %v971
    %1301 = vmatprep.subr.bf16.mxu0 0
    %1302 = vmatpush1.bf16.msra.mxu0 %v972
    %1303 = vmatprep.subr.bf16.mxu0 0
    %1304 = vmatpush1.bf16.msra.mxu0 %v973
    %1305 = vmatprep.subr.bf16.mxu0 0
    %1306 = vmatpush1.bf16.msra.mxu0 %v974
    %1307 = vmatprep.subr.bf16.mxu0 0
    %1308 = vmatpush1.bf16.msra.mxu0 %v975
    %1309 = vmatprep.subr.bf16.mxu0 0
    %1310 = vmatpush1.bf16.msra.mxu0 %v976
    %1311 = vmatprep.subr.bf16.mxu0 0
    %1312 = vmatpush1.bf16.msra.mxu0 %v977
    %1313 = vmatprep.subr.bf16.mxu0 0
    %1314 = vmatpush1.bf16.msra.mxu0 %v978
    %1315 = vmatprep.subr.bf16.mxu0 0
    %1316 = vmatpush1.bf16.msra.mxu0 %v979
    %1317 = vmatprep.subr.bf16.mxu0 0
    %1318 = vmatpush1.bf16.msra.mxu0 %v980
    %1319 = vmatprep.subr.bf16.mxu0 0
    %1320 = vmatpush1.bf16.msra.mxu0 %v981
    %1321 = vmatprep.subr.bf16.mxu0 0
    %1322 = vmatpush1.bf16.msra.mxu0 %v982
    %1323 = vmatprep.subr.bf16.mxu0 0
    %1324 = vmatpush1.bf16.msra.mxu0 %v983
    %1325 = vmatprep.subr.bf16.mxu0 0
    %1326 = vmatpush1.bf16.msra.mxu0 %v984
    %1327 = vmatprep.subr.bf16.mxu0 0
    %1328 = vmatpush1.bf16.msra.mxu0 %v985
    %1329 = vmatprep.subr.bf16.mxu0 0
    %1330 = vmatpush1.bf16.msra.mxu0 %v986
    %1331 = vmatprep.mubr.bf16.mxu0 %v386
    %1332 = vmatmul.mubr.bf16.gmra.mrb[0].mxu0 %v385
    %v1333 = vpop.f32.mrb[0].mxu0
    %v1334 = vadd.f32 %v1294, %v1333
    %v1335 = vpop.f32.mrb[0].mxu0
    %v1336 = vpop.f32.mrb[0].mxu0
    %v1337 = vpop.f32.mrb[0].mxu0
    %1338 = vdwg.mxu0
    %1339 = vmatprep.subr.bf16.mxu0 0
    %1340 = vmatpush1.bf16.msra.mxu0 %v987
    %1341 = vmatprep.subr.bf16.mxu0 0
    %1342 = vmatpush1.bf16.msra.mxu0 %v988
    %1343 = vmatprep.subr.bf16.mxu0 0
    %1344 = vmatpush1.bf16.msra.mxu0 %v989
    %1345 = vmatprep.subr.bf16.mxu0 0
    %1346 = vmatpush1.bf16.msra.mxu0 %v990
    %1347 = vmatprep.subr.bf16.mxu0 0
    %1348 = vmatpush1.bf16.msra.mxu0 %v991
    %1349 = vmatprep.subr.bf16.mxu0 0
    %1350 = vmatpush1.bf16.msra.mxu0 %v992
    %1351 = vmatprep.subr.bf16.mxu0 0
    %1352 = vmatpush1.bf16.msra.mxu0 %v993
    %1353 = vmatprep.subr.bf16.mxu0 0
    %1354 = vmatpush1.bf16.msra.mxu0 %v994
    %1355 = vmatprep.subr.bf16.mxu0 0
    %1356 = vmatpush1.bf16.msra.mxu0 %v995
    %1357 = vmatprep.subr.bf16.mxu0 0
    %1358 = vmatpush1.bf16.msra.mxu0 %v996
    %1359 = vmatprep.subr.bf16.mxu0 0
    %1360 = vmatpush1.bf16.msra.mxu0 %v997
    %1361 = vmatprep.subr.bf16.mxu0 0
    %1362 = vmatpush1.bf16.msra.mxu0 %v998
    %1363 = vmatprep.subr.bf16.mxu0 0
    %1364 = vmatpush1.bf16.msra.mxu0 %v999
    %1365 = vmatprep.subr.bf16.mxu0 0
    %1366 = vmatpush1.bf16.msra.mxu0 %v1000
    %1367 = vmatprep.subr.bf16.mxu0 0
    %1368 = vmatpush1.bf16.msra.mxu0 %v1001
    %1369 = vmatprep.subr.bf16.mxu0 0
    %1370 = vmatpush1.bf16.msra.mxu0 %v1002
    %1371 = vmatprep.mubr.bf16.mxu0 %v388
    %1372 = vmatmul.mubr.bf16.gmra.mrb[0].mxu0 %v387
    %v1373 = vpop.f32.mrb[0].mxu0
    %v1374 = vadd.f32 %v1334, %v1373
    %v1375 = vpop.f32.mrb[0].mxu0
    %v1376 = vpop.f32.mrb[0].mxu0
    %v1377 = vpop.f32.mrb[0].mxu0
    %1378 = vdwg.mxu0
    %1379 = vmatprep.subr.bf16.mxu0 0
    %1380 = vmatpush1.bf16.msra.mxu0 %v1003
    %1381 = vmatprep.subr.bf16.mxu0 0
    %1382 = vmatpush1.bf16.msra.mxu0 %v1004
    %1383 = vmatprep.subr.bf16.mxu0 0
    %1384 = vmatpush1.bf16.msra.mxu0 %v1005
    %1385 = vmatprep.subr.bf16.mxu0 0
    %1386 = vmatpush1.bf16.msra.mxu0 %v1006
    %1387 = vmatprep.subr.bf16.mxu0 0
    %1388 = vmatpush1.bf16.msra.mxu0 %v1007
    %1389 = vmatprep.subr.bf16.mxu0 0
    %1390 = vmatpush1.bf16.msra.mxu0 %v1008
    %1391 = vmatprep.subr.bf16.mxu0 0
    %1392 = vmatpush1.bf16.msra.mxu0 %v1009
    %1393 = vmatprep.subr.bf16.mxu0 0
    %1394 = vmatpush1.bf16.msra.mxu0 %v1010
    %1395 = vmatprep.subr.bf16.mxu0 0
    %1396 = vmatpush1.bf16.msra.mxu0 %v1011
    %1397 = vmatprep.subr.bf16.mxu0 0
    %1398 = vmatpush1.bf16.msra.mxu0 %v1012
    %1399 = vmatprep.subr.bf16.mxu0 0
    %1400 = vmatpush1.bf16.msra.mxu0 %v1013
    %1401 = vmatprep.subr.bf16.mxu0 0
    %1402 = vmatpush1.bf16.msra.mxu0 %v1014
    %1403 = vmatprep.subr.bf16.mxu0 0
    %1404 = vmatpush1.bf16.msra.mxu0 %v1015
    %1405 = vmatprep.subr.bf16.mxu0 0
    %1406 = vmatpush1.bf16.msra.mxu0 %v1016
    %1407 = vmatprep.subr.bf16.mxu0 0
    %1408 = vmatpush1.bf16.msra.mxu0 %v1017
    %1409 = vmatprep.subr.bf16.mxu0 0
    %1410 = vmatpush1.bf16.msra.mxu0 %v1018
    %1411 = vmatprep.mubr.bf16.mxu0 %v390
    %1412 = vmatmul.mubr.bf16.gmra.mrb[0].mxu0 %v389
    %v1413 = vpop.f32.mrb[0].mxu0
    %v1414 = vadd.f32 %v1374, %v1413
    %v1415 = vpop.f32.mrb[0].mxu0
    %v1416 = vpop.f32.mrb[0].mxu0
    %v1417 = vpop.f32.mrb[0].mxu0
    %1418 = vdwg.mxu0
    %1419 = vmatprep.subr.bf16.mxu0 0
    %1420 = vmatpush1.bf16.msra.mxu0 %v1019
    %1421 = vmatprep.subr.bf16.mxu0 0
    %1422 = vmatpush1.bf16.msra.mxu0 %v1020
    %1423 = vmatprep.subr.bf16.mxu0 0
    %1424 = vmatpush1.bf16.msra.mxu0 %v1021
    %1425 = vmatprep.subr.bf16.mxu0 0
    %1426 = vmatpush1.bf16.msra.mxu0 %v1022
    %1427 = vmatprep.subr.bf16.mxu0 0
    %1428 = vmatpush1.bf16.msra.mxu0 %v1023
    %1429 = vmatprep.subr.bf16.mxu0 0
    %1430 = vmatpush1.bf16.msra.mxu0 %v1024
    %1431 = vmatprep.subr.bf16.mxu0 0
    %1432 = vmatpush1.bf16.msra.mxu0 %v1025
    %1433 = vmatprep.subr.bf16.mxu0 0
    %1434 = vmatpush1.bf16.msra.mxu0 %v1026
    %1435 = vmatprep.subr.bf16.mxu0 0
    %1436 = vmatpush1.bf16.msra.mxu0 %v1027
    %1437 = vmatprep.subr.bf16.mxu0 0
    %1438 = vmatpush1.bf16.msra.mxu0 %v1028
    %1439 = vmatprep.subr.bf16.mxu0 0
    %1440 = vmatpush1.bf16.msra.mxu0 %v1029
    %1441 = vmatprep.subr.bf16.mxu0 0
    %1442 = vmatpush1.bf16.msra.mxu0 %v1030
    %1443 = vmatprep.subr.bf16.mxu0 0
    %1444 = vmatpush1.bf16.msra.mxu0 %v1031
    %1445 = vmatprep.subr.bf16.mxu0 0
    %1446 = vmatpush1.bf16.msra.mxu0 %v1032
    %1447 = vmatprep.subr.bf16.mxu0 0
    %1448 = vmatpush1.bf16.msra.mxu0 %v1033
    %1449 = vmatprep.subr.bf16.mxu0 0
    %1450 = vmatpush1.bf16.msra.mxu0 %v1034
    %1451 = vmatprep.mubr.bf16.mxu0 %v392
    %1452 = vmatmul.mubr.bf16.gmra.mrb[0].mxu0 %v391
    %v1453 = vpop.f32.mrb[0].mxu0
    %v1454 = vadd.f32 %v1414, %v1453
    %v1455 = vpop.f32.mrb[0].mxu0
    %v1456 = vpop.f32.mrb[0].mxu0
    %v1457 = vpop.f32.mrb[0].mxu0
    %1458 = vdwg.mxu0
    %1459 = vmatprep.subr.bf16.mxu0 0
    %1460 = vmatpush1.bf16.msra.mxu0 %v1035
    %1461 = vmatprep.subr.bf16.mxu0 0
    %1462 = vmatpush1.bf16.msra.mxu0 %v1036
    %1463 = vmatprep.subr.bf16.mxu0 0
    %1464 = vmatpush1.bf16.msra.mxu0 %v1037
    %1465 = vmatprep.subr.bf16.mxu0 0
    %1466 = vmatpush1.bf16.msra.mxu0 %v1038
    %1467 = vmatprep.subr.bf16.mxu0 0
    %1468 = vmatpush1.bf16.msra.mxu0 %v1039
    %1469 = vmatprep.subr.bf16.mxu0 0
    %1470 = vmatpush1.bf16.msra.mxu0 %v1040
    %1471 = vmatprep.subr.bf16.mxu0 0
    %1472 = vmatpush1.bf16.msra.mxu0 %v1041
    %1473 = vmatprep.subr.bf16.mxu0 0
    %1474 = vmatpush1.bf16.msra.mxu0 %v1042
    %1475 = vmatprep.subr.bf16.mxu0 0
    %1476 = vmatpush1.bf16.msra.mxu0 %v1043
    %1477 = vmatprep.subr.bf16.mxu0 0
    %1478 = vmatpush1.bf16.msra.mxu0 %v1044
    %1479 = vmatprep.subr.bf16.mxu0 0
    %1480 = vmatpush1.bf16.msra.mxu0 %v1045
    %1481 = vmatprep.subr.bf16.mxu0 0
    %1482 = vmatpush1.bf16.msra.mxu0 %v1046
    %1483 = vmatprep.subr.bf16.mxu0 0
    %1484 = vmatpush1.bf16.msra.mxu0 %v1047
    %1485 = vmatprep.subr.bf16.mxu0 0
    %1486 = vmatpush1.bf16.msra.mxu0 %v1048
    %1487 = vmatprep.subr.bf16.mxu0 0
    %1488 = vmatpush1.bf16.msra.mxu0 %v1049
    %1489 = vmatprep.subr.bf16.mxu0 0
    %1490 = vmatpush1.bf16.msra.mxu0 %v1050
    %1491 = vmatprep.mubr.bf16.mxu0 %v394
    %1492 = vmatmul.mubr.bf16.gmra.mrb[0].mxu0 %v393
    %v1493 = vpop.f32.mrb[0].mxu0
    %v1494 = vadd.f32 %v1454, %v1493
    %v1495 = vpop.f32.mrb[0].mxu0
    %v1496 = vpop.f32.mrb[0].mxu0
    %v1497 = vpop.f32.mrb[0].mxu0
    %1498 = vdwg.mxu0
    %v1499 = vmax.f32 %v1494, 0.0
    %v1500 = vpack.c.bf16 %v1499, %v1499
    %v1501 = vld [vmem:[#allocation8] sm:$0xf]
    %v1502 = vld [vmem:[#allocation8 + $0x4] sm:$0xf]
    %v1503 = vld [vmem:[#allocation8 + $0x8] sm:$0xf]
    %v1504 = vld [vmem:[#allocation8 + $0xc] sm:$0xf]
    %v1505 = vld [vmem:[#allocation8 + $0x10] sm:$0xf]
    %v1506 = vld [vmem:[#allocation8 + $0x14] sm:$0xf]
    %v1507 = vld [vmem:[#allocation8 + $0x18] sm:$0xf]
    %v1508 = vld [vmem:[#allocation8 + $0x1c] sm:$0xf]
    %v1509 = vld [vmem:[#allocation8 + $0x20] sm:$0xf]
    %v1510 = vld [vmem:[#allocation8 + $0x24] sm:$0xf]
    %v1511 = vld [vmem:[#allocation8 + $0x28] sm:$0xf]
    %v1512 = vld [vmem:[#allocation8 + $0x2c] sm:$0xf]
    %v1513 = vld [vmem:[#allocation8 + $0x30] sm:$0xf]
    %v1514 = vld [vmem:[#allocation8 + $0x34] sm:$0xf]
    %v1515 = vld [vmem:[#allocation8 + $0x38] sm:$0xf]
    %v1516 = vld [vmem:[#allocation8 + $0x3c] sm:$0xf]
    %v1517 = vld [vmem:[#allocation10] sm:$0x1]
    %v1519 = vlaneseq
    %v1520 = vshrl.u32 %v1519, 7
    %v1521 = vsub.s32 0, %v1520
    %v1522 = vrot.slane %v1517, %v1521
    %v1540 = vunpack.c.l.b16 %v1501
    %v1541 = vunpack.c.l.b16 %v1502
    %v1542 = vunpack.c.l.b16 %v1503
    %v1543 = vunpack.c.l.b16 %v1504
    %v1544 = vunpack.c.l.b16 %v1505
    %v1545 = vunpack.c.l.b16 %v1506
    %v1546 = vunpack.c.l.b16 %v1507
    %v1547 = vunpack.c.l.b16 %v1508
    %v1548 = vunpack.c.l.b16 %v1509
    %v1549 = vunpack.c.l.b16 %v1510
    %v1550 = vunpack.c.l.b16 %v1511
    %v1551 = vunpack.c.l.b16 %v1512
    %v1552 = vunpack.c.l.b16 %v1513
    %v1553 = vunpack.c.l.b16 %v1514
    %v1554 = vunpack.c.l.b16 %v1515
    %v1555 = vunpack.c.l.b16 %v1516
    %v1556 = vpack.c.b16 %v1541, %v1540
    %v1557 = vpack.c.b16 %v1543, %v1542
    %v1558 = vpack.c.b16 %v1545, %v1544
    %v1559 = vpack.c.b16 %v1547, %v1546
    %v1560 = vpack.c.b16 %v1549, %v1548
    %v1561 = vpack.c.b16 %v1551, %v1550
    %v1562 = vpack.c.b16 %v1553, %v1552
    %v1563 = vpack.c.b16 %v1555, %v1554
    %1572 = vmatprep.subr.bf16.mxu0 0
    %1573 = vmatpush1.bf16.msra.mxu0 %v1556
    %1574 = vmatprep.subr.bf16.mxu0 0
    %1575 = vmatpush1.bf16.msra.mxu0 %v1557
    %1576 = vmatprep.subr.bf16.mxu0 0
    %1577 = vmatpush1.bf16.msra.mxu0 %v1558
    %1578 = vmatprep.subr.bf16.mxu0 0
    %1579 = vmatpush1.bf16.msra.mxu0 %v1559
    %1580 = vmatprep.subr.bf16.mxu0 0
    %1581 = vmatpush1.bf16.msra.mxu0 %v1560
    %1582 = vmatprep.subr.bf16.mxu0 0
    %1583 = vmatpush1.bf16.msra.mxu0 %v1561
    %1584 = vmatprep.subr.bf16.mxu0 0
    %1585 = vmatpush1.bf16.msra.mxu0 %v1562
    %1586 = vmatprep.subr.bf16.mxu0 0
    %1587 = vmatpush1.bf16.msra.mxu0 %v1563
    %1588 = vmatprep.subr.bf16.mxu0 0
    %1589 = vmatpush1.bf16.msra.mxu0 0
    %1590 = vmatprep.subr.bf16.mxu0 0
    %1591 = vmatpush1.bf16.msra.mxu0 0
    %1592 = vmatprep.subr.bf16.mxu0 0
    %1593 = vmatpush1.bf16.msra.mxu0 0
    %1594 = vmatprep.subr.bf16.mxu0 0
    %1595 = vmatpush1.bf16.msra.mxu0 0
    %1596 = vmatprep.subr.bf16.mxu0 0
    %1597 = vmatpush1.bf16.msra.mxu0 0
    %1598 = vmatprep.subr.bf16.mxu0 0
    %1599 = vmatpush1.bf16.msra.mxu0 0
    %1600 = vmatprep.subr.bf16.mxu0 0
    %1601 = vmatpush1.bf16.msra.mxu0 0
    %1602 = vmatprep.subr.bf16.mxu0 0
    %1603 = vmatpush1.bf16.msra.mxu0 0
    %1604 = vmatprep.mubr.bf16.mxu0 0
    %1605 = vmatmul.mubr.bf16.gmra.mrb[0].mxu0 %v1500
    %v1606 = vpop.f32.mrb[0].mxu0
    %v1607 = vadd.f32 %v1522, %v1606
    %v1608 = vpop.f32.mrb[0].mxu0
    %v1609 = vpop.f32.mrb[0].mxu0
    %v1610 = vpop.f32.mrb[0].mxu0
    %1611 = vdwg.mxu0
    %1612 = vmax.xlane.f32.xlu0 %v1607
    %v1613 = vpop.xlane.xlu0 %1612
    %v1614 = vsub.f32 %v1607, %v1613
    %v1615 = vmul.f32 %v1614, 1.442695
    %v1616 = vpow.pop %v1615
    %1617 = vadd.xlane.f32.xlu0 %v1616
    %v1618 = vpop.xlane.xlu0 %1617
    %v1619 = vlog2.pop %v1618
    %v1620 = vmul.f32 %v1619, 0.6931472
    %v1621 = vsub.f32 %v1614, %v1620
    %1622 = vst [vmem:[#allocation11] sm:$0xff] %v1621
    // Predicated region
    $region42: #{net_forward.5} parent=1 // pred_check
      _
    $region43: #{net_forward.5} parent=1 // pred_check_branch
      %1624 = sbr.rel (0) target = $region45
    $region44: #{net_forward.5} parent=1 // pred_region
      %s1626 = ssub.s32 128, 128
      %1627 = vsyncadd [#allocation4], %s1626
      %s1629 = sshll.u32 [#allocation11], 4
      %s1630 = int_to_ptr.vmem [resolvable:$true] %s1629
      %1632 = dma.vmem_to_hbm [thread:$0]  %s1630, 128, %s5, [#allocation4]
    $region45: #{net_forward.5} parent=1 // pred_fallthru
      _
    // Predicated region
    $region46: #{net_forward.5} parent=1 // pred_check
      _
    $region47: #{net_forward.5} parent=1 // pred_check_branch
      %1634 = sbr.rel (0) target = $region49
    $region48: #{net_forward.5} parent=1 // pred_region
      %1635 = dma.done [#allocation4], 128
    $region49: #{net_forward.5} parent=1 // pred_fallthru
      _
    %1636 = vsyncpa [#allocation3], 1
    %1637 = vsyncpa [#allocation6], 1
    %1638 = vsyncpa [#allocation9], 1
    %1639 = vsyncpa [#allocation4], 1

// kernel: net_forward.4
$region0: #{net_forward.4}
  #allocation0 [shape = 'u32[]', space=smem, size = 0x4, offset = 0x4, fixed_abs, tag = 'smem constant byte address 0x4 - core index']
  #allocation1 [shape = 'u32[144,128]{1,0:T(1,128)}', space=vmem, size = 0x12000, scoped, tag = 'internal scratch']
  %s0 = inlined_call_operand.hbm [shape: bf16[2,12,12,128], index: 0, kind: input, shape index: {}]
  %s1 = inlined_call_operand.hbm [shape: bf16[25,128,128], index: 1, kind: input, shape index: {}]
  %s2 = inlined_call_operand.hbm [shape: f32[1,128], index: 2, kind: input, shape index: {}]
  %s3 = inlined_call_operand.hbm [shape: bf16[2,16,128], index: 3, kind: output, shape index: {}]
  %s4 = sld [smem:[#allocation0]]
  $region57: #{net_forward.4} parent=0
    _
  %s6 = ssub.s32 1, %s4
  %s7 = scalar_select 0, %s6, %s4
  $region1: #{net_forward.4} parent=0
    #allocation2 [shape = 'u8[98304]{0}', space=vmem, size = 0x18000, scoped, tag = 'input window, operand 0']
    #allocation3 [shape = 's32[2]{0}', space=sflag, size = 0x8, scoped, tag = 'scoped memory for net_forward.4']
    #allocation4 [shape = 's32[2]{0}', space=sflag, size = 0x8, scoped, tag = 'scoped memory for net_forward.4']
    #allocation5 [shape = 'u8[819200]{0}', space=vmem, size = 0xc8000, scoped, tag = 'input window, operand 1, single buffered']
    #allocation6 [shape = 's32[1]{0}', space=sflag, size = 0x4, scoped, tag = 'scoped memory for net_forward.4']
    #allocation7 [shape = 'u8[512]{0}', space=vmem, size = 0x400, scoped, tag = 'input window, operand 2, single buffered']
    #allocation8 [shape = 'u8[8192]{0}', space=vmem, size = 0x2000, scoped, tag = 'output window, operand 0']
    %8 = vsyncpa [#allocation3], 0
    %s9 = scalar_lea.sflag [#allocation3], 1
    %10 = vsyncpa %s9, 0
    %11 = vsyncpa [#allocation6], 0
    %12 = vsyncpa [#allocation4], 0
    %s13 = scalar_lea.sflag [#allocation4], 1
    %14 = vsyncpa %s13, 0
    loop: start=0, step=1, limit=4
    $region2: #{net_forward.4} parent=1 // loop_pre_header
      _
    $region3: #{net_forward.4} parent=1 // loop_header
      %s16 = sphi 0, %s20
      %p17 = scmp.ge.s32.totalorder %s16, 4
      %s26 = sphi 0, %s28
      %s29 = sphi 0, %s26
      %s30 = sphi 0, %s29
      %s46 = sphi 0, %s30
      %s50 = sphi 0, %s50
      %s52 = sphi 0, %s50
      %s53 = sphi 0, %s52
      %s67 = sphi 0, %s53
      %s71 = sphi 0, %s71
      %s73 = sphi 0, %s71
      %s74 = sphi 0, %s73
      %s88 = sphi 0, %s74
      %s94 = sphi 0, %s96
      %s97 = sphi 0, %s94
      %s98 = sphi 0, %s97
      %s114 = sphi 0, %s98
    $region4: #{net_forward.4} parent=1 // loop_header_branch
      %19 = sbr.rel (%p17) target = $region8
    $region5: #{net_forward.4} parent=1 // loop_body
      %s21 = ssub.s32 %s16, 1
      %s22 = ssub.s32 %s16, 2
      %s23 = sadd.s32 %s16, 1
      %s24 = ssub.s32 %s16, %s23
      %p25 = scmp.eq.s32.totalorder %s24, 0
      %s27 = sadd.s32 %s26, 1
      %s28 = scalar_select %p25, %s26, %s27
      %p31 = pneg %p25
      %p32 = scmp.eq.s32.totalorder %s16, 1
      %p33 = por %p31, %p32
      %p34 = scmp.ne.s32.totalorder %s26, %s29
      %p35 = scmp.eq.s32.totalorder %s16, 0
      %p36 = por %p34, %p35
      %p37 = scmp.ne.s32.totalorder %s26, %s29
      %p38 = scmp.eq.s32.totalorder %s21, 1
      %p39 = por %p37, %p38
      %p40 = scmp.ne.s32.totalorder %s29, %s30
      %p41 = scmp.eq.s32.totalorder %s21, 0
      %p42 = por %p40, %p41
      %p43 = scmp.ne.s32.totalorder %s29, %s30
      %p44 = scmp.eq.s32.totalorder %s22, 1
      %p45 = por %p43, %p44
      %p47 = scmp.ne.s32.totalorder %s30, %s46
      %p48 = scmp.eq.s32.totalorder %s22, 0
      %p49 = por %p47, %p48
      %s51 = sadd.s32 %s50, 1
      %p54 = scmp.eq.s32.totalorder %s16, 1
      %p55 = scmp.ne.s32.totalorder %s50, %s52
      %p56 = scmp.eq.s32.totalorder %s16, 0
      %p57 = por %p55, %p56
      %p58 = scmp.ne.s32.totalorder %s50, %s52
      %p59 = scmp.eq.s32.totalorder %s21, 1
      %p60 = por %p58, %p59
      %p61 = scmp.ne.s32.totalorder %s52, %s53
      %p62 = scmp.eq.s32.totalorder %s21, 0
      %p63 = por %p61, %p62
      %p64 = scmp.ne.s32.totalorder %s52, %s53
      %p65 = scmp.eq.s32.totalorder %s22, 1
      %p66 = por %p64, %p65
      %p68 = scmp.ne.s32.totalorder %s53, %s67
      %p69 = scmp.eq.s32.totalorder %s22, 0
      %p70 = por %p68, %p69
      %s72 = sadd.s32 %s71, 1
      %p75 = scmp.eq.s32.totalorder %s16, 1
      %p76 = scmp.ne.s32.totalorder %s71, %s73
      %p77 = scmp.eq.s32.totalorder %s16, 0
      %p78 = por %p76, %p77
      %p79 = scmp.ne.s32.totalorder %s71, %s73
      %p80 = scmp.eq.s32.totalorder %s21, 1
      %p81 = por %p79, %p80
      %p82 = scmp.ne.s32.totalorder %s73, %s74
      %p83 = scmp.eq.s32.totalorder %s21, 0
      %p84 = por %p82, %p83
      %p85 = scmp.ne.s32.totalorder %s73, %s74
      %p86 = scmp.eq.s32.totalorder %s22, 1
      %p87 = por %p85, %p86
      %p89 = scmp.ne.s32.totalorder %s74, %s88
      %p90 = scmp.eq.s32.totalorder %s22, 0
      %p91 = por %p89, %p90
      %s92 = ssub.s32 %s16, %s23
      %p93 = scmp.eq.s32.totalorder %s92, 0
      %s95 = sadd.s32 %s94, 1
      %s96 = scalar_select %p93, %s94, %s95
      %p99 = pneg %p93
      %p100 = scmp.eq.s32.totalorder %s16, 1
      %p101 = por %p99, %p100
      %p102 = scmp.ne.s32.totalorder %s94, %s97
      %p103 = scmp.eq.s32.totalorder %s16, 0
      %p104 = por %p102, %p103
      %p105 = scmp.ne.s32.totalorder %s94, %s97
      %p106 = scmp.eq.s32.totalorder %s21, 1
      %p107 = por %p105, %p106
      %p108 = scmp.ne.s32.totalorder %s97, %s98
      %p109 = scmp.eq.s32.totalorder %s21, 0
      %p110 = por %p108, %p109
      %p111 = scmp.ne.s32.totalorder %s97, %s98
      %p112 = scmp.eq.s32.totalorder %s22, 1
      %p113 = por %p111, %p112
      %p115 = scmp.ne.s32.totalorder %s98, %s114
      %p116 = scmp.eq.s32.totalorder %s22, 0
      %p117 = por %p115, %p116
      %p118 = scmp.le.s32.totalorder 1, %s16
      %p119 = scmp.lt.s32.totalorder %s16, 3
      %p120 = pnand %p118, %p119
      %p121 = pneg %p120
      // Predicated region
      $region9: #{net_forward.4} parent=5 // pred_check
        _
      $region10: #{net_forward.4} parent=5 // pred_check_branch
        %123 = sbr.rel (%p120) target = $region12
      $region11: #{net_forward.4} parent=5 // pred_region
        %s124 = ssub.s32 %s16, 1
        // Predicated region
        $region13: #{net_forward.4} parent=11 // pred_check
          %p125 = pneg %p63
        $region14: #{net_forward.4} parent=11 // pred_check_branch
          %127 = sbr.rel (%p125) target = $region16
        $region15: #{net_forward.4} parent=11 // pred_region
          %s129 = ssub.s32 25600, 25600
          %130 = vsyncadd [#allocation6], %s129
          %s131 = sshll.u32 [#allocation5], 4
          %s132 = int_to_ptr.vmem [resolvable:$true] %s131
          %137 = dma.hbm_to_vmem [thread:$0]  %s1, 25600, %s132, [#allocation6], 64, 64, 4
        $region16: #{net_forward.4} parent=11 // pred_fallthru
          _
        // Predicated region
        $region17: #{net_forward.4} parent=11 // pred_check
          %p138 = pneg %p84
        $region18: #{net_forward.4} parent=11 // pred_check_branch
          %140 = sbr.rel (%p138) target = $region20
        $region19: #{net_forward.4} parent=11 // pred_region
          %s142 = ssub.s32 16, 16
          %143 = vsyncadd [#allocation6], %s142
          %s145 = sshll.u32 [#allocation7], 4
          %s146 = int_to_ptr.vmem [resolvable:$true] %s145
          %148 = dma.hbm_to_vmem [thread:$0]  %s2, 16, %s146, [#allocation6]
        $region20: #{net_forward.4} parent=11 // pred_fallthru
          _
      $region12: #{net_forward.4} parent=5 // pred_fallthru
        _
      %p149 = scmp.lt.s32.totalorder %s16, 2
      // Predicated region
      $region21: #{net_forward.4} parent=5 // pred_check
        %p150 = pneg %p149
      $region22: #{net_forward.4} parent=5 // pred_check_branch
        %152 = sbr.rel (%p150) target = $region24
      $region23: #{net_forward.4} parent=5 // pred_region
        // Predicated region
        $region25: #{net_forward.4} parent=23 // pred_check
          %p153 = pneg %p36
        $region26: #{net_forward.4} parent=23 // pred_check_branch
          %155 = sbr.rel (%p153) target = $region28
        $region27: #{net_forward.4} parent=23 // pred_region
          %s156 = sand.u32 %s26, 1
          %s157 = scalar_lea.sflag [#allocation3], %s156
          %s158 = sand.u32 %s26, 1
          %s159 = smul.addr %s158, 96
          %s160 = scalar_lea.vmem [#allocation2], %s159
          %s162 = ssub.s32 1536, 1536
          %163 = vsyncadd %s157, %s162
          %s164 = smul.addr %s16, 24
          %s165 = smul.addr %s164, 64
          %s166 = scalar_lea.hbm %s0, %s165
          %s167 = sshll.u32 %s160, 4
          %s168 = int_to_ptr.vmem [resolvable:$true] %s167
          %173 = dma.hbm_to_vmem [thread:$0]  %s166, 1536, %s168, %s157, 64, 64, 4
        $region28: #{net_forward.4} parent=23 // pred_fallthru
          _
      $region24: #{net_forward.4} parent=5 // pred_fallthru
        _
      %p174 = scmp.le.s32.totalorder 1, %s16
      %p175 = scmp.lt.s32.totalorder %s16, 3
      %p176 = pnand %p174, %p175
      %p177 = pneg %p176
      // Predicated region
      $region29: #{net_forward.4} parent=5 // pred_check
        _
      $region30: #{net_forward.4} parent=5 // pred_check_branch
        %179 = sbr.rel (%p176) target = $region32
      $region31: #{net_forward.4} parent=5 // pred_region
        %s180 = ssub.s32 %s16, 1
        %s181 = sand.u32 %s29, 1
        %s182 = scalar_lea.sflag [#allocation3], %s181
        %s183 = sand.u32 %s29, 1
        %s184 = smul.addr %s183, 96
        %s185 = scalar_lea.vmem [#allocation2], %s184
        // Predicated region
        $region33: #{net_forward.4} parent=31 // pred_check
          %p186 = pneg %p42
        $region34: #{net_forward.4} parent=31 // pred_check_branch
          %188 = sbr.rel (%p186) target = $region36
        $region35: #{net_forward.4} parent=31 // pred_region
          %189 = dma.done %s182, 1536
        $region36: #{net_forward.4} parent=31 // pred_fallthru
          _
        // Predicated region
        $region37: #{net_forward.4} parent=31 // pred_check
          %p190 = pneg %p63
        $region38: #{net_forward.4} parent=31 // pred_check_branch
          %192 = sbr.rel (%p190) target = $region40
        $region39: #{net_forward.4} parent=31 // pred_region
          %193 = dma.done [#allocation6], 25600
        $region40: #{net_forward.4} parent=31 // pred_fallthru
          _
        // Predicated region
        $region41: #{net_forward.4} parent=31 // pred_check
          %p194 = pneg %p84
        $region42: #{net_forward.4} parent=31 // pred_check_branch
          %196 = sbr.rel (%p194) target = $region44
        $region43: #{net_forward.4} parent=31 // pred_region
          %197 = dma.done [#allocation6], 16
        $region44: #{net_forward.4} parent=31 // pred_fallthru
          _
        %s198 = sand.u32 %s29, 1
        %s199 = scalar_lea.sflag [#allocation3], %s198
        %s200 = sand.u32 %s29, 1
        %s201 = smul.addr %s200, 96
        %s202 = scalar_lea.vmem [#allocation2], %s201
        %p203 = pneg %p42
        %p204 = pneg %p39
        %p205 = pneg %p63
        %p206 = pneg %p60
        %p207 = pneg %p84
        %p208 = pneg %p81
        %p209 = pneg %p110
        %p210 = pneg %p107
        %s211 = sand.u32 %s97, 1
        %s212 = scalar_lea.sflag [#allocation4], %s211
        %s213 = sand.u32 %s97, 1
        %s214 = smul.addr %s213, 8
        %s215 = scalar_lea.vmem [#allocation8], %s214
        %v217 = vld [vmem:[%s185] sm:$0xf]
        %v218 = vld [vmem:[%s185 + $0x4] sm:$0x3]
        %v219 = vld [vmem:[%s185 + $0x8] sm:$0xf]
        %v220 = vld [vmem:[%s185 + $0xc] sm:$0x3]
        %v221 = vld [vmem:[%s185 + $0x10] sm:$0xf]
        %v222 = vld [vmem:[%s185 + $0x14] sm:$0x3]
        %v223 = vld [vmem:[%s185 + $0x18] sm:$0xf]
        %v224 = vld [vmem:[%s185 + $0x1c] sm:$0x3]
        %v225 = vld [vmem:[%s185 + $0x20] sm:$0xf]
        %v226 = vld [vmem:[%s185 + $0x24] sm:$0x3]
        %v227 = vld [vmem:[%s185 + $0x28] sm:$0xf]
        %v228 = vld [vmem:[%s185 + $0x2c] sm:$0x3]
        %v229 = vld [vmem:[%s185 + $0x30] sm:$0xf]
        %v230 = vld [vmem:[%s185 + $0x34] sm:$0x3]
        %v231 = vld [vmem:[%s185 + $0x38] sm:$0xf]
        %v232 = vld [vmem:[%s185 + $0x3c] sm:$0x3]
        %v233 = vld [vmem:[%s185 + $0x40] sm:$0xf]
        %v234 = vld [vmem:[%s185 + $0x44] sm:$0x3]
        %v235 = vld [vmem:[%s185 + $0x48] sm:$0xf]
        %v236 = vld [vmem:[%s185 + $0x4c] sm:$0x3]
        %v237 = vld [vmem:[%s185 + $0x50] sm:$0xf]
        %v238 = vld [vmem:[%s185 + $0x54] sm:$0x3]
        %v239 = vld [vmem:[%s185 + $0x58] sm:$0xf]
        %v240 = vld [vmem:[%s185 + $0x5c] sm:$0x3]
        %v241 = vld [vmem:[#allocation5] sm:$0xf]
        %v242 = vld [vmem:[#allocation5 + $0x4] sm:$0xf]
        %v243 = vld [vmem:[#allocation5 + $0x8] sm:$0xf]
        %v244 = vld [vmem:[#allocation5 + $0xc] sm:$0xf]
        %v245 = vld [vmem:[#allocation5 + $0x10] sm:$0xf]
        %v246 = vld [vmem:[#allocation5 + $0x14] sm:$0xf]
        %v247 = vld [vmem:[#allocation5 + $0x18] sm:$0xf]
        %v248 = vld [vmem:[#allocation5 + $0x1c] sm:$0xf]
        %v249 = vld [vmem:[#allocation5 + $0x20] sm:$0xf]
        %v250 = vld [vmem:[#allocation5 + $0x24] sm:$0xf]
        %v251 = vld [vmem:[#allocation5 + $0x28] sm:$0xf]
        %v252 = vld [vmem:[#allocation5 + $0x2c] sm:$0xf]
        %v253 = vld [vmem:[#allocation5 + $0x30] sm:$0xf]
        %v254 = vld [vmem:[#allocation5 + $0x34] sm:$0xf]
        %v255 = vld [vmem:[#allocation5 + $0x38] sm:$0xf]
        %v256 = vld [vmem:[#allocation5 + $0x3c] sm:$0xf]
        %vm257 = vsmask.f32 3328
        %vm258 = vsmask.f32 7440
        %vm259 = vmor %vm257, %vm258
        %v261 = vshrl.u32 %v217, 16
        %v263 = vrot.slane %v261, 4
        %v264 = vshll.u32 %v217, 16
        %v266 = vrot.slane %v264, 5
        %v267 = vor.u32 %v263, %v266
        %v268 = vrot.slane %v267, 4
        %v270 = vshll.u32 %v218, 16
        %v272 = vrot.slane %v270, 5
        %v273 = vsel %vm259, %v268, %v272
        %v275 = vshrl.u32 %v219, 16
        %v277 = vrot.slane %v275, 4
        %v278 = vshll.u32 %v219, 16
        %v280 = vrot.slane %v278, 5
        %v281 = vor.u32 %v277, %v280
        %v282 = vrot.slane %v281, 4
        %v284 = vshll.u32 %v220, 16
        %v286 = vrot.slane %v284, 5
        %v287 = vsel %vm259, %v282, %v286
        %v289 = vshrl.u32 %v221, 16
        %v291 = vrot.slane %v289, 4
        %v292 = vshll.u32 %v221, 16
        %v294 = vrot.slane %v292, 5
        %v295 = vor.u32 %v291, %v294
        %v296 = vrot.slane %v295, 4
        %v298 = vshll.u32 %v222, 16
        %v300 = vrot.slane %v298, 5
        %v301 = vsel %vm259, %v296, %v300
        %v303 = vshrl.u32 %v223, 16
        %v305 = vrot.slane %v303, 4
        %v306 = vshll.u32 %v223, 16
        %v308 = vrot.slane %v306, 5
        %v309 = vor.u32 %v305, %v308
        %v310 = vrot.slane %v309, 4
        %v312 = vshll.u32 %v224, 16
        %v314 = vrot.slane %v312, 5
        %v315 = vsel %vm259, %v310, %v314
        %v317 = vshrl.u32 %v225, 16
        %v319 = vrot.slane %v317, 4
        %v320 = vshll.u32 %v225, 16
        %v322 = vrot.slane %v320, 5
        %v323 = vor.u32 %v319, %v322
        %v324 = vrot.slane %v323, 4
        %v326 = vshll.u32 %v226, 16
        %v328 = vrot.slane %v326, 5
        %v329 = vsel %vm259, %v324, %v328
        %v331 = vshrl.u32 %v227, 16
        %v333 = vrot.slane %v331, 4
        %v334 = vshll.u32 %v227, 16
        %v336 = vrot.slane %v334, 5
        %v337 = vor.u32 %v333, %v336
        %v338 = vrot.slane %v337, 4
        %v340 = vshll.u32 %v228, 16
        %v342 = vrot.slane %v340, 5
        %v343 = vsel %vm259, %v338, %v342
        %v345 = vshrl.u32 %v229, 16
        %v347 = vrot.slane %v345, 4
        %v348 = vshll.u32 %v229, 16
        %v350 = vrot.slane %v348, 5
        %v351 = vor.u32 %v347, %v350
        %v352 = vrot.slane %v351, 4
        %v354 = vshll.u32 %v230, 16
        %v356 = vrot.slane %v354, 5
        %v357 = vsel %vm259, %v352, %v356
        %v359 = vshrl.u32 %v231, 16
        %v361 = vrot.slane %v359, 4
        %v362 = vshll.u32 %v231, 16
        %v364 = vrot.slane %v362, 5
        %v365 = vor.u32 %v361, %v364
        %v366 = vrot.slane %v365, 4
        %v368 = vshll.u32 %v232, 16
        %v370 = vrot.slane %v368, 5
        %v371 = vsel %vm259, %v366, %v370
        %s372 = scalar_lea.vmem [#allocation5], 64
        %v373 = vld [vmem:[%s372] sm:$0xf]
        %v374 = vld [vmem:[%s372 + $0x4] sm:$0xf]
        %v375 = vld [vmem:[%s372 + $0x8] sm:$0xf]
        %v376 = vld [vmem:[%s372 + $0xc] sm:$0xf]
        %v377 = vld [vmem:[%s372 + $0x10] sm:$0xf]
        %v378 = vld [vmem:[%s372 + $0x14] sm:$0xf]
        %v379 = vld [vmem:[%s372 + $0x18] sm:$0xf]
        %v380 = vld [vmem:[%s372 + $0x1c] sm:$0xf]
        %v381 = vld [vmem:[%s372 + $0x20] sm:$0xf]
        %v382 = vld [vmem:[%s372 + $0x24] sm:$0xf]
        %v383 = vld [vmem:[%s372 + $0x28] sm:$0xf]
        %v384 = vld [vmem:[%s372 + $0x2c] sm:$0xf]
        %v385 = vld [vmem:[%s372 + $0x30] sm:$0xf]
        %v386 = vld [vmem:[%s372 + $0x34] sm:$0xf]
        %v387 = vld [vmem:[%s372 + $0x38] sm:$0xf]
        %v388 = vld [vmem:[%s372 + $0x3c] sm:$0xf]
        %v389 = vunpack.c.l.b16 %v273
        %v390 = vunpack.c.l.b16 %v287
        %v391 = vunpack.c.l.b16 %v301
        %v392 = vunpack.c.l.b16 %v315
        %v393 = vunpack.c.l.b16 %v329
        %v394 = vunpack.c.l.b16 %v343
        %v395 = vunpack.c.l.b16 %v357
        %v396 = vunpack.c.l.b16 %v371
        %v397 = vpack.c.b16 %v390, %v389
        %v398 = vpack.c.b16 %v392, %v391
        %v399 = vpack.c.b16 %v394, %v393
        %v400 = vpack.c.b16 %v396, %v395
        %v421 = vunpack.c.l.b16 %v373
        %v422 = vunpack.c.l.b16 %v374
        %v423 = vunpack.c.l.b16 %v375
        %v424 = vunpack.c.l.b16 %v376
        %v425 = vunpack.c.l.b16 %v377
        %v426 = vunpack.c.l.b16 %v378
        %v427 = vunpack.c.l.b16 %v379
        %v428 = vunpack.c.l.b16 %v380
        %v429 = vunpack.c.l.b16 %v381
        %v430 = vunpack.c.l.b16 %v382
        %v431 = vunpack.c.l.b16 %v383
        %v432 = vunpack.c.l.b16 %v384
        %v433 = vunpack.c.l.b16 %v385
        %v434 = vunpack.c.l.b16 %v386
        %v435 = vunpack.c.l.b16 %v387
        %v436 = vunpack.c.l.b16 %v388
        %v437 = vpack.c.b16 %v422, %v421
        %v438 = vpack.c.b16 %v424, %v423
        %v439 = vpack.c.b16 %v426, %v425
        %v440 = vpack.c.b16 %v428, %v427
        %v441 = vpack.c.b16 %v430, %v429
        %v442 = vpack.c.b16 %v432, %v431
        %v443 = vpack.c.b16 %v434, %v433
        %v444 = vpack.c.b16 %v436, %v435
        %453 = vmatprep.subr.bf16.mxu0 0
        %454 = vmatpush1.bf16.msra.mxu0 %v437
        %455 = vmatprep.subr.bf16.mxu0 0
        %456 = vmatpush1.bf16.msra.mxu0 %v438
        %457 = vmatprep.subr.bf16.mxu0 0
        %458 = vmatpush1.bf16.msra.mxu0 %v439
        %459 = vmatprep.subr.bf16.mxu0 0
        %460 = vmatpush1.bf16.msra.mxu0 %v440
        %461 = vmatprep.subr.bf16.mxu0 0
        %462 = vmatpush1.bf16.msra.mxu0 %v441
        %463 = vmatprep.subr.bf16.mxu0 0
        %464 = vmatpush1.bf16.msra.mxu0 %v442
        %465 = vmatprep.subr.bf16.mxu0 0
        %466 = vmatpush1.bf16.msra.mxu0 %v443
        %467 = vmatprep.subr.bf16.mxu0 0
        %468 = vmatpush1.bf16.msra.mxu0 %v444
        %469 = vmatprep.subr.bf16.mxu0 0
        %470 = vmatpush1.bf16.msra.mxu0 0
        %471 = vmatprep.subr.bf16.mxu0 0
        %472 = vmatpush1.bf16.msra.mxu0 0
        %473 = vmatprep.subr.bf16.mxu0 0
        %474 = vmatpush1.bf16.msra.mxu0 0
        %475 = vmatprep.subr.bf16.mxu0 0
        %476 = vmatpush1.bf16.msra.mxu0 0
        %477 = vmatprep.subr.bf16.mxu0 0
        %478 = vmatpush1.bf16.msra.mxu0 0
        %479 = vmatprep.subr.bf16.mxu0 0
        %480 = vmatpush1.bf16.msra.mxu0 0
        %481 = vmatprep.subr.bf16.mxu0 0
        %482 = vmatpush1.bf16.msra.mxu0 0
        %483 = vmatprep.subr.bf16.mxu0 0
        %484 = vmatpush1.bf16.msra.mxu0 0
        %485 = vmatprep.mubr.bf16.mxu0 0
        %486 = vmatmul.mubr.bf16.gmra.mrb[0].mxu0 %v397
        %v487 = vpop.f32.mrb[0].mxu0
        %v488 = vadd.f32 0.0, %v487
        %v489 = vpop.f32.mrb[0].mxu0
        %v490 = vpop.f32.mrb[0].mxu0
        %v491 = vadd.f32 0.0, %v490
        %v492 = vpop.f32.mrb[0].mxu0
        %493 = vmatprep.mubr.bf16.mxu0 0
        %494 = vmatmul.mubr.bf16.gmra.mrb[0].mxu0 %v398
        %v495 = vpop.f32.mrb[0].mxu0
        %v496 = vadd.f32 0.0, %v495
        %v497 = vpop.f32.mrb[0].mxu0
        %v498 = vpop.f32.mrb[0].mxu0
        %v499 = vadd.f32 0.0, %v498
        %v500 = vpop.f32.mrb[0].mxu0
        %501 = vmatprep.mubr.bf16.mxu0 0
        %502 = vmatmul.mubr.bf16.gmra.mrb[0].mxu0 %v399
        %v503 = vpop.f32.mrb[0].mxu0
        %v504 = vadd.f32 0.0, %v503
        %v505 = vpop.f32.mrb[0].mxu0
        %v506 = vpop.f32.mrb[0].mxu0
        %v507 = vadd.f32 0.0, %v506
        %v508 = vpop.f32.mrb[0].mxu0
        %509 = vmatprep.mubr.bf16.mxu0 0
        %510 = vmatmul.mubr.bf16.gmra.mrb[0].mxu0 %v400
        %v511 = vpop.f32.mrb[0].mxu0
        %v512 = vadd.f32 0.0, %v511
        %v513 = vpop.f32.mrb[0].mxu0
        %v514 = vpop.f32.mrb[0].mxu0
        %v515 = vadd.f32 0.0, %v514
        %v516 = vpop.f32.mrb[0].mxu0
        %517 = vdwg.mxu0
        %v526 = vunpack.c.l.b16 %v217
        %v527 = vunpack.c.l.b16 %v219
        %v528 = vunpack.c.l.b16 %v221
        %v529 = vunpack.c.l.b16 %v223
        %v530 = vunpack.c.l.b16 %v225
        %v531 = vunpack.c.l.b16 %v227
        %v532 = vunpack.c.l.b16 %v229
        %v533 = vunpack.c.l.b16 %v231
        %v534 = vpack.c.b16 %v527, %v526
        %v535 = vpack.c.b16 %v529, %v528
        %v536 = vpack.c.b16 %v531, %v530
        %v537 = vpack.c.b16 %v533, %v532
        %v558 = vunpack.c.l.b16 %v241
        %v559 = vunpack.c.l.b16 %v242
        %v560 = vunpack.c.l.b16 %v243
        %v561 = vunpack.c.l.b16 %v244
        %v562 = vunpack.c.l.b16 %v245
        %v563 = vunpack.c.l.b16 %v246
        %v564 = vunpack.c.l.b16 %v247
        %v565 = vunpack.c.l.b16 %v248
        %v566 = vunpack.c.l.b16 %v249
        %v567 = vunpack.c.l.b16 %v250
        %v568 = vunpack.c.l.b16 %v251
        %v569 = vunpack.c.l.b16 %v252
        %v570 = vunpack.c.l.b16 %v253
        %v571 = vunpack.c.l.b16 %v254
        %v572 = vunpack.c.l.b16 %v255
        %v573 = vunpack.c.l.b16 %v256
        %v574 = vpack.c.b16 %v559, %v558
        %v575 = vpack.c.b16 %v561, %v560
        %v576 = vpack.c.b16 %v563, %v562
        %v577 = vpack.c.b16 %v565, %v564
        %v578 = vpack.c.b16 %v567, %v566
        %v579 = vpack.c.b16 %v569, %v568
        %v580 = vpack.c.b16 %v571, %v570
        %v581 = vpack.c.b16 %v573, %v572
        %590 = vmatprep.subr.bf16.mxu0 0
        %591 = vmatpush1.bf16.msra.mxu0 %v574
        %592 = vmatprep.subr.bf16.mxu0 0
        %593 = vmatpush1.bf16.msra.mxu0 %v575
        %594 = vmatprep.subr.bf16.mxu0 0
        %595 = vmatpush1.bf16.msra.mxu0 %v576
        %596 = vmatprep.subr.bf16.mxu0 0
        %597 = vmatpush1.bf16.msra.mxu0 %v577
        %598 = vmatprep.subr.bf16.mxu0 0
        %599 = vmatpush1.bf16.msra.mxu0 %v578
        %600 = vmatprep.subr.bf16.mxu0 0
        %601 = vmatpush1.bf16.msra.mxu0 %v579
        %602 = vmatprep.subr.bf16.mxu0 0
        %603 = vmatpush1.bf16.msra.mxu0 %v580
        %604 = vmatprep.subr.bf16.mxu0 0
        %605 = vmatpush1.bf16.msra.mxu0 %v581
        %606 = vmatprep.subr.bf16.mxu0 0
        %607 = vmatpush1.bf16.msra.mxu0 0
        %608 = vmatprep.subr.bf16.mxu0 0
        %609 = vmatpush1.bf16.msra.mxu0 0
        %610 = vmatprep.subr.bf16.mxu0 0
        %611 = vmatpush1.bf16.msra.mxu0 0
        %612 = vmatprep.subr.bf16.mxu0 0
        %613 = vmatpush1.bf16.msra.mxu0 0
        %614 = vmatprep.subr.bf16.mxu0 0
        %615 = vmatpush1.bf16.msra.mxu0 0
        %616 = vmatprep.subr.bf16.mxu0 0
        %617 = vmatpush1.bf16.msra.mxu0 0
        %618 = vmatprep.subr.bf16.mxu0 0
        %619 = vmatpush1.bf16.msra.mxu0 0
        %620 = vmatprep.subr.bf16.mxu0 0
        %621 = vmatpush1.bf16.msra.mxu0 0
        %622 = vmatprep.mubr.bf16.mxu0 0
        %623 = vmatmul.mubr.bf16.gmra.mrb[0].mxu0 %v534
        %v624 = vpop.f32.mrb[0].mxu0
        %v625 = vadd.f32 %v488, %v624
        %v626 = vpop.f32.mrb[0].mxu0
        %v627 = vpop.f32.mrb[0].mxu0
        %v628 = vadd.f32 %v491, %v627
        %v629 = vpop.f32.mrb[0].mxu0
        %630 = vmatprep.mubr.bf16.mxu0 0
        %631 = vmatmul.mubr.bf16.gmra.mrb[0].mxu0 %v535
        %v632 = vpop.f32.mrb[0].mxu0
        %v633 = vadd.f32 %v496, %v632
        %v634 = vpop.f32.mrb[0].mxu0
        %v635 = vpop.f32.mrb[0].mxu0
        %v636 = vadd.f32 %v499, %v635
        %v637 = vpop.f32.mrb[0].mxu0
        %638 = vmatprep.mubr.bf16.mxu0 0
        %639 = vmatmul.mubr.bf16.gmra.mrb[0].mxu0 %v536
        %v640 = vpop.f32.mrb[0].mxu0
        %v641 = vadd.f32 %v504, %v640
        %v642 = vpop.f32.mrb[0].mxu0
        %v643 = vpop.f32.mrb[0].mxu0
        %v644 = vadd.f32 %v507, %v643
        %v645 = vpop.f32.mrb[0].mxu0
        %646 = vmatprep.mubr.bf16.mxu0 0
        %647 = vmatmul.mubr.bf16.gmra.mrb[0].mxu0 %v537
        %v648 = vpop.f32.mrb[0].mxu0
        %v649 = vadd.f32 %v512, %v648
        %v650 = vpop.f32.mrb[0].mxu0
        %v651 = vpop.f32.mrb[0].mxu0
        %v652 = vadd.f32 %v515, %v651
        %v653 = vpop.f32.mrb[0].mxu0
        %654 = vdwg.mxu0
        %vm663 = vcmask 1042432
        %vm664 = vcmask 1046532
        %vm665 = vmor %vm663, %vm664
        %v666 = vrot.slane %v217, 5
        %v667 = vrot.slane %v666, 4
        %v668 = vrot.slane %v218, 5
        %v669 = vsel %vm665, %v667, %v668
        %v670 = vrot.slane %v219, 5
        %v671 = vrot.slane %v670, 4
        %v672 = vrot.slane %v220, 5
        %v673 = vsel %vm665, %v671, %v672
        %v674 = vrot.slane %v221, 5
        %v675 = vrot.slane %v674, 4
        %v676 = vrot.slane %v222, 5
        %v677 = vsel %vm665, %v675, %v676
        %v678 = vrot.slane %v223, 5
        %v679 = vrot.slane %v678, 4
        %v680 = vrot.slane %v224, 5
        %v681 = vsel %vm665, %v679, %v680
        %v682 = vrot.slane %v225, 5
        %v683 = vrot.slane %v682, 4
        %v684 = vrot.slane %v226, 5
        %v685 = vsel %vm665, %v683, %v684
        %v686 = vrot.slane %v227, 5
        %v687 = vrot.slane %v686, 4
        %v688 = vrot.slane %v228, 5
        %v689 = vsel %vm665, %v687, %v688
        %v690 = vrot.slane %v229, 5
        %v691 = vrot.slane %v690, 4
        %v692 = vrot.slane %v230, 5
        %v693 = vsel %vm665, %v691, %v692
        %v694 = vrot.slane %v231, 5
        %v695 = vrot.slane %v694, 4
        %v696 = vrot.slane %v232, 5
        %v697 = vsel %vm665, %v695, %v696
        %s698 = scalar_lea.vmem [#allocation5], 128
        %v699 = vld [vmem:[%s698] sm:$0xf]
        %v700 = vld [vmem:[%s698 + $0x4] sm:$0xf]
        %v701 = vld [vmem:[%s698 + $0x8] sm:$0xf]
        %v702 = vld [vmem:[%s698 + $0xc] sm:$0xf]
        %v703 = vld [vmem:[%s698 + $0x10] sm:$0xf]
        %v704 = vld [vmem:[%s698 + $0x14] sm:$0xf]
        %v705 = vld [vmem:[%s698 + $0x18] sm:$0xf]
        %v706 = vld [vmem:[%s698 + $0x1c] sm:$0xf]
        %v707 = vld [vmem:[%s698 + $0x20] sm:$0xf]
        %v708 = vld [vmem:[%s698 + $0x24] sm:$0xf]
        %v709 = vld [vmem:[%s698 + $0x28] sm:$0xf]
        %v710 = vld [vmem:[%s698 + $0x2c] sm:$0xf]
        %v711 = vld [vmem:[%s698 + $0x30] sm:$0xf]
        %v712 = vld [vmem:[%s698 + $0x34] sm:$0xf]
        %v713 = vld [vmem:[%s698 + $0x38] sm:$0xf]
        %v714 = vld [vmem:[%s698 + $0x3c] sm:$0xf]
        %v715 = vunpack.c.l.b16 %v669
        %v716 = vunpack.c.l.b16 %v673
        %v717 = vunpack.c.l.b16 %v677
        %v718 = vunpack.c.l.b16 %v681
        %v719 = vunpack.c.l.b16 %v685
        %v720 = vunpack.c.l.b16 %v689
        %v721 = vunpack.c.l.b16 %v693
        %v722 = vunpack.c.l.b16 %v697
        %v723 = vpack.c.b16 %v716, %v715
        %v724 = vpack.c.b16 %v718, %v717
        %v725 = vpack.c.b16 %v720, %v719
        %v726 = vpack.c.b16 %v722, %v721
        %v747 = vunpack.c.l.b16 %v699
        %v748 = vunpack.c.l.b16 %v700
        %v749 = vunpack.c.l.b16 %v701
        %v750 = vunpack.c.l.b16 %v702
        %v751 = vunpack.c.l.b16 %v703
        %v752 = vunpack.c.l.b16 %v704
        %v753 = vunpack.c.l.b16 %v705
        %v754 = vunpack.c.l.b16 %v706
        %v755 = vunpack.c.l.b16 %v707
        %v756 = vunpack.c.l.b16 %v708
        %v757 = vunpack.c.l.b16 %v709
        %v758 = vunpack.c.l.b16 %v710
        %v759 = vunpack.c.l.b16 %v711
        %v760 = vunpack.c.l.b16 %v712
        %v761 = vunpack.c.l.b16 %v713
        %v762 = vunpack.c.l.b16 %v714
        %v763 = vpack.c.b16 %v748, %v747
        %v764 = vpack.c.b16 %v750, %v749
        %v765 = vpack.c.b16 %v752, %v751
        %v766 = vpack.c.b16 %v754, %v753
        %v767 = vpack.c.b16 %v756, %v755
        %v768 = vpack.c.b16 %v758, %v757
        %v769 = vpack.c.b16 %v760, %v759
        %v770 = vpack.c.b16 %v762, %v761
        %779 = vmatprep.subr.bf16.mxu0 0
        %780 = vmatpush1.bf16.msra.mxu0 %v763
        %781 = vmatprep.subr.bf16.mxu0 0
        %782 = vmatpush1.bf16.msra.mxu0 %v764
        %783 = vmatprep.subr.bf16.mxu0 0
        %784 = vmatpush1.bf16.msra.mxu0 %v765
        %785 = vmatprep.subr.bf16.mxu0 0
        %786 = vmatpush1.bf16.msra.mxu0 %v766
        %787 = vmatprep.subr.bf16.mxu0 0
        %788 = vmatpush1.bf16.msra.mxu0 %v767
        %789 = vmatprep.subr.bf16.mxu0 0
        %790 = vmatpush1.bf16.msra.mxu0 %v768
        %791 = vmatprep.subr.bf16.mxu0 0
        %792 = vmatpush1.bf16.msra.mxu0 %v769
        %793 = vmatprep.subr.bf16.mxu0 0
        %794 = vmatpush1.bf16.msra.mxu0 %v770
        %795 = vmatprep.subr.bf16.mxu0 0
        %796 = vmatpush1.bf16.msra.mxu0 0
        %797 = vmatprep.subr.bf16.mxu0 0
        %798 = vmatpush1.bf16.msra.mxu0 0
        %799 = vmatprep.subr.bf16.mxu0 0
        %800 = vmatpush1.bf16.msra.mxu0 0
        %801 = vmatprep.subr.bf16.mxu0 0
        %802 = vmatpush1.bf16.msra.mxu0 0
        %803 = vmatprep.subr.bf16.mxu0 0
        %804 = vmatpush1.bf16.msra.mxu0 0
        %805 = vmatprep.subr.bf16.mxu0 0
        %806 = vmatpush1.bf16.msra.mxu0 0
        %807 = vmatprep.subr.bf16.mxu0 0
        %808 = vmatpush1.bf16.msra.mxu0 0
        %809 = vmatprep.subr.bf16.mxu0 0
        %810 = vmatpush1.bf16.msra.mxu0 0
        %811 = vmatprep.mubr.bf16.mxu0 0
        %812 = vmatmul.mubr.bf16.gmra.mrb[0].mxu0 %v723
        %v813 = vpop.f32.mrb[0].mxu0
        %v814 = vadd.f32 0.0, %v813
        %v815 = vpop.f32.mrb[0].mxu0
        %v816 = vpop.f32.mrb[0].mxu0
        %v817 = vadd.f32 0.0, %v816
        %v818 = vpop.f32.mrb[0].mxu0
        %819 = vmatprep.mubr.bf16.mxu0 0
        %820 = vmatmul.mubr.bf16.gmra.mrb[0].mxu0 %v724
        %v821 = vpop.f32.mrb[0].mxu0
        %v822 = vadd.f32 0.0, %v821
        %v823 = vpop.f32.mrb[0].mxu0
        %v824 = vpop.f32.mrb[0].mxu0
        %v825 = vadd.f32 0.0, %v824
        %v826 = vpop.f32.mrb[0].mxu0
        %827 = vmatprep.mubr.bf16.mxu0 0
        %828 = vmatmul.mubr.bf16.gmra.mrb[0].mxu0 %v725
        %v829 = vpop.f32.mrb[0].mxu0
        %v830 = vadd.f32 0.0, %v829
        %v831 = vpop.f32.mrb[0].mxu0
        %v832 = vpop.f32.mrb[0].mxu0
        %v833 = vadd.f32 0.0, %v832
        %v834 = vpop.f32.mrb[0].mxu0
        %835 = vmatprep.mubr.bf16.mxu0 0
        %836 = vmatmul.mubr.bf16.gmra.mrb[0].mxu0 %v726
        %v837 = vpop.f32.mrb[0].mxu0
        %v838 = vadd.f32 0.0, %v837
        %v839 = vpop.f32.mrb[0].mxu0
        %v840 = vpop.f32.mrb[0].mxu0
        %v841 = vadd.f32 0.0, %v840
        %v842 = vpop.f32.mrb[0].mxu0
        %843 = vdwg.mxu0
        %v844 = vadd.f32 %v625, %v814
        %v845 = vadd.f32 %v628, %v817
        %v846 = vadd.f32 %v633, %v822
        %v847 = vadd.f32 %v636, %v825
        %v848 = vadd.f32 %v641, %v830
        %v849 = vadd.f32 %v644, %v833
        %v850 = vadd.f32 %v649, %v838
        %v851 = vadd.f32 %v652, %v841
        %vm852 = vsmask.f32 2304
        %vm853 = vsmask.f32 6416
        %vm854 = vmor %vm852, %vm853
        %v855 = vrot.slane %v261, 5
        %v856 = vrot.slane %v264, 6
        %v857 = vor.u32 %v855, %v856
        %v858 = vrot.slane %v857, 4
        %v859 = vshrl.u32 %v218, 16
        %v861 = vrot.slane %v859, 5
        %v862 = vrot.slane %v270, 6
        %v863 = vor.u32 %v861, %v862
        %v864 = vsel %vm854, %v858, %v863
        %v865 = vrot.slane %v275, 5
        %v866 = vrot.slane %v278, 6
        %v867 = vor.u32 %v865, %v866
        %v868 = vrot.slane %v867, 4
        %v869 = vshrl.u32 %v220, 16
        %v871 = vrot.slane %v869, 5
        %v872 = vrot.slane %v284, 6
        %v873 = vor.u32 %v871, %v872
        %v874 = vsel %vm854, %v868, %v873
        %v875 = vrot.slane %v289, 5
        %v876 = vrot.slane %v292, 6
        %v877 = vor.u32 %v875, %v876
        %v878 = vrot.slane %v877, 4
        %v879 = vshrl.u32 %v222, 16
        %v881 = vrot.slane %v879, 5
        %v882 = vrot.slane %v298, 6
        %v883 = vor.u32 %v881, %v882
        %v884 = vsel %vm854, %v878, %v883
        %v885 = vrot.slane %v303, 5
        %v886 = vrot.slane %v306, 6
        %v887 = vor.u32 %v885, %v886
        %v888 = vrot.slane %v887, 4
        %v889 = vshrl.u32 %v224, 16
        %v891 = vrot.slane %v889, 5
        %v892 = vrot.slane %v312, 6
        %v893 = vor.u32 %v891, %v892
        %v894 = vsel %vm854, %v888, %v893
        %v895 = vrot.slane %v317, 5
        %v896 = vrot.slane %v320, 6
        %v897 = vor.u32 %v895, %v896
        %v898 = vrot.slane %v897, 4
        %v899 = vshrl.u32 %v226, 16
        %v901 = vrot.slane %v899, 5
        %v902 = vrot.slane %v326, 6
        %v903 = vor.u32 %v901, %v902
        %v904 = vsel %vm854, %v898, %v903
        %v905 = vrot.slane %v331, 5
        %v906 = vrot.slane %v334, 6
        %v907 = vor.u32 %v905, %v906
        %v908 = vrot.slane %v907, 4
        %v909 = vshrl.u32 %v228, 16
        %v911 = vrot.slane %v909, 5
        %v912 = vrot.slane %v340, 6
        %v913 = vor.u32 %v911, %v912
        %v914 = vsel %vm854, %v908, %v913
        %v915 = vrot.slane %v345, 5
        %v916 = vrot.slane %v348, 6
        %v917 = vor.u32 %v915, %v916
        %v918 = vrot.slane %v917, 4
        %v919 = vshrl.u32 %v230, 16
        %v921 = vrot.slane %v919, 5
        %v922 = vrot.slane %v354, 6
        %v923 = vor.u32 %v921, %v922
        %v924 = vsel %vm854, %v918, %v923
        %v925 = vrot.slane %v359, 5
        %v926 = vrot.slane %v362, 6
        %v927 = vor.u32 %v925, %v926
        %v928 = vrot.slane %v927, 4
        %v929 = vshrl.u32 %v232, 16
        %v931 = vrot.slane %v929, 5
        %v932 = vrot.slane %v368, 6
        %v933 = vor.u32 %v931, %v932
        %v934 = vsel %vm854, %v928, %v933
        %s935 = scalar_lea.vmem [#allocation5], 192
        %v936 = vld [vmem:[%s935] sm:$0xf]
        %v937 = vld [vmem:[%s935 + $0x4] sm:$0xf]
        %v938 = vld [vmem:[%s935 + $0x8] sm:$0xf]
        %v939 = vld [vmem:[%s935 + $0xc] sm:$0xf]
        %v940 = vld [vmem:[%s935 + $0x10] sm:$0xf]
        %v941 = vld [vmem:[%s935 + $0x14] sm:$0xf]
        %v942 = vld [vmem:[%s935 + $0x18] sm:$0xf]
        %v943 = vld [vmem:[%s935 + $0x1c] sm:$0xf]
        %v944 = vld [vmem:[%s935 + $0x20] sm:$0xf]
        %v945 = vld [vmem:[%s935 + $0x24] sm:$0xf]
        %v946 = vld [vmem:[%s935 + $0x28] sm:$0xf]
        %v947 = vld [vmem:[%s935 + $0x2c] sm:$0xf]
        %v948 = vld [vmem:[%s935 + $0x30] sm:$0xf]
        %v949 = vld [vmem:[%s935 + $0x34] sm:$0xf]
        %v950 = vld [vmem:[%s935 + $0x38] sm:$0xf]
        %v951 = vld [vmem:[%s935 + $0x3c] sm:$0xf]
        %v952 = vunpack.c.l.b16 %v864
        %v953 = vunpack.c.l.b16 %v874
        %v954 = vunpack.c.l.b16 %v884
        %v955 = vunpack.c.l.b16 %v894
        %v956 = vunpack.c.l.b16 %v904
        %v957 = vunpack.c.l.b16 %v914
        %v958 = vunpack.c.l.b16 %v924
        %v959 = vunpack.c.l.b16 %v934
        %v960 = vpack.c.b16 %v953, %v952
        %v961 = vpack.c.b16 %v955, %v954
        %v962 = vpack.c.b16 %v957, %v956
        %v963 = vpack.c.b16 %v959, %v958
        %v984 = vunpack.c.l.b16 %v936
        %v985 = vunpack.c.l.b16 %v937
        %v986 = vunpack.c.l.b16 %v938
        %v987 = vunpack.c.l.b16 %v939
        %v988 = vunpack.c.l.b16 %v940
        %v989 = vunpack.c.l.b16 %v941
        %v990 = vunpack.c.l.b16 %v942
        %v991 = vunpack.c.l.b16 %v943
        %v992 = vunpack.c.l.b16 %v944
        %v993 = vunpack.c.l.b16 %v945
        %v994 = vunpack.c.l.b16 %v946
        %v995 = vunpack.c.l.b16 %v947
        %v996 = vunpack.c.l.b16 %v948
        %v997 = vunpack.c.l.b16 %v949
        %v998 = vunpack.c.l.b16 %v950
        %v999 = vunpack.c.l.b16 %v951
        %v1000 = vpack.c.b16 %v985, %v984
        %v1001 = vpack.c.b16 %v987, %v986
        %v1002 = vpack.c.b16 %v989, %v988
        %v1003 = vpack.c.b16 %v991, %v990
        %v1004 = vpack.c.b16 %v993, %v992
        %v1005 = vpack.c.b16 %v995, %v994
        %v1006 = vpack.c.b16 %v997, %v996
        %v1007 = vpack.c.b16 %v999, %v998
        %1016 = vmatprep.subr.bf16.mxu0 0
        %1017 = vmatpush1.bf16.msra.mxu0 %v1000
        %1018 = vmatprep.subr.bf16.mxu0 0
        %1019 = vmatpush1.bf16.msra.mxu0 %v1001
        %1020 = vmatprep.subr.bf16.mxu0 0
        %1021 = vmatpush1.bf16.msra.mxu0 %v1002
        %1022 = vmatprep.subr.bf16.mxu0 0
        %1023 = vmatpush1.bf16.msra.mxu0 %v1003
        %1024 = vmatprep.subr.bf16.mxu0 0
        %1025 = vmatpush1.bf16.msra.mxu0 %v1004
        %1026 = vmatprep.subr.bf16.mxu0 0
        %1027 = vmatpush1.bf16.msra.mxu0 %v1005
        %1028 = vmatprep.subr.bf16.mxu0 0
        %1029 = vmatpush1.bf16.msra.mxu0 %v1006
        %1030 = vmatprep.subr.bf16.mxu0 0
        %1031 = vmatpush1.bf16.msra.mxu0 %v1007
        %1032 = vmatprep.subr.bf16.mxu0 0
        %1033 = vmatpush1.bf16.msra.mxu0 0
        %1034 = vmatprep.subr.bf16.mxu0 0
        %1035 = vmatpush1.bf16.msra.mxu0 0
        %1036 = vmatprep.subr.bf16.mxu0 0
        %1037 = vmatpush1.bf16.msra.mxu0 0
        %1038 = vmatprep.subr.bf16.mxu0 0
        %1039 = vmatpush1.bf16.msra.mxu0 0
        %1040 = vmatprep.subr.bf16.mxu0 0
        %1041 = vmatpush1.bf16.msra.mxu0 0
        %1042 = vmatprep.subr.bf16.mxu0 0
        %1043 = vmatpush1.bf16.msra.mxu0 0
        %1044 = vmatprep.subr.bf16.mxu0 0
        %1045 = vmatpush1.bf16.msra.mxu0 0
        %1046 = vmatprep.subr.bf16.mxu0 0
        %1047 = vmatpush1.bf16.msra.mxu0 0
        %1048 = vmatprep.mubr.bf16.mxu0 0
        %1049 = vmatmul.mubr.bf16.gmra.mrb[0].mxu0 %v960
        %v1050 = vpop.f32.mrb[0].mxu0
        %v1051 = vadd.f32 0.0, %v1050
        %v1052 = vpop.f32.mrb[0].mxu0
        %v1053 = vpop.f32.mrb[0].mxu0
        %v1054 = vadd.f32 0.0, %v1053
        %v1055 = vpop.f32.mrb[0].mxu0
        %1056 = vmatprep.mubr.bf16.mxu0 0
        %1057 = vmatmul.mubr.bf16.gmra.mrb[0].mxu0 %v961
        %v1058 = vpop.f32.mrb[0].mxu0
        %v1059 = vadd.f32 0.0, %v1058
        %v1060 = vpop.f32.mrb[0].mxu0
        %v1061 = vpop.f32.mrb[0].mxu0
        %v1062 = vadd.f32 0.0, %v1061
        %v1063 = vpop.f32.mrb[0].mxu0
        %1064 = vmatprep.mubr.bf16.mxu0 0
        %1065 = vmatmul.mubr.bf16.gmra.mrb[0].mxu0 %v962
        %v1066 = vpop.f32.mrb[0].mxu0
        %v1067 = vadd.f32 0.0, %v1066
        %v1068 = vpop.f32.mrb[0].mxu0
        %v1069 = vpop.f32.mrb[0].mxu0
        %v1070 = vadd.f32 0.0, %v1069
        %v1071 = vpop.f32.mrb[0].mxu0
        %1072 = vmatprep.mubr.bf16.mxu0 0
        %1073 = vmatmul.mubr.bf16.gmra.mrb[0].mxu0 %v963
        %v1074 = vpop.f32.mrb[0].mxu0
        %v1075 = vadd.f32 0.0, %v1074
        %v1076 = vpop.f32.mrb[0].mxu0
        %v1077 = vpop.f32.mrb[0].mxu0
        %v1078 = vadd.f32 0.0, %v1077
        %v1079 = vpop.f32.mrb[0].mxu0
        %1080 = vdwg.mxu0
        %v1081 = vadd.f32 %v844, %v1051
        %v1082 = vadd.f32 %v845, %v1054
        %v1083 = vadd.f32 %v846, %v1059
        %v1084 = vadd.f32 %v847, %v1062
        %v1085 = vadd.f32 %v848, %v1067
        %v1086 = vadd.f32 %v849, %v1070
        %v1087 = vadd.f32 %v850, %v1075
        %v1088 = vadd.f32 %v851, %v1078
        %vm1089 = vcmask 1041408
        %vm1090 = vcmask 1045508
        %vm1091 = vmor %vm1089, %vm1090
        %v1092 = vrot.slane %v217, 6
        %v1093 = vrot.slane %v1092, 4
        %v1094 = vrot.slane %v218, 6
        %v1095 = vsel %vm1091, %v1093, %v1094
        %v1096 = vrot.slane %v219, 6
        %v1097 = vrot.slane %v1096, 4
        %v1098 = vrot.slane %v220, 6
        %v1099 = vsel %vm1091, %v1097, %v1098
        %v1100 = vrot.slane %v221, 6
        %v1101 = vrot.slane %v1100, 4
        %v1102 = vrot.slane %v222, 6
        %v1103 = vsel %vm1091, %v1101, %v1102
        %v1104 = vrot.slane %v223, 6
        %v1105 = vrot.slane %v1104, 4
        %v1106 = vrot.slane %v224, 6
        %v1107 = vsel %vm1091, %v1105, %v1106
        %v1108 = vrot.slane %v225, 6
        %v1109 = vrot.slane %v1108, 4
        %v1110 = vrot.slane %v226, 6
        %v1111 = vsel %vm1091, %v1109, %v1110
        %v1112 = vrot.slane %v227, 6
        %v1113 = vrot.slane %v1112, 4
        %v1114 = vrot.slane %v228, 6
        %v1115 = vsel %vm1091, %v1113, %v1114
        %v1116 = vrot.slane %v229, 6
        %v1117 = vrot.slane %v1116, 4
        %v1118 = vrot.slane %v230, 6
        %v1119 = vsel %vm1091, %v1117, %v1118
        %v1120 = vrot.slane %v231, 6
        %v1121 = vrot.slane %v1120, 4
        %v1122 = vrot.slane %v232, 6
        %v1123 = vsel %vm1091, %v1121, %v1122
        %s1124 = scalar_lea.vmem [#allocation5], 256
        %v1125 = vld [vmem:[%s1124] sm:$0xf]
        %v1126 = vld [vmem:[%s1124 + $0x4] sm:$0xf]
        %v1127 = vld [vmem:[%s1124 + $0x8] sm:$0xf]
        %v1128 = vld [vmem:[%s1124 + $0xc] sm:$0xf]
        %v1129 = vld [vmem:[%s1124 + $0x10] sm:$0xf]
        %v1130 = vld [vmem:[%s1124 + $0x14] sm:$0xf]
        %v1131 = vld [vmem:[%s1124 + $0x18] sm:$0xf]
        %v1132 = vld [vmem:[%s1124 + $0x1c] sm:$0xf]
        %v1133 = vld [vmem:[%s1124 + $0x20] sm:$0xf]
        %v1134 = vld [vmem:[%s1124 + $0x24] sm:$0xf]
        %v1135 = vld [vmem:[%s1124 + $0x28] sm:$0xf]
        %v1136 = vld [vmem:[%s1124 + $0x2c] sm:$0xf]
        %v1137 = vld [vmem:[%s1124 + $0x30] sm:$0xf]
        %v1138 = vld [vmem:[%s1124 + $0x34] sm:$0xf]
        %v1139 = vld [vmem:[%s1124 + $0x38] sm:$0xf]
        %v1140 = vld [vmem:[%s1124 + $0x3c] sm:$0xf]
        %v1141 = vunpack.c.l.b16 %v1095
        %v1142 = vunpack.c.l.b16 %v1099
        %v1143 = vunpack.c.l.b16 %v1103
        %v1144 = vunpack.c.l.b16 %v1107
        %v1145 = vunpack.c.l.b16 %v1111
        %v1146 = vunpack.c.l.b16 %v1115
        %v1147 = vunpack.c.l.b16 %v1119
        %v1148 = vunpack.c.l.b16 %v1123
        %v1149 = vpack.c.b16 %v1142, %v1141
        %v1150 = vpack.c.b16 %v1144, %v1143
        %v1151 = vpack.c.b16 %v1146, %v1145
        %v1152 = vpack.c.b16 %v1148, %v1147
        %v1173 = vunpack.c.l.b16 %v1125
        %v1174 = vunpack.c.l.b16 %v1126
        %v1175 = vunpack.c.l.b16 %v1127
        %v1176 = vunpack.c.l.b16 %v1128
        %v1177 = vunpack.c.l.b16 %v1129
        %v1178 = vunpack.c.l.b16 %v1130
        %v1179 = vunpack.c.l.b16 %v1131
        %v1180 = vunpack.c.l.b16 %v1132
        %v1181 = vunpack.c.l.b16 %v1133
        %v1182 = vunpack.c.l.b16 %v1134
        %v1183 = vunpack.c.l.b16 %v1135
        %v1184 = vunpack.c.l.b16 %v1136
        %v1185 = vunpack.c.l.b16 %v1137
        %v1186 = vunpack.c.l.b16 %v1138
        %v1187 = vunpack.c.l.b16 %v1139
        %v1188 = vunpack.c.l.b16 %v1140
        %v1189 = vpack.c.b16 %v1174, %v1173
        %v1190 = vpack.c.b16 %v1176, %v1175
        %v1191 = vpack.c.b16 %v1178, %v1177
        %v1192 = vpack.c.b16 %v1180, %v1179
        %v1193 = vpack.c.b16 %v1182, %v1181
        %v1194 = vpack.c.b16 %v1184, %v1183
        %v1195 = vpack.c.b16 %v1186, %v1185
        %v1196 = vpack.c.b16 %v1188, %v1187
        %1205 = vmatprep.subr.bf16.mxu0 0
        %1206 = vmatpush1.bf16.msra.mxu0 %v1189
        %1207 = vmatprep.subr.bf16.mxu0 0
        %1208 = vmatpush1.bf16.msra.mxu0 %v1190
        %1209 = vmatprep.subr.bf16.mxu0 0
        %1210 = vmatpush1.bf16.msra.mxu0 %v1191
        %1211 = vmatprep.subr.bf16.mxu0 0
        %1212 = vmatpush1.bf16.msra.mxu0 %v1192
        %1213 = vmatprep.subr.bf16.mxu0 0
        %1214 = vmatpush1.bf16.msra.mxu0 %v1193
        %1215 = vmatprep.subr.bf16.mxu0 0
        %1216 = vmatpush1.bf16.msra.mxu0 %v1194
        %1217 = vmatprep.subr.bf16.mxu0 0
        %1218 = vmatpush1.bf16.msra.mxu0 %v1195
        %1219 = vmatprep.subr.bf16.mxu0 0
        %1220 = vmatpush1.bf16.msra.mxu0 %v1196
        %1221 = vmatprep.subr.bf16.mxu0 0
        %1222 = vmatpush1.bf16.msra.mxu0 0
        %1223 = vmatprep.subr.bf16.mxu0 0
        %1224 = vmatpush1.bf16.msra.mxu0 0
        %1225 = vmatprep.subr.bf16.mxu0 0
        %1226 = vmatpush1.bf16.msra.mxu0 0
        %1227 = vmatprep.subr.bf16.mxu0 0
        %1228 = vmatpush1.bf16.msra.mxu0 0
        %1229 = vmatprep.subr.bf16.mxu0 0
        %1230 = vmatpush1.bf16.msra.mxu0 0
        %1231 = vmatprep.subr.bf16.mxu0 0
        %1232 = vmatpush1.bf16.msra.mxu0 0
        %1233 = vmatprep.subr.bf16.mxu0 0
        %1234 = vmatpush1.bf16.msra.mxu0 0
        %1235 = vmatprep.subr.bf16.mxu0 0
        %1236 = vmatpush1.bf16.msra.mxu0 0
        %1237 = vmatprep.mubr.bf16.mxu0 0
        %1238 = vmatmul.mubr.bf16.gmra.mrb[0].mxu0 %v1149
        %v1239 = vpop.f32.mrb[0].mxu0
        %v1240 = vadd.f32 0.0, %v1239
        %v1241 = vpop.f32.mrb[0].mxu0
        %v1242 = vpop.f32.mrb[0].mxu0
        %v1243 = vadd.f32 0.0, %v1242
        %v1244 = vpop.f32.mrb[0].mxu0
        %1245 = vmatprep.mubr.bf16.mxu0 0
        %1246 = vmatmul.mubr.bf16.gmra.mrb[0].mxu0 %v1150
        %v1247 = vpop.f32.mrb[0].mxu0
        %v1248 = vadd.f32 0.0, %v1247
        %v1249 = vpop.f32.mrb[0].mxu0
        %v1250 = vpop.f32.mrb[0].mxu0
        %v1251 = vadd.f32 0.0, %v1250
        %v1252 = vpop.f32.mrb[0].mxu0
        %1253 = vmatprep.mubr.bf16.mxu0 0
        %1254 = vmatmul.mubr.bf16.gmra.mrb[0].mxu0 %v1151
        %v1255 = vpop.f32.mrb[0].mxu0
        %v1256 = vadd.f32 0.0, %v1255
        %v1257 = vpop.f32.mrb[0].mxu0
        %v1258 = vpop.f32.mrb[0].mxu0
        %v1259 = vadd.f32 0.0, %v1258
        %v1260 = vpop.f32.mrb[0].mxu0
        %1261 = vmatprep.mubr.bf16.mxu0 0
        %1262 = vmatmul.mubr.bf16.gmra.mrb[0].mxu0 %v1152
        %v1263 = vpop.f32.mrb[0].mxu0
        %v1264 = vadd.f32 0.0, %v1263
        %v1265 = vpop.f32.mrb[0].mxu0
        %v1266 = vpop.f32.mrb[0].mxu0
        %v1267 = vadd.f32 0.0, %v1266
        %v1268 = vpop.f32.mrb[0].mxu0
        %1269 = vdwg.mxu0
        %v1270 = vadd.f32 %v1081, %v1240
        %v1271 = vadd.f32 %v1082, %v1243
        %v1272 = vadd.f32 %v1083, %v1248
        %v1273 = vadd.f32 %v1084, %v1251
        %v1274 = vadd.f32 %v1085, %v1256
        %v1275 = vadd.f32 %v1086, %v1259
        %v1276 = vadd.f32 %v1087, %v1264
        %v1277 = vadd.f32 %v1088, %v1267
        %s1278 = scalar_lea.vmem [#allocation5], 320
        %v1279 = vld [vmem:[%s1278] sm:$0xf]
        %v1280 = vld [vmem:[%s1278 + $0x4] sm:$0xf]
        %v1281 = vld [vmem:[%s1278 + $0x8] sm:$0xf]
        %v1282 = vld [vmem:[%s1278 + $0xc] sm:$0xf]
        %v1283 = vld [vmem:[%s1278 + $0x10] sm:$0xf]
        %v1284 = vld [vmem:[%s1278 + $0x14] sm:$0xf]
        %v1285 = vld [vmem:[%s1278 + $0x18] sm:$0xf]
        %v1286 = vld [vmem:[%s1278 + $0x1c] sm:$0xf]
        %v1287 = vld [vmem:[%s1278 + $0x20] sm:$0xf]
        %v1288 = vld [vmem:[%s1278 + $0x24] sm:$0xf]
        %v1289 = vld [vmem:[%s1278 + $0x28] sm:$0xf]
        %v1290 = vld [vmem:[%s1278 + $0x2c] sm:$0xf]
        %v1291 = vld [vmem:[%s1278 + $0x30] sm:$0xf]
        %v1292 = vld [vmem:[%s1278 + $0x34] sm:$0xf]
        %v1293 = vld [vmem:[%s1278 + $0x38] sm:$0xf]
        %v1294 = vld [vmem:[%s1278 + $0x3c] sm:$0xf]
        %v1296 = vunpack.c.l.b16 %v233
        %v1297 = vpack.c.b16 %v528, %v527
        %v1298 = vpack.c.b16 %v530, %v529
        %v1299 = vpack.c.b16 %v532, %v531
        %v1300 = vpack.c.b16 %v1296, %v533
        %v1321 = vunpack.c.l.b16 %v1279
        %v1322 = vunpack.c.l.b16 %v1280
        %v1323 = vunpack.c.l.b16 %v1281
        %v1324 = vunpack.c.l.b16 %v1282
        %v1325 = vunpack.c.l.b16 %v1283
        %v1326 = vunpack.c.l.b16 %v1284
        %v1327 = vunpack.c.l.b16 %v1285
        %v1328 = vunpack.c.l.b16 %v1286
        %v1329 = vunpack.c.l.b16 %v1287
        %v1330 = vunpack.c.l.b16 %v1288
        %v1331 = vunpack.c.l.b16 %v1289
        %v1332 = vunpack.c.l.b16 %v1290
        %v1333 = vunpack.c.l.b16 %v1291
        %v1334 = vunpack.c.l.b16 %v1292
        %v1335 = vunpack.c.l.b16 %v1293
        %v1336 = vunpack.c.l.b16 %v1294
        %v1337 = vpack.c.b16 %v1322, %v1321
        %v1338 = vpack.c.b16 %v1324, %v1323
        %v1339 = vpack.c.b16 %v1326, %v1325
        %v1340 = vpack.c.b16 %v1328, %v1327
        %v1341 = vpack.c.b16 %v1330, %v1329
        %v1342 = vpack.c.b16 %v1332, %v1331
        %v1343 = vpack.c.b16 %v1334, %v1333
        %v1344 = vpack.c.b16 %v1336, %v1335
        %1353 = vmatprep.subr.bf16.mxu0 0
        %1354 = vmatpush1.bf16.msra.mxu0 %v1337
        %1355 = vmatprep.subr.bf16.mxu0 0
        %1356 = vmatpush1.bf16.msra.mxu0 %v1338
        %1357 = vmatprep.subr.bf16.mxu0 0
        %1358 = vmatpush1.bf16.msra.mxu0 %v1339
        %1359 = vmatprep.subr.bf16.mxu0 0
        %1360 = vmatpush1.bf16.msra.mxu0 %v1340
        %1361 = vmatprep.subr.bf16.mxu0 0
        %1362 = vmatpush1.bf16.msra.mxu0 %v1341
        %1363 = vmatprep.subr.bf16.mxu0 0
        %1364 = vmatpush1.bf16.msra.mxu0 %v1342
        %1365 = vmatprep.subr.bf16.mxu0 0
        %1366 = vmatpush1.bf16.msra.mxu0 %v1343
        %1367 = vmatprep.subr.bf16.mxu0 0
        %1368 = vmatpush1.bf16.msra.mxu0 %v1344
        %1369 = vmatprep.subr.bf16.mxu0 0
        %1370 = vmatpush1.bf16.msra.mxu0 0
        %1371 = vmatprep.subr.bf16.mxu0 0
        %1372 = vmatpush1.bf16.msra.mxu0 0
        %1373 = vmatprep.subr.bf16.mxu0 0
        %1374 = vmatpush1.bf16.msra.mxu0 0
        %1375 = vmatprep.subr.bf16.mxu0 0
        %1376 = vmatpush1.bf16.msra.mxu0 0
        %1377 = vmatprep.subr.bf16.mxu0 0
        %1378 = vmatpush1.bf16.msra.mxu0 0
        %1379 = vmatprep.subr.bf16.mxu0 0
        %1380 = vmatpush1.bf16.msra.mxu0 0
        %1381 = vmatprep.subr.bf16.mxu0 0
        %1382 = vmatpush1.bf16.msra.mxu0 0
        %1383 = vmatprep.subr.bf16.mxu0 0
        %1384 = vmatpush1.bf16.msra.mxu0 0
        %1385 = vmatprep.mubr.bf16.mxu0 0
        %1386 = vmatmul.mubr.bf16.gmra.mrb[0].mxu0 %v1297
        %v1387 = vpop.f32.mrb[0].mxu0
        %v1388 = vadd.f32 0.0, %v1387
        %v1389 = vpop.f32.mrb[0].mxu0
        %v1390 = vpop.f32.mrb[0].mxu0
        %v1391 = vadd.f32 0.0, %v1390
        %v1392 = vpop.f32.mrb[0].mxu0
        %1393 = vmatprep.mubr.bf16.mxu0 0
        %1394 = vmatmul.mubr.bf16.gmra.mrb[0].mxu0 %v1298
        %v1395 = vpop.f32.mrb[0].mxu0
        %v1396 = vadd.f32 0.0, %v1395
        %v1397 = vpop.f32.mrb[0].mxu0
        %v1398 = vpop.f32.mrb[0].mxu0
        %v1399 = vadd.f32 0.0, %v1398
        %v1400 = vpop.f32.mrb[0].mxu0
        %1401 = vmatprep.mubr.bf16.mxu0 0
        %1402 = vmatmul.mubr.bf16.gmra.mrb[0].mxu0 %v1299
        %v1403 = vpop.f32.mrb[0].mxu0
        %v1404 = vadd.f32 0.0, %v1403
        %v1405 = vpop.f32.mrb[0].mxu0
        %v1406 = vpop.f32.mrb[0].mxu0
        %v1407 = vadd.f32 0.0, %v1406
        %v1408 = vpop.f32.mrb[0].mxu0
        %1409 = vmatprep.mubr.bf16.mxu0 0
        %1410 = vmatmul.mubr.bf16.gmra.mrb[0].mxu0 %v1300
        %v1411 = vpop.f32.mrb[0].mxu0
        %v1412 = vadd.f32 0.0, %v1411
        %v1413 = vpop.f32.mrb[0].mxu0
        %v1414 = vpop.f32.mrb[0].mxu0
        %v1415 = vadd.f32 0.0, %v1414
        %v1416 = vpop.f32.mrb[0].mxu0
        %1417 = vdwg.mxu0
        %v1418 = vadd.f32 %v1270, %v1388
        %v1419 = vadd.f32 %v1271, %v1391
        %v1420 = vadd.f32 %v1272, %v1396
        %v1421 = vadd.f32 %v1273, %v1399
        %v1422 = vadd.f32 %v1274, %v1404
        %v1423 = vadd.f32 %v1275, %v1407
        %v1424 = vadd.f32 %v1276, %v1412
        %v1425 = vadd.f32 %v1277, %v1415
        %v1427 = vshrl.u32 %v233, 16
        %v1429 = vrot.slane %v1427, 4
        %v1430 = vshll.u32 %v233, 16
        %v1432 = vrot.slane %v1430, 5
        %v1433 = vor.u32 %v1429, %v1432
        %v1434 = vrot.slane %v1433, 4
        %v1436 = vshll.u32 %v234, 16
        %v1438 = vrot.slane %v1436, 5
        %v1439 = vsel %vm259, %v1434, %v1438
        %s1440 = scalar_lea.vmem [#allocation5], 384
        %v1441 = vld [vmem:[%s1440] sm:$0xf]
        %v1442 = vld [vmem:[%s1440 + $0x4] sm:$0xf]
        %v1443 = vld [vmem:[%s1440 + $0x8] sm:$0xf]
        %v1444 = vld [vmem:[%s1440 + $0xc] sm:$0xf]
        %v1445 = vld [vmem:[%s1440 + $0x10] sm:$0xf]
        %v1446 = vld [vmem:[%s1440 + $0x14] sm:$0xf]
        %v1447 = vld [vmem:[%s1440 + $0x18] sm:$0xf]
        %v1448 = vld [vmem:[%s1440 + $0x1c] sm:$0xf]
        %v1449 = vld [vmem:[%s1440 + $0x20] sm:$0xf]
        %v1450 = vld [vmem:[%s1440 + $0x24] sm:$0xf]
        %v1451 = vld [vmem:[%s1440 + $0x28] sm:$0xf]
        %v1452 = vld [vmem:[%s1440 + $0x2c] sm:$0xf]
        %v1453 = vld [vmem:[%s1440 + $0x30] sm:$0xf]
        %v1454 = vld [vmem:[%s1440 + $0x34] sm:$0xf]
        %v1455 = vld [vmem:[%s1440 + $0x38] sm:$0xf]
        %v1456 = vld [vmem:[%s1440 + $0x3c] sm:$0xf]
        %v1457 = vunpack.c.l.b16 %v1439
        %v1458 = vpack.c.b16 %v391, %v390
        %v1459 = vpack.c.b16 %v393, %v392
        %v1460 = vpack.c.b16 %v395, %v394
        %v1461 = vpack.c.b16 %v1457, %v396
        %v1482 = vunpack.c.l.b16 %v1441
        %v1483 = vunpack.c.l.b16 %v1442
        %v1484 = vunpack.c.l.b16 %v1443
        %v1485 = vunpack.c.l.b16 %v1444
        %v1486 = vunpack.c.l.b16 %v1445
        %v1487 = vunpack.c.l.b16 %v1446
        %v1488 = vunpack.c.l.b16 %v1447
        %v1489 = vunpack.c.l.b16 %v1448
        %v1490 = vunpack.c.l.b16 %v1449
        %v1491 = vunpack.c.l.b16 %v1450
        %v1492 = vunpack.c.l.b16 %v1451
        %v1493 = vunpack.c.l.b16 %v1452
        %v1494 = vunpack.c.l.b16 %v1453
        %v1495 = vunpack.c.l.b16 %v1454
        %v1496 = vunpack.c.l.b16 %v1455
        %v1497 = vunpack.c.l.b16 %v1456
        %v1498 = vpack.c.b16 %v1483, %v1482
        %v1499 = vpack.c.b16 %v1485, %v1484
        %v1500 = vpack.c.b16 %v1487, %v1486
        %v1501 = vpack.c.b16 %v1489, %v1488
        %v1502 = vpack.c.b16 %v1491, %v1490
        %v1503 = vpack.c.b16 %v1493, %v1492
        %v1504 = vpack.c.b16 %v1495, %v1494
        %v1505 = vpack.c.b16 %v1497, %v1496
        %1514 = vmatprep.subr.bf16.mxu0 0
        %1515 = vmatpush1.bf16.msra.mxu0 %v1498
        %1516 = vmatprep.subr.bf16.mxu0 0
        %1517 = vmatpush1.bf16.msra.mxu0 %v1499
        %1518 = vmatprep.subr.bf16.mxu0 0
        %1519 = vmatpush1.bf16.msra.mxu0 %v1500
        %1520 = vmatprep.subr.bf16.mxu0 0
        %1521 = vmatpush1.bf16.msra.mxu0 %v1501
        %1522 = vmatprep.subr.bf16.mxu0 0
        %1523 = vmatpush1.bf16.msra.mxu0 %v1502
        %1524 = vmatprep.subr.bf16.mxu0 0
        %1525 = vmatpush1.bf16.msra.mxu0 %v1503
        %1526 = vmatprep.subr.bf16.mxu0 0
        %1527 = vmatpush1.bf16.msra.mxu0 %v1504
        %1528 = vmatprep.subr.bf16.mxu0 0
        %1529 = vmatpush1.bf16.msra.mxu0 %v1505
        %1530 = vmatprep.subr.bf16.mxu0 0
        %1531 = vmatpush1.bf16.msra.mxu0 0
        %1532 = vmatprep.subr.bf16.mxu0 0
        %1533 = vmatpush1.bf16.msra.mxu0 0
        %1534 = vmatprep.subr.bf16.mxu0 0
        %1535 = vmatpush1.bf16.msra.mxu0 0
        %1536 = vmatprep.subr.bf16.mxu0 0
        %1537 = vmatpush1.bf16.msra.mxu0 0
        %1538 = vmatprep.subr.bf16.mxu0 0
        %1539 = vmatpush1.bf16.msra.mxu0 0
        %1540 = vmatprep.subr.bf16.mxu0 0
        %1541 = vmatpush1.bf16.msra.mxu0 0
        %1542 = vmatprep.subr.bf16.mxu0 0
        %1543 = vmatpush1.bf16.msra.mxu0 0
        %1544 = vmatprep.subr.bf16.mxu0 0
        %1545 = vmatpush1.bf16.msra.mxu0 0
        %1546 = vmatprep.mubr.bf16.mxu0 0
        %1547 = vmatmul.mubr.bf16.gmra.mrb[0].mxu0 %v1458
        %v1548 = vpop.f32.mrb[0].mxu0
        %v1549 = vadd.f32 0.0, %v1548
        %v1550 = vpop.f32.mrb[0].mxu0
        %v1551 = vpop.f32.mrb[0].mxu0
        %v1552 = vadd.f32 0.0, %v1551
        %v1553 = vpop.f32.mrb[0].mxu0
        %1554 = vmatprep.mubr.bf16.mxu0 0
        %1555 = vmatmul.mubr.bf16.gmra.mrb[0].mxu0 %v1459
        %v1556 = vpop.f32.mrb[0].mxu0
        %v1557 = vadd.f32 0.0, %v1556
        %v1558 = vpop.f32.mrb[0].mxu0
        %v1559 = vpop.f32.mrb[0].mxu0
        %v1560 = vadd.f32 0.0, %v1559
        %v1561 = vpop.f32.mrb[0].mxu0
        %1562 = vmatprep.mubr.bf16.mxu0 0
        %1563 = vmatmul.mubr.bf16.gmra.mrb[0].mxu0 %v1460
        %v1564 = vpop.f32.mrb[0].mxu0
        %v1565 = vadd.f32 0.0, %v1564
        %v1566 = vpop.f32.mrb[0].mxu0
        %v1567 = vpop.f32.mrb[0].mxu0
        %v1568 = vadd.f32 0.0, %v1567
        %v1569 = vpop.f32.mrb[0].mxu0
        %1570 = vmatprep.mubr.bf16.mxu0 0
        %1571 = vmatmul.mubr.bf16.gmra.mrb[0].mxu0 %v1461
        %v1572 = vpop.f32.mrb[0].mxu0
        %v1573 = vadd.f32 0.0, %v1572
        %v1574 = vpop.f32.mrb[0].mxu0
        %v1575 = vpop.f32.mrb[0].mxu0
        %v1576 = vadd.f32 0.0, %v1575
        %v1577 = vpop.f32.mrb[0].mxu0
        %1578 = vdwg.mxu0
        %v1579 = vadd.f32 %v1418, %v1549
        %v1580 = vadd.f32 %v1419, %v1552
        %v1581 = vadd.f32 %v1420, %v1557
        %v1582 = vadd.f32 %v1421, %v1560
        %v1583 = vadd.f32 %v1422, %v1565
        %v1584 = vadd.f32 %v1423, %v1568
        %v1585 = vadd.f32 %v1424, %v1573
        %v1586 = vadd.f32 %v1425, %v1576
        %v1588 = vrot.slane %v233, 5
        %v1589 = vrot.slane %v1588, 4
        %v1590 = vrot.slane %v234, 5
        %v1591 = vsel %vm665, %v1589, %v1590
        %s1592 = scalar_lea.vmem [#allocation5], 448
        %v1593 = vld [vmem:[%s1592] sm:$0xf]
        %v1594 = vld [vmem:[%s1592 + $0x4] sm:$0xf]
        %v1595 = vld [vmem:[%s1592 + $0x8] sm:$0xf]
        %v1596 = vld [vmem:[%s1592 + $0xc] sm:$0xf]
        %v1597 = vld [vmem:[%s1592 + $0x10] sm:$0xf]
        %v1598 = vld [vmem:[%s1592 + $0x14] sm:$0xf]
        %v1599 = vld [vmem:[%s1592 + $0x18] sm:$0xf]
        %v1600 = vld [vmem:[%s1592 + $0x1c] sm:$0xf]
        %v1601 = vld [vmem:[%s1592 + $0x20] sm:$0xf]
        %v1602 = vld [vmem:[%s1592 + $0x24] sm:$0xf]
        %v1603 = vld [vmem:[%s1592 + $0x28] sm:$0xf]
        %v1604 = vld [vmem:[%s1592 + $0x2c] sm:$0xf]
        %v1605 = vld [vmem:[%s1592 + $0x30] sm:$0xf]
        %v1606 = vld [vmem:[%s1592 + $0x34] sm:$0xf]
        %v1607 = vld [vmem:[%s1592 + $0x38] sm:$0xf]
        %v1608 = vld [vmem:[%s1592 + $0x3c] sm:$0xf]
        %v1609 = vunpack.c.l.b16 %v1591
        %v1610 = vpack.c.b16 %v717, %v716
        %v1611 = vpack.c.b16 %v719, %v718
        %v1612 = vpack.c.b16 %v721, %v720
        %v1613 = vpack.c.b16 %v1609, %v722
        %v1634 = vunpack.c.l.b16 %v1593
        %v1635 = vunpack.c.l.b16 %v1594
        %v1636 = vunpack.c.l.b16 %v1595
        %v1637 = vunpack.c.l.b16 %v1596
        %v1638 = vunpack.c.l.b16 %v1597
        %v1639 = vunpack.c.l.b16 %v1598
        %v1640 = vunpack.c.l.b16 %v1599
        %v1641 = vunpack.c.l.b16 %v1600
        %v1642 = vunpack.c.l.b16 %v1601
        %v1643 = vunpack.c.l.b16 %v1602
        %v1644 = vunpack.c.l.b16 %v1603
        %v1645 = vunpack.c.l.b16 %v1604
        %v1646 = vunpack.c.l.b16 %v1605
        %v1647 = vunpack.c.l.b16 %v1606
        %v1648 = vunpack.c.l.b16 %v1607
        %v1649 = vunpack.c.l.b16 %v1608
        %v1650 = vpack.c.b16 %v1635, %v1634
        %v1651 = vpack.c.b16 %v1637, %v1636
        %v1652 = vpack.c.b16 %v1639, %v1638
        %v1653 = vpack.c.b16 %v1641, %v1640
        %v1654 = vpack.c.b16 %v1643, %v1642
        %v1655 = vpack.c.b16 %v1645, %v1644
        %v1656 = vpack.c.b16 %v1647, %v1646
        %v1657 = vpack.c.b16 %v1649, %v1648
        %1666 = vmatprep.subr.bf16.mxu0 0
        %1667 = vmatpush1.bf16.msra.mxu0 %v1650
        %1668 = vmatprep.subr.bf16.mxu0 0
        %1669 = vmatpush1.bf16.msra.mxu0 %v1651
        %1670 = vmatprep.subr.bf16.mxu0 0
        %1671 = vmatpush1.bf16.msra.mxu0 %v1652
        %1672 = vmatprep.subr.bf16.mxu0 0
        %1673 = vmatpush1.bf16.msra.mxu0 %v1653
        %1674 = vmatprep.subr.bf16.mxu0 0
        %1675 = vmatpush1.bf16.msra.mxu0 %v1654
        %1676 = vmatprep.subr.bf16.mxu0 0
        %1677 = vmatpush1.bf16.msra.mxu0 %v1655
        %1678 = vmatprep.subr.bf16.mxu0 0
        %1679 = vmatpush1.bf16.msra.mxu0 %v1656
        %1680 = vmatprep.subr.bf16.mxu0 0
        %1681 = vmatpush1.bf16.msra.mxu0 %v1657
        %1682 = vmatprep.subr.bf16.mxu0 0
        %1683 = vmatpush1.bf16.msra.mxu0 0
        %1684 = vmatprep.subr.bf16.mxu0 0
        %1685 = vmatpush1.bf16.msra.mxu0 0
        %1686 = vmatprep.subr.bf16.mxu0 0
        %1687 = vmatpush1.bf16.msra.mxu0 0
        %1688 = vmatprep.subr.bf16.mxu0 0
        %1689 = vmatpush1.bf16.msra.mxu0 0
        %1690 = vmatprep.subr.bf16.mxu0 0
        %1691 = vmatpush1.bf16.msra.mxu0 0
        %1692 = vmatprep.subr.bf16.mxu0 0
        %1693 = vmatpush1.bf16.msra.mxu0 0
        %1694 = vmatprep.subr.bf16.mxu0 0
        %1695 = vmatpush1.bf16.msra.mxu0 0
        %1696 = vmatprep.subr.bf16.mxu0 0
        %1697 = vmatpush1.bf16.msra.mxu0 0
        %1698 = vmatprep.mubr.bf16.mxu0 0
        %1699 = vmatmul.mubr.bf16.gmra.mrb[0].mxu0 %v1610
        %v1700 = vpop.f32.mrb[0].mxu0
        %v1701 = vadd.f32 0.0, %v1700
        %v1702 = vpop.f32.mrb[0].mxu0
        %v1703 = vpop.f32.mrb[0].mxu0
        %v1704 = vadd.f32 0.0, %v1703
        %v1705 = vpop.f32.mrb[0].mxu0
        %1706 = vmatprep.mubr.bf16.mxu0 0
        %1707 = vmatmul.mubr.bf16.gmra.mrb[0].mxu0 %v1611
        %v1708 = vpop.f32.mrb[0].mxu0
        %v1709 = vadd.f32 0.0, %v1708
        %v1710 = vpop.f32.mrb[0].mxu0
        %v1711 = vpop.f32.mrb[0].mxu0
        %v1712 = vadd.f32 0.0, %v1711
        %v1713 = vpop.f32.mrb[0].mxu0
        %1714 = vmatprep.mubr.bf16.mxu0 0
        %1715 = vmatmul.mubr.bf16.gmra.mrb[0].mxu0 %v1612
        %v1716 = vpop.f32.mrb[0].mxu0
        %v1717 = vadd.f32 0.0, %v1716
        %v1718 = vpop.f32.mrb[0].mxu0
        %v1719 = vpop.f32.mrb[0].mxu0
        %v1720 = vadd.f32 0.0, %v1719
        %v1721 = vpop.f32.mrb[0].mxu0
        %1722 = vmatprep.mubr.bf16.mxu0 0
        %1723 = vmatmul.mubr.bf16.gmra.mrb[0].mxu0 %v1613
        %v1724 = vpop.f32.mrb[0].mxu0
        %v1725 = vadd.f32 0.0, %v1724
        %v1726 = vpop.f32.mrb[0].mxu0
        %v1727 = vpop.f32.mrb[0].mxu0
        %v1728 = vadd.f32 0.0, %v1727
        %v1729 = vpop.f32.mrb[0].mxu0
        %1730 = vdwg.mxu0
        %v1731 = vadd.f32 %v1579, %v1701
        %v1732 = vadd.f32 %v1580, %v1704
        %v1733 = vadd.f32 %v1581, %v1709
        %v1734 = vadd.f32 %v1582, %v1712
        %v1735 = vadd.f32 %v1583, %v1717
        %v1736 = vadd.f32 %v1584, %v1720
        %v1737 = vadd.f32 %v1585, %v1725
        %v1738 = vadd.f32 %v1586, %v1728
        %v1739 = vrot.slane %v1427, 5
        %v1740 = vrot.slane %v1430, 6
        %v1741 = vor.u32 %v1739, %v1740
        %v1742 = vrot.slane %v1741, 4
        %v1743 = vshrl.u32 %v234, 16
        %v1745 = vrot.slane %v1743, 5
        %v1746 = vrot.slane %v1436, 6
        %v1747 = vor.u32 %v1745, %v1746
        %v1748 = vsel %vm854, %v1742, %v1747
        %s1749 = scalar_lea.vmem [#allocation5], 512
        %v1750 = vld [vmem:[%s1749] sm:$0xf]
        %v1751 = vld [vmem:[%s1749 + $0x4] sm:$0xf]
        %v1752 = vld [vmem:[%s1749 + $0x8] sm:$0xf]
        %v1753 = vld [vmem:[%s1749 + $0xc] sm:$0xf]
        %v1754 = vld [vmem:[%s1749 + $0x10] sm:$0xf]
        %v1755 = vld [vmem:[%s1749 + $0x14] sm:$0xf]
        %v1756 = vld [vmem:[%s1749 + $0x18] sm:$0xf]
        %v1757 = vld [vmem:[%s1749 + $0x1c] sm:$0xf]
        %v1758 = vld [vmem:[%s1749 + $0x20] sm:$0xf]
        %v1759 = vld [vmem:[%s1749 + $0x24] sm:$0xf]
        %v1760 = vld [vmem:[%s1749 + $0x28] sm:$0xf]
        %v1761 = vld [vmem:[%s1749 + $0x2c] sm:$0xf]
        %v1762 = vld [vmem:[%s1749 + $0x30] sm:$0xf]
        %v1763 = vld [vmem:[%s1749 + $0x34] sm:$0xf]
        %v1764 = vld [vmem:[%s1749 + $0x38] sm:$0xf]
        %v1765 = vld [vmem:[%s1749 + $0x3c] sm:$0xf]
        %v1766 = vunpack.c.l.b16 %v1748
        %v1767 = vpack.c.b16 %v954, %v953
        %v1768 = vpack.c.b16 %v956, %v955
        %v1769 = vpack.c.b16 %v958, %v957
        %v1770 = vpack.c.b16 %v1766, %v959
        %v1791 = vunpack.c.l.b16 %v1750
        %v1792 = vunpack.c.l.b16 %v1751
        %v1793 = vunpack.c.l.b16 %v1752
        %v1794 = vunpack.c.l.b16 %v1753
        %v1795 = vunpack.c.l.b16 %v1754
        %v1796 = vunpack.c.l.b16 %v1755
        %v1797 = vunpack.c.l.b16 %v1756
        %v1798 = vunpack.c.l.b16 %v1757
        %v1799 = vunpack.c.l.b16 %v1758
        %v1800 = vunpack.c.l.b16 %v1759
        %v1801 = vunpack.c.l.b16 %v1760
        %v1802 = vunpack.c.l.b16 %v1761
        %v1803 = vunpack.c.l.b16 %v1762
        %v1804 = vunpack.c.l.b16 %v1763
        %v1805 = vunpack.c.l.b16 %v1764
        %v1806 = vunpack.c.l.b16 %v1765
        %v1807 = vpack.c.b16 %v1792, %v1791
        %v1808 = vpack.c.b16 %v1794, %v1793
        %v1809 = vpack.c.b16 %v1796, %v1795
        %v1810 = vpack.c.b16 %v1798, %v1797
        %v1811 = vpack.c.b16 %v1800, %v1799
        %v1812 = vpack.c.b16 %v1802, %v1801
        %v1813 = vpack.c.b16 %v1804, %v1803
        %v1814 = vpack.c.b16 %v1806, %v1805
        %1823 = vmatprep.subr.bf16.mxu0 0
        %1824 = vmatpush1.bf16.msra.mxu0 %v1807
        %1825 = vmatprep.subr.bf16.mxu0 0
        %1826 = vmatpush1.bf16.msra.mxu0 %v1808
        %1827 = vmatprep.subr.bf16.mxu0 0
        %1828 = vmatpush1.bf16.msra.mxu0 %v1809
        %1829 = vmatprep.subr.bf16.mxu0 0
        %1830 = vmatpush1.bf16.msra.mxu0 %v1810
        %1831 = vmatprep.subr.bf16.mxu0 0
        %1832 = vmatpush1.bf16.msra.mxu0 %v1811
        %1833 = vmatprep.subr.bf16.mxu0 0
        %1834 = vmatpush1.bf16.msra.mxu0 %v1812
        %1835 = vmatprep.subr.bf16.mxu0 0
        %1836 = vmatpush1.bf16.msra.mxu0 %v1813
        %1837 = vmatprep.subr.bf16.mxu0 0
        %1838 = vmatpush1.bf16.msra.mxu0 %v1814
        %1839 = vmatprep.subr.bf16.mxu0 0
        %1840 = vmatpush1.bf16.msra.mxu0 0
        %1841 = vmatprep.subr.bf16.mxu0 0
        %1842 = vmatpush1.bf16.msra.mxu0 0
        %1843 = vmatprep.subr.bf16.mxu0 0
        %1844 = vmatpush1.bf16.msra.mxu0 0
        %1845 = vmatprep.subr.bf16.mxu0 0
        %1846 = vmatpush1.bf16.msra.mxu0 0
        %1847 = vmatprep.subr.bf16.mxu0 0
        %1848 = vmatpush1.bf16.msra.mxu0 0
        %1849 = vmatprep.subr.bf16.mxu0 0
        %1850 = vmatpush1.bf16.msra.mxu0 0
        %1851 = vmatprep.subr.bf16.mxu0 0
        %1852 = vmatpush1.bf16.msra.mxu0 0
        %1853 = vmatprep.subr.bf16.mxu0 0
        %1854 = vmatpush1.bf16.msra.mxu0 0
        %1855 = vmatprep.mubr.bf16.mxu0 0
        %1856 = vmatmul.mubr.bf16.gmra.mrb[0].mxu0 %v1767
        %v1857 = vpop.f32.mrb[0].mxu0
        %v1858 = vadd.f32 0.0, %v1857
        %v1859 = vpop.f32.mrb[0].mxu0
        %v1860 = vpop.f32.mrb[0].mxu0
        %v1861 = vadd.f32 0.0, %v1860
        %v1862 = vpop.f32.mrb[0].mxu0
        %1863 = vmatprep.mubr.bf16.mxu0 0
        %1864 = vmatmul.mubr.bf16.gmra.mrb[0].mxu0 %v1768
        %v1865 = vpop.f32.mrb[0].mxu0
        %v1866 = vadd.f32 0.0, %v1865
        %v1867 = vpop.f32.mrb[0].mxu0
        %v1868 = vpop.f32.mrb[0].mxu0
        %v1869 = vadd.f32 0.0, %v1868
        %v1870 = vpop.f32.mrb[0].mxu0
        %1871 = vmatprep.mubr.bf16.mxu0 0
        %1872 = vmatmul.mubr.bf16.gmra.mrb[0].mxu0 %v1769
        %v1873 = vpop.f32.mrb[0].mxu0
        %v1874 = vadd.f32 0.0, %v1873
        %v1875 = vpop.f32.mrb[0].mxu0
        %v1876 = vpop.f32.mrb[0].mxu0
        %v1877 = vadd.f32 0.0, %v1876
        %v1878 = vpop.f32.mrb[0].mxu0
        %1879 = vmatprep.mubr.bf16.mxu0 0
        %1880 = vmatmul.mubr.bf16.gmra.mrb[0].mxu0 %v1770
        %v1881 = vpop.f32.mrb[0].mxu0
        %v1882 = vadd.f32 0.0, %v1881
        %v1883 = vpop.f32.mrb[0].mxu0
        %v1884 = vpop.f32.mrb[0].mxu0
        %v1885 = vadd.f32 0.0, %v1884
        %v1886 = vpop.f32.mrb[0].mxu0
        %1887 = vdwg.mxu0
        %v1888 = vadd.f32 %v1731, %v1858
        %v1889 = vadd.f32 %v1732, %v1861
        %v1890 = vadd.f32 %v1733, %v1866
        %v1891 = vadd.f32 %v1734, %v1869
        %v1892 = vadd.f32 %v1735, %v1874
        %v1893 = vadd.f32 %v1736, %v1877
        %v1894 = vadd.f32 %v1737, %v1882
        %v1895 = vadd.f32 %v1738, %v1885
        %v1896 = vrot.slane %v233, 6
        %v1897 = vrot.slane %v1896, 4
        %v1898 = vrot.slane %v234, 6
        %v1899 = vsel %vm1091, %v1897, %v1898
        %s1900 = scalar_lea.vmem [#allocation5], 576
        %v1901 = vld [vmem:[%s1900] sm:$0xf]
        %v1902 = vld [vmem:[%s1900 + $0x4] sm:$0xf]
        %v1903 = vld [vmem:[%s1900 + $0x8] sm:$0xf]
        %v1904 = vld [vmem:[%s1900 + $0xc] sm:$0xf]
        %v1905 = vld [vmem:[%s1900 + $0x10] sm:$0xf]
        %v1906 = vld [vmem:[%s1900 + $0x14] sm:$0xf]
        %v1907 = vld [vmem:[%s1900 + $0x18] sm:$0xf]
        %v1908 = vld [vmem:[%s1900 + $0x1c] sm:$0xf]
        %v1909 = vld [vmem:[%s1900 + $0x20] sm:$0xf]
        %v1910 = vld [vmem:[%s1900 + $0x24] sm:$0xf]
        %v1911 = vld [vmem:[%s1900 + $0x28] sm:$0xf]
        %v1912 = vld [vmem:[%s1900 + $0x2c] sm:$0xf]
        %v1913 = vld [vmem:[%s1900 + $0x30] sm:$0xf]
        %v1914 = vld [vmem:[%s1900 + $0x34] sm:$0xf]
        %v1915 = vld [vmem:[%s1900 + $0x38] sm:$0xf]
        %v1916 = vld [vmem:[%s1900 + $0x3c] sm:$0xf]
        %v1917 = vunpack.c.l.b16 %v1899
        %v1918 = vpack.c.b16 %v1143, %v1142
        %v1919 = vpack.c.b16 %v1145, %v1144
        %v1920 = vpack.c.b16 %v1147, %v1146
        %v1921 = vpack.c.b16 %v1917, %v1148
        %v1942 = vunpack.c.l.b16 %v1901
        %v1943 = vunpack.c.l.b16 %v1902
        %v1944 = vunpack.c.l.b16 %v1903
        %v1945 = vunpack.c.l.b16 %v1904
        %v1946 = vunpack.c.l.b16 %v1905
        %v1947 = vunpack.c.l.b16 %v1906
        %v1948 = vunpack.c.l.b16 %v1907
        %v1949 = vunpack.c.l.b16 %v1908
        %v1950 = vunpack.c.l.b16 %v1909
        %v1951 = vunpack.c.l.b16 %v1910
        %v1952 = vunpack.c.l.b16 %v1911
        %v1953 = vunpack.c.l.b16 %v1912
        %v1954 = vunpack.c.l.b16 %v1913
        %v1955 = vunpack.c.l.b16 %v1914
        %v1956 = vunpack.c.l.b16 %v1915
        %v1957 = vunpack.c.l.b16 %v1916
        %v1958 = vpack.c.b16 %v1943, %v1942
        %v1959 = vpack.c.b16 %v1945, %v1944
        %v1960 = vpack.c.b16 %v1947, %v1946
        %v1961 = vpack.c.b16 %v1949, %v1948
        %v1962 = vpack.c.b16 %v1951, %v1950
        %v1963 = vpack.c.b16 %v1953, %v1952
        %v1964 = vpack.c.b16 %v1955, %v1954
        %v1965 = vpack.c.b16 %v1957, %v1956
        %1974 = vmatprep.subr.bf16.mxu0 0
        %1975 = vmatpush1.bf16.msra.mxu0 %v1958
        %1976 = vmatprep.subr.bf16.mxu0 0
        %1977 = vmatpush1.bf16.msra.mxu0 %v1959
        %1978 = vmatprep.subr.bf16.mxu0 0
        %1979 = vmatpush1.bf16.msra.mxu0 %v1960
        %1980 = vmatprep.subr.bf16.mxu0 0
        %1981 = vmatpush1.bf16.msra.mxu0 %v1961
        %1982 = vmatprep.subr.bf16.mxu0 0
        %1983 = vmatpush1.bf16.msra.mxu0 %v1962
        %1984 = vmatprep.subr.bf16.mxu0 0
        %1985 = vmatpush1.bf16.msra.mxu0 %v1963
        %1986 = vmatprep.subr.bf16.mxu0 0
        %1987 = vmatpush1.bf16.msra.mxu0 %v1964
        %1988 = vmatprep.subr.bf16.mxu0 0
        %1989 = vmatpush1.bf16.msra.mxu0 %v1965
        %1990 = vmatprep.subr.bf16.mxu0 0
        %1991 = vmatpush1.bf16.msra.mxu0 0
        %1992 = vmatprep.subr.bf16.mxu0 0
        %1993 = vmatpush1.bf16.msra.mxu0 0
        %1994 = vmatprep.subr.bf16.mxu0 0
        %1995 = vmatpush1.bf16.msra.mxu0 0
        %1996 = vmatprep.subr.bf16.mxu0 0
        %1997 = vmatpush1.bf16.msra.mxu0 0
        %1998 = vmatprep.subr.bf16.mxu0 0
        %1999 = vmatpush1.bf16.msra.mxu0 0
        %2000 = vmatprep.subr.bf16.mxu0 0
        %2001 = vmatpush1.bf16.msra.mxu0 0
        %2002 = vmatprep.subr.bf16.mxu0 0
        %2003 = vmatpush1.bf16.msra.mxu0 0
        %2004 = vmatprep.subr.bf16.mxu0 0
        %2005 = vmatpush1.bf16.msra.mxu0 0
        %2006 = vmatprep.mubr.bf16.mxu0 0
        %2007 = vmatmul.mubr.bf16.gmra.mrb[0].mxu0 %v1918
        %v2008 = vpop.f32.mrb[0].mxu0
        %v2009 = vadd.f32 0.0, %v2008
        %v2010 = vpop.f32.mrb[0].mxu0
        %v2011 = vpop.f32.mrb[0].mxu0
        %v2012 = vadd.f32 0.0, %v2011
        %v2013 = vpop.f32.mrb[0].mxu0
        %2014 = vmatprep.mubr.bf16.mxu0 0
        %2015 = vmatmul.mubr.bf16.gmra.mrb[0].mxu0 %v1919
        %v2016 = vpop.f32.mrb[0].mxu0
        %v2017 = vadd.f32 0.0, %v2016
        %v2018 = vpop.f32.mrb[0].mxu0
        %v2019 = vpop.f32.mrb[0].mxu0
        %v2020 = vadd.f32 0.0, %v2019
        %v2021 = vpop.f32.mrb[0].mxu0
        %2022 = vmatprep.mubr.bf16.mxu0 0
        %2023 = vmatmul.mubr.bf16.gmra.mrb[0].mxu0 %v1920
        %v2024 = vpop.f32.mrb[0].mxu0
        %v2025 = vadd.f32 0.0, %v2024
        %v2026 = vpop.f32.mrb[0].mxu0
        %v2027 = vpop.f32.mrb[0].mxu0
        %v2028 = vadd.f32 0.0, %v2027
        %v2029 = vpop.f32.mrb[0].mxu0
        %2030 = vmatprep.mubr.bf16.mxu0 0
        %2031 = vmatmul.mubr.bf16.gmra.mrb[0].mxu0 %v1921
        %v2032 = vpop.f32.mrb[0].mxu0
        %v2033 = vadd.f32 0.0, %v2032
        %v2034 = vpop.f32.mrb[0].mxu0
        %v2035 = vpop.f32.mrb[0].mxu0
        %v2036 = vadd.f32 0.0, %v2035
        %v2037 = vpop.f32.mrb[0].mxu0
        %2038 = vdwg.mxu0
        %v2039 = vadd.f32 %v1888, %v2009
        %v2040 = vadd.f32 %v1889, %v2012
        %v2041 = vadd.f32 %v1890, %v2017
        %v2042 = vadd.f32 %v1891, %v2020
        %v2043 = vadd.f32 %v1892, %v2025
        %v2044 = vadd.f32 %v1893, %v2028
        %v2045 = vadd.f32 %v1894, %v2033
        %v2046 = vadd.f32 %v1895, %v2036
        %s2047 = scalar_lea.vmem [#allocation5], 640
        %v2048 = vld [vmem:[%s2047] sm:$0xf]
        %v2049 = vld [vmem:[%s2047 + $0x4] sm:$0xf]
        %v2050 = vld [vmem:[%s2047 + $0x8] sm:$0xf]
        %v2051 = vld [vmem:[%s2047 + $0xc] sm:$0xf]
        %v2052 = vld [vmem:[%s2047 + $0x10] sm:$0xf]
        %v2053 = vld [vmem:[%s2047 + $0x14] sm:$0xf]
        %v2054 = vld [vmem:[%s2047 + $0x18] sm:$0xf]
        %v2055 = vld [vmem:[%s2047 + $0x1c] sm:$0xf]
        %v2056 = vld [vmem:[%s2047 + $0x20] sm:$0xf]
        %v2057 = vld [vmem:[%s2047 + $0x24] sm:$0xf]
        %v2058 = vld [vmem:[%s2047 + $0x28] sm:$0xf]
        %v2059 = vld [vmem:[%s2047 + $0x2c] sm:$0xf]
        %v2060 = vld [vmem:[%s2047 + $0x30] sm:$0xf]
        %v2061 = vld [vmem:[%s2047 + $0x34] sm:$0xf]
        %v2062 = vld [vmem:[%s2047 + $0x38] sm:$0xf]
        %v2063 = vld [vmem:[%s2047 + $0x3c] sm:$0xf]
        %v2065 = vunpack.c.l.b16 %v235
        %v2066 = vpack.c.b16 %v2065, %v1296
        %v2084 = vunpack.c.l.b16 %v2048
        %v2085 = vunpack.c.l.b16 %v2049
        %v2086 = vunpack.c.l.b16 %v2050
        %v2087 = vunpack.c.l.b16 %v2051
        %v2088 = vunpack.c.l.b16 %v2052
        %v2089 = vunpack.c.l.b16 %v2053
        %v2090 = vunpack.c.l.b16 %v2054
        %v2091 = vunpack.c.l.b16 %v2055
        %v2092 = vunpack.c.l.b16 %v2056
        %v2093 = vunpack.c.l.b16 %v2057
        %v2094 = vunpack.c.l.b16 %v2058
        %v2095 = vunpack.c.l.b16 %v2059
        %v2096 = vunpack.c.l.b16 %v2060
        %v2097 = vunpack.c.l.b16 %v2061
        %v2098 = vunpack.c.l.b16 %v2062
        %v2099 = vunpack.c.l.b16 %v2063
        %v2100 = vpack.c.b16 %v2085, %v2084
        %v2101 = vpack.c.b16 %v2087, %v2086
        %v2102 = vpack.c.b16 %v2089, %v2088
        %v2103 = vpack.c.b16 %v2091, %v2090
        %v2104 = vpack.c.b16 %v2093, %v2092
        %v2105 = vpack.c.b16 %v2095, %v2094
        %v2106 = vpack.c.b16 %v2097, %v2096
        %v2107 = vpack.c.b16 %v2099, %v2098
        %2116 = vmatprep.subr.bf16.mxu0 0
        %2117 = vmatpush1.bf16.msra.mxu0 %v2100
        %2118 = vmatprep.subr.bf16.mxu0 0
        %2119 = vmatpush1.bf16.msra.mxu0 %v2101
        %2120 = vmatprep.subr.bf16.mxu0 0
        %2121 = vmatpush1.bf16.msra.mxu0 %v2102
        %2122 = vmatprep.subr.bf16.mxu0 0
        %2123 = vmatpush1.bf16.msra.mxu0 %v2103
        %2124 = vmatprep.subr.bf16.mxu0 0
        %2125 = vmatpush1.bf16.msra.mxu0 %v2104
        %2126 = vmatprep.subr.bf16.mxu0 0
        %2127 = vmatpush1.bf16.msra.mxu0 %v2105
        %2128 = vmatprep.subr.bf16.mxu0 0
        %2129 = vmatpush1.bf16.msra.mxu0 %v2106
        %2130 = vmatprep.subr.bf16.mxu0 0
        %2131 = vmatpush1.bf16.msra.mxu0 %v2107
        %2132 = vmatprep.subr.bf16.mxu0 0
        %2133 = vmatpush1.bf16.msra.mxu0 0
        %2134 = vmatprep.subr.bf16.mxu0 0
        %2135 = vmatpush1.bf16.msra.mxu0 0
        %2136 = vmatprep.subr.bf16.mxu0 0
        %2137 = vmatpush1.bf16.msra.mxu0 0
        %2138 = vmatprep.subr.bf16.mxu0 0
        %2139 = vmatpush1.bf16.msra.mxu0 0
        %2140 = vmatprep.subr.bf16.mxu0 0
        %2141 = vmatpush1.bf16.msra.mxu0 0
        %2142 = vmatprep.subr.bf16.mxu0 0
        %2143 = vmatpush1.bf16.msra.mxu0 0
        %2144 = vmatprep.subr.bf16.mxu0 0
        %2145 = vmatpush1.bf16.msra.mxu0 0
        %2146 = vmatprep.subr.bf16.mxu0 0
        %2147 = vmatpush1.bf16.msra.mxu0 0
        %2148 = vmatprep.mubr.bf16.mxu0 0
        %2149 = vmatmul.mubr.bf16.gmra.mrb[0].mxu0 %v535
        %v2150 = vpop.f32.mrb[0].mxu0
        %v2151 = vadd.f32 0.0, %v2150
        %v2152 = vpop.f32.mrb[0].mxu0
        %v2153 = vpop.f32.mrb[0].mxu0
        %v2154 = vadd.f32 0.0, %v2153
        %v2155 = vpop.f32.mrb[0].mxu0
        %2156 = vmatprep.mubr.bf16.mxu0 0
        %2157 = vmatmul.mubr.bf16.gmra.mrb[0].mxu0 %v536
        %v2158 = vpop.f32.mrb[0].mxu0
        %v2159 = vadd.f32 0.0, %v2158
        %v2160 = vpop.f32.mrb[0].mxu0
        %v2161 = vpop.f32.mrb[0].mxu0
        %v2162 = vadd.f32 0.0, %v2161
        %v2163 = vpop.f32.mrb[0].mxu0
        %2164 = vmatprep.mubr.bf16.mxu0 0
        %2165 = vmatmul.mubr.bf16.gmra.mrb[0].mxu0 %v537
        %v2166 = vpop.f32.mrb[0].mxu0
        %v2167 = vadd.f32 0.0, %v2166
        %v2168 = vpop.f32.mrb[0].mxu0
        %v2169 = vpop.f32.mrb[0].mxu0
        %v2170 = vadd.f32 0.0, %v2169
        %v2171 = vpop.f32.mrb[0].mxu0
        %2172 = vmatprep.mubr.bf16.mxu0 0
        %2173 = vmatmul.mubr.bf16.gmra.mrb[0].mxu0 %v2066
        %v2174 = vpop.f32.mrb[0].mxu0
        %v2175 = vadd.f32 0.0, %v2174
        %v2176 = vpop.f32.mrb[0].mxu0
        %v2177 = vpop.f32.mrb[0].mxu0
        %v2178 = vadd.f32 0.0, %v2177
        %v2179 = vpop.f32.mrb[0].mxu0
        %2180 = vdwg.mxu0
        %v2181 = vadd.f32 %v2039, %v2151
        %v2182 = vadd.f32 %v2040, %v2154
        %v2183 = vadd.f32 %v2041, %v2159
        %v2184 = vadd.f32 %v2042, %v2162
        %v2185 = vadd.f32 %v2043, %v2167
        %v2186 = vadd.f32 %v2044, %v2170
        %v2187 = vadd.f32 %v2045, %v2175
        %v2188 = vadd.f32 %v2046, %v2178
        %v2190 = vshrl.u32 %v235, 16
        %v2192 = vrot.slane %v2190, 4
        %v2193 = vshll.u32 %v235, 16
        %v2195 = vrot.slane %v2193, 5
        %v2196 = vor.u32 %v2192, %v2195
        %v2197 = vrot.slane %v2196, 4
        %v2199 = vshll.u32 %v236, 16
        %v2201 = vrot.slane %v2199, 5
        %v2202 = vsel %vm259, %v2197, %v2201
        %s2203 = scalar_lea.vmem [#allocation5], 704
        %v2204 = vld [vmem:[%s2203] sm:$0xf]
        %v2205 = vld [vmem:[%s2203 + $0x4] sm:$0xf]
        %v2206 = vld [vmem:[%s2203 + $0x8] sm:$0xf]
        %v2207 = vld [vmem:[%s2203 + $0xc] sm:$0xf]
        %v2208 = vld [vmem:[%s2203 + $0x10] sm:$0xf]
        %v2209 = vld [vmem:[%s2203 + $0x14] sm:$0xf]
        %v2210 = vld [vmem:[%s2203 + $0x18] sm:$0xf]
        %v2211 = vld [vmem:[%s2203 + $0x1c] sm:$0xf]
        %v2212 = vld [vmem:[%s2203 + $0x20] sm:$0xf]
        %v2213 = vld [vmem:[%s2203 + $0x24] sm:$0xf]
        %v2214 = vld [vmem:[%s2203 + $0x28] sm:$0xf]
        %v2215 = vld [vmem:[%s2203 + $0x2c] sm:$0xf]
        %v2216 = vld [vmem:[%s2203 + $0x30] sm:$0xf]
        %v2217 = vld [vmem:[%s2203 + $0x34] sm:$0xf]
        %v2218 = vld [vmem:[%s2203 + $0x38] sm:$0xf]
        %v2219 = vld [vmem:[%s2203 + $0x3c] sm:$0xf]
        %v2220 = vunpack.c.l.b16 %v2202
        %v2221 = vpack.c.b16 %v2220, %v1457
        %v2239 = vunpack.c.l.b16 %v2204
        %v2240 = vunpack.c.l.b16 %v2205
        %v2241 = vunpack.c.l.b16 %v2206
        %v2242 = vunpack.c.l.b16 %v2207
        %v2243 = vunpack.c.l.b16 %v2208
        %v2244 = vunpack.c.l.b16 %v2209
        %v2245 = vunpack.c.l.b16 %v2210
        %v2246 = vunpack.c.l.b16 %v2211
        %v2247 = vunpack.c.l.b16 %v2212
        %v2248 = vunpack.c.l.b16 %v2213
        %v2249 = vunpack.c.l.b16 %v2214
        %v2250 = vunpack.c.l.b16 %v2215
        %v2251 = vunpack.c.l.b16 %v2216
        %v2252 = vunpack.c.l.b16 %v2217
        %v2253 = vunpack.c.l.b16 %v2218
        %v2254 = vunpack.c.l.b16 %v2219
        %v2255 = vpack.c.b16 %v2240, %v2239
        %v2256 = vpack.c.b16 %v2242, %v2241
        %v2257 = vpack.c.b16 %v2244, %v2243
        %v2258 = vpack.c.b16 %v2246, %v2245
        %v2259 = vpack.c.b16 %v2248, %v2247
        %v2260 = vpack.c.b16 %v2250, %v2249
        %v2261 = vpack.c.b16 %v2252, %v2251
        %v2262 = vpack.c.b16 %v2254, %v2253
        %2271 = vmatprep.subr.bf16.mxu0 0
        %2272 = vmatpush1.bf16.msra.mxu0 %v2255
        %2273 = vmatprep.subr.bf16.mxu0 0
        %2274 = vmatpush1.bf16.msra.mxu0 %v2256
        %2275 = vmatprep.subr.bf16.mxu0 0
        %2276 = vmatpush1.bf16.msra.mxu0 %v2257
        %2277 = vmatprep.subr.bf16.mxu0 0
        %2278 = vmatpush1.bf16.msra.mxu0 %v2258
        %2279 = vmatprep.subr.bf16.mxu0 0
        %2280 = vmatpush1.bf16.msra.mxu0 %v2259
        %2281 = vmatprep.subr.bf16.mxu0 0
        %2282 = vmatpush1.bf16.msra.mxu0 %v2260
        %2283 = vmatprep.subr.bf16.mxu0 0
        %2284 = vmatpush1.bf16.msra.mxu0 %v2261
        %2285 = vmatprep.subr.bf16.mxu0 0
        %2286 = vmatpush1.bf16.msra.mxu0 %v2262
        %2287 = vmatprep.subr.bf16.mxu0 0
        %2288 = vmatpush1.bf16.msra.mxu0 0
        %2289 = vmatprep.subr.bf16.mxu0 0
        %2290 = vmatpush1.bf16.msra.mxu0 0
        %2291 = vmatprep.subr.bf16.mxu0 0
        %2292 = vmatpush1.bf16.msra.mxu0 0
        %2293 = vmatprep.subr.bf16.mxu0 0
        %2294 = vmatpush1.bf16.msra.mxu0 0
        %2295 = vmatprep.subr.bf16.mxu0 0
        %2296 = vmatpush1.bf16.msra.mxu0 0
        %2297 = vmatprep.subr.bf16.mxu0 0
        %2298 = vmatpush1.bf16.msra.mxu0 0
        %2299 = vmatprep.subr.bf16.mxu0 0
        %2300 = vmatpush1.bf16.msra.mxu0 0
        %2301 = vmatprep.subr.bf16.mxu0 0
        %2302 = vmatpush1.bf16.msra.mxu0 0
        %2303 = vmatprep.mubr.bf16.mxu0 0
        %2304 = vmatmul.mubr.bf16.gmra.mrb[0].mxu0 %v398
        %v2305 = vpop.f32.mrb[0].mxu0
        %v2306 = vadd.f32 0.0, %v2305
        %v2307 = vpop.f32.mrb[0].mxu0
        %v2308 = vpop.f32.mrb[0].mxu0
        %v2309 = vadd.f32 0.0, %v2308
        %v2310 = vpop.f32.mrb[0].mxu0
        %2311 = vmatprep.mubr.bf16.mxu0 0
        %2312 = vmatmul.mubr.bf16.gmra.mrb[0].mxu0 %v399
        %v2313 = vpop.f32.mrb[0].mxu0
        %v2314 = vadd.f32 0.0, %v2313
        %v2315 = vpop.f32.mrb[0].mxu0
        %v2316 = vpop.f32.mrb[0].mxu0
        %v2317 = vadd.f32 0.0, %v2316
        %v2318 = vpop.f32.mrb[0].mxu0
        %2319 = vmatprep.mubr.bf16.mxu0 0
        %2320 = vmatmul.mubr.bf16.gmra.mrb[0].mxu0 %v400
        %v2321 = vpop.f32.mrb[0].mxu0
        %v2322 = vadd.f32 0.0, %v2321
        %v2323 = vpop.f32.mrb[0].mxu0
        %v2324 = vpop.f32.mrb[0].mxu0
        %v2325 = vadd.f32 0.0, %v2324
        %v2326 = vpop.f32.mrb[0].mxu0
        %2327 = vmatprep.mubr.bf16.mxu0 0
        %2328 = vmatmul.mubr.bf16.gmra.mrb[0].mxu0 %v2221
        %v2329 = vpop.f32.mrb[0].mxu0
        %v2330 = vadd.f32 0.0, %v2329
        %v2331 = vpop.f32.mrb[0].mxu0
        %v2332 = vpop.f32.mrb[0].mxu0
        %v2333 = vadd.f32 0.0, %v2332
        %v2334 = vpop.f32.mrb[0].mxu0
        %2335 = vdwg.mxu0
        %v2336 = vadd.f32 %v2181, %v2306
        %v2337 = vadd.f32 %v2182, %v2309
        %v2338 = vadd.f32 %v2183, %v2314
        %v2339 = vadd.f32 %v2184, %v2317
        %v2340 = vadd.f32 %v2185, %v2322
        %v2341 = vadd.f32 %v2186, %v2325
        %v2342 = vadd.f32 %v2187, %v2330
        %v2343 = vadd.f32 %v2188, %v2333
        %v2345 = vrot.slane %v235, 5
        %v2346 = vrot.slane %v2345, 4
        %v2347 = vrot.slane %v236, 5
        %v2348 = vsel %vm665, %v2346, %v2347
        %s2349 = scalar_lea.vmem [#allocation5], 768
        %v2350 = vld [vmem:[%s2349] sm:$0xf]
        %v2351 = vld [vmem:[%s2349 + $0x4] sm:$0xf]
        %v2352 = vld [vmem:[%s2349 + $0x8] sm:$0xf]
        %v2353 = vld [vmem:[%s2349 + $0xc] sm:$0xf]
        %v2354 = vld [vmem:[%s2349 + $0x10] sm:$0xf]
        %v2355 = vld [vmem:[%s2349 + $0x14] sm:$0xf]
        %v2356 = vld [vmem:[%s2349 + $0x18] sm:$0xf]
        %v2357 = vld [vmem:[%s2349 + $0x1c] sm:$0xf]
        %v2358 = vld [vmem:[%s2349 + $0x20] sm:$0xf]
        %v2359 = vld [vmem:[%s2349 + $0x24] sm:$0xf]
        %v2360 = vld [vmem:[%s2349 + $0x28] sm:$0xf]
        %v2361 = vld [vmem:[%s2349 + $0x2c] sm:$0xf]
        %v2362 = vld [vmem:[%s2349 + $0x30] sm:$0xf]
        %v2363 = vld [vmem:[%s2349 + $0x34] sm:$0xf]
        %v2364 = vld [vmem:[%s2349 + $0x38] sm:$0xf]
        %v2365 = vld [vmem:[%s2349 + $0x3c] sm:$0xf]
        %v2366 = vunpack.c.l.b16 %v2348
        %v2367 = vpack.c.b16 %v2366, %v1609
        %v2385 = vunpack.c.l.b16 %v2350
        %v2386 = vunpack.c.l.b16 %v2351
        %v2387 = vunpack.c.l.b16 %v2352
        %v2388 = vunpack.c.l.b16 %v2353
        %v2389 = vunpack.c.l.b16 %v2354
        %v2390 = vunpack.c.l.b16 %v2355
        %v2391 = vunpack.c.l.b16 %v2356
        %v2392 = vunpack.c.l.b16 %v2357
        %v2393 = vunpack.c.l.b16 %v2358
        %v2394 = vunpack.c.l.b16 %v2359
        %v2395 = vunpack.c.l.b16 %v2360
        %v2396 = vunpack.c.l.b16 %v2361
        %v2397 = vunpack.c.l.b16 %v2362
        %v2398 = vunpack.c.l.b16 %v2363
        %v2399 = vunpack.c.l.b16 %v2364
        %v2400 = vunpack.c.l.b16 %v2365
        %v2401 = vpack.c.b16 %v2386, %v2385
        %v2402 = vpack.c.b16 %v2388, %v2387
        %v2403 = vpack.c.b16 %v2390, %v2389
        %v2404 = vpack.c.b16 %v2392, %v2391
        %v2405 = vpack.c.b16 %v2394, %v2393
        %v2406 = vpack.c.b16 %v2396, %v2395
        %v2407 = vpack.c.b16 %v2398, %v2397
        %v2408 = vpack.c.b16 %v2400, %v2399
        %2417 = vmatprep.subr.bf16.mxu0 0
        %2418 = vmatpush1.bf16.msra.mxu0 %v2401
        %2419 = vmatprep.subr.bf16.mxu0 0
        %2420 = vmatpush1.bf16.msra.mxu0 %v2402
        %2421 = vmatprep.subr.bf16.mxu0 0
        %2422 = vmatpush1.bf16.msra.mxu0 %v2403
        %2423 = vmatprep.subr.bf16.mxu0 0
        %2424 = vmatpush1.bf16.msra.mxu0 %v2404
        %2425 = vmatprep.subr.bf16.mxu0 0
        %2426 = vmatpush1.bf16.msra.mxu0 %v2405
        %2427 = vmatprep.subr.bf16.mxu0 0
        %2428 = vmatpush1.bf16.msra.mxu0 %v2406
        %2429 = vmatprep.subr.bf16.mxu0 0
        %2430 = vmatpush1.bf16.msra.mxu0 %v2407
        %2431 = vmatprep.subr.bf16.mxu0 0
        %2432 = vmatpush1.bf16.msra.mxu0 %v2408
        %2433 = vmatprep.subr.bf16.mxu0 0
        %2434 = vmatpush1.bf16.msra.mxu0 0
        %2435 = vmatprep.subr.bf16.mxu0 0
        %2436 = vmatpush1.bf16.msra.mxu0 0
        %2437 = vmatprep.subr.bf16.mxu0 0
        %2438 = vmatpush1.bf16.msra.mxu0 0
        %2439 = vmatprep.subr.bf16.mxu0 0
        %2440 = vmatpush1.bf16.msra.mxu0 0
        %2441 = vmatprep.subr.bf16.mxu0 0
        %2442 = vmatpush1.bf16.msra.mxu0 0
        %2443 = vmatprep.subr.bf16.mxu0 0
        %2444 = vmatpush1.bf16.msra.mxu0 0
        %2445 = vmatprep.subr.bf16.mxu0 0
        %2446 = vmatpush1.bf16.msra.mxu0 0
        %2447 = vmatprep.subr.bf16.mxu0 0
        %2448 = vmatpush1.bf16.msra.mxu0 0
        %2449 = vmatprep.mubr.bf16.mxu0 0
        %2450 = vmatmul.mubr.bf16.gmra.mrb[0].mxu0 %v724
        %v2451 = vpop.f32.mrb[0].mxu0
        %v2452 = vadd.f32 0.0, %v2451
        %v2453 = vpop.f32.mrb[0].mxu0
        %v2454 = vpop.f32.mrb[0].mxu0
        %v2455 = vadd.f32 0.0, %v2454
        %v2456 = vpop.f32.mrb[0].mxu0
        %2457 = vmatprep.mubr.bf16.mxu0 0
        %2458 = vmatmul.mubr.bf16.gmra.mrb[0].mxu0 %v725
        %v2459 = vpop.f32.mrb[0].mxu0
        %v2460 = vadd.f32 0.0, %v2459
        %v2461 = vpop.f32.mrb[0].mxu0
        %v2462 = vpop.f32.mrb[0].mxu0
        %v2463 = vadd.f32 0.0, %v2462
        %v2464 = vpop.f32.mrb[0].mxu0
        %2465 = vmatprep.mubr.bf16.mxu0 0
        %2466 = vmatmul.mubr.bf16.gmra.mrb[0].mxu0 %v726
        %v2467 = vpop.f32.mrb[0].mxu0
        %v2468 = vadd.f32 0.0, %v2467
        %v2469 = vpop.f32.mrb[0].mxu0
        %v2470 = vpop.f32.mrb[0].mxu0
        %v2471 = vadd.f32 0.0, %v2470
        %v2472 = vpop.f32.mrb[0].mxu0
        %2473 = vmatprep.mubr.bf16.mxu0 0
        %2474 = vmatmul.mubr.bf16.gmra.mrb[0].mxu0 %v2367
        %v2475 = vpop.f32.mrb[0].mxu0
        %v2476 = vadd.f32 0.0, %v2475
        %v2477 = vpop.f32.mrb[0].mxu0
        %v2478 = vpop.f32.mrb[0].mxu0
        %v2479 = vadd.f32 0.0, %v2478
        %v2480 = vpop.f32.mrb[0].mxu0
        %2481 = vdwg.mxu0
        %v2482 = vadd.f32 %v2336, %v2452
        %v2483 = vadd.f32 %v2337, %v2455
        %v2484 = vadd.f32 %v2338, %v2460
        %v2485 = vadd.f32 %v2339, %v2463
        %v2486 = vadd.f32 %v2340, %v2468
        %v2487 = vadd.f32 %v2341, %v2471
        %v2488 = vadd.f32 %v2342, %v2476
        %v2489 = vadd.f32 %v2343, %v2479
        %v2490 = vrot.slane %v2190, 5
        %v2491 = vrot.slane %v2193, 6
        %v2492 = vor.u32 %v2490, %v2491
        %v2493 = vrot.slane %v2492, 4
        %v2494 = vshrl.u32 %v236, 16
        %v2496 = vrot.slane %v2494, 5
        %v2497 = vrot.slane %v2199, 6
        %v2498 = vor.u32 %v2496, %v2497
        %v2499 = vsel %vm854, %v2493, %v2498
        %s2500 = scalar_lea.vmem [#allocation5], 832
        %v2501 = vld [vmem:[%s2500] sm:$0xf]
        %v2502 = vld [vmem:[%s2500 + $0x4] sm:$0xf]
        %v2503 = vld [vmem:[%s2500 + $0x8] sm:$0xf]
        %v2504 = vld [vmem:[%s2500 + $0xc] sm:$0xf]
        %v2505 = vld [vmem:[%s2500 + $0x10] sm:$0xf]
        %v2506 = vld [vmem:[%s2500 + $0x14] sm:$0xf]
        %v2507 = vld [vmem:[%s2500 + $0x18] sm:$0xf]
        %v2508 = vld [vmem:[%s2500 + $0x1c] sm:$0xf]
        %v2509 = vld [vmem:[%s2500 + $0x20] sm:$0xf]
        %v2510 = vld [vmem:[%s2500 + $0x24] sm:$0xf]
        %v2511 = vld [vmem:[%s2500 + $0x28] sm:$0xf]
        %v2512 = vld [vmem:[%s2500 + $0x2c] sm:$0xf]
        %v2513 = vld [vmem:[%s2500 + $0x30] sm:$0xf]
        %v2514 = vld [vmem:[%s2500 + $0x34] sm:$0xf]
        %v2515 = vld [vmem:[%s2500 + $0x38] sm:$0xf]
        %v2516 = vld [vmem:[%s2500 + $0x3c] sm:$0xf]
        %v2517 = vunpack.c.l.b16 %v2499
        %v2518 = vpack.c.b16 %v2517, %v1766
        %v2536 = vunpack.c.l.b16 %v2501
        %v2537 = vunpack.c.l.b16 %v2502
        %v2538 = vunpack.c.l.b16 %v2503
        %v2539 = vunpack.c.l.b16 %v2504
        %v2540 = vunpack.c.l.b16 %v2505
        %v2541 = vunpack.c.l.b16 %v2506
        %v2542 = vunpack.c.l.b16 %v2507
        %v2543 = vunpack.c.l.b16 %v2508
        %v2544 = vunpack.c.l.b16 %v2509
        %v2545 = vunpack.c.l.b16 %v2510
        %v2546 = vunpack.c.l.b16 %v2511
        %v2547 = vunpack.c.l.b16 %v2512
        %v2548 = vunpack.c.l.b16 %v2513
        %v2549 = vunpack.c.l.b16 %v2514
        %v2550 = vunpack.c.l.b16 %v2515
        %v2551 = vunpack.c.l.b16 %v2516
        %v2552 = vpack.c.b16 %v2537, %v2536
        %v2553 = vpack.c.b16 %v2539, %v2538
        %v2554 = vpack.c.b16 %v2541, %v2540
        %v2555 = vpack.c.b16 %v2543, %v2542
        %v2556 = vpack.c.b16 %v2545, %v2544
        %v2557 = vpack.c.b16 %v2547, %v2546
        %v2558 = vpack.c.b16 %v2549, %v2548
        %v2559 = vpack.c.b16 %v2551, %v2550
        %2568 = vmatprep.subr.bf16.mxu0 0
        %2569 = vmatpush1.bf16.msra.mxu0 %v2552
        %2570 = vmatprep.subr.bf16.mxu0 0
        %2571 = vmatpush1.bf16.msra.mxu0 %v2553
        %2572 = vmatprep.subr.bf16.mxu0 0
        %2573 = vmatpush1.bf16.msra.mxu0 %v2554
        %2574 = vmatprep.subr.bf16.mxu0 0
        %2575 = vmatpush1.bf16.msra.mxu0 %v2555
        %2576 = vmatprep.subr.bf16.mxu0 0
        %2577 = vmatpush1.bf16.msra.mxu0 %v2556
        %2578 = vmatprep.subr.bf16.mxu0 0
        %2579 = vmatpush1.bf16.msra.mxu0 %v2557
        %2580 = vmatprep.subr.bf16.mxu0 0
        %2581 = vmatpush1.bf16.msra.mxu0 %v2558
        %2582 = vmatprep.subr.bf16.mxu0 0
        %2583 = vmatpush1.bf16.msra.mxu0 %v2559
        %2584 = vmatprep.subr.bf16.mxu0 0
        %2585 = vmatpush1.bf16.msra.mxu0 0
        %2586 = vmatprep.subr.bf16.mxu0 0
        %2587 = vmatpush1.bf16.msra.mxu0 0
        %2588 = vmatprep.subr.bf16.mxu0 0
        %2589 = vmatpush1.bf16.msra.mxu0 0
        %2590 = vmatprep.subr.bf16.mxu0 0
        %2591 = vmatpush1.bf16.msra.mxu0 0
        %2592 = vmatprep.subr.bf16.mxu0 0
        %2593 = vmatpush1.bf16.msra.mxu0 0
        %2594 = vmatprep.subr.bf16.mxu0 0
        %2595 = vmatpush1.bf16.msra.mxu0 0
        %2596 = vmatprep.subr.bf16.mxu0 0
        %2597 = vmatpush1.bf16.msra.mxu0 0
        %2598 = vmatprep.subr.bf16.mxu0 0
        %2599 = vmatpush1.bf16.msra.mxu0 0
        %2600 = vmatprep.mubr.bf16.mxu0 0
        %2601 = vmatmul.mubr.bf16.gmra.mrb[0].mxu0 %v961
        %v2602 = vpop.f32.mrb[0].mxu0
        %v2603 = vadd.f32 0.0, %v2602
        %v2604 = vpop.f32.mrb[0].mxu0
        %v2605 = vpop.f32.mrb[0].mxu0
        %v2606 = vadd.f32 0.0, %v2605
        %v2607 = vpop.f32.mrb[0].mxu0
        %2608 = vmatprep.mubr.bf16.mxu0 0
        %2609 = vmatmul.mubr.bf16.gmra.mrb[0].mxu0 %v962
        %v2610 = vpop.f32.mrb[0].mxu0
        %v2611 = vadd.f32 0.0, %v2610
        %v2612 = vpop.f32.mrb[0].mxu0
        %v2613 = vpop.f32.mrb[0].mxu0
        %v2614 = vadd.f32 0.0, %v2613
        %v2615 = vpop.f32.mrb[0].mxu0
        %2616 = vmatprep.mubr.bf16.mxu0 0
        %2617 = vmatmul.mubr.bf16.gmra.mrb[0].mxu0 %v963
        %v2618 = vpop.f32.mrb[0].mxu0
        %v2619 = vadd.f32 0.0, %v2618
        %v2620 = vpop.f32.mrb[0].mxu0
        %v2621 = vpop.f32.mrb[0].mxu0
        %v2622 = vadd.f32 0.0, %v2621
        %v2623 = vpop.f32.mrb[0].mxu0
        %2624 = vmatprep.mubr.bf16.mxu0 0
        %2625 = vmatmul.mubr.bf16.gmra.mrb[0].mxu0 %v2518
        %v2626 = vpop.f32.mrb[0].mxu0
        %v2627 = vadd.f32 0.0, %v2626
        %v2628 = vpop.f32.mrb[0].mxu0
        %v2629 = vpop.f32.mrb[0].mxu0
        %v2630 = vadd.f32 0.0, %v2629
        %v2631 = vpop.f32.mrb[0].mxu0
        %2632 = vdwg.mxu0
        %v2633 = vadd.f32 %v2482, %v2603
        %v2634 = vadd.f32 %v2483, %v2606
        %v2635 = vadd.f32 %v2484, %v2611
        %v2636 = vadd.f32 %v2485, %v2614
        %v2637 = vadd.f32 %v2486, %v2619
        %v2638 = vadd.f32 %v2487, %v2622
        %v2639 = vadd.f32 %v2488, %v2627
        %v2640 = vadd.f32 %v2489, %v2630
        %v2641 = vrot.slane %v235, 6
        %v2642 = vrot.slane %v2641, 4
        %v2643 = vrot.slane %v236, 6
        %v2644 = vsel %vm1091, %v2642, %v2643
        %s2645 = scalar_lea.vmem [#allocation5], 896
        %v2646 = vld [vmem:[%s2645] sm:$0xf]
        %v2647 = vld [vmem:[%s2645 + $0x4] sm:$0xf]
        %v2648 = vld [vmem:[%s2645 + $0x8] sm:$0xf]
        %v2649 = vld [vmem:[%s2645 + $0xc] sm:$0xf]
        %v2650 = vld [vmem:[%s2645 + $0x10] sm:$0xf]
        %v2651 = vld [vmem:[%s2645 + $0x14] sm:$0xf]
        %v2652 = vld [vmem:[%s2645 + $0x18] sm:$0xf]
        %v2653 = vld [vmem:[%s2645 + $0x1c] sm:$0xf]
        %v2654 = vld [vmem:[%s2645 + $0x20] sm:$0xf]
        %v2655 = vld [vmem:[%s2645 + $0x24] sm:$0xf]
        %v2656 = vld [vmem:[%s2645 + $0x28] sm:$0xf]
        %v2657 = vld [vmem:[%s2645 + $0x2c] sm:$0xf]
        %v2658 = vld [vmem:[%s2645 + $0x30] sm:$0xf]
        %v2659 = vld [vmem:[%s2645 + $0x34] sm:$0xf]
        %v2660 = vld [vmem:[%s2645 + $0x38] sm:$0xf]
        %v2661 = vld [vmem:[%s2645 + $0x3c] sm:$0xf]
        %v2662 = vunpack.c.l.b16 %v2644
        %v2663 = vpack.c.b16 %v2662, %v1917
        %v2681 = vunpack.c.l.b16 %v2646
        %v2682 = vunpack.c.l.b16 %v2647
        %v2683 = vunpack.c.l.b16 %v2648
        %v2684 = vunpack.c.l.b16 %v2649
        %v2685 = vunpack.c.l.b16 %v2650
        %v2686 = vunpack.c.l.b16 %v2651
        %v2687 = vunpack.c.l.b16 %v2652
        %v2688 = vunpack.c.l.b16 %v2653
        %v2689 = vunpack.c.l.b16 %v2654
        %v2690 = vunpack.c.l.b16 %v2655
        %v2691 = vunpack.c.l.b16 %v2656
        %v2692 = vunpack.c.l.b16 %v2657
        %v2693 = vunpack.c.l.b16 %v2658
        %v2694 = vunpack.c.l.b16 %v2659
        %v2695 = vunpack.c.l.b16 %v2660
        %v2696 = vunpack.c.l.b16 %v2661
        %v2697 = vpack.c.b16 %v2682, %v2681
        %v2698 = vpack.c.b16 %v2684, %v2683
        %v2699 = vpack.c.b16 %v2686, %v2685
        %v2700 = vpack.c.b16 %v2688, %v2687
        %v2701 = vpack.c.b16 %v2690, %v2689
        %v2702 = vpack.c.b16 %v2692, %v2691
        %v2703 = vpack.c.b16 %v2694, %v2693
        %v2704 = vpack.c.b16 %v2696, %v2695
        %2713 = vmatprep.subr.bf16.mxu0 0
        %2714 = vmatpush1.bf16.msra.mxu0 %v2697
        %2715 = vmatprep.subr.bf16.mxu0 0
        %2716 = vmatpush1.bf16.msra.mxu0 %v2698
        %2717 = vmatprep.subr.bf16.mxu0 0
        %2718 = vmatpush1.bf16.msra.mxu0 %v2699
        %2719 = vmatprep.subr.bf16.mxu0 0
        %2720 = vmatpush1.bf16.msra.mxu0 %v2700
        %2721 = vmatprep.subr.bf16.mxu0 0
        %2722 = vmatpush1.bf16.msra.mxu0 %v2701
        %2723 = vmatprep.subr.bf16.mxu0 0
        %2724 = vmatpush1.bf16.msra.mxu0 %v2702
        %2725 = vmatprep.subr.bf16.mxu0 0
        %2726 = vmatpush1.bf16.msra.mxu0 %v2703
        %2727 = vmatprep.subr.bf16.mxu0 0
        %2728 = vmatpush1.bf16.msra.mxu0 %v2704
        %2729 = vmatprep.subr.bf16.mxu0 0
        %2730 = vmatpush1.bf16.msra.mxu0 0
        %2731 = vmatprep.subr.bf16.mxu0 0
        %2732 = vmatpush1.bf16.msra.mxu0 0
        %2733 = vmatprep.subr.bf16.mxu0 0
        %2734 = vmatpush1.bf16.msra.mxu0 0
        %2735 = vmatprep.subr.bf16.mxu0 0
        %2736 = vmatpush1.bf16.msra.mxu0 0
        %2737 = vmatprep.subr.bf16.mxu0 0
        %2738 = vmatpush1.bf16.msra.mxu0 0
        %2739 = vmatprep.subr.bf16.mxu0 0
        %2740 = vmatpush1.bf16.msra.mxu0 0
        %2741 = vmatprep.subr.bf16.mxu0 0
        %2742 = vmatpush1.bf16.msra.mxu0 0
        %2743 = vmatprep.subr.bf16.mxu0 0
        %2744 = vmatpush1.bf16.msra.mxu0 0
        %2745 = vmatprep.mubr.bf16.mxu0 0
        %2746 = vmatmul.mubr.bf16.gmra.mrb[0].mxu0 %v1150
        %v2747 = vpop.f32.mrb[0].mxu0
        %v2748 = vadd.f32 0.0, %v2747
        %v2749 = vpop.f32.mrb[0].mxu0
        %v2750 = vpop.f32.mrb[0].mxu0
        %v2751 = vadd.f32 0.0, %v2750
        %v2752 = vpop.f32.mrb[0].mxu0
        %2753 = vmatprep.mubr.bf16.mxu0 0
        %2754 = vmatmul.mubr.bf16.gmra.mrb[0].mxu0 %v1151
        %v2755 = vpop.f32.mrb[0].mxu0
        %v2756 = vadd.f32 0.0, %v2755
        %v2757 = vpop.f32.mrb[0].mxu0
        %v2758 = vpop.f32.mrb[0].mxu0
        %v2759 = vadd.f32 0.0, %v2758
        %v2760 = vpop.f32.mrb[0].mxu0
        %2761 = vmatprep.mubr.bf16.mxu0 0
        %2762 = vmatmul.mubr.bf16.gmra.mrb[0].mxu0 %v1152
        %v2763 = vpop.f32.mrb[0].mxu0
        %v2764 = vadd.f32 0.0, %v2763
        %v2765 = vpop.f32.mrb[0].mxu0
        %v2766 = vpop.f32.mrb[0].mxu0
        %v2767 = vadd.f32 0.0, %v2766
        %v2768 = vpop.f32.mrb[0].mxu0
        %2769 = vmatprep.mubr.bf16.mxu0 0
        %2770 = vmatmul.mubr.bf16.gmra.mrb[0].mxu0 %v2663
        %v2771 = vpop.f32.mrb[0].mxu0
        %v2772 = vadd.f32 0.0, %v2771
        %v2773 = vpop.f32.mrb[0].mxu0
        %v2774 = vpop.f32.mrb[0].mxu0
        %v2775 = vadd.f32 0.0, %v2774
        %v2776 = vpop.f32.mrb[0].mxu0
        %2777 = vdwg.mxu0
        %v2778 = vadd.f32 %v2633, %v2748
        %v2779 = vadd.f32 %v2634, %v2751
        %v2780 = vadd.f32 %v2635, %v2756
        %v2781 = vadd.f32 %v2636, %v2759
        %v2782 = vadd.f32 %v2637, %v2764
        %v2783 = vadd.f32 %v2638, %v2767
        %v2784 = vadd.f32 %v2639, %v2772
        %v2785 = vadd.f32 %v2640, %v2775
        %s2786 = scalar_lea.vmem [#allocation5], 960
        %v2787 = vld [vmem:[%s2786] sm:$0xf]
        %v2788 = vld [vmem:[%s2786 + $0x4] sm:$0xf]
        %v2789 = vld [vmem:[%s2786 + $0x8] sm:$0xf]
        %v2790 = vld [vmem:[%s2786 + $0xc] sm:$0xf]
        %v2791 = vld [vmem:[%s2786 + $0x10] sm:$0xf]
        %v2792 = vld [vmem:[%s2786 + $0x14] sm:$0xf]
        %v2793 = vld [vmem:[%s2786 + $0x18] sm:$0xf]
        %v2794 = vld [vmem:[%s2786 + $0x1c] sm:$0xf]
        %v2795 = vld [vmem:[%s2786 + $0x20] sm:$0xf]
        %v2796 = vld [vmem:[%s2786 + $0x24] sm:$0xf]
        %v2797 = vld [vmem:[%s2786 + $0x28] sm:$0xf]
        %v2798 = vld [vmem:[%s2786 + $0x2c] sm:$0xf]
        %v2799 = vld [vmem:[%s2786 + $0x30] sm:$0xf]
        %v2800 = vld [vmem:[%s2786 + $0x34] sm:$0xf]
        %v2801 = vld [vmem:[%s2786 + $0x38] sm:$0xf]
        %v2802 = vld [vmem:[%s2786 + $0x3c] sm:$0xf]
        %v2804 = vunpack.c.l.b16 %v237
        %v2805 = vpack.c.b16 %v2804, %v2065
        %v2823 = vunpack.c.l.b16 %v2787
        %v2824 = vunpack.c.l.b16 %v2788
        %v2825 = vunpack.c.l.b16 %v2789
        %v2826 = vunpack.c.l.b16 %v2790
        %v2827 = vunpack.c.l.b16 %v2791
        %v2828 = vunpack.c.l.b16 %v2792
        %v2829 = vunpack.c.l.b16 %v2793
        %v2830 = vunpack.c.l.b16 %v2794
        %v2831 = vunpack.c.l.b16 %v2795
        %v2832 = vunpack.c.l.b16 %v2796
        %v2833 = vunpack.c.l.b16 %v2797
        %v2834 = vunpack.c.l.b16 %v2798
        %v2835 = vunpack.c.l.b16 %v2799
        %v2836 = vunpack.c.l.b16 %v2800
        %v2837 = vunpack.c.l.b16 %v2801
        %v2838 = vunpack.c.l.b16 %v2802
        %v2839 = vpack.c.b16 %v2824, %v2823
        %v2840 = vpack.c.b16 %v2826, %v2825
        %v2841 = vpack.c.b16 %v2828, %v2827
        %v2842 = vpack.c.b16 %v2830, %v2829
        %v2843 = vpack.c.b16 %v2832, %v2831
        %v2844 = vpack.c.b16 %v2834, %v2833
        %v2845 = vpack.c.b16 %v2836, %v2835
        %v2846 = vpack.c.b16 %v2838, %v2837
        %2855 = vmatprep.subr.bf16.mxu0 0
        %2856 = vmatpush1.bf16.msra.mxu0 %v2839
        %2857 = vmatprep.subr.bf16.mxu0 0
        %2858 = vmatpush1.bf16.msra.mxu0 %v2840
        %2859 = vmatprep.subr.bf16.mxu0 0
        %2860 = vmatpush1.bf16.msra.mxu0 %v2841
        %2861 = vmatprep.subr.bf16.mxu0 0
        %2862 = vmatpush1.bf16.msra.mxu0 %v2842
        %2863 = vmatprep.subr.bf16.mxu0 0
        %2864 = vmatpush1.bf16.msra.mxu0 %v2843
        %2865 = vmatprep.subr.bf16.mxu0 0
        %2866 = vmatpush1.bf16.msra.mxu0 %v2844
        %2867 = vmatprep.subr.bf16.mxu0 0
        %2868 = vmatpush1.bf16.msra.mxu0 %v2845
        %2869 = vmatprep.subr.bf16.mxu0 0
        %2870 = vmatpush1.bf16.msra.mxu0 %v2846
        %2871 = vmatprep.subr.bf16.mxu0 0
        %2872 = vmatpush1.bf16.msra.mxu0 0
        %2873 = vmatprep.subr.bf16.mxu0 0
        %2874 = vmatpush1.bf16.msra.mxu0 0
        %2875 = vmatprep.subr.bf16.mxu0 0
        %2876 = vmatpush1.bf16.msra.mxu0 0
        %2877 = vmatprep.subr.bf16.mxu0 0
        %2878 = vmatpush1.bf16.msra.mxu0 0
        %2879 = vmatprep.subr.bf16.mxu0 0
        %2880 = vmatpush1.bf16.msra.mxu0 0
        %2881 = vmatprep.subr.bf16.mxu0 0
        %2882 = vmatpush1.bf16.msra.mxu0 0
        %2883 = vmatprep.subr.bf16.mxu0 0
        %2884 = vmatpush1.bf16.msra.mxu0 0
        %2885 = vmatprep.subr.bf16.mxu0 0
        %2886 = vmatpush1.bf16.msra.mxu0 0
        %2887 = vmatprep.mubr.bf16.mxu0 0
        %2888 = vmatmul.mubr.bf16.gmra.mrb[0].mxu0 %v1298
        %v2889 = vpop.f32.mrb[0].mxu0
        %v2890 = vadd.f32 0.0, %v2889
        %v2891 = vpop.f32.mrb[0].mxu0
        %v2892 = vpop.f32.mrb[0].mxu0
        %v2893 = vadd.f32 0.0, %v2892
        %v2894 = vpop.f32.mrb[0].mxu0
        %2895 = vmatprep.mubr.bf16.mxu0 0
        %2896 = vmatmul.mubr.bf16.gmra.mrb[0].mxu0 %v1299
        %v2897 = vpop.f32.mrb[0].mxu0
        %v2898 = vadd.f32 0.0, %v2897
        %v2899 = vpop.f32.mrb[0].mxu0
        %v2900 = vpop.f32.mrb[0].mxu0
        %v2901 = vadd.f32 0.0, %v2900
        %v2902 = vpop.f32.mrb[0].mxu0
        %2903 = vmatprep.mubr.bf16.mxu0 0
        %2904 = vmatmul.mubr.bf16.gmra.mrb[0].mxu0 %v1300
        %v2905 = vpop.f32.mrb[0].mxu0
        %v2906 = vadd.f32 0.0, %v2905
        %v2907 = vpop.f32.mrb[0].mxu0
        %v2908 = vpop.f32.mrb[0].mxu0
        %v2909 = vadd.f32 0.0, %v2908
        %v2910 = vpop.f32.mrb[0].mxu0
        %2911 = vmatprep.mubr.bf16.mxu0 0
        %2912 = vmatmul.mubr.bf16.gmra.mrb[0].mxu0 %v2805
        %v2913 = vpop.f32.mrb[0].mxu0
        %v2914 = vadd.f32 0.0, %v2913
        %v2915 = vpop.f32.mrb[0].mxu0
        %v2916 = vpop.f32.mrb[0].mxu0
        %v2917 = vadd.f32 0.0, %v2916
        %v2918 = vpop.f32.mrb[0].mxu0
        %2919 = vdwg.mxu0
        %v2920 = vadd.f32 %v2778, %v2890
        %v2921 = vadd.f32 %v2779, %v2893
        %v2922 = vadd.f32 %v2780, %v2898
        %v2923 = vadd.f32 %v2781, %v2901
        %v2924 = vadd.f32 %v2782, %v2906
        %v2925 = vadd.f32 %v2783, %v2909
        %v2926 = vadd.f32 %v2784, %v2914
        %v2927 = vadd.f32 %v2785, %v2917
        %v2929 = vshrl.u32 %v237, 16
        %v2931 = vrot.slane %v2929, 4
        %v2932 = vshll.u32 %v237, 16
        %v2934 = vrot.slane %v2932, 5
        %v2935 = vor.u32 %v2931, %v2934
        %v2936 = vrot.slane %v2935, 4
        %v2938 = vshll.u32 %v238, 16
        %v2940 = vrot.slane %v2938, 5
        %v2941 = vsel %vm259, %v2936, %v2940
        %s2942 = scalar_lea.vmem [#allocation5], 1024
        %v2943 = vld [vmem:[%s2942] sm:$0xf]
        %v2944 = vld [vmem:[%s2942 + $0x4] sm:$0xf]
        %v2945 = vld [vmem:[%s2942 + $0x8] sm:$0xf]
        %v2946 = vld [vmem:[%s2942 + $0xc] sm:$0xf]
        %v2947 = vld [vmem:[%s2942 + $0x10] sm:$0xf]
        %v2948 = vld [vmem:[%s2942 + $0x14] sm:$0xf]
        %v2949 = vld [vmem:[%s2942 + $0x18] sm:$0xf]
        %v2950 = vld [vmem:[%s2942 + $0x1c] sm:$0xf]
        %v2951 = vld [vmem:[%s2942 + $0x20] sm:$0xf]
        %v2952 = vld [vmem:[%s2942 + $0x24] sm:$0xf]
        %v2953 = vld [vmem:[%s2942 + $0x28] sm:$0xf]
        %v2954 = vld [vmem:[%s2942 + $0x2c] sm:$0xf]
        %v2955 = vld [vmem:[%s2942 + $0x30] sm:$0xf]
        %v2956 = vld [vmem:[%s2942 + $0x34] sm:$0xf]
        %v2957 = vld [vmem:[%s2942 + $0x38] sm:$0xf]
        %v2958 = vld [vmem:[%s2942 + $0x3c] sm:$0xf]
        %v2959 = vunpack.c.l.b16 %v2941
        %v2960 = vpack.c.b16 %v2959, %v2220
        %v2978 = vunpack.c.l.b16 %v2943
        %v2979 = vunpack.c.l.b16 %v2944
        %v2980 = vunpack.c.l.b16 %v2945
        %v2981 = vunpack.c.l.b16 %v2946
        %v2982 = vunpack.c.l.b16 %v2947
        %v2983 = vunpack.c.l.b16 %v2948
        %v2984 = vunpack.c.l.b16 %v2949
        %v2985 = vunpack.c.l.b16 %v2950
        %v2986 = vunpack.c.l.b16 %v2951
        %v2987 = vunpack.c.l.b16 %v2952
        %v2988 = vunpack.c.l.b16 %v2953
        %v2989 = vunpack.c.l.b16 %v2954
        %v2990 = vunpack.c.l.b16 %v2955
        %v2991 = vunpack.c.l.b16 %v2956
        %v2992 = vunpack.c.l.b16 %v2957
        %v2993 = vunpack.c.l.b16 %v2958
        %v2994 = vpack.c.b16 %v2979, %v2978
        %v2995 = vpack.c.b16 %v2981, %v2980
        %v2996 = vpack.c.b16 %v2983, %v2982
        %v2997 = vpack.c.b16 %v2985, %v2984
        %v2998 = vpack.c.b16 %v2987, %v2986
        %v2999 = vpack.c.b16 %v2989, %v2988
        %v3000 = vpack.c.b16 %v2991, %v2990
        %v3001 = vpack.c.b16 %v2993, %v2992
        %3010 = vmatprep.subr.bf16.mxu0 0
        %3011 = vmatpush1.bf16.msra.mxu0 %v2994
        %3012 = vmatprep.subr.bf16.mxu0 0
        %3013 = vmatpush1.bf16.msra.mxu0 %v2995
        %3014 = vmatprep.subr.bf16.mxu0 0
        %3015 = vmatpush1.bf16.msra.mxu0 %v2996
        %3016 = vmatprep.subr.bf16.mxu0 0
        %3017 = vmatpush1.bf16.msra.mxu0 %v2997
        %3018 = vmatprep.subr.bf16.mxu0 0
        %3019 = vmatpush1.bf16.msra.mxu0 %v2998
        %3020 = vmatprep.subr.bf16.mxu0 0
        %3021 = vmatpush1.bf16.msra.mxu0 %v2999
        %3022 = vmatprep.subr.bf16.mxu0 0
        %3023 = vmatpush1.bf16.msra.mxu0 %v3000
        %3024 = vmatprep.subr.bf16.mxu0 0
        %3025 = vmatpush1.bf16.msra.mxu0 %v3001
        %3026 = vmatprep.subr.bf16.mxu0 0
        %3027 = vmatpush1.bf16.msra.mxu0 0
        %3028 = vmatprep.subr.bf16.mxu0 0
        %3029 = vmatpush1.bf16.msra.mxu0 0
        %3030 = vmatprep.subr.bf16.mxu0 0
        %3031 = vmatpush1.bf16.msra.mxu0 0
        %3032 = vmatprep.subr.bf16.mxu0 0
        %3033 = vmatpush1.bf16.msra.mxu0 0
        %3034 = vmatprep.subr.bf16.mxu0 0
        %3035 = vmatpush1.bf16.msra.mxu0 0
        %3036 = vmatprep.subr.bf16.mxu0 0
        %3037 = vmatpush1.bf16.msra.mxu0 0
        %3038 = vmatprep.subr.bf16.mxu0 0
        %3039 = vmatpush1.bf16.msra.mxu0 0
        %3040 = vmatprep.subr.bf16.mxu0 0
        %3041 = vmatpush1.bf16.msra.mxu0 0
        %3042 = vmatprep.mubr.bf16.mxu0 0
        %3043 = vmatmul.mubr.bf16.gmra.mrb[0].mxu0 %v1459
        %v3044 = vpop.f32.mrb[0].mxu0
        %v3045 = vadd.f32 0.0, %v3044
        %v3046 = vpop.f32.mrb[0].mxu0
        %v3047 = vpop.f32.mrb[0].mxu0
        %v3048 = vadd.f32 0.0, %v3047
        %v3049 = vpop.f32.mrb[0].mxu0
        %3050 = vmatprep.mubr.bf16.mxu0 0
        %3051 = vmatmul.mubr.bf16.gmra.mrb[0].mxu0 %v1460
        %v3052 = vpop.f32.mrb[0].mxu0
        %v3053 = vadd.f32 0.0, %v3052
        %v3054 = vpop.f32.mrb[0].mxu0
        %v3055 = vpop.f32.mrb[0].mxu0
        %v3056 = vadd.f32 0.0, %v3055
        %v3057 = vpop.f32.mrb[0].mxu0
        %3058 = vmatprep.mubr.bf16.mxu0 0
        %3059 = vmatmul.mubr.bf16.gmra.mrb[0].mxu0 %v1461
        %v3060 = vpop.f32.mrb[0].mxu0
        %v3061 = vadd.f32 0.0, %v3060
        %v3062 = vpop.f32.mrb[0].mxu0
        %v3063 = vpop.f32.mrb[0].mxu0
        %v3064 = vadd.f32 0.0, %v3063
        %v3065 = vpop.f32.mrb[0].mxu0
        %3066 = vmatprep.mubr.bf16.mxu0 0
        %3067 = vmatmul.mubr.bf16.gmra.mrb[0].mxu0 %v2960
        %v3068 = vpop.f32.mrb[0].mxu0
        %v3069 = vadd.f32 0.0, %v3068
        %v3070 = vpop.f32.mrb[0].mxu0
        %v3071 = vpop.f32.mrb[0].mxu0
        %v3072 = vadd.f32 0.0, %v3071
        %v3073 = vpop.f32.mrb[0].mxu0
        %3074 = vdwg.mxu0
        %v3075 = vadd.f32 %v2920, %v3045
        %v3076 = vadd.f32 %v2921, %v3048
        %v3077 = vadd.f32 %v2922, %v3053
        %v3078 = vadd.f32 %v2923, %v3056
        %v3079 = vadd.f32 %v2924, %v3061
        %v3080 = vadd.f32 %v2925, %v3064
        %v3081 = vadd.f32 %v2926, %v3069
        %v3082 = vadd.f32 %v2927, %v3072
        %v3084 = vrot.slane %v237, 5
        %v3085 = vrot.slane %v3084, 4
        %v3086 = vrot.slane %v238, 5
        %v3087 = vsel %vm665, %v3085, %v3086
        %s3088 = scalar_lea.vmem [#allocation5], 1088
        %v3089 = vld [vmem:[%s3088] sm:$0xf]
        %v3090 = vld [vmem:[%s3088 + $0x4] sm:$0xf]
        %v3091 = vld [vmem:[%s3088 + $0x8] sm:$0xf]
        %v3092 = vld [vmem:[%s3088 + $0xc] sm:$0xf]
        %v3093 = vld [vmem:[%s3088 + $0x10] sm:$0xf]
        %v3094 = vld [vmem:[%s3088 + $0x14] sm:$0xf]
        %v3095 = vld [vmem:[%s3088 + $0x18] sm:$0xf]
        %v3096 = vld [vmem:[%s3088 + $0x1c] sm:$0xf]
        %v3097 = vld [vmem:[%s3088 + $0x20] sm:$0xf]
        %v3098 = vld [vmem:[%s3088 + $0x24] sm:$0xf]
        %v3099 = vld [vmem:[%s3088 + $0x28] sm:$0xf]
        %v3100 = vld [vmem:[%s3088 + $0x2c] sm:$0xf]
        %v3101 = vld [vmem:[%s3088 + $0x30] sm:$0xf]
        %v3102 = vld [vmem:[%s3088 + $0x34] sm:$0xf]
        %v3103 = vld [vmem:[%s3088 + $0x38] sm:$0xf]
        %v3104 = vld [vmem:[%s3088 + $0x3c] sm:$0xf]
        %v3105 = vunpack.c.l.b16 %v3087
        %v3106 = vpack.c.b16 %v3105, %v2366
        %v3124 = vunpack.c.l.b16 %v3089
        %v3125 = vunpack.c.l.b16 %v3090
        %v3126 = vunpack.c.l.b16 %v3091
        %v3127 = vunpack.c.l.b16 %v3092
        %v3128 = vunpack.c.l.b16 %v3093
        %v3129 = vunpack.c.l.b16 %v3094
        %v3130 = vunpack.c.l.b16 %v3095
        %v3131 = vunpack.c.l.b16 %v3096
        %v3132 = vunpack.c.l.b16 %v3097
        %v3133 = vunpack.c.l.b16 %v3098
        %v3134 = vunpack.c.l.b16 %v3099
        %v3135 = vunpack.c.l.b16 %v3100
        %v3136 = vunpack.c.l.b16 %v3101
        %v3137 = vunpack.c.l.b16 %v3102
        %v3138 = vunpack.c.l.b16 %v3103
        %v3139 = vunpack.c.l.b16 %v3104
        %v3140 = vpack.c.b16 %v3125, %v3124
        %v3141 = vpack.c.b16 %v3127, %v3126
        %v3142 = vpack.c.b16 %v3129, %v3128
        %v3143 = vpack.c.b16 %v3131, %v3130
        %v3144 = vpack.c.b16 %v3133, %v3132
        %v3145 = vpack.c.b16 %v3135, %v3134
        %v3146 = vpack.c.b16 %v3137, %v3136
        %v3147 = vpack.c.b16 %v3139, %v3138
        %3156 = vmatprep.subr.bf16.mxu0 0
        %3157 = vmatpush1.bf16.msra.mxu0 %v3140
        %3158 = vmatprep.subr.bf16.mxu0 0
        %3159 = vmatpush1.bf16.msra.mxu0 %v3141
        %3160 = vmatprep.subr.bf16.mxu0 0
        %3161 = vmatpush1.bf16.msra.mxu0 %v3142
        %3162 = vmatprep.subr.bf16.mxu0 0
        %3163 = vmatpush1.bf16.msra.mxu0 %v3143
        %3164 = vmatprep.subr.bf16.mxu0 0
        %3165 = vmatpush1.bf16.msra.mxu0 %v3144
        %3166 = vmatprep.subr.bf16.mxu0 0
        %3167 = vmatpush1.bf16.msra.mxu0 %v3145
        %3168 = vmatprep.subr.bf16.mxu0 0
        %3169 = vmatpush1.bf16.msra.mxu0 %v3146
        %3170 = vmatprep.subr.bf16.mxu0 0
        %3171 = vmatpush1.bf16.msra.mxu0 %v3147
        %3172 = vmatprep.subr.bf16.mxu0 0
        %3173 = vmatpush1.bf16.msra.mxu0 0
        %3174 = vmatprep.subr.bf16.mxu0 0
        %3175 = vmatpush1.bf16.msra.mxu0 0
        %3176 = vmatprep.subr.bf16.mxu0 0
        %3177 = vmatpush1.bf16.msra.mxu0 0
        %3178 = vmatprep.subr.bf16.mxu0 0
        %3179 = vmatpush1.bf16.msra.mxu0 0
        %3180 = vmatprep.subr.bf16.mxu0 0
        %3181 = vmatpush1.bf16.msra.mxu0 0
        %3182 = vmatprep.subr.bf16.mxu0 0
        %3183 = vmatpush1.bf16.msra.mxu0 0
        %3184 = vmatprep.subr.bf16.mxu0 0
        %3185 = vmatpush1.bf16.msra.mxu0 0
        %3186 = vmatprep.subr.bf16.mxu0 0
        %3187 = vmatpush1.bf16.msra.mxu0 0
        %3188 = vmatprep.mubr.bf16.mxu0 0
        %3189 = vmatmul.mubr.bf16.gmra.mrb[0].mxu0 %v1611
        %v3190 = vpop.f32.mrb[0].mxu0
        %v3191 = vadd.f32 0.0, %v3190
        %v3192 = vpop.f32.mrb[0].mxu0
        %v3193 = vpop.f32.mrb[0].mxu0
        %v3194 = vadd.f32 0.0, %v3193
        %v3195 = vpop.f32.mrb[0].mxu0
        %3196 = vmatprep.mubr.bf16.mxu0 0
        %3197 = vmatmul.mubr.bf16.gmra.mrb[0].mxu0 %v1612
        %v3198 = vpop.f32.mrb[0].mxu0
        %v3199 = vadd.f32 0.0, %v3198
        %v3200 = vpop.f32.mrb[0].mxu0
        %v3201 = vpop.f32.mrb[0].mxu0
        %v3202 = vadd.f32 0.0, %v3201
        %v3203 = vpop.f32.mrb[0].mxu0
        %3204 = vmatprep.mubr.bf16.mxu0 0
        %3205 = vmatmul.mubr.bf16.gmra.mrb[0].mxu0 %v1613
        %v3206 = vpop.f32.mrb[0].mxu0
        %v3207 = vadd.f32 0.0, %v3206
        %v3208 = vpop.f32.mrb[0].mxu0
        %v3209 = vpop.f32.mrb[0].mxu0
        %v3210 = vadd.f32 0.0, %v3209
        %v3211 = vpop.f32.mrb[0].mxu0
        %3212 = vmatprep.mubr.bf16.mxu0 0
        %3213 = vmatmul.mubr.bf16.gmra.mrb[0].mxu0 %v3106
        %v3214 = vpop.f32.mrb[0].mxu0
        %v3215 = vadd.f32 0.0, %v3214
        %v3216 = vpop.f32.mrb[0].mxu0
        %v3217 = vpop.f32.mrb[0].mxu0
        %v3218 = vadd.f32 0.0, %v3217
        %v3219 = vpop.f32.mrb[0].mxu0
        %3220 = vdwg.mxu0
        %v3221 = vadd.f32 %v3075, %v3191
        %v3222 = vadd.f32 %v3076, %v3194
        %v3223 = vadd.f32 %v3077, %v3199
        %v3224 = vadd.f32 %v3078, %v3202
        %v3225 = vadd.f32 %v3079, %v3207
        %v3226 = vadd.f32 %v3080, %v3210
        %v3227 = vadd.f32 %v3081, %v3215
        %v3228 = vadd.f32 %v3082, %v3218
        %v3229 = vrot.slane %v2929, 5
        %v3230 = vrot.slane %v2932, 6
        %v3231 = vor.u32 %v3229, %v3230
        %v3232 = vrot.slane %v3231, 4
        %v3233 = vshrl.u32 %v238, 16
        %v3235 = vrot.slane %v3233, 5
        %v3236 = vrot.slane %v2938, 6
        %v3237 = vor.u32 %v3235, %v3236
        %v3238 = vsel %vm854, %v3232, %v3237
        %s3239 = scalar_lea.vmem [#allocation5], 1152
        %v3240 = vld [vmem:[%s3239] sm:$0xf]
        %v3241 = vld [vmem:[%s3239 + $0x4] sm:$0xf]
        %v3242 = vld [vmem:[%s3239 + $0x8] sm:$0xf]
        %v3243 = vld [vmem:[%s3239 + $0xc] sm:$0xf]
        %v3244 = vld [vmem:[%s3239 + $0x10] sm:$0xf]
        %v3245 = vld [vmem:[%s3239 + $0x14] sm:$0xf]
        %v3246 = vld [vmem:[%s3239 + $0x18] sm:$0xf]
        %v3247 = vld [vmem:[%s3239 + $0x1c] sm:$0xf]
        %v3248 = vld [vmem:[%s3239 + $0x20] sm:$0xf]
        %v3249 = vld [vmem:[%s3239 + $0x24] sm:$0xf]
        %v3250 = vld [vmem:[%s3239 + $0x28] sm:$0xf]
        %v3251 = vld [vmem:[%s3239 + $0x2c] sm:$0xf]
        %v3252 = vld [vmem:[%s3239 + $0x30] sm:$0xf]
        %v3253 = vld [vmem:[%s3239 + $0x34] sm:$0xf]
        %v3254 = vld [vmem:[%s3239 + $0x38] sm:$0xf]
        %v3255 = vld [vmem:[%s3239 + $0x3c] sm:$0xf]
        %v3256 = vunpack.c.l.b16 %v3238
        %v3257 = vpack.c.b16 %v3256, %v2517
        %v3275 = vunpack.c.l.b16 %v3240
        %v3276 = vunpack.c.l.b16 %v3241
        %v3277 = vunpack.c.l.b16 %v3242
        %v3278 = vunpack.c.l.b16 %v3243
        %v3279 = vunpack.c.l.b16 %v3244
        %v3280 = vunpack.c.l.b16 %v3245
        %v3281 = vunpack.c.l.b16 %v3246
        %v3282 = vunpack.c.l.b16 %v3247
        %v3283 = vunpack.c.l.b16 %v3248
        %v3284 = vunpack.c.l.b16 %v3249
        %v3285 = vunpack.c.l.b16 %v3250
        %v3286 = vunpack.c.l.b16 %v3251
        %v3287 = vunpack.c.l.b16 %v3252
        %v3288 = vunpack.c.l.b16 %v3253
        %v3289 = vunpack.c.l.b16 %v3254
        %v3290 = vunpack.c.l.b16 %v3255
        %v3291 = vpack.c.b16 %v3276, %v3275
        %v3292 = vpack.c.b16 %v3278, %v3277
        %v3293 = vpack.c.b16 %v3280, %v3279
        %v3294 = vpack.c.b16 %v3282, %v3281
        %v3295 = vpack.c.b16 %v3284, %v3283
        %v3296 = vpack.c.b16 %v3286, %v3285
        %v3297 = vpack.c.b16 %v3288, %v3287
        %v3298 = vpack.c.b16 %v3290, %v3289
        %3307 = vmatprep.subr.bf16.mxu0 0
        %3308 = vmatpush1.bf16.msra.mxu0 %v3291
        %3309 = vmatprep.subr.bf16.mxu0 0
        %3310 = vmatpush1.bf16.msra.mxu0 %v3292
        %3311 = vmatprep.subr.bf16.mxu0 0
        %3312 = vmatpush1.bf16.msra.mxu0 %v3293
        %3313 = vmatprep.subr.bf16.mxu0 0
        %3314 = vmatpush1.bf16.msra.mxu0 %v3294
        %3315 = vmatprep.subr.bf16.mxu0 0
        %3316 = vmatpush1.bf16.msra.mxu0 %v3295
        %3317 = vmatprep.subr.bf16.mxu0 0
        %3318 = vmatpush1.bf16.msra.mxu0 %v3296
        %3319 = vmatprep.subr.bf16.mxu0 0
        %3320 = vmatpush1.bf16.msra.mxu0 %v3297
        %3321 = vmatprep.subr.bf16.mxu0 0
        %3322 = vmatpush1.bf16.msra.mxu0 %v3298
        %3323 = vmatprep.subr.bf16.mxu0 0
        %3324 = vmatpush1.bf16.msra.mxu0 0
        %3325 = vmatprep.subr.bf16.mxu0 0
        %3326 = vmatpush1.bf16.msra.mxu0 0
        %3327 = vmatprep.subr.bf16.mxu0 0
        %3328 = vmatpush1.bf16.msra.mxu0 0
        %3329 = vmatprep.subr.bf16.mxu0 0
        %3330 = vmatpush1.bf16.msra.mxu0 0
        %3331 = vmatprep.subr.bf16.mxu0 0
        %3332 = vmatpush1.bf16.msra.mxu0 0
        %3333 = vmatprep.subr.bf16.mxu0 0
        %3334 = vmatpush1.bf16.msra.mxu0 0
        %3335 = vmatprep.subr.bf16.mxu0 0
        %3336 = vmatpush1.bf16.msra.mxu0 0
        %3337 = vmatprep.subr.bf16.mxu0 0
        %3338 = vmatpush1.bf16.msra.mxu0 0
        %3339 = vmatprep.mubr.bf16.mxu0 0
        %3340 = vmatmul.mubr.bf16.gmra.mrb[0].mxu0 %v1768
        %v3341 = vpop.f32.mrb[0].mxu0
        %v3342 = vadd.f32 0.0, %v3341
        %v3343 = vpop.f32.mrb[0].mxu0
        %v3344 = vpop.f32.mrb[0].mxu0
        %v3345 = vadd.f32 0.0, %v3344
        %v3346 = vpop.f32.mrb[0].mxu0
        %3347 = vmatprep.mubr.bf16.mxu0 0
        %3348 = vmatmul.mubr.bf16.gmra.mrb[0].mxu0 %v1769
        %v3349 = vpop.f32.mrb[0].mxu0
        %v3350 = vadd.f32 0.0, %v3349
        %v3351 = vpop.f32.mrb[0].mxu0
        %v3352 = vpop.f32.mrb[0].mxu0
        %v3353 = vadd.f32 0.0, %v3352
        %v3354 = vpop.f32.mrb[0].mxu0
        %3355 = vmatprep.mubr.bf16.mxu0 0
        %3356 = vmatmul.mubr.bf16.gmra.mrb[0].mxu0 %v1770
        %v3357 = vpop.f32.mrb[0].mxu0
        %v3358 = vadd.f32 0.0, %v3357
        %v3359 = vpop.f32.mrb[0].mxu0
        %v3360 = vpop.f32.mrb[0].mxu0
        %v3361 = vadd.f32 0.0, %v3360
        %v3362 = vpop.f32.mrb[0].mxu0
        %3363 = vmatprep.mubr.bf16.mxu0 0
        %3364 = vmatmul.mubr.bf16.gmra.mrb[0].mxu0 %v3257
        %v3365 = vpop.f32.mrb[0].mxu0
        %v3366 = vadd.f32 0.0, %v3365
        %v3367 = vpop.f32.mrb[0].mxu0
        %v3368 = vpop.f32.mrb[0].mxu0
        %v3369 = vadd.f32 0.0, %v3368
        %v3370 = vpop.f32.mrb[0].mxu0
        %3371 = vdwg.mxu0
        %v3372 = vadd.f32 %v3221, %v3342
        %v3373 = vadd.f32 %v3222, %v3345
        %v3374 = vadd.f32 %v3223, %v3350
        %v3375 = vadd.f32 %v3224, %v3353
        %v3376 = vadd.f32 %v3225, %v3358
        %v3377 = vadd.f32 %v3226, %v3361
        %v3378 = vadd.f32 %v3227, %v3366
        %v3379 = vadd.f32 %v3228, %v3369
        %v3380 = vrot.slane %v237, 6
        %v3381 = vrot.slane %v3380, 4
        %v3382 = vrot.slane %v238, 6
        %v3383 = vsel %vm1091, %v3381, %v3382
        %s3384 = scalar_lea.vmem [#allocation5], 1216
        %v3385 = vld [vmem:[%s3384] sm:$0xf]
        %v3386 = vld [vmem:[%s3384 + $0x4] sm:$0xf]
        %v3387 = vld [vmem:[%s3384 + $0x8] sm:$0xf]
        %v3388 = vld [vmem:[%s3384 + $0xc] sm:$0xf]
        %v3389 = vld [vmem:[%s3384 + $0x10] sm:$0xf]
        %v3390 = vld [vmem:[%s3384 + $0x14] sm:$0xf]
        %v3391 = vld [vmem:[%s3384 + $0x18] sm:$0xf]
        %v3392 = vld [vmem:[%s3384 + $0x1c] sm:$0xf]
        %v3393 = vld [vmem:[%s3384 + $0x20] sm:$0xf]
        %v3394 = vld [vmem:[%s3384 + $0x24] sm:$0xf]
        %v3395 = vld [vmem:[%s3384 + $0x28] sm:$0xf]
        %v3396 = vld [vmem:[%s3384 + $0x2c] sm:$0xf]
        %v3397 = vld [vmem:[%s3384 + $0x30] sm:$0xf]
        %v3398 = vld [vmem:[%s3384 + $0x34] sm:$0xf]
        %v3399 = vld [vmem:[%s3384 + $0x38] sm:$0xf]
        %v3400 = vld [vmem:[%s3384 + $0x3c] sm:$0xf]
        %v3401 = vunpack.c.l.b16 %v3383
        %v3402 = vpack.c.b16 %v3401, %v2662
        %v3420 = vunpack.c.l.b16 %v3385
        %v3421 = vunpack.c.l.b16 %v3386
        %v3422 = vunpack.c.l.b16 %v3387
        %v3423 = vunpack.c.l.b16 %v3388
        %v3424 = vunpack.c.l.b16 %v3389
        %v3425 = vunpack.c.l.b16 %v3390
        %v3426 = vunpack.c.l.b16 %v3391
        %v3427 = vunpack.c.l.b16 %v3392
        %v3428 = vunpack.c.l.b16 %v3393
        %v3429 = vunpack.c.l.b16 %v3394
        %v3430 = vunpack.c.l.b16 %v3395
        %v3431 = vunpack.c.l.b16 %v3396
        %v3432 = vunpack.c.l.b16 %v3397
        %v3433 = vunpack.c.l.b16 %v3398
        %v3434 = vunpack.c.l.b16 %v3399
        %v3435 = vunpack.c.l.b16 %v3400
        %v3436 = vpack.c.b16 %v3421, %v3420
        %v3437 = vpack.c.b16 %v3423, %v3422
        %v3438 = vpack.c.b16 %v3425, %v3424
        %v3439 = vpack.c.b16 %v3427, %v3426
        %v3440 = vpack.c.b16 %v3429, %v3428
        %v3441 = vpack.c.b16 %v3431, %v3430
        %v3442 = vpack.c.b16 %v3433, %v3432
        %v3443 = vpack.c.b16 %v3435, %v3434
        %3452 = vmatprep.subr.bf16.mxu0 0
        %3453 = vmatpush1.bf16.msra.mxu0 %v3436
        %3454 = vmatprep.subr.bf16.mxu0 0
        %3455 = vmatpush1.bf16.msra.mxu0 %v3437
        %3456 = vmatprep.subr.bf16.mxu0 0
        %3457 = vmatpush1.bf16.msra.mxu0 %v3438
        %3458 = vmatprep.subr.bf16.mxu0 0
        %3459 = vmatpush1.bf16.msra.mxu0 %v3439
        %3460 = vmatprep.subr.bf16.mxu0 0
        %3461 = vmatpush1.bf16.msra.mxu0 %v3440
        %3462 = vmatprep.subr.bf16.mxu0 0
        %3463 = vmatpush1.bf16.msra.mxu0 %v3441
        %3464 = vmatprep.subr.bf16.mxu0 0
        %3465 = vmatpush1.bf16.msra.mxu0 %v3442
        %3466 = vmatprep.subr.bf16.mxu0 0
        %3467 = vmatpush1.bf16.msra.mxu0 %v3443
        %3468 = vmatprep.subr.bf16.mxu0 0
        %3469 = vmatpush1.bf16.msra.mxu0 0
        %3470 = vmatprep.subr.bf16.mxu0 0
        %3471 = vmatpush1.bf16.msra.mxu0 0
        %3472 = vmatprep.subr.bf16.mxu0 0
        %3473 = vmatpush1.bf16.msra.mxu0 0
        %3474 = vmatprep.subr.bf16.mxu0 0
        %3475 = vmatpush1.bf16.msra.mxu0 0
        %3476 = vmatprep.subr.bf16.mxu0 0
        %3477 = vmatpush1.bf16.msra.mxu0 0
        %3478 = vmatprep.subr.bf16.mxu0 0
        %3479 = vmatpush1.bf16.msra.mxu0 0
        %3480 = vmatprep.subr.bf16.mxu0 0
        %3481 = vmatpush1.bf16.msra.mxu0 0
        %3482 = vmatprep.subr.bf16.mxu0 0
        %3483 = vmatpush1.bf16.msra.mxu0 0
        %3484 = vmatprep.mubr.bf16.mxu0 0
        %3485 = vmatmul.mubr.bf16.gmra.mrb[0].mxu0 %v1919
        %v3486 = vpop.f32.mrb[0].mxu0
        %v3487 = vadd.f32 0.0, %v3486
        %v3488 = vpop.f32.mrb[0].mxu0
        %v3489 = vpop.f32.mrb[0].mxu0
        %v3490 = vadd.f32 0.0, %v3489
        %v3491 = vpop.f32.mrb[0].mxu0
        %3492 = vmatprep.mubr.bf16.mxu0 0
        %3493 = vmatmul.mubr.bf16.gmra.mrb[0].mxu0 %v1920
        %v3494 = vpop.f32.mrb[0].mxu0
        %v3495 = vadd.f32 0.0, %v3494
        %v3496 = vpop.f32.mrb[0].mxu0
        %v3497 = vpop.f32.mrb[0].mxu0
        %v3498 = vadd.f32 0.0, %v3497
        %v3499 = vpop.f32.mrb[0].mxu0
        %3500 = vmatprep.mubr.bf16.mxu0 0
        %3501 = vmatmul.mubr.bf16.gmra.mrb[0].mxu0 %v1921
        %v3502 = vpop.f32.mrb[0].mxu0
        %v3503 = vadd.f32 0.0, %v3502
        %v3504 = vpop.f32.mrb[0].mxu0
        %v3505 = vpop.f32.mrb[0].mxu0
        %v3506 = vadd.f32 0.0, %v3505
        %v3507 = vpop.f32.mrb[0].mxu0
        %3508 = vmatprep.mubr.bf16.mxu0 0
        %3509 = vmatmul.mubr.bf16.gmra.mrb[0].mxu0 %v3402
        %v3510 = vpop.f32.mrb[0].mxu0
        %v3511 = vadd.f32 0.0, %v3510
        %v3512 = vpop.f32.mrb[0].mxu0
        %v3513 = vpop.f32.mrb[0].mxu0
        %v3514 = vadd.f32 0.0, %v3513
        %v3515 = vpop.f32.mrb[0].mxu0
        %3516 = vdwg.mxu0
        %v3517 = vadd.f32 %v3372, %v3487
        %v3518 = vadd.f32 %v3373, %v3490
        %v3519 = vadd.f32 %v3374, %v3495
        %v3520 = vadd.f32 %v3375, %v3498
        %v3521 = vadd.f32 %v3376, %v3503
        %v3522 = vadd.f32 %v3377, %v3506
        %v3523 = vadd.f32 %v3378, %v3511
        %v3524 = vadd.f32 %v3379, %v3514
        %s3525 = scalar_lea.vmem [#allocation5], 1280
        %v3526 = vld [vmem:[%s3525] sm:$0xf]
        %v3527 = vld [vmem:[%s3525 + $0x4] sm:$0xf]
        %v3528 = vld [vmem:[%s3525 + $0x8] sm:$0xf]
        %v3529 = vld [vmem:[%s3525 + $0xc] sm:$0xf]
        %v3530 = vld [vmem:[%s3525 + $0x10] sm:$0xf]
        %v3531 = vld [vmem:[%s3525 + $0x14] sm:$0xf]
        %v3532 = vld [vmem:[%s3525 + $0x18] sm:$0xf]
        %v3533 = vld [vmem:[%s3525 + $0x1c] sm:$0xf]
        %v3534 = vld [vmem:[%s3525 + $0x20] sm:$0xf]
        %v3535 = vld [vmem:[%s3525 + $0x24] sm:$0xf]
        %v3536 = vld [vmem:[%s3525 + $0x28] sm:$0xf]
        %v3537 = vld [vmem:[%s3525 + $0x2c] sm:$0xf]
        %v3538 = vld [vmem:[%s3525 + $0x30] sm:$0xf]
        %v3539 = vld [vmem:[%s3525 + $0x34] sm:$0xf]
        %v3540 = vld [vmem:[%s3525 + $0x38] sm:$0xf]
        %v3541 = vld [vmem:[%s3525 + $0x3c] sm:$0xf]
        %v3543 = vunpack.c.l.b16 %v239
        %v3544 = vpack.c.b16 %v3543, %v2804
        %v3562 = vunpack.c.l.b16 %v3526
        %v3563 = vunpack.c.l.b16 %v3527
        %v3564 = vunpack.c.l.b16 %v3528
        %v3565 = vunpack.c.l.b16 %v3529
        %v3566 = vunpack.c.l.b16 %v3530
        %v3567 = vunpack.c.l.b16 %v3531
        %v3568 = vunpack.c.l.b16 %v3532
        %v3569 = vunpack.c.l.b16 %v3533
        %v3570 = vunpack.c.l.b16 %v3534
        %v3571 = vunpack.c.l.b16 %v3535
        %v3572 = vunpack.c.l.b16 %v3536
        %v3573 = vunpack.c.l.b16 %v3537
        %v3574 = vunpack.c.l.b16 %v3538
        %v3575 = vunpack.c.l.b16 %v3539
        %v3576 = vunpack.c.l.b16 %v3540
        %v3577 = vunpack.c.l.b16 %v3541
        %v3578 = vpack.c.b16 %v3563, %v3562
        %v3579 = vpack.c.b16 %v3565, %v3564
        %v3580 = vpack.c.b16 %v3567, %v3566
        %v3581 = vpack.c.b16 %v3569, %v3568
        %v3582 = vpack.c.b16 %v3571, %v3570
        %v3583 = vpack.c.b16 %v3573, %v3572
        %v3584 = vpack.c.b16 %v3575, %v3574
        %v3585 = vpack.c.b16 %v3577, %v3576
        %3594 = vmatprep.subr.bf16.mxu0 0
        %3595 = vmatpush1.bf16.msra.mxu0 %v3578
        %3596 = vmatprep.subr.bf16.mxu0 0
        %3597 = vmatpush1.bf16.msra.mxu0 %v3579
        %3598 = vmatprep.subr.bf16.mxu0 0
        %3599 = vmatpush1.bf16.msra.mxu0 %v3580
        %3600 = vmatprep.subr.bf16.mxu0 0
        %3601 = vmatpush1.bf16.msra.mxu0 %v3581
        %3602 = vmatprep.subr.bf16.mxu0 0
        %3603 = vmatpush1.bf16.msra.mxu0 %v3582
        %3604 = vmatprep.subr.bf16.mxu0 0
        %3605 = vmatpush1.bf16.msra.mxu0 %v3583
        %3606 = vmatprep.subr.bf16.mxu0 0
        %3607 = vmatpush1.bf16.msra.mxu0 %v3584
        %3608 = vmatprep.subr.bf16.mxu0 0
        %3609 = vmatpush1.bf16.msra.mxu0 %v3585
        %3610 = vmatprep.subr.bf16.mxu0 0
        %3611 = vmatpush1.bf16.msra.mxu0 0
        %3612 = vmatprep.subr.bf16.mxu0 0
        %3613 = vmatpush1.bf16.msra.mxu0 0
        %3614 = vmatprep.subr.bf16.mxu0 0
        %3615 = vmatpush1.bf16.msra.mxu0 0
        %3616 = vmatprep.subr.bf16.mxu0 0
        %3617 = vmatpush1.bf16.msra.mxu0 0
        %3618 = vmatprep.subr.bf16.mxu0 0
        %3619 = vmatpush1.bf16.msra.mxu0 0
        %3620 = vmatprep.subr.bf16.mxu0 0
        %3621 = vmatpush1.bf16.msra.mxu0 0
        %3622 = vmatprep.subr.bf16.mxu0 0
        %3623 = vmatpush1.bf16.msra.mxu0 0
        %3624 = vmatprep.subr.bf16.mxu0 0
        %3625 = vmatpush1.bf16.msra.mxu0 0
        %3626 = vmatprep.mubr.bf16.mxu0 0
        %3627 = vmatmul.mubr.bf16.gmra.mrb[0].mxu0 %v536
        %v3628 = vpop.f32.mrb[0].mxu0
        %v3629 = vadd.f32 0.0, %v3628
        %v3630 = vpop.f32.mrb[0].mxu0
        %v3631 = vpop.f32.mrb[0].mxu0
        %v3632 = vadd.f32 0.0, %v3631
        %v3633 = vpop.f32.mrb[0].mxu0
        %3634 = vmatprep.mubr.bf16.mxu0 0
        %3635 = vmatmul.mubr.bf16.gmra.mrb[0].mxu0 %v537
        %v3636 = vpop.f32.mrb[0].mxu0
        %v3637 = vadd.f32 0.0, %v3636
        %v3638 = vpop.f32.mrb[0].mxu0
        %v3639 = vpop.f32.mrb[0].mxu0
        %v3640 = vadd.f32 0.0, %v3639
        %v3641 = vpop.f32.mrb[0].mxu0
        %3642 = vmatprep.mubr.bf16.mxu0 0
        %3643 = vmatmul.mubr.bf16.gmra.mrb[0].mxu0 %v2066
        %v3644 = vpop.f32.mrb[0].mxu0
        %v3645 = vadd.f32 0.0, %v3644
        %v3646 = vpop.f32.mrb[0].mxu0
        %v3647 = vpop.f32.mrb[0].mxu0
        %v3648 = vadd.f32 0.0, %v3647
        %v3649 = vpop.f32.mrb[0].mxu0
        %3650 = vmatprep.mubr.bf16.mxu0 0
        %3651 = vmatmul.mubr.bf16.gmra.mrb[0].mxu0 %v3544
        %v3652 = vpop.f32.mrb[0].mxu0
        %v3653 = vadd.f32 0.0, %v3652
        %v3654 = vpop.f32.mrb[0].mxu0
        %v3655 = vpop.f32.mrb[0].mxu0
        %v3656 = vadd.f32 0.0, %v3655
        %v3657 = vpop.f32.mrb[0].mxu0
        %3658 = vdwg.mxu0
        %v3659 = vadd.f32 %v3517, %v3629
        %v3660 = vadd.f32 %v3518, %v3632
        %v3661 = vadd.f32 %v3519, %v3637
        %v3662 = vadd.f32 %v3520, %v3640
        %v3663 = vadd.f32 %v3521, %v3645
        %v3664 = vadd.f32 %v3522, %v3648
        %v3665 = vadd.f32 %v3523, %v3653
        %v3666 = vadd.f32 %v3524, %v3656
        %v3668 = vshrl.u32 %v239, 16
        %v3670 = vrot.slane %v3668, 4
        %v3671 = vshll.u32 %v239, 16
        %v3673 = vrot.slane %v3671, 5
        %v3674 = vor.u32 %v3670, %v3673
        %v3675 = vrot.slane %v3674, 4
        %v3677 = vshll.u32 %v240, 16
        %v3679 = vrot.slane %v3677, 5
        %v3680 = vsel %vm259, %v3675, %v3679
        %s3681 = scalar_lea.vmem [#allocation5], 1344
        %v3682 = vld [vmem:[%s3681] sm:$0xf]
        %v3683 = vld [vmem:[%s3681 + $0x4] sm:$0xf]
        %v3684 = vld [vmem:[%s3681 + $0x8] sm:$0xf]
        %v3685 = vld [vmem:[%s3681 + $0xc] sm:$0xf]
        %v3686 = vld [vmem:[%s3681 + $0x10] sm:$0xf]
        %v3687 = vld [vmem:[%s3681 + $0x14] sm:$0xf]
        %v3688 = vld [vmem:[%s3681 + $0x18] sm:$0xf]
        %v3689 = vld [vmem:[%s3681 + $0x1c] sm:$0xf]
        %v3690 = vld [vmem:[%s3681 + $0x20] sm:$0xf]
        %v3691 = vld [vmem:[%s3681 + $0x24] sm:$0xf]
        %v3692 = vld [vmem:[%s3681 + $0x28] sm:$0xf]
        %v3693 = vld [vmem:[%s3681 + $0x2c] sm:$0xf]
        %v3694 = vld [vmem:[%s3681 + $0x30] sm:$0xf]
        %v3695 = vld [vmem:[%s3681 + $0x34] sm:$0xf]
        %v3696 = vld [vmem:[%s3681 + $0x38] sm:$0xf]
        %v3697 = vld [vmem:[%s3681 + $0x3c] sm:$0xf]
        %v3698 = vunpack.c.l.b16 %v3680
        %v3699 = vpack.c.b16 %v3698, %v2959
        %v3717 = vunpack.c.l.b16 %v3682
        %v3718 = vunpack.c.l.b16 %v3683
        %v3719 = vunpack.c.l.b16 %v3684
        %v3720 = vunpack.c.l.b16 %v3685
        %v3721 = vunpack.c.l.b16 %v3686
        %v3722 = vunpack.c.l.b16 %v3687
        %v3723 = vunpack.c.l.b16 %v3688
        %v3724 = vunpack.c.l.b16 %v3689
        %v3725 = vunpack.c.l.b16 %v3690
        %v3726 = vunpack.c.l.b16 %v3691
        %v3727 = vunpack.c.l.b16 %v3692
        %v3728 = vunpack.c.l.b16 %v3693
        %v3729 = vunpack.c.l.b16 %v3694
        %v3730 = vunpack.c.l.b16 %v3695
        %v3731 = vunpack.c.l.b16 %v3696
        %v3732 = vunpack.c.l.b16 %v3697
        %v3733 = vpack.c.b16 %v3718, %v3717
        %v3734 = vpack.c.b16 %v3720, %v3719
        %v3735 = vpack.c.b16 %v3722, %v3721
        %v3736 = vpack.c.b16 %v3724, %v3723
        %v3737 = vpack.c.b16 %v3726, %v3725
        %v3738 = vpack.c.b16 %v3728, %v3727
        %v3739 = vpack.c.b16 %v3730, %v3729
        %v3740 = vpack.c.b16 %v3732, %v3731
        %3749 = vmatprep.subr.bf16.mxu0 0
        %3750 = vmatpush1.bf16.msra.mxu0 %v3733
        %3751 = vmatprep.subr.bf16.mxu0 0
        %3752 = vmatpush1.bf16.msra.mxu0 %v3734
        %3753 = vmatprep.subr.bf16.mxu0 0
        %3754 = vmatpush1.bf16.msra.mxu0 %v3735
        %3755 = vmatprep.subr.bf16.mxu0 0
        %3756 = vmatpush1.bf16.msra.mxu0 %v3736
        %3757 = vmatprep.subr.bf16.mxu0 0
        %3758 = vmatpush1.bf16.msra.mxu0 %v3737
        %3759 = vmatprep.subr.bf16.mxu0 0
        %3760 = vmatpush1.bf16.msra.mxu0 %v3738
        %3761 = vmatprep.subr.bf16.mxu0 0
        %3762 = vmatpush1.bf16.msra.mxu0 %v3739
        %3763 = vmatprep.subr.bf16.mxu0 0
        %3764 = vmatpush1.bf16.msra.mxu0 %v3740
        %3765 = vmatprep.subr.bf16.mxu0 0
        %3766 = vmatpush1.bf16.msra.mxu0 0
        %3767 = vmatprep.subr.bf16.mxu0 0
        %3768 = vmatpush1.bf16.msra.mxu0 0
        %3769 = vmatprep.subr.bf16.mxu0 0
        %3770 = vmatpush1.bf16.msra.mxu0 0
        %3771 = vmatprep.subr.bf16.mxu0 0
        %3772 = vmatpush1.bf16.msra.mxu0 0
        %3773 = vmatprep.subr.bf16.mxu0 0
        %3774 = vmatpush1.bf16.msra.mxu0 0
        %3775 = vmatprep.subr.bf16.mxu0 0
        %3776 = vmatpush1.bf16.msra.mxu0 0
        %3777 = vmatprep.subr.bf16.mxu0 0
        %3778 = vmatpush1.bf16.msra.mxu0 0
        %3779 = vmatprep.subr.bf16.mxu0 0
        %3780 = vmatpush1.bf16.msra.mxu0 0
        %3781 = vmatprep.mubr.bf16.mxu0 0
        %3782 = vmatmul.mubr.bf16.gmra.mrb[0].mxu0 %v399
        %v3783 = vpop.f32.mrb[0].mxu0
        %v3784 = vadd.f32 0.0, %v3783
        %v3785 = vpop.f32.mrb[0].mxu0
        %v3786 = vpop.f32.mrb[0].mxu0
        %v3787 = vadd.f32 0.0, %v3786
        %v3788 = vpop.f32.mrb[0].mxu0
        %3789 = vmatprep.mubr.bf16.mxu0 0
        %3790 = vmatmul.mubr.bf16.gmra.mrb[0].mxu0 %v400
        %v3791 = vpop.f32.mrb[0].mxu0
        %v3792 = vadd.f32 0.0, %v3791
        %v3793 = vpop.f32.mrb[0].mxu0
        %v3794 = vpop.f32.mrb[0].mxu0
        %v3795 = vadd.f32 0.0, %v3794
        %v3796 = vpop.f32.mrb[0].mxu0
        %3797 = vmatprep.mubr.bf16.mxu0 0
        %3798 = vmatmul.mubr.bf16.gmra.mrb[0].mxu0 %v2221
        %v3799 = vpop.f32.mrb[0].mxu0
        %v3800 = vadd.f32 0.0, %v3799
        %v3801 = vpop.f32.mrb[0].mxu0
        %v3802 = vpop.f32.mrb[0].mxu0
        %v3803 = vadd.f32 0.0, %v3802
        %v3804 = vpop.f32.mrb[0].mxu0
        %3805 = vmatprep.mubr.bf16.mxu0 0
        %3806 = vmatmul.mubr.bf16.gmra.mrb[0].mxu0 %v3699
        %v3807 = vpop.f32.mrb[0].mxu0
        %v3808 = vadd.f32 0.0, %v3807
        %v3809 = vpop.f32.mrb[0].mxu0
        %v3810 = vpop.f32.mrb[0].mxu0
        %v3811 = vadd.f32 0.0, %v3810
        %v3812 = vpop.f32.mrb[0].mxu0
        %3813 = vdwg.mxu0
        %v3814 = vadd.f32 %v3659, %v3784
        %v3815 = vadd.f32 %v3660, %v3787
        %v3816 = vadd.f32 %v3661, %v3792
        %v3817 = vadd.f32 %v3662, %v3795
        %v3818 = vadd.f32 %v3663, %v3800
        %v3819 = vadd.f32 %v3664, %v3803
        %v3820 = vadd.f32 %v3665, %v3808
        %v3821 = vadd.f32 %v3666, %v3811
        %v3823 = vrot.slane %v239, 5
        %v3824 = vrot.slane %v3823, 4
        %v3825 = vrot.slane %v240, 5
        %v3826 = vsel %vm665, %v3824, %v3825
        %s3827 = scalar_lea.vmem [#allocation5], 1408
        %v3828 = vld [vmem:[%s3827] sm:$0xf]
        %v3829 = vld [vmem:[%s3827 + $0x4] sm:$0xf]
        %v3830 = vld [vmem:[%s3827 + $0x8] sm:$0xf]
        %v3831 = vld [vmem:[%s3827 + $0xc] sm:$0xf]
        %v3832 = vld [vmem:[%s3827 + $0x10] sm:$0xf]
        %v3833 = vld [vmem:[%s3827 + $0x14] sm:$0xf]
        %v3834 = vld [vmem:[%s3827 + $0x18] sm:$0xf]
        %v3835 = vld [vmem:[%s3827 + $0x1c] sm:$0xf]
        %v3836 = vld [vmem:[%s3827 + $0x20] sm:$0xf]
        %v3837 = vld [vmem:[%s3827 + $0x24] sm:$0xf]
        %v3838 = vld [vmem:[%s3827 + $0x28] sm:$0xf]
        %v3839 = vld [vmem:[%s3827 + $0x2c] sm:$0xf]
        %v3840 = vld [vmem:[%s3827 + $0x30] sm:$0xf]
        %v3841 = vld [vmem:[%s3827 + $0x34] sm:$0xf]
        %v3842 = vld [vmem:[%s3827 + $0x38] sm:$0xf]
        %v3843 = vld [vmem:[%s3827 + $0x3c] sm:$0xf]
        %v3844 = vunpack.c.l.b16 %v3826
        %v3845 = vpack.c.b16 %v3844, %v3105
        %v3863 = vunpack.c.l.b16 %v3828
        %v3864 = vunpack.c.l.b16 %v3829
        %v3865 = vunpack.c.l.b16 %v3830
        %v3866 = vunpack.c.l.b16 %v3831
        %v3867 = vunpack.c.l.b16 %v3832
        %v3868 = vunpack.c.l.b16 %v3833
        %v3869 = vunpack.c.l.b16 %v3834
        %v3870 = vunpack.c.l.b16 %v3835
        %v3871 = vunpack.c.l.b16 %v3836
        %v3872 = vunpack.c.l.b16 %v3837
        %v3873 = vunpack.c.l.b16 %v3838
        %v3874 = vunpack.c.l.b16 %v3839
        %v3875 = vunpack.c.l.b16 %v3840
        %v3876 = vunpack.c.l.b16 %v3841
        %v3877 = vunpack.c.l.b16 %v3842
        %v3878 = vunpack.c.l.b16 %v3843
        %v3879 = vpack.c.b16 %v3864, %v3863
        %v3880 = vpack.c.b16 %v3866, %v3865
        %v3881 = vpack.c.b16 %v3868, %v3867
        %v3882 = vpack.c.b16 %v3870, %v3869
        %v3883 = vpack.c.b16 %v3872, %v3871
        %v3884 = vpack.c.b16 %v3874, %v3873
        %v3885 = vpack.c.b16 %v3876, %v3875
        %v3886 = vpack.c.b16 %v3878, %v3877
        %3895 = vmatprep.subr.bf16.mxu0 0
        %3896 = vmatpush1.bf16.msra.mxu0 %v3879
        %3897 = vmatprep.subr.bf16.mxu0 0
        %3898 = vmatpush1.bf16.msra.mxu0 %v3880
        %3899 = vmatprep.subr.bf16.mxu0 0
        %3900 = vmatpush1.bf16.msra.mxu0 %v3881
        %3901 = vmatprep.subr.bf16.mxu0 0
        %3902 = vmatpush1.bf16.msra.mxu0 %v3882
        %3903 = vmatprep.subr.bf16.mxu0 0
        %3904 = vmatpush1.bf16.msra.mxu0 %v3883
        %3905 = vmatprep.subr.bf16.mxu0 0
        %3906 = vmatpush1.bf16.msra.mxu0 %v3884
        %3907 = vmatprep.subr.bf16.mxu0 0
        %3908 = vmatpush1.bf16.msra.mxu0 %v3885
        %3909 = vmatprep.subr.bf16.mxu0 0
        %3910 = vmatpush1.bf16.msra.mxu0 %v3886
        %3911 = vmatprep.subr.bf16.mxu0 0
        %3912 = vmatpush1.bf16.msra.mxu0 0
        %3913 = vmatprep.subr.bf16.mxu0 0
        %3914 = vmatpush1.bf16.msra.mxu0 0
        %3915 = vmatprep.subr.bf16.mxu0 0
        %3916 = vmatpush1.bf16.msra.mxu0 0
        %3917 = vmatprep.subr.bf16.mxu0 0
        %3918 = vmatpush1.bf16.msra.mxu0 0
        %3919 = vmatprep.subr.bf16.mxu0 0
        %3920 = vmatpush1.bf16.msra.mxu0 0
        %3921 = vmatprep.subr.bf16.mxu0 0
        %3922 = vmatpush1.bf16.msra.mxu0 0
        %3923 = vmatprep.subr.bf16.mxu0 0
        %3924 = vmatpush1.bf16.msra.mxu0 0
        %3925 = vmatprep.subr.bf16.mxu0 0
        %3926 = vmatpush1.bf16.msra.mxu0 0
        %3927 = vmatprep.mubr.bf16.mxu0 0
        %3928 = vmatmul.mubr.bf16.gmra.mrb[0].mxu0 %v725
        %v3929 = vpop.f32.mrb[0].mxu0
        %v3930 = vadd.f32 0.0, %v3929
        %v3931 = vpop.f32.mrb[0].mxu0
        %v3932 = vpop.f32.mrb[0].mxu0
        %v3933 = vadd.f32 0.0, %v3932
        %v3934 = vpop.f32.mrb[0].mxu0
        %3935 = vmatprep.mubr.bf16.mxu0 0
        %3936 = vmatmul.mubr.bf16.gmra.mrb[0].mxu0 %v726
        %v3937 = vpop.f32.mrb[0].mxu0
        %v3938 = vadd.f32 0.0, %v3937
        %v3939 = vpop.f32.mrb[0].mxu0
        %v3940 = vpop.f32.mrb[0].mxu0
        %v3941 = vadd.f32 0.0, %v3940
        %v3942 = vpop.f32.mrb[0].mxu0
        %3943 = vmatprep.mubr.bf16.mxu0 0
        %3944 = vmatmul.mubr.bf16.gmra.mrb[0].mxu0 %v2367
        %v3945 = vpop.f32.mrb[0].mxu0
        %v3946 = vadd.f32 0.0, %v3945
        %v3947 = vpop.f32.mrb[0].mxu0
        %v3948 = vpop.f32.mrb[0].mxu0
        %v3949 = vadd.f32 0.0, %v3948
        %v3950 = vpop.f32.mrb[0].mxu0
        %3951 = vmatprep.mubr.bf16.mxu0 0
        %3952 = vmatmul.mubr.bf16.gmra.mrb[0].mxu0 %v3845
        %v3953 = vpop.f32.mrb[0].mxu0
        %v3954 = vadd.f32 0.0, %v3953
        %v3955 = vpop.f32.mrb[0].mxu0
        %v3956 = vpop.f32.mrb[0].mxu0
        %v3957 = vadd.f32 0.0, %v3956
        %v3958 = vpop.f32.mrb[0].mxu0
        %3959 = vdwg.mxu0
        %v3960 = vadd.f32 %v3814, %v3930
        %v3961 = vadd.f32 %v3815, %v3933
        %v3962 = vadd.f32 %v3816, %v3938
        %v3963 = vadd.f32 %v3817, %v3941
        %v3964 = vadd.f32 %v3818, %v3946
        %v3965 = vadd.f32 %v3819, %v3949
        %v3966 = vadd.f32 %v3820, %v3954
        %v3967 = vadd.f32 %v3821, %v3957
        %v3968 = vrot.slane %v3668, 5
        %v3969 = vrot.slane %v3671, 6
        %v3970 = vor.u32 %v3968, %v3969
        %v3971 = vrot.slane %v3970, 4
        %v3972 = vshrl.u32 %v240, 16
        %v3974 = vrot.slane %v3972, 5
        %v3975 = vrot.slane %v3677, 6
        %v3976 = vor.u32 %v3974, %v3975
        %v3977 = vsel %vm854, %v3971, %v3976
        %s3978 = scalar_lea.vmem [#allocation5], 1472
        %v3979 = vld [vmem:[%s3978] sm:$0xf]
        %v3980 = vld [vmem:[%s3978 + $0x4] sm:$0xf]
        %v3981 = vld [vmem:[%s3978 + $0x8] sm:$0xf]
        %v3982 = vld [vmem:[%s3978 + $0xc] sm:$0xf]
        %v3983 = vld [vmem:[%s3978 + $0x10] sm:$0xf]
        %v3984 = vld [vmem:[%s3978 + $0x14] sm:$0xf]
        %v3985 = vld [vmem:[%s3978 + $0x18] sm:$0xf]
        %v3986 = vld [vmem:[%s3978 + $0x1c] sm:$0xf]
        %v3987 = vld [vmem:[%s3978 + $0x20] sm:$0xf]
        %v3988 = vld [vmem:[%s3978 + $0x24] sm:$0xf]
        %v3989 = vld [vmem:[%s3978 + $0x28] sm:$0xf]
        %v3990 = vld [vmem:[%s3978 + $0x2c] sm:$0xf]
        %v3991 = vld [vmem:[%s3978 + $0x30] sm:$0xf]
        %v3992 = vld [vmem:[%s3978 + $0x34] sm:$0xf]
        %v3993 = vld [vmem:[%s3978 + $0x38] sm:$0xf]
        %v3994 = vld [vmem:[%s3978 + $0x3c] sm:$0xf]
        %v3995 = vunpack.c.l.b16 %v3977
        %v3996 = vpack.c.b16 %v3995, %v3256
        %v4014 = vunpack.c.l.b16 %v3979
        %v4015 = vunpack.c.l.b16 %v3980
        %v4016 = vunpack.c.l.b16 %v3981
        %v4017 = vunpack.c.l.b16 %v3982
        %v4018 = vunpack.c.l.b16 %v3983
        %v4019 = vunpack.c.l.b16 %v3984
        %v4020 = vunpack.c.l.b16 %v3985
        %v4021 = vunpack.c.l.b16 %v3986
        %v4022 = vunpack.c.l.b16 %v3987
        %v4023 = vunpack.c.l.b16 %v3988
        %v4024 = vunpack.c.l.b16 %v3989
        %v4025 = vunpack.c.l.b16 %v3990
        %v4026 = vunpack.c.l.b16 %v3991
        %v4027 = vunpack.c.l.b16 %v3992
        %v4028 = vunpack.c.l.b16 %v3993
        %v4029 = vunpack.c.l.b16 %v3994
        %v4030 = vpack.c.b16 %v4015, %v4014
        %v4031 = vpack.c.b16 %v4017, %v4016
        %v4032 = vpack.c.b16 %v4019, %v4018
        %v4033 = vpack.c.b16 %v4021, %v4020
        %v4034 = vpack.c.b16 %v4023, %v4022
        %v4035 = vpack.c.b16 %v4025, %v4024
        %v4036 = vpack.c.b16 %v4027, %v4026
        %v4037 = vpack.c.b16 %v4029, %v4028
        %4046 = vmatprep.subr.bf16.mxu0 0
        %4047 = vmatpush1.bf16.msra.mxu0 %v4030
        %4048 = vmatprep.subr.bf16.mxu0 0
        %4049 = vmatpush1.bf16.msra.mxu0 %v4031
        %4050 = vmatprep.subr.bf16.mxu0 0
        %4051 = vmatpush1.bf16.msra.mxu0 %v4032
        %4052 = vmatprep.subr.bf16.mxu0 0
        %4053 = vmatpush1.bf16.msra.mxu0 %v4033
        %4054 = vmatprep.subr.bf16.mxu0 0
        %4055 = vmatpush1.bf16.msra.mxu0 %v4034
        %4056 = vmatprep.subr.bf16.mxu0 0
        %4057 = vmatpush1.bf16.msra.mxu0 %v4035
        %4058 = vmatprep.subr.bf16.mxu0 0
        %4059 = vmatpush1.bf16.msra.mxu0 %v4036
        %4060 = vmatprep.subr.bf16.mxu0 0
        %4061 = vmatpush1.bf16.msra.mxu0 %v4037
        %4062 = vmatprep.subr.bf16.mxu0 0
        %4063 = vmatpush1.bf16.msra.mxu0 0
        %4064 = vmatprep.subr.bf16.mxu0 0
        %4065 = vmatpush1.bf16.msra.mxu0 0
        %4066 = vmatprep.subr.bf16.mxu0 0
        %4067 = vmatpush1.bf16.msra.mxu0 0
        %4068 = vmatprep.subr.bf16.mxu0 0
        %4069 = vmatpush1.bf16.msra.mxu0 0
        %4070 = vmatprep.subr.bf16.mxu0 0
        %4071 = vmatpush1.bf16.msra.mxu0 0
        %4072 = vmatprep.subr.bf16.mxu0 0
        %4073 = vmatpush1.bf16.msra.mxu0 0
        %4074 = vmatprep.subr.bf16.mxu0 0
        %4075 = vmatpush1.bf16.msra.mxu0 0
        %4076 = vmatprep.subr.bf16.mxu0 0
        %4077 = vmatpush1.bf16.msra.mxu0 0
        %4078 = vmatprep.mubr.bf16.mxu0 0
        %4079 = vmatmul.mubr.bf16.gmra.mrb[0].mxu0 %v962
        %v4080 = vpop.f32.mrb[0].mxu0
        %v4081 = vadd.f32 0.0, %v4080
        %v4082 = vpop.f32.mrb[0].mxu0
        %v4083 = vpop.f32.mrb[0].mxu0
        %v4084 = vadd.f32 0.0, %v4083
        %v4085 = vpop.f32.mrb[0].mxu0
        %4086 = vmatprep.mubr.bf16.mxu0 0
        %4087 = vmatmul.mubr.bf16.gmra.mrb[0].mxu0 %v963
        %v4088 = vpop.f32.mrb[0].mxu0
        %v4089 = vadd.f32 0.0, %v4088
        %v4090 = vpop.f32.mrb[0].mxu0
        %v4091 = vpop.f32.mrb[0].mxu0
        %v4092 = vadd.f32 0.0, %v4091
        %v4093 = vpop.f32.mrb[0].mxu0
        %4094 = vmatprep.mubr.bf16.mxu0 0
        %4095 = vmatmul.mubr.bf16.gmra.mrb[0].mxu0 %v2518
        %v4096 = vpop.f32.mrb[0].mxu0
        %v4097 = vadd.f32 0.0, %v4096
        %v4098 = vpop.f32.mrb[0].mxu0
        %v4099 = vpop.f32.mrb[0].mxu0
        %v4100 = vadd.f32 0.0, %v4099
        %v4101 = vpop.f32.mrb[0].mxu0
        %4102 = vmatprep.mubr.bf16.mxu0 0
        %4103 = vmatmul.mubr.bf16.gmra.mrb[0].mxu0 %v3996
        %v4104 = vpop.f32.mrb[0].mxu0
        %v4105 = vadd.f32 0.0, %v4104
        %v4106 = vpop.f32.mrb[0].mxu0
        %v4107 = vpop.f32.mrb[0].mxu0
        %v4108 = vadd.f32 0.0, %v4107
        %v4109 = vpop.f32.mrb[0].mxu0
        %4110 = vdwg.mxu0
        %v4111 = vadd.f32 %v3960, %v4081
        %v4112 = vadd.f32 %v3961, %v4084
        %v4113 = vadd.f32 %v3962, %v4089
        %v4114 = vadd.f32 %v3963, %v4092
        %v4115 = vadd.f32 %v3964, %v4097
        %v4116 = vadd.f32 %v3965, %v4100
        %v4117 = vadd.f32 %v3966, %v4105
        %v4118 = vadd.f32 %v3967, %v4108
        %v4119 = vrot.slane %v239, 6
        %v4120 = vrot.slane %v4119, 4
        %v4121 = vrot.slane %v240, 6
        %v4122 = vsel %vm1091, %v4120, %v4121
        %s4123 = scalar_lea.vmem [#allocation5], 1536
        %v4124 = vld [vmem:[%s4123] sm:$0xf]
        %v4125 = vld [vmem:[%s4123 + $0x4] sm:$0xf]
        %v4126 = vld [vmem:[%s4123 + $0x8] sm:$0xf]
        %v4127 = vld [vmem:[%s4123 + $0xc] sm:$0xf]
        %v4128 = vld [vmem:[%s4123 + $0x10] sm:$0xf]
        %v4129 = vld [vmem:[%s4123 + $0x14] sm:$0xf]
        %v4130 = vld [vmem:[%s4123 + $0x18] sm:$0xf]
        %v4131 = vld [vmem:[%s4123 + $0x1c] sm:$0xf]
        %v4132 = vld [vmem:[%s4123 + $0x20] sm:$0xf]
        %v4133 = vld [vmem:[%s4123 + $0x24] sm:$0xf]
        %v4134 = vld [vmem:[%s4123 + $0x28] sm:$0xf]
        %v4135 = vld [vmem:[%s4123 + $0x2c] sm:$0xf]
        %v4136 = vld [vmem:[%s4123 + $0x30] sm:$0xf]
        %v4137 = vld [vmem:[%s4123 + $0x34] sm:$0xf]
        %v4138 = vld [vmem:[%s4123 + $0x38] sm:$0xf]
        %v4139 = vld [vmem:[%s4123 + $0x3c] sm:$0xf]
        %v4140 = vunpack.c.l.b16 %v4122
        %v4141 = vpack.c.b16 %v4140, %v3401
        %v4159 = vunpack.c.l.b16 %v4124
        %v4160 = vunpack.c.l.b16 %v4125
        %v4161 = vunpack.c.l.b16 %v4126
        %v4162 = vunpack.c.l.b16 %v4127
        %v4163 = vunpack.c.l.b16 %v4128
        %v4164 = vunpack.c.l.b16 %v4129
        %v4165 = vunpack.c.l.b16 %v4130
        %v4166 = vunpack.c.l.b16 %v4131
        %v4167 = vunpack.c.l.b16 %v4132
        %v4168 = vunpack.c.l.b16 %v4133
        %v4169 = vunpack.c.l.b16 %v4134
        %v4170 = vunpack.c.l.b16 %v4135
        %v4171 = vunpack.c.l.b16 %v4136
        %v4172 = vunpack.c.l.b16 %v4137
        %v4173 = vunpack.c.l.b16 %v4138
        %v4174 = vunpack.c.l.b16 %v4139
        %v4175 = vpack.c.b16 %v4160, %v4159
        %v4176 = vpack.c.b16 %v4162, %v4161
        %v4177 = vpack.c.b16 %v4164, %v4163
        %v4178 = vpack.c.b16 %v4166, %v4165
        %v4179 = vpack.c.b16 %v4168, %v4167
        %v4180 = vpack.c.b16 %v4170, %v4169
        %v4181 = vpack.c.b16 %v4172, %v4171
        %v4182 = vpack.c.b16 %v4174, %v4173
        %4191 = vmatprep.subr.bf16.mxu0 0
        %4192 = vmatpush1.bf16.msra.mxu0 %v4175
        %4193 = vmatprep.subr.bf16.mxu0 0
        %4194 = vmatpush1.bf16.msra.mxu0 %v4176
        %4195 = vmatprep.subr.bf16.mxu0 0
        %4196 = vmatpush1.bf16.msra.mxu0 %v4177
        %4197 = vmatprep.subr.bf16.mxu0 0
        %4198 = vmatpush1.bf16.msra.mxu0 %v4178
        %4199 = vmatprep.subr.bf16.mxu0 0
        %4200 = vmatpush1.bf16.msra.mxu0 %v4179
        %4201 = vmatprep.subr.bf16.mxu0 0
        %4202 = vmatpush1.bf16.msra.mxu0 %v4180
        %4203 = vmatprep.subr.bf16.mxu0 0
        %4204 = vmatpush1.bf16.msra.mxu0 %v4181
        %4205 = vmatprep.subr.bf16.mxu0 0
        %4206 = vmatpush1.bf16.msra.mxu0 %v4182
        %4207 = vmatprep.subr.bf16.mxu0 0
        %4208 = vmatpush1.bf16.msra.mxu0 0
        %4209 = vmatprep.subr.bf16.mxu0 0
        %4210 = vmatpush1.bf16.msra.mxu0 0
        %4211 = vmatprep.subr.bf16.mxu0 0
        %4212 = vmatpush1.bf16.msra.mxu0 0
        %4213 = vmatprep.subr.bf16.mxu0 0
        %4214 = vmatpush1.bf16.msra.mxu0 0
        %4215 = vmatprep.subr.bf16.mxu0 0
        %4216 = vmatpush1.bf16.msra.mxu0 0
        %4217 = vmatprep.subr.bf16.mxu0 0
        %4218 = vmatpush1.bf16.msra.mxu0 0
        %4219 = vmatprep.subr.bf16.mxu0 0
        %4220 = vmatpush1.bf16.msra.mxu0 0
        %4221 = vmatprep.subr.bf16.mxu0 0
        %4222 = vmatpush1.bf16.msra.mxu0 0
        %4223 = vmatprep.mubr.bf16.mxu0 0
        %4224 = vmatmul.mubr.bf16.gmra.mrb[0].mxu0 %v1151
        %v4225 = vpop.f32.mrb[0].mxu0
        %v4226 = vadd.f32 0.0, %v4225
        %v4227 = vpop.f32.mrb[0].mxu0
        %v4228 = vpop.f32.mrb[0].mxu0
        %v4229 = vadd.f32 0.0, %v4228
        %v4230 = vpop.f32.mrb[0].mxu0
        %4231 = vmatprep.mubr.bf16.mxu0 0
        %4232 = vmatmul.mubr.bf16.gmra.mrb[0].mxu0 %v1152
        %v4233 = vpop.f32.mrb[0].mxu0
        %v4234 = vadd.f32 0.0, %v4233
        %v4235 = vpop.f32.mrb[0].mxu0
        %v4236 = vpop.f32.mrb[0].mxu0
        %v4237 = vadd.f32 0.0, %v4236
        %v4238 = vpop.f32.mrb[0].mxu0
        %4239 = vmatprep.mubr.bf16.mxu0 0
        %4240 = vmatmul.mubr.bf16.gmra.mrb[0].mxu0 %v2663
        %v4241 = vpop.f32.mrb[0].mxu0
        %v4242 = vadd.f32 0.0, %v4241
        %v4243 = vpop.f32.mrb[0].mxu0
        %v4244 = vpop.f32.mrb[0].mxu0
        %v4245 = vadd.f32 0.0, %v4244
        %v4246 = vpop.f32.mrb[0].mxu0
        %4247 = vmatprep.mubr.bf16.mxu0 0
        %4248 = vmatmul.mubr.bf16.gmra.mrb[0].mxu0 %v4141
        %v4249 = vpop.f32.mrb[0].mxu0
        %v4250 = vadd.f32 0.0, %v4249
        %v4251 = vpop.f32.mrb[0].mxu0
        %v4252 = vpop.f32.mrb[0].mxu0
        %v4253 = vadd.f32 0.0, %v4252
        %v4254 = vpop.f32.mrb[0].mxu0
        %4255 = vdwg.mxu0
        %v4256 = vadd.f32 %v4111, %v4226
        %v4257 = vadd.f32 %v4112, %v4229
        %v4258 = vadd.f32 %v4113, %v4234
        %v4259 = vadd.f32 %v4114, %v4237
        %v4260 = vadd.f32 %v4115, %v4242
        %v4261 = vadd.f32 %v4116, %v4245
        %v4262 = vadd.f32 %v4117, %v4250
        %v4263 = vadd.f32 %v4118, %v4253
        %v4264 = vmax.f32 %v4256, %v4257
        %v4265 = vmax.f32 %v4258, %v4259
        %v4266 = vmax.f32 %v4260, %v4261
        %v4267 = vmax.f32 %v4262, %v4263
        %v4268 = vld [vmem:[#allocation7] sm:$0x1]
        %v4273 = vrot.slane %v4264, 1
        %v4274 = vrot.slane %v4265, 1
        %v4275 = vrot.slane %v4266, 1
        %v4276 = vrot.slane %v4267, 1
        %v4281 = vmax.f32 %v4264, %v4273
        %v4282 = vmax.f32 %v4265, %v4274
        %v4283 = vmax.f32 %v4266, %v4275
        %v4284 = vmax.f32 %v4267, %v4276
        %v4286 = vlaneseq
        %v4287 = vshrl.u32 %v4286, 7
        %v4288 = vsub.s32 0, %v4287
        %v4289 = vrot.slane %v4268, %v4288
        %v4291 = vadd.f32 %v4281, %v4289
        %v4292 = vadd.f32 %v4282, %v4289
        %v4293 = vadd.f32 %v4283, %v4289
        %v4294 = vadd.f32 %v4284, %v4289
        %v4295 = vmax.f32 %v4291, 0.0
        %v4296 = vmax.f32 %v4292, 0.0
        %v4297 = vmax.f32 %v4293, 0.0
        %v4298 = vmax.f32 %v4294, 0.0
        %v4299 = vpack.c.bf16 %v4295, %v4295
        %v4300 = vpack.c.bf16 %v4296, %v4296
        %v4301 = vpack.c.bf16 %v4297, %v4297
        %v4302 = vpack.c.bf16 %v4298, %v4298
        %v4307 = vunpack.c.l.b16 %v4299
        %v4308 = vunpack.c.l.b16 %v4300
        %v4309 = vunpack.c.l.b16 %v4301
        %v4310 = vunpack.c.l.b16 %v4302
        %v4311 = vpack.c.b16 %v4307, %v4307
        %v4312 = vpack.c.b16 %v4308, %v4308
        %v4313 = vpack.c.b16 %v4309, %v4309
        %v4314 = vpack.c.b16 %v4310, %v4310
        %v4315 = vunpack.c.l.b16 %v4311
        %v4316 = vunpack.c.l.b16 %v4312
        %v4317 = vunpack.c.l.b16 %v4313
        %v4318 = vunpack.c.l.b16 %v4314
        %v4319 = vrot.slane %v4316, 7
        %vm4320 = vcmask 1041409
        %v4321 = vsel %vm4320, %v4319, %v4315
        %v4322 = vrot.slane %v4317, 6
        %vm4323 = vcmask 1042434
        %v4324 = vsel %vm4323, %v4322, %v4321
        %v4325 = vrot.slane %v4318, 5
        %vm4326 = vcmask 1043459
        %v4327 = vsel %vm4326, %v4325, %v4324
        %v4328 = vpack.c.b16 %v4327, %v4327
        %4330 = vst [vmem:[%s215] sm:$0x3] %v4328
        %v4331 = vrot.slane %v4315, 6
        %v4332 = vrot.slane %v4316, 5
        %vm4333 = vcmask 1045509
        %v4334 = vsel %vm4333, %v4332, %v4331
        %v4335 = vrot.slane %v4317, 4
        %vm4336 = vcmask 1046534
        %v4337 = vsel %vm4336, %v4335, %v4334
        %v4338 = vrot.slane %v4318, 3
        %vm4339 = vcmask 1047559
        %v4340 = vsel %vm4339, %v4338, %v4337
        %v4341 = vpack.c.b16 %v4340, %v4340
        %4343 = vst [vmem:[%s215] sm:$0xc] %v4341
        %v4344 = vrot.slane %v4315, 4
        %v4345 = vrot.slane %v4316, 3
        %v4346 = vsel %vm4320, %v4345, %v4344
        %v4347 = vrot.slane %v4317, 2
        %v4348 = vsel %vm4323, %v4347, %v4346
        %v4349 = vrot.slane %v4318, 1
        %v4350 = vsel %vm4326, %v4349, %v4348
        %v4351 = vpack.c.b16 %v4350, %v4350
        %4353 = vst [vmem:[%s215 + $0x4] sm:$0x3] %v4351
        %v4354 = vrot.slane %v4315, 2
        %v4355 = vrot.slane %v4316, 1
        %v4356 = vsel %vm4333, %v4355, %v4354
        %v4357 = vsel %vm4336, %v4317, %v4356
        %v4358 = vrot.slane %v4318, 7
        %v4359 = vsel %vm4339, %v4358, %v4357
        %v4360 = vpack.c.b16 %v4359, %v4359
        %4362 = vst [vmem:[%s215 + $0x4] sm:$0xc] %v4360
        %s4363 = sand.u32 %s97, 1
        %s4364 = scalar_lea.sflag [#allocation4], %s4363
        %s4365 = sand.u32 %s97, 1
        %s4366 = smul.addr %s4365, 8
        %s4367 = scalar_lea.vmem [#allocation8], %s4366
        // Predicated region
        $region45: #{net_forward.4} parent=31 // pred_check
          %p4368 = pneg %p107
        $region46: #{net_forward.4} parent=31 // pred_check_branch
          %4370 = sbr.rel (%p4368) target = $region48
        $region47: #{net_forward.4} parent=31 // pred_region
          %s4372 = ssub.s32 128, 128
          %4373 = vsyncadd %s4364, %s4372
          %s4374 = smul.addr %s21, 2
          %s4375 = smul.addr %s4374, 64
          %s4376 = scalar_lea.hbm %s3, %s4375
          %s4377 = sshll.u32 %s4367, 4
          %s4378 = int_to_ptr.vmem [resolvable:$true] %s4377
          %4383 = dma.vmem_to_hbm [thread:$0]  %s4378, 128, %s4376, %s4364, 64, 64, 4
        $region48: #{net_forward.4} parent=31 // pred_fallthru
          _
      $region32: #{net_forward.4} parent=5 // pred_fallthru
        _
      %p4384 = scmp.le.s32.totalorder 2, %s16
      // Predicated region
      $region49: #{net_forward.4} parent=5 // pred_check
        %p4385 = pneg %p4384
      $region50: #{net_forward.4} parent=5 // pred_check_branch
        %4387 = sbr.rel (%p4385) target = $region52
      $region51: #{net_forward.4} parent=5 // pred_region
        %s4388 = ssub.s32 %s16, 2
        // Predicated region
        $region53: #{net_forward.4} parent=51 // pred_check
          %p4389 = pneg %p113
        $region54: #{net_forward.4} parent=51 // pred_check_branch
          %4391 = sbr.rel (%p4389) target = $region56
        $region55: #{net_forward.4} parent=51 // pred_region
          %s4392 = sand.u32 %s98, 1
          %s4393 = scalar_lea.sflag [#allocation4], %s4392
          %s4394 = sand.u32 %s98, 1
          %s4395 = smul.addr %s4394, 8
          %s4396 = scalar_lea.vmem [#allocation8], %s4395
          %4397 = dma.done %s4393, 128
        $region56: #{net_forward.4} parent=51 // pred_fallthru
          _
      $region52: #{net_forward.4} parent=5 // pred_fallthru
        _
    $region6: #{net_forward.4} parent=1 // loop_footer
      %s20 = sadd.s32 1, %s16
    $region7: #{net_forward.4} parent=1 // loop_footer_branch
      %15 = sbr.rel target = $region3
    $region8: #{net_forward.4} parent=1 // loop_exit
      _
    %4398 = vsyncpa [#allocation3], 1
    %s4399 = scalar_lea.sflag [#allocation3], 1
    %4400 = vsyncpa %s4399, 1
    %4401 = vsyncpa [#allocation6], 1
    %4402 = vsyncpa [#allocation4], 1
    %s4403 = scalar_lea.sflag [#allocation4], 1
    %4404 = vsyncpa %s4403, 1

</llo_original>
